<compile_context>
chip_gen: v5e
topology: v5e:2x2
jax: 0.10.0
libtpu: 0.0.40
codegen_flags: <defaults>
</compile_context>

<pallas_src>
import functools

import numpy as np
import jax
import jax.numpy as jnp
from jax import lax
from jax.experimental import pallas as pl
from jax.experimental.pallas import tpu as pltpu

EPS = 1e-5
GROUPS = 16  # nn.GroupNorm(16, ...)


# ----------------------------------------------------------------------------
# In-kernel helpers
# ----------------------------------------------------------------------------
def _gn_stats(x2, mfold, mbcast, group_size):
    """GroupNorm statistics on a lane-dense (D*H, W*C) view.

    mfold  : (W*C, G) 0/1 matrix summing lane positions into their group.
    mbcast : (G, W*C) 0/1 matrix broadcasting group values back to lanes.
    Returns (x - mean) and rsqrt(var + eps), both broadcast to (., W*C).
    """
    colsum = jnp.sum(x2, axis=0, keepdims=True)                                 # (1, WC)
    gmean = jnp.dot(colsum, mfold, preferred_element_type=jnp.float32) / group_size
    d = x2 - jnp.dot(gmean, mbcast, preferred_element_type=jnp.float32)
    sqsum = jnp.sum(d * d, axis=0, keepdims=True)                               # (1, WC)
    gvar = jnp.dot(sqsum, mfold, preferred_element_type=jnp.float32) / group_size
    inv = jnp.dot(lax.rsqrt(gvar + EPS), mbcast, preferred_element_type=jnp.float32)
    return d, inv


def _staged_conv3x3x3(y, wband_ref, xp_ref, acc_ref, D, H, W, Cin):
    """3x3x3 'same' conv of y, a lane-dense (D*H, W*Cin) activation.

    kw taps + width padding live in the block-banded weight (K = W*Cin = 256);
    depth/height halos come from the zero-padded VMEM staging buffer.
    Result (D*H, W*Cout) is left in acc_ref.
    """
    WCin = W * Cin
    xp_ref[...] = jnp.zeros_like(xp_ref)          # cheap memset keeps halos zero
    xp_ref[1:D + 1, 1:H + 1, :] = y.reshape(D, H, WCin)
    acc_ref[...] = jnp.zeros_like(acc_ref)
    for kd in range(3):
        for kh in range(3):
            slab = xp_ref[kd:kd + D, kh:kh + H, :].reshape(D * H, WCin)
            acc_ref[...] += jnp.dot(slab, wband_ref[kd, kh],
                                    preferred_element_type=jnp.float32)


# ----------------------------------------------------------------------------
# Pallas kernels
# ----------------------------------------------------------------------------
def gn1_conv1_kernel(x_ref, g1_ref, b1_ref, mfold_ref, mbcast_ref, wband_ref,
                     o_ref, xp_ref, acc_ref, *, W, Ci, Co, G):
    _, D, H, _ = x_ref.shape
    gsize = float(D * H * W * (Ci // G))
    x2 = x_ref[...].reshape(D * H, W * Ci)
    d, inv = _gn_stats(x2, mfold_ref[...], mbcast_ref[...], gsize)
    y = jnp.maximum(d * (inv * g1_ref[...]) + b1_ref[...], 0.0)        # GN1 + ReLU
    _staged_conv3x3x3(y, wband_ref, xp_ref, acc_ref, D, H, W, Ci)      # conv1
    o_ref[...] = acc_ref[...].reshape(1, D, H, W * Co)


def tail_kernel(c1_ref, res_ref, tep_ref, gg_ref, bg_ref, g2_ref, b2_ref,
                mfold_ref, mbcast_ref, cfold_ref, cbcast_ref, wfeat_ref,
                wband_ref, o_ref, xp_ref, acc_ref, *, W, C, G):
    _, D, H, _ = c1_ref.shape
    WC = W * C
    gsize = float(D * H * W * (C // G))

    c2 = c1_ref[...].reshape(D * H, WC)
    # GN stats are identical for gng and gn2 (same tensor, same groups).
    d, inv = _gn_stats(c2, mfold_ref[...], mbcast_ref[...], gsize)

    # --- GAP branch: GN_g -> ReLU -> global average pool -> controller -> sigmoid
    yg = jnp.maximum(d * (inv * gg_ref[...]) + bg_ref[...], 0.0)
    feat = jnp.dot(jnp.sum(yg, axis=0, keepdims=True), cfold_ref[...],
                   preferred_element_type=jnp.float32) / float(D * H * W)    # (1, Fg)
    logit = jnp.dot(feat, wfeat_ref[...],
                    preferred_element_type=jnp.float32) + tep_ref[...].reshape(1, -1)
    att = jax.nn.sigmoid(logit)                                              # (1, Fl)
    att_t = jnp.dot(att, cbcast_ref[...], preferred_element_type=jnp.float32)  # (1, W*Fl)

    # --- main branch: GN2 -> ReLU -> conv2, then + residual * attention
    y2 = jnp.maximum(d * (inv * g2_ref[...]) + b2_ref[...], 0.0)
    _staged_conv3x3x3(y2, wband_ref, xp_ref, acc_ref, D, H, W, C)
    out = acc_ref[...] + res_ref[...].reshape(D * H, WC) * att_t
    o_ref[...] = out.reshape(1, D, H, WC)


# ----------------------------------------------------------------------------
# pallas_call wrappers
# ----------------------------------------------------------------------------
def _call_gn1_conv1(x2, kp, W, Ci, Co):
    N, D, H, WCi = x2.shape
    G = GROUPS
    kern = functools.partial(gn1_conv1_kernel, W=W, Ci=Ci, Co=Co, G=G)
    return pl.pallas_call(
        kern,
        out_shape=jax.ShapeDtypeStruct((N, D, H, W * Co), jnp.float32),
        grid=(N,),
        in_specs=[
            pl.BlockSpec((1, D, H, WCi), lambda n: (n, 0, 0, 0)),
            pl.BlockSpec((1, WCi), lambda n: (0, 0)),
            pl.BlockSpec((1, WCi), lambda n: (0, 0)),
            pl.BlockSpec((WCi, G), lambda n: (0, 0)),
            pl.BlockSpec((G, WCi), lambda n: (0, 0)),
            pl.BlockSpec((3, 3, W * Ci, W * Co), lambda n: (0, 0, 0, 0)),
        ],
        out_specs=pl.BlockSpec((1, D, H, W * Co), lambda n: (n, 0, 0, 0)),
        scratch_shapes=[
            pltpu.VMEM((D + 2, H + 2, W * Ci), jnp.float32),   # padded activation stage
            pltpu.VMEM((D * H, W * Co), jnp.float32),          # conv accumulator
        ],
        compiler_params=pltpu.CompilerParams(dimension_semantics=("parallel",)),
    )(x2, kp["gn1_gamma_t"], kp["gn1_beta_t"], kp["mfold1"], kp["mbcast1"],
      kp["conv1_band"])


def _call_tail(c1, res, te_proj, kp, W, C):
    N, D, H, WC = c1.shape
    G = GROUPS
    Fl = te_proj.shape[-1]
    kern = functools.partial(tail_kernel, W=W, C=C, G=G)
    return pl.pallas_call(
        kern,
        out_shape=jax.ShapeDtypeStruct((N, D, H, WC), jnp.float32),
        grid=(N,),
        in_specs=[
            pl.BlockSpec((1, D, H, WC), lambda n: (n, 0, 0, 0)),   # c1
            pl.BlockSpec((1, D, H, WC), lambda n: (n, 0, 0, 0)),   # residual (x)
            pl.BlockSpec((1, 1, Fl), lambda n: (n, 0, 0)),         # te@W_te + bias
            pl.BlockSpec((1, WC), lambda n: (0, 0)),               # gng gamma (tiled)
            pl.BlockSpec((1, WC), lambda n: (0, 0)),               # gng beta
            pl.BlockSpec((1, WC), lambda n: (0, 0)),               # gn2 gamma
            pl.BlockSpec((1, WC), lambda n: (0, 0)),               # gn2 beta
            pl.BlockSpec((WC, G), lambda n: (0, 0)),               # group fold
            pl.BlockSpec((G, WC), lambda n: (0, 0)),               # group broadcast
            pl.BlockSpec((WC, C), lambda n: (0, 0)),               # GAP channel fold
            pl.BlockSpec((Fl, W * Fl), lambda n: (0, 0)),          # attention -> lanes
            pl.BlockSpec((C, Fl), lambda n: (0, 0)),               # controller W (feat part)
            pl.BlockSpec((3, 3, W * C, WC), lambda n: (0, 0, 0, 0)),  # conv2 band
        ],
        out_specs=pl.BlockSpec((1, D, H, WC), lambda n: (n, 0, 0, 0)),
        scratch_shapes=[
            pltpu.VMEM((D + 2, H + 2, W * C), jnp.float32),
            pltpu.VMEM((D * H, WC), jnp.float32),
        ],
        compiler_params=pltpu.CompilerParams(dimension_semantics=("parallel",)),
    )(c1, res, te_proj, kp["gng_gamma_t"], kp["gng_beta_t"], kp["gn2_gamma_t"],
      kp["gn2_beta_t"], kp["mfold2"], kp["mbcast2"], kp["wfold2"], kp["cbcast"],
      kp["ctrl_w_feat"], kp["conv2_band"])


# ----------------------------------------------------------------------------
# Full module forward (glue in plain JAX)
# ----------------------------------------------------------------------------
def dyn_no_bottleneck_forward(kp, x_ncdhw, task_encoding):
    """x_ncdhw: (N, inplanes, D, H, W); task_encoding: (N, 7, 1, 1, 1)."""
    N, Ci, D, H, W = x_ncdhw.shape
    Co = kp["gn2_gamma_t"].shape[1] // W
    Fl = kp["ctrl_b"].shape[1]

    x = jnp.transpose(x_ncdhw, (0, 2, 3, 4, 1)).astype(jnp.float32)   # NDHWC
    x2 = x.reshape(N, D, H, W * Ci)                                   # lane-dense view

    # out = conv1(relu(gn1(x)))  -- fused in one kernel
    c1 = _call_gn1_conv1(x2, kp, W=W, Ci=Ci, Co=Co)

    # task-encoding part of the controller (tiny) in plain JAX
    te = task_encoding.reshape(N, -1).astype(jnp.float32)             # (N, 7)
    te_proj = (te @ kp["ctrl_w_te"] + kp["ctrl_b"]).reshape(N, 1, Fl)

    # GAP + controller + GN2 + conv2 + residual*attention -- fused in one kernel
    out = _call_tail(c1, x2, te_proj, kp, W=W, C=Co)

    out = out.reshape(N, D, H, W, Co)
    return jnp.transpose(out, (0, 4, 1, 2, 3))                        # back to NCDHW


# ----------------------------------------------------------------------------
# Parameter construction: raw (torch layout) + kernel layout
# ----------------------------------------------------------------------------
def init_raw_params(key, inplanes, planes, Fg, Fl):
    ks = jax.random.split(key, 10)
    return {
        "gn1_g": 1.0 + 0.1 * jax.random.normal(ks[0], (inplanes,), jnp.float32),
        "gn1_b": 0.1 * jax.random.normal(ks[1], (inplanes,), jnp.float32),
        "conv1_w": 0.1 * jax.random.normal(ks[2], (planes, inplanes, 3, 3, 3), jnp.float32),
        "gng_g": 1.0 + 0.1 * jax.random.normal(ks[3], (Fg,), jnp.float32),
        "gng_b": 0.1 * jax.random.normal(ks[4], (Fg,), jnp.float32),
        "ctrl_w": 0.1 * jax.random.normal(ks[5], (Fl, Fg + 7, 1, 1, 1), jnp.float32),
        "ctrl_b": 0.1 * jax.random.normal(ks[6], (Fl,), jnp.float32),
        "gn2_g": 1.0 + 0.1 * jax.random.normal(ks[7], (planes,), jnp.float32),
        "gn2_b": 0.1 * jax.random.normal(ks[8], (planes,), jnp.float32),
        "conv2_w": 0.1 * jax.random.normal(ks[9], (planes, planes, 3, 3, 3), jnp.float32),
    }


def _band_weight(w_oidhw, W):
    """(Co, Ci, 3, 3, 3) torch conv weight -> (3, 3, W*Ci, W*Co) block-banded
    matrices that fold the kw taps and width zero-padding into the contraction."""
    Co, Ci = int(w_oidhw.shape[0]), int(w_oidhw.shape[1])
    w = jnp.transpose(w_oidhw, (2, 3, 4, 1, 0))           # (kd, kh, kw, Ci, Co)
    sel = np.zeros((3, W, W), np.float32)                 # sel[kw, w_in, w_out]
    for kw in range(3):
        for wo in range(W):
            wi = wo + kw - 1
            if 0 <= wi < W:
                sel[kw, wi, wo] = 1.0
    band = jnp.einsum("xiw,dhxab->dhiawb", jnp.asarray(sel), w)  # (3,3,W,Ci,W,Co)
    return band.reshape(3, 3, W * Ci, W * Co)


def _fold_matrices(C, W, G):
    per = C // G
    cidx = np.arange(W * C) % C
    mfold = (cidx[:, None] // per == np.arange(G)[None, :]).astype(np.float32)  # (W*C, G)
    cfold = (cidx[:, None] == np.arange(C)[None, :]).astype(np.float32)         # (W*C, C)
    return (jnp.asarray(mfold), jnp.asarray(mfold.T.copy()),
            jnp.asarray(cfold), jnp.asarray(cfold.T.copy()))


def prepare_kernel_params(raw, W, inplanes, planes, Fg, Fl):
    assert inplanes % GROUPS == 0 and planes % GROUPS == 0
    assert inplanes == planes and Fg == planes and Fl == inplanes, (
        "DynNoBottleneck with downsample=None requires inplanes==planes==Fg==Fl")
    tile = lambda v, C: jnp.tile(v.reshape(1, C), (1, W))
    mfold1, mbcast1, _, _ = _fold_matrices(inplanes, W, GROUPS)
    mfold2, mbcast2, cfold2, cbcast2 = _fold_matrices(planes, W, GROUPS)
    ctrl_full = raw["ctrl_w"].reshape(Fl, Fg + 7).T          # (Fg+7, Fl)
    return {
        "gn1_gamma_t": tile(raw["gn1_g"], inplanes),
        "gn1_beta_t": tile(raw["gn1_b"], inplanes),
        "mfold1": mfold1, "mbcast1": mbcast1,
        "conv1_band": _band_weight(raw["conv1_w"], W),
        "gng_gamma_t": tile(raw["gng_g"], planes),
        "gng_beta_t": tile(raw["gng_b"], planes),
        "gn2_gamma_t": tile(raw["gn2_g"], planes),
        "gn2_beta_t": tile(raw["gn2_b"], planes),
        "mfold2": mfold2, "mbcast2": mbcast2,
        "wfold2": cfold2,            # (W*planes, planes): GAP channel fold
        "cbcast": cbcast2,           # (Fl, W*Fl): attention -> lane layout
        "ctrl_w_feat": ctrl_full[:Fg, :],
        "ctrl_w_te": ctrl_full[Fg:, :],
        "ctrl_b": raw["ctrl_b"].reshape(1, Fl),
        "conv2_band": _band_weight(raw["conv2_w"], W),
    }


# ----------------------------------------------------------------------------
# Pure-JAX reference (mirrors the PyTorch forward exactly) for validation
# ----------------------------------------------------------------------------
def reference_forward(raw, x, te):
    def gn(v, gamma, beta):
        N, C = v.shape[:2]
        vg = v.reshape(N, GROUPS, -1)
        m = vg.mean(-1, keepdims=True)
        var = ((vg - m) ** 2).mean(-1, keepdims=True)
        vn = ((vg - m) * lax.rsqrt(var + EPS)).reshape(v.shape)
        return vn * gamma.reshape(1, C, 1, 1, 1) + beta.reshape(1, C, 1, 1, 1)

    def conv(v, w, pad):
        return lax.conv_general_dilated(
            v, w, (1, 1, 1), [(pad, pad)] * 3,
            dimension_numbers=("NCDHW", "OIDHW", "NCDHW"))

    relu = lambda v: jnp.maximum(v, 0.0)

    out = conv(relu(gn(x, raw["gn1_g"], raw["gn1_b"])), raw["conv1_w"], 1)
    feat = relu(gn(out, raw["gng_g"], raw["gng_b"])).mean(axis=(2, 3, 4), keepdims=True)
    cond = jnp.concatenate([feat, te], axis=1)
    p = conv(cond, raw["ctrl_w"], 0) + raw["ctrl_b"].reshape(1, -1, 1, 1, 1)
    att = jax.nn.sigmoid(p)
    out2 = conv(relu(gn(out, raw["gn2_g"], raw["gn2_b"])), raw["conv2_w"], 1)
    return out2 + x * att


# ----------------------------------------------------------------------------
if __name__ == "__main__":
    # GroupNorm(16, .) => channels divisible by 16; Fg == planes and Fl ==
    # inplanes are required by the module's GAP / expand_as semantics.
    inplanes = planes = Fg = Fl = 32
    N, D, H, W = 2, 8, 8, 8

    key = jax.random.PRNGKey(0)
    kx, kt, kparam = jax.random.split(key, 3)
    x = jax.random.normal(kx, (N, inplanes, D, H, W), jnp.float32)
    task_encoding = jax.random.normal(kt, (N, 7, 1, 1, 1), jnp.float32)

    raw = init_raw_params(kparam, inplanes, planes, Fg, Fl)
    kparams = prepare_kernel_params(raw, W, inplanes, planes, Fg, Fl)

    fwd = jax.jit(dyn_no_bottleneck_forward)
    out = jax.block_until_ready(fwd(kparams, x, task_encoding))

    ref = reference_forward(raw, x, task_encoding)
    assert out.shape == ref.shape == (N, planes, D, H, W)
    max_err = float(jnp.max(jnp.abs(out - ref)))
    if not bool(jnp.allclose(out, ref, atol=1e-3, rtol=1e-3)):
        raise AssertionError(f"Pallas result mismatch, max_err={max_err}")

    print("KERNEL_OK")
</pallas_src>

<mosaic_0001>
module attributes {stable_mosaic.version = 11 : i64} {
  func.func @gn1_conv1_kernel(%arg0: i32, %arg1: memref<1x8x8x256xf32, #tpu.memory_space<vmem>>, %arg2: memref<1x256xf32, #tpu.memory_space<vmem>>, %arg3: memref<1x256xf32, #tpu.memory_space<vmem>>, %arg4: memref<256x16xf32, #tpu.memory_space<vmem>>, %arg5: memref<16x256xf32, #tpu.memory_space<vmem>>, %arg6: memref<3x3x256x256xf32, #tpu.memory_space<vmem>>, %arg7: memref<1x8x8x256xf32, #tpu.memory_space<vmem>>, %arg8: memref<10x10x256xf32, #tpu.memory_space<vmem>>, %arg9: memref<64x256xf32, #tpu.memory_space<vmem>>) attributes {dimension_semantics = [#tpu.dimension_semantics<parallel>], iteration_bounds = array<i64: 2>, scalar_prefetch = 0 : i64, scratch_operands = 2 : i64, tpu.core_type = #tpu.core_type<tc>, window_params = [{transform_indices = @transform_0, window_bounds = array<i64: 1, 8, 8, 256>}, {pipeline_mode = #tpu.pipeline_mode<synchronous>, transform_indices = @transform_1, window_bounds = array<i64: 1, 256>}, {pipeline_mode = #tpu.pipeline_mode<synchronous>, transform_indices = @transform_2, window_bounds = array<i64: 1, 256>}, {pipeline_mode = #tpu.pipeline_mode<synchronous>, transform_indices = @transform_3, window_bounds = array<i64: 256, 16>}, {pipeline_mode = #tpu.pipeline_mode<synchronous>, transform_indices = @transform_4, window_bounds = array<i64: 16, 256>}, {pipeline_mode = #tpu.pipeline_mode<synchronous>, transform_indices = @transform_5, window_bounds = array<i64: 3, 3, 256, 256>}, {transform_indices = @transform_6, window_bounds = array<i64: 1, 8, 8, 256>}]} {
    %c0 = arith.constant 0 : index
    %c0_0 = arith.constant 0 : index
    %c0_1 = arith.constant 0 : index
    %c0_2 = arith.constant 0 : index
    %0 = vector.load %arg1[%c0, %c0_0, %c0_1, %c0_2] : memref<1x8x8x256xf32, #tpu.memory_space<vmem>>, vector<1x8x8x256xf32>
    %1 = vector.shape_cast %0 : vector<1x8x8x256xf32> to vector<64x256xf32>
    %c0_3 = arith.constant 0 : index
    %c0_4 = arith.constant 0 : index
    %2 = vector.load %arg4[%c0_3, %c0_4] : memref<256x16xf32, #tpu.memory_space<vmem>>, vector<256x16xf32>
    %c0_5 = arith.constant 0 : index
    %c0_6 = arith.constant 0 : index
    %3 = vector.load %arg5[%c0_5, %c0_6] : memref<16x256xf32, #tpu.memory_space<vmem>>, vector<16x256xf32>
    %cst = arith.constant dense<0.000000e+00> : vector<256xf32>
    %4 = vector.multi_reduction <add>, %1, %cst [0] : vector<64x256xf32> to vector<256xf32>
    %5 = vector.shape_cast %4 : vector<256xf32> to vector<1x256xf32>
    %cst_7 = arith.constant dense<0.000000e+00> : vector<1x16xf32>
    %6 = tpu.matmul %5, %2, %cst_7 {dimension_numbers = #tpu.dot_dimension_numbers<[1], [0], [0], [1], [0, 0, 1, 1], [], []>} : vector<1x256xf32>, vector<256x16xf32>, vector<1x16xf32> -> vector<1x16xf32>
    %cst_8 = arith.constant 1.024000e+03 : f32
    %7 = vector.broadcast %cst_8 : f32 to vector<1x16xf32>
    %8 = arith.divf %6, %7 : vector<1x16xf32>
    %cst_9 = arith.constant dense<0.000000e+00> : vector<1x256xf32>
    %9 = tpu.matmul %8, %3, %cst_9 {dimension_numbers = #tpu.dot_dimension_numbers<[1], [0], [0], [1], [0, 0, 1, 1], [], []>} : vector<1x16xf32>, vector<16x256xf32>, vector<1x256xf32> -> vector<1x256xf32>
    %10 = vector.broadcast %9 : vector<1x256xf32> to vector<64x256xf32>
    %11 = arith.subf %1, %10 : vector<64x256xf32>
    %12 = arith.mulf %11, %11 : vector<64x256xf32>
    %cst_10 = arith.constant dense<0.000000e+00> : vector<256xf32>
    %13 = vector.multi_reduction <add>, %12, %cst_10 [0] : vector<64x256xf32> to vector<256xf32>
    %14 = vector.shape_cast %13 : vector<256xf32> to vector<1x256xf32>
    %cst_11 = arith.constant dense<0.000000e+00> : vector<1x16xf32>
    %15 = tpu.matmul %14, %2, %cst_11 {dimension_numbers = #tpu.dot_dimension_numbers<[1], [0], [0], [1], [0, 0, 1, 1], [], []>} : vector<1x256xf32>, vector<256x16xf32>, vector<1x16xf32> -> vector<1x16xf32>
    %cst_12 = arith.constant 1.024000e+03 : f32
    %16 = vector.broadcast %cst_12 : f32 to vector<1x16xf32>
    %17 = arith.divf %15, %16 : vector<1x16xf32>
    %cst_13 = arith.constant 9.99999974E-6 : f32
    %18 = vector.broadcast %cst_13 : f32 to vector<1x16xf32>
    %19 = arith.addf %17, %18 : vector<1x16xf32>
    %20 = math.rsqrt %19 : vector<1x16xf32>
    %cst_14 = arith.constant dense<0.000000e+00> : vector<1x256xf32>
    %21 = tpu.matmul %20, %3, %cst_14 {dimension_numbers = #tpu.dot_dimension_numbers<[1], [0], [0], [1], [0, 0, 1, 1], [], []>} : vector<1x16xf32>, vector<16x256xf32>, vector<1x256xf32> -> vector<1x256xf32>
    %c0_15 = arith.constant 0 : index
    %c0_16 = arith.constant 0 : index
    %22 = vector.load %arg2[%c0_15, %c0_16] : memref<1x256xf32, #tpu.memory_space<vmem>>, vector<1x256xf32>
    %23 = arith.mulf %21, %22 : vector<1x256xf32>
    %24 = vector.broadcast %23 : vector<1x256xf32> to vector<64x256xf32>
    %25 = arith.mulf %11, %24 : vector<64x256xf32>
    %c0_17 = arith.constant 0 : index
    %c0_18 = arith.constant 0 : index
    %26 = vector.load %arg3[%c0_17, %c0_18] : memref<1x256xf32, #tpu.memory_space<vmem>>, vector<1x256xf32>
    %27 = vector.broadcast %26 : vector<1x256xf32> to vector<64x256xf32>
    %28 = arith.addf %25, %27 : vector<64x256xf32>
    %cst_19 = arith.constant 0.000000e+00 : f32
    %29 = vector.broadcast %cst_19 : f32 to vector<64x256xf32>
    %30 = arith.maximumf %28, %29 : vector<64x256xf32>
    %cst_20 = arith.constant 0.000000e+00 : f32
    %31 = vector.broadcast %cst_20 : f32 to vector<10x10x256xf32>
    %c0_21 = arith.constant 0 : index
    %c0_22 = arith.constant 0 : index
    %c0_23 = arith.constant 0 : index
    %32 = vector.load %arg8[%c0_21, %c0_22, %c0_23] : memref<10x10x256xf32, #tpu.memory_space<vmem>>, vector<10x10x256xf32>
    tpu.vector_store %arg8[%c0_21, %c0_22, %c0_23], %31 {strides = array<i32>} : memref<10x10x256xf32, #tpu.memory_space<vmem>>, vector<10x10x256xf32>,
    %33 = vector.shape_cast %30 : vector<64x256xf32> to vector<8x8x256xf32>
    %c1 = arith.constant 1 : index
    %c1_24 = arith.constant 1 : index
    %c0_25 = arith.constant 0 : index
    %34 = vector.load %arg8[%c1, %c1_24, %c0_25] : memref<10x10x256xf32, #tpu.memory_space<vmem>>, vector<8x8x256xf32>
    tpu.vector_store %arg8[%c1, %c1_24, %c0_25], %33 {strides = array<i32>} : memref<10x10x256xf32, #tpu.memory_space<vmem>>, vector<8x8x256xf32>,
    %cst_26 = arith.constant 0.000000e+00 : f32
    %35 = vector.broadcast %cst_26 : f32 to vector<64x256xf32>
    %c0_27 = arith.constant 0 : index
    %c0_28 = arith.constant 0 : index
    %36 = vector.load %arg9[%c0_27, %c0_28] : memref<64x256xf32, #tpu.memory_space<vmem>>, vector<64x256xf32>
    tpu.vector_store %arg9[%c0_27, %c0_28], %35 {strides = array<i32>} : memref<64x256xf32, #tpu.memory_space<vmem>>, vector<64x256xf32>,
    %c0_29 = arith.constant 0 : index
    %c0_30 = arith.constant 0 : index
    %c0_31 = arith.constant 0 : index
    %37 = vector.load %arg8[%c0_29, %c0_30, %c0_31] : memref<10x10x256xf32, #tpu.memory_space<vmem>>, vector<8x8x256xf32>
    %38 = vector.shape_cast %37 : vector<8x8x256xf32> to vector<64x256xf32>
    %c0_32 = arith.constant 0 : index
    %c0_33 = arith.constant 0 : index
    %39 = vector.load %arg9[%c0_32, %c0_33] : memref<64x256xf32, #tpu.memory_space<vmem>>, vector<64x256xf32>
    %c0_34 = arith.constant 0 : index
    %c0_35 = arith.constant 0 : index
    %c0_36 = arith.constant 0 : index
    %c0_37 = arith.constant 0 : index
    %40 = vector.load %arg6[%c0_34, %c0_35, %c0_36, %c0_37] : memref<3x3x256x256xf32, #tpu.memory_space<vmem>>, vector<1x1x256x256xf32>
    %41 = vector.shape_cast %40 : vector<1x1x256x256xf32> to vector<256x256xf32>
    %cst_38 = arith.constant dense<0.000000e+00> : vector<64x256xf32>
    %42 = tpu.matmul %38, %41, %cst_38 {dimension_numbers = #tpu.dot_dimension_numbers<[1], [0], [0], [1], [0, 0, 1, 1], [], []>} : vector<64x256xf32>, vector<256x256xf32>, vector<64x256xf32> -> vector<64x256xf32>
    %43 = arith.addf %39, %42 : vector<64x256xf32>
    %c0_39 = arith.constant 0 : index
    %c0_40 = arith.constant 0 : index
    %44 = vector.load %arg9[%c0_39, %c0_40] : memref<64x256xf32, #tpu.memory_space<vmem>>, vector<64x256xf32>
    tpu.vector_store %arg9[%c0_39, %c0_40], %43 {strides = array<i32>} : memref<64x256xf32, #tpu.memory_space<vmem>>, vector<64x256xf32>,
    %c0_41 = arith.constant 0 : index
    %c1_42 = arith.constant 1 : index
    %c0_43 = arith.constant 0 : index
    %45 = vector.load %arg8[%c0_41, %c1_42, %c0_43] : memref<10x10x256xf32, #tpu.memory_space<vmem>>, vector<8x8x256xf32>
    %46 = vector.shape_cast %45 : vector<8x8x256xf32> to vector<64x256xf32>
    %c0_44 = arith.constant 0 : index
    %c0_45 = arith.constant 0 : index
    %47 = vector.load %arg9[%c0_44, %c0_45] : memref<64x256xf32, #tpu.memory_space<vmem>>, vector<64x256xf32>
    %c0_46 = arith.constant 0 : index
    %c1_47 = arith.constant 1 : index
    %c0_48 = arith.constant 0 : index
    %c0_49 = arith.constant 0 : index
    %48 = vector.load %arg6[%c0_46, %c1_47, %c0_48, %c0_49] : memref<3x3x256x256xf32, #tpu.memory_space<vmem>>, vector<1x1x256x256xf32>
    %49 = vector.shape_cast %48 : vector<1x1x256x256xf32> to vector<256x256xf32>
    %cst_50 = arith.constant dense<0.000000e+00> : vector<64x256xf32>
    %50 = tpu.matmul %46, %49, %cst_50 {dimension_numbers = #tpu.dot_dimension_numbers<[1], [0], [0], [1], [0, 0, 1, 1], [], []>} : vector<64x256xf32>, vector<256x256xf32>, vector<64x256xf32> -> vector<64x256xf32>
    %51 = arith.addf %47, %50 : vector<64x256xf32>
    %c0_51 = arith.constant 0 : index
    %c0_52 = arith.constant 0 : index
    %52 = vector.load %arg9[%c0_51, %c0_52] : memref<64x256xf32, #tpu.memory_space<vmem>>, vector<64x256xf32>
    tpu.vector_store %arg9[%c0_51, %c0_52], %51 {strides = array<i32>} : memref<64x256xf32, #tpu.memory_space<vmem>>, vector<64x256xf32>,
    %c0_53 = arith.constant 0 : index
    %c2 = arith.constant 2 : index
    %c0_54 = arith.constant 0 : index
    %53 = vector.load %arg8[%c0_53, %c2, %c0_54] : memref<10x10x256xf32, #tpu.memory_space<vmem>>, vector<8x8x256xf32>
    %54 = vector.shape_cast %53 : vector<8x8x256xf32> to vector<64x256xf32>
    %c0_55 = arith.constant 0 : index
    %c0_56 = arith.constant 0 : index
    %55 = vector.load %arg9[%c0_55, %c0_56] : memref<64x256xf32, #tpu.memory_space<vmem>>, vector<64x256xf32>
    %c0_57 = arith.constant 0 : index
    %c2_58 = arith.constant 2 : index
    %c0_59 = arith.constant 0 : index
    %c0_60 = arith.constant 0 : index
    %56 = vector.load %arg6[%c0_57, %c2_58, %c0_59, %c0_60] : memref<3x3x256x256xf32, #tpu.memory_space<vmem>>, vector<1x1x256x256xf32>
    %57 = vector.shape_cast %56 : vector<1x1x256x256xf32> to vector<256x256xf32>
    %cst_61 = arith.constant dense<0.000000e+00> : vector<64x256xf32>
    %58 = tpu.matmul %54, %57, %cst_61 {dimension_numbers = #tpu.dot_dimension_numbers<[1], [0], [0], [1], [0, 0, 1, 1], [], []>} : vector<64x256xf32>, vector<256x256xf32>, vector<64x256xf32> -> vector<64x256xf32>
    %59 = arith.addf %55, %58 : vector<64x256xf32>
    %c0_62 = arith.constant 0 : index
    %c0_63 = arith.constant 0 : index
    %60 = vector.load %arg9[%c0_62, %c0_63] : memref<64x256xf32, #tpu.memory_space<vmem>>, vector<64x256xf32>
    tpu.vector_store %arg9[%c0_62, %c0_63], %59 {strides = array<i32>} : memref<64x256xf32, #tpu.memory_space<vmem>>, vector<64x256xf32>,
    %c1_64 = arith.constant 1 : index
    %c0_65 = arith.constant 0 : index
    %c0_66 = arith.constant 0 : index
    %61 = vector.load %arg8[%c1_64, %c0_65, %c0_66] : memref<10x10x256xf32, #tpu.memory_space<vmem>>, vector<8x8x256xf32>
    %62 = vector.shape_cast %61 : vector<8x8x256xf32> to vector<64x256xf32>
    %c0_67 = arith.constant 0 : index
    %c0_68 = arith.constant 0 : index
    %63 = vector.load %arg9[%c0_67, %c0_68] : memref<64x256xf32, #tpu.memory_space<vmem>>, vector<64x256xf32>
    %c1_69 = arith.constant 1 : index
    %c0_70 = arith.constant 0 : index
    %c0_71 = arith.constant 0 : index
    %c0_72 = arith.constant 0 : index
    %64 = vector.load %arg6[%c1_69, %c0_70, %c0_71, %c0_72] : memref<3x3x256x256xf32, #tpu.memory_space<vmem>>, vector<1x1x256x256xf32>
    %65 = vector.shape_cast %64 : vector<1x1x256x256xf32> to vector<256x256xf32>
    %cst_73 = arith.constant dense<0.000000e+00> : vector<64x256xf32>
    %66 = tpu.matmul %62, %65, %cst_73 {dimension_numbers = #tpu.dot_dimension_numbers<[1], [0], [0], [1], [0, 0, 1, 1], [], []>} : vector<64x256xf32>, vector<256x256xf32>, vector<64x256xf32> -> vector<64x256xf32>
    %67 = arith.addf %63, %66 : vector<64x256xf32>
    %c0_74 = arith.constant 0 : index
    %c0_75 = arith.constant 0 : index
    %68 = vector.load %arg9[%c0_74, %c0_75] : memref<64x256xf32, #tpu.memory_space<vmem>>, vector<64x256xf32>
    tpu.vector_store %arg9[%c0_74, %c0_75], %67 {strides = array<i32>} : memref<64x256xf32, #tpu.memory_space<vmem>>, vector<64x256xf32>,
    %c1_76 = arith.constant 1 : index
    %c1_77 = arith.constant 1 : index
    %c0_78 = arith.constant 0 : index
    %69 = vector.load %arg8[%c1_76, %c1_77, %c0_78] : memref<10x10x256xf32, #tpu.memory_space<vmem>>, vector<8x8x256xf32>
    %70 = vector.shape_cast %69 : vector<8x8x256xf32> to vector<64x256xf32>
    %c0_79 = arith.constant 0 : index
    %c0_80 = arith.constant 0 : index
    %71 = vector.load %arg9[%c0_79, %c0_80] : memref<64x256xf32, #tpu.memory_space<vmem>>, vector<64x256xf32>
    %c1_81 = arith.constant 1 : index
    %c1_82 = arith.constant 1 : index
    %c0_83 = arith.constant 0 : index
    %c0_84 = arith.constant 0 : index
    %72 = vector.load %arg6[%c1_81, %c1_82, %c0_83, %c0_84] : memref<3x3x256x256xf32, #tpu.memory_space<vmem>>, vector<1x1x256x256xf32>
    %73 = vector.shape_cast %72 : vector<1x1x256x256xf32> to vector<256x256xf32>
    %cst_85 = arith.constant dense<0.000000e+00> : vector<64x256xf32>
    %74 = tpu.matmul %70, %73, %cst_85 {dimension_numbers = #tpu.dot_dimension_numbers<[1], [0], [0], [1], [0, 0, 1, 1], [], []>} : vector<64x256xf32>, vector<256x256xf32>, vector<64x256xf32> -> vector<64x256xf32>
    %75 = arith.addf %71, %74 : vector<64x256xf32>
    %c0_86 = arith.constant 0 : index
    %c0_87 = arith.constant 0 : index
    %76 = vector.load %arg9[%c0_86, %c0_87] : memref<64x256xf32, #tpu.memory_space<vmem>>, vector<64x256xf32>
    tpu.vector_store %arg9[%c0_86, %c0_87], %75 {strides = array<i32>} : memref<64x256xf32, #tpu.memory_space<vmem>>, vector<64x256xf32>,
    %c1_88 = arith.constant 1 : index
    %c2_89 = arith.constant 2 : index
    %c0_90 = arith.constant 0 : index
    %77 = vector.load %arg8[%c1_88, %c2_89, %c0_90] : memref<10x10x256xf32, #tpu.memory_space<vmem>>, vector<8x8x256xf32>
    %78 = vector.shape_cast %77 : vector<8x8x256xf32> to vector<64x256xf32>
    %c0_91 = arith.constant 0 : index
    %c0_92 = arith.constant 0 : index
    %79 = vector.load %arg9[%c0_91, %c0_92] : memref<64x256xf32, #tpu.memory_space<vmem>>, vector<64x256xf32>
    %c1_93 = arith.constant 1 : index
    %c2_94 = arith.constant 2 : index
    %c0_95 = arith.constant 0 : index
    %c0_96 = arith.constant 0 : index
    %80 = vector.load %arg6[%c1_93, %c2_94, %c0_95, %c0_96] : memref<3x3x256x256xf32, #tpu.memory_space<vmem>>, vector<1x1x256x256xf32>
    %81 = vector.shape_cast %80 : vector<1x1x256x256xf32> to vector<256x256xf32>
    %cst_97 = arith.constant dense<0.000000e+00> : vector<64x256xf32>
    %82 = tpu.matmul %78, %81, %cst_97 {dimension_numbers = #tpu.dot_dimension_numbers<[1], [0], [0], [1], [0, 0, 1, 1], [], []>} : vector<64x256xf32>, vector<256x256xf32>, vector<64x256xf32> -> vector<64x256xf32>
    %83 = arith.addf %79, %82 : vector<64x256xf32>
    %c0_98 = arith.constant 0 : index
    %c0_99 = arith.constant 0 : index
    %84 = vector.load %arg9[%c0_98, %c0_99] : memref<64x256xf32, #tpu.memory_space<vmem>>, vector<64x256xf32>
    tpu.vector_store %arg9[%c0_98, %c0_99], %83 {strides = array<i32>} : memref<64x256xf32, #tpu.memory_space<vmem>>, vector<64x256xf32>,
    %c2_100 = arith.constant 2 : index
    %c0_101 = arith.constant 0 : index
    %c0_102 = arith.constant 0 : index
    %85 = vector.load %arg8[%c2_100, %c0_101, %c0_102] : memref<10x10x256xf32, #tpu.memory_space<vmem>>, vector<8x8x256xf32>
    %86 = vector.shape_cast %85 : vector<8x8x256xf32> to vector<64x256xf32>
    %c0_103 = arith.constant 0 : index
    %c0_104 = arith.constant 0 : index
    %87 = vector.load %arg9[%c0_103, %c0_104] : memref<64x256xf32, #tpu.memory_space<vmem>>, vector<64x256xf32>
    %c2_105 = arith.constant 2 : index
    %c0_106 = arith.constant 0 : index
    %c0_107 = arith.constant 0 : index
    %c0_108 = arith.constant 0 : index
    %88 = vector.load %arg6[%c2_105, %c0_106, %c0_107, %c0_108] : memref<3x3x256x256xf32, #tpu.memory_space<vmem>>, vector<1x1x256x256xf32>
    %89 = vector.shape_cast %88 : vector<1x1x256x256xf32> to vector<256x256xf32>
    %cst_109 = arith.constant dense<0.000000e+00> : vector<64x256xf32>
    %90 = tpu.matmul %86, %89, %cst_109 {dimension_numbers = #tpu.dot_dimension_numbers<[1], [0], [0], [1], [0, 0, 1, 1], [], []>} : vector<64x256xf32>, vector<256x256xf32>, vector<64x256xf32> -> vector<64x256xf32>
    %91 = arith.addf %87, %90 : vector<64x256xf32>
    %c0_110 = arith.constant 0 : index
    %c0_111 = arith.constant 0 : index
    %92 = vector.load %arg9[%c0_110, %c0_111] : memref<64x256xf32, #tpu.memory_space<vmem>>, vector<64x256xf32>
    tpu.vector_store %arg9[%c0_110, %c0_111], %91 {strides = array<i32>} : memref<64x256xf32, #tpu.memory_space<vmem>>, vector<64x256xf32>,
    %c2_112 = arith.constant 2 : index
    %c1_113 = arith.constant 1 : index
    %c0_114 = arith.constant 0 : index
    %93 = vector.load %arg8[%c2_112, %c1_113, %c0_114] : memref<10x10x256xf32, #tpu.memory_space<vmem>>, vector<8x8x256xf32>
    %94 = vector.shape_cast %93 : vector<8x8x256xf32> to vector<64x256xf32>
    %c0_115 = arith.constant 0 : index
    %c0_116 = arith.constant 0 : index
    %95 = vector.load %arg9[%c0_115, %c0_116] : memref<64x256xf32, #tpu.memory_space<vmem>>, vector<64x256xf32>
    %c2_117 = arith.constant 2 : index
    %c1_118 = arith.constant 1 : index
    %c0_119 = arith.constant 0 : index
    %c0_120 = arith.constant 0 : index
    %96 = vector.load %arg6[%c2_117, %c1_118, %c0_119, %c0_120] : memref<3x3x256x256xf32, #tpu.memory_space<vmem>>, vector<1x1x256x256xf32>
    %97 = vector.shape_cast %96 : vector<1x1x256x256xf32> to vector<256x256xf32>
    %cst_121 = arith.constant dense<0.000000e+00> : vector<64x256xf32>
    %98 = tpu.matmul %94, %97, %cst_121 {dimension_numbers = #tpu.dot_dimension_numbers<[1], [0], [0], [1], [0, 0, 1, 1], [], []>} : vector<64x256xf32>, vector<256x256xf32>, vector<64x256xf32> -> vector<64x256xf32>
    %99 = arith.addf %95, %98 : vector<64x256xf32>
    %c0_122 = arith.constant 0 : index
    %c0_123 = arith.constant 0 : index
    %100 = vector.load %arg9[%c0_122, %c0_123] : memref<64x256xf32, #tpu.memory_space<vmem>>, vector<64x256xf32>
    tpu.vector_store %arg9[%c0_122, %c0_123], %99 {strides = array<i32>} : memref<64x256xf32, #tpu.memory_space<vmem>>, vector<64x256xf32>,
    %c2_124 = arith.constant 2 : index
    %c2_125 = arith.constant 2 : index
    %c0_126 = arith.constant 0 : index
    %101 = vector.load %arg8[%c2_124, %c2_125, %c0_126] : memref<10x10x256xf32, #tpu.memory_space<vmem>>, vector<8x8x256xf32>
    %102 = vector.shape_cast %101 : vector<8x8x256xf32> to vector<64x256xf32>
    %c0_127 = arith.constant 0 : index
    %c0_128 = arith.constant 0 : index
    %103 = vector.load %arg9[%c0_127, %c0_128] : memref<64x256xf32, #tpu.memory_space<vmem>>, vector<64x256xf32>
    %c2_129 = arith.constant 2 : index
    %c2_130 = arith.constant 2 : index
    %c0_131 = arith.constant 0 : index
    %c0_132 = arith.constant 0 : index
    %104 = vector.load %arg6[%c2_129, %c2_130, %c0_131, %c0_132] : memref<3x3x256x256xf32, #tpu.memory_space<vmem>>, vector<1x1x256x256xf32>
    %105 = vector.shape_cast %104 : vector<1x1x256x256xf32> to vector<256x256xf32>
    %cst_133 = arith.constant dense<0.000000e+00> : vector<64x256xf32>
    %106 = tpu.matmul %102, %105, %cst_133 {dimension_numbers = #tpu.dot_dimension_numbers<[1], [0], [0], [1], [0, 0, 1, 1], [], []>} : vector<64x256xf32>, vector<256x256xf32>, vector<64x256xf32> -> vector<64x256xf32>
    %107 = arith.addf %103, %106 : vector<64x256xf32>
    %c0_134 = arith.constant 0 : index
    %c0_135 = arith.constant 0 : index
    %108 = vector.load %arg9[%c0_134, %c0_135] : memref<64x256xf32, #tpu.memory_space<vmem>>, vector<64x256xf32>
    tpu.vector_store %arg9[%c0_134, %c0_135], %107 {strides = array<i32>} : memref<64x256xf32, #tpu.memory_space<vmem>>, vector<64x256xf32>,
    %c0_136 = arith.constant 0 : index
    %c0_137 = arith.constant 0 : index
    %109 = vector.load %arg9[%c0_136, %c0_137] : memref<64x256xf32, #tpu.memory_space<vmem>>, vector<64x256xf32>
    %110 = vector.shape_cast %109 : vector<64x256xf32> to vector<1x8x8x256xf32>
    %c0_138 = arith.constant 0 : index
    %c0_139 = arith.constant 0 : index
    %c0_140 = arith.constant 0 : index
    %c0_141 = arith.constant 0 : index
    %111 = vector.load %arg7[%c0_138, %c0_139, %c0_140, %c0_141] : memref<1x8x8x256xf32, #tpu.memory_space<vmem>>, vector<1x8x8x256xf32>
    tpu.vector_store %arg7[%c0_138, %c0_139, %c0_140, %c0_141], %110 {strides = array<i32>} : memref<1x8x8x256xf32, #tpu.memory_space<vmem>>, vector<1x8x8x256xf32>,
    return
  }
  func.func @transform_0(%arg0: i32) -> (i32, i32, i32, i32) {
    %c0_i32 = arith.constant 0 : i32
    %c0_i32_0 = arith.constant 0 : i32
    %c0_i32_1 = arith.constant 0 : i32
    %c0_i32_2 = arith.constant 0 : i32
    return %arg0, %c0_i32, %c0_i32_0, %c0_i32_1 : i32, i32, i32, i32
  }
  func.func @transform_1(%arg0: i32) -> (i32, i32) {
    %c0_i32 = arith.constant 0 : i32
    %c0_i32_0 = arith.constant 0 : i32
    %c0_i32_1 = arith.constant 0 : i32
    return %c0_i32, %c0_i32_0 : i32, i32
  }
  func.func @transform_2(%arg0: i32) -> (i32, i32) {
    %c0_i32 = arith.constant 0 : i32
    %c0_i32_0 = arith.constant 0 : i32
    %c0_i32_1 = arith.constant 0 : i32
    return %c0_i32, %c0_i32_0 : i32, i32
  }
  func.func @transform_3(%arg0: i32) -> (i32, i32) {
    %c0_i32 = arith.constant 0 : i32
    %c0_i32_0 = arith.constant 0 : i32
    %c0_i32_1 = arith.constant 0 : i32
    return %c0_i32, %c0_i32_0 : i32, i32
  }
  func.func @transform_4(%arg0: i32) -> (i32, i32) {
    %c0_i32 = arith.constant 0 : i32
    %c0_i32_0 = arith.constant 0 : i32
    %c0_i32_1 = arith.constant 0 : i32
    return %c0_i32, %c0_i32_0 : i32, i32
  }
  func.func @transform_5(%arg0: i32) -> (i32, i32, i32, i32) {
    %c0_i32 = arith.constant 0 : i32
    %c0_i32_0 = arith.constant 0 : i32
    %c0_i32_1 = arith.constant 0 : i32
    %c0_i32_2 = arith.constant 0 : i32
    %c0_i32_3 = arith.constant 0 : i32
    return %c0_i32, %c0_i32_0, %c0_i32_1, %c0_i32_2 : i32, i32, i32, i32
  }
  func.func @transform_6(%arg0: i32) -> (i32, i32, i32, i32) {
    %c0_i32 = arith.constant 0 : i32
    %c0_i32_0 = arith.constant 0 : i32
    %c0_i32_1 = arith.constant 0 : i32
    %c0_i32_2 = arith.constant 0 : i32
    return %arg0, %c0_i32, %c0_i32_0, %c0_i32_1 : i32, i32, i32, i32
  }
}

module attributes {stable_mosaic.version = 11 : i64} {
  func.func @tail_kernel(%arg0: i32, %arg1: memref<1x8x8x256xf32, #tpu.memory_space<vmem>>, %arg2: memref<1x8x8x256xf32, #tpu.memory_space<vmem>>, %arg3: memref<1x1x32xf32, #tpu.memory_space<vmem>>, %arg4: memref<1x256xf32, #tpu.memory_space<vmem>>, %arg5: memref<1x256xf32, #tpu.memory_space<vmem>>, %arg6: memref<1x256xf32, #tpu.memory_space<vmem>>, %arg7: memref<1x256xf32, #tpu.memory_space<vmem>>, %arg8: memref<256x16xf32, #tpu.memory_space<vmem>>, %arg9: memref<16x256xf32, #tpu.memory_space<vmem>>, %arg10: memref<256x32xf32, #tpu.memory_space<vmem>>, %arg11: memref<32x256xf32, #tpu.memory_space<vmem>>, %arg12: memref<32x32xf32, #tpu.memory_space<vmem>>, %arg13: memref<3x3x256x256xf32, #tpu.memory_space<vmem>>, %arg14: memref<1x8x8x256xf32, #tpu.memory_space<vmem>>, %arg15: memref<10x10x256xf32, #tpu.memory_space<vmem>>, %arg16: memref<64x256xf32, #tpu.memory_space<vmem>>) attributes {dimension_semantics = [#tpu.dimension_semantics<parallel>], iteration_bounds = array<i64: 2>, scalar_prefetch = 0 : i64, scratch_operands = 2 : i64, tpu.core_type = #tpu.core_type<tc>, window_params = [{transform_indices = @transform_0, window_bounds = array<i64: 1, 8, 8, 256>}, {transform_indices = @transform_1, window_bounds = array<i64: 1, 8, 8, 256>}, {transform_indices = @transform_2, window_bounds = array<i64: 1, 1, 32>}, {pipeline_mode = #tpu.pipeline_mode<synchronous>, transform_indices = @transform_3, window_bounds = array<i64: 1, 256>}, {pipeline_mode = #tpu.pipeline_mode<synchronous>, transform_indices = @transform_4, window_bounds = array<i64: 1, 256>}, {pipeline_mode = #tpu.pipeline_mode<synchronous>, transform_indices = @transform_5, window_bounds = array<i64: 1, 256>}, {pipeline_mode = #tpu.pipeline_mode<synchronous>, transform_indices = @transform_6, window_bounds = array<i64: 1, 256>}, {pipeline_mode = #tpu.pipeline_mode<synchronous>, transform_indices = @transform_7, window_bounds = array<i64: 256, 16>}, {pipeline_mode = #tpu.pipeline_mode<synchronous>, transform_indices = @transform_8, window_bounds = array<i64: 16, 256>}, {pipeline_mode = #tpu.pipeline_mode<synchronous>, transform_indices = @transform_9, window_bounds = array<i64: 256, 32>}, {pipeline_mode = #tpu.pipeline_mode<synchronous>, transform_indices = @transform_10, window_bounds = array<i64: 32, 256>}, {pipeline_mode = #tpu.pipeline_mode<synchronous>, transform_indices = @transform_11, window_bounds = array<i64: 32, 32>}, {pipeline_mode = #tpu.pipeline_mode<synchronous>, transform_indices = @transform_12, window_bounds = array<i64: 3, 3, 256, 256>}, {transform_indices = @transform_13, window_bounds = array<i64: 1, 8, 8, 256>}]} {
    %c0 = arith.constant 0 : index
    %c0_0 = arith.constant 0 : index
    %c0_1 = arith.constant 0 : index
    %c0_2 = arith.constant 0 : index
    %0 = vector.load %arg1[%c0, %c0_0, %c0_1, %c0_2] : memref<1x8x8x256xf32, #tpu.memory_space<vmem>>, vector<1x8x8x256xf32>
    %1 = vector.shape_cast %0 : vector<1x8x8x256xf32> to vector<64x256xf32>
    %c0_3 = arith.constant 0 : index
    %c0_4 = arith.constant 0 : index
    %2 = vector.load %arg8[%c0_3, %c0_4] : memref<256x16xf32, #tpu.memory_space<vmem>>, vector<256x16xf32>
    %c0_5 = arith.constant 0 : index
    %c0_6 = arith.constant 0 : index
    %3 = vector.load %arg9[%c0_5, %c0_6] : memref<16x256xf32, #tpu.memory_space<vmem>>, vector<16x256xf32>
    %cst = arith.constant dense<0.000000e+00> : vector<256xf32>
    %4 = vector.multi_reduction <add>, %1, %cst [0] : vector<64x256xf32> to vector<256xf32>
    %5 = vector.shape_cast %4 : vector<256xf32> to vector<1x256xf32>
    %cst_7 = arith.constant dense<0.000000e+00> : vector<1x16xf32>
    %6 = tpu.matmul %5, %2, %cst_7 {dimension_numbers = #tpu.dot_dimension_numbers<[1], [0], [0], [1], [0, 0, 1, 1], [], []>} : vector<1x256xf32>, vector<256x16xf32>, vector<1x16xf32> -> vector<1x16xf32>
    %cst_8 = arith.constant 1.024000e+03 : f32
    %7 = vector.broadcast %cst_8 : f32 to vector<1x16xf32>
    %8 = arith.divf %6, %7 : vector<1x16xf32>
    %cst_9 = arith.constant dense<0.000000e+00> : vector<1x256xf32>
    %9 = tpu.matmul %8, %3, %cst_9 {dimension_numbers = #tpu.dot_dimension_numbers<[1], [0], [0], [1], [0, 0, 1, 1], [], []>} : vector<1x16xf32>, vector<16x256xf32>, vector<1x256xf32> -> vector<1x256xf32>
    %10 = vector.broadcast %9 : vector<1x256xf32> to vector<64x256xf32>
    %11 = arith.subf %1, %10 : vector<64x256xf32>
    %12 = arith.mulf %11, %11 : vector<64x256xf32>
    %cst_10 = arith.constant dense<0.000000e+00> : vector<256xf32>
    %13 = vector.multi_reduction <add>, %12, %cst_10 [0] : vector<64x256xf32> to vector<256xf32>
    %14 = vector.shape_cast %13 : vector<256xf32> to vector<1x256xf32>
    %cst_11 = arith.constant dense<0.000000e+00> : vector<1x16xf32>
    %15 = tpu.matmul %14, %2, %cst_11 {dimension_numbers = #tpu.dot_dimension_numbers<[1], [0], [0], [1], [0, 0, 1, 1], [], []>} : vector<1x256xf32>, vector<256x16xf32>, vector<1x16xf32> -> vector<1x16xf32>
    %cst_12 = arith.constant 1.024000e+03 : f32
    %16 = vector.broadcast %cst_12 : f32 to vector<1x16xf32>
    %17 = arith.divf %15, %16 : vector<1x16xf32>
    %cst_13 = arith.constant 9.99999974E-6 : f32
    %18 = vector.broadcast %cst_13 : f32 to vector<1x16xf32>
    %19 = arith.addf %17, %18 : vector<1x16xf32>
    %20 = math.rsqrt %19 : vector<1x16xf32>
    %cst_14 = arith.constant dense<0.000000e+00> : vector<1x256xf32>
    %21 = tpu.matmul %20, %3, %cst_14 {dimension_numbers = #tpu.dot_dimension_numbers<[1], [0], [0], [1], [0, 0, 1, 1], [], []>} : vector<1x16xf32>, vector<16x256xf32>, vector<1x256xf32> -> vector<1x256xf32>
    %c0_15 = arith.constant 0 : index
    %c0_16 = arith.constant 0 : index
    %22 = vector.load %arg4[%c0_15, %c0_16] : memref<1x256xf32, #tpu.memory_space<vmem>>, vector<1x256xf32>
    %23 = arith.mulf %21, %22 : vector<1x256xf32>
    %24 = vector.broadcast %23 : vector<1x256xf32> to vector<64x256xf32>
    %25 = arith.mulf %11, %24 : vector<64x256xf32>
    %c0_17 = arith.constant 0 : index
    %c0_18 = arith.constant 0 : index
    %26 = vector.load %arg5[%c0_17, %c0_18] : memref<1x256xf32, #tpu.memory_space<vmem>>, vector<1x256xf32>
    %27 = vector.broadcast %26 : vector<1x256xf32> to vector<64x256xf32>
    %28 = arith.addf %25, %27 : vector<64x256xf32>
    %cst_19 = arith.constant 0.000000e+00 : f32
    %29 = vector.broadcast %cst_19 : f32 to vector<64x256xf32>
    %30 = arith.maximumf %28, %29 : vector<64x256xf32>
    %cst_20 = arith.constant dense<0.000000e+00> : vector<256xf32>
    %31 = vector.multi_reduction <add>, %30, %cst_20 [0] : vector<64x256xf32> to vector<256xf32>
    %32 = vector.shape_cast %31 : vector<256xf32> to vector<1x256xf32>
    %c0_21 = arith.constant 0 : index
    %c0_22 = arith.constant 0 : index
    %33 = vector.load %arg10[%c0_21, %c0_22] : memref<256x32xf32, #tpu.memory_space<vmem>>, vector<256x32xf32>
    %cst_23 = arith.constant dense<0.000000e+00> : vector<1x32xf32>
    %34 = tpu.matmul %32, %33, %cst_23 {dimension_numbers = #tpu.dot_dimension_numbers<[1], [0], [0], [1], [0, 0, 1, 1], [], []>} : vector<1x256xf32>, vector<256x32xf32>, vector<1x32xf32> -> vector<1x32xf32>
    %cst_24 = arith.constant 5.120000e+02 : f32
    %35 = vector.broadcast %cst_24 : f32 to vector<1x32xf32>
    %36 = arith.divf %34, %35 : vector<1x32xf32>
    %c0_25 = arith.constant 0 : index
    %c0_26 = arith.constant 0 : index
    %37 = vector.load %arg12[%c0_25, %c0_26] : memref<32x32xf32, #tpu.memory_space<vmem>>, vector<32x32xf32>
    %cst_27 = arith.constant dense<0.000000e+00> : vector<1x32xf32>
    %38 = tpu.matmul %36, %37, %cst_27 {dimension_numbers = #tpu.dot_dimension_numbers<[1], [0], [0], [1], [0, 0, 1, 1], [], []>} : vector<1x32xf32>, vector<32x32xf32>, vector<1x32xf32> -> vector<1x32xf32>
    %c0_28 = arith.constant 0 : index
    %c0_29 = arith.constant 0 : index
    %c0_30 = arith.constant 0 : index
    %39 = vector.load %arg3[%c0_28, %c0_29, %c0_30] : memref<1x1x32xf32, #tpu.memory_space<vmem>>, vector<1x1x32xf32>
    %40 = vector.shape_cast %39 : vector<1x1x32xf32> to vector<1x32xf32>
    %41 = arith.addf %38, %40 : vector<1x32xf32>
    %42 = arith.negf %41 : vector<1x32xf32>
    %43 = math.exp %42 : vector<1x32xf32>
    %cst_31 = arith.constant 1.000000e+00 : f32
    %44 = vector.broadcast %cst_31 : f32 to vector<1x32xf32>
    %45 = arith.addf %44, %43 : vector<1x32xf32>
    %46 = arith.divf %44, %45 : vector<1x32xf32>
    %c0_32 = arith.constant 0 : index
    %c0_33 = arith.constant 0 : index
    %47 = vector.load %arg11[%c0_32, %c0_33] : memref<32x256xf32, #tpu.memory_space<vmem>>, vector<32x256xf32>
    %cst_34 = arith.constant dense<0.000000e+00> : vector<1x256xf32>
    %48 = tpu.matmul %46, %47, %cst_34 {dimension_numbers = #tpu.dot_dimension_numbers<[1], [0], [0], [1], [0, 0, 1, 1], [], []>} : vector<1x32xf32>, vector<32x256xf32>, vector<1x256xf32> -> vector<1x256xf32>
    %c0_35 = arith.constant 0 : index
    %c0_36 = arith.constant 0 : index
    %49 = vector.load %arg6[%c0_35, %c0_36] : memref<1x256xf32, #tpu.memory_space<vmem>>, vector<1x256xf32>
    %50 = arith.mulf %21, %49 : vector<1x256xf32>
    %51 = vector.broadcast %50 : vector<1x256xf32> to vector<64x256xf32>
    %52 = arith.mulf %11, %51 : vector<64x256xf32>
    %c0_37 = arith.constant 0 : index
    %c0_38 = arith.constant 0 : index
    %53 = vector.load %arg7[%c0_37, %c0_38] : memref<1x256xf32, #tpu.memory_space<vmem>>, vector<1x256xf32>
    %54 = vector.broadcast %53 : vector<1x256xf32> to vector<64x256xf32>
    %55 = arith.addf %52, %54 : vector<64x256xf32>
    %cst_39 = arith.constant 0.000000e+00 : f32
    %56 = vector.broadcast %cst_39 : f32 to vector<64x256xf32>
    %57 = arith.maximumf %55, %56 : vector<64x256xf32>
    %cst_40 = arith.constant 0.000000e+00 : f32
    %58 = vector.broadcast %cst_40 : f32 to vector<10x10x256xf32>
    %c0_41 = arith.constant 0 : index
    %c0_42 = arith.constant 0 : index
    %c0_43 = arith.constant 0 : index
    %59 = vector.load %arg15[%c0_41, %c0_42, %c0_43] : memref<10x10x256xf32, #tpu.memory_space<vmem>>, vector<10x10x256xf32>
    tpu.vector_store %arg15[%c0_41, %c0_42, %c0_43], %58 {strides = array<i32>} : memref<10x10x256xf32, #tpu.memory_space<vmem>>, vector<10x10x256xf32>,
    %60 = vector.shape_cast %57 : vector<64x256xf32> to vector<8x8x256xf32>
    %c1 = arith.constant 1 : index
    %c1_44 = arith.constant 1 : index
    %c0_45 = arith.constant 0 : index
    %61 = vector.load %arg15[%c1, %c1_44, %c0_45] : memref<10x10x256xf32, #tpu.memory_space<vmem>>, vector<8x8x256xf32>
    tpu.vector_store %arg15[%c1, %c1_44, %c0_45], %60 {strides = array<i32>} : memref<10x10x256xf32, #tpu.memory_space<vmem>>, vector<8x8x256xf32>,
    %cst_46 = arith.constant 0.000000e+00 : f32
    %62 = vector.broadcast %cst_46 : f32 to vector<64x256xf32>
    %c0_47 = arith.constant 0 : index
    %c0_48 = arith.constant 0 : index
    %63 = vector.load %arg16[%c0_47, %c0_48] : memref<64x256xf32, #tpu.memory_space<vmem>>, vector<64x256xf32>
    tpu.vector_store %arg16[%c0_47, %c0_48], %62 {strides = array<i32>} : memref<64x256xf32, #tpu.memory_space<vmem>>, vector<64x256xf32>,
    %c0_49 = arith.constant 0 : index
    %c0_50 = arith.constant 0 : index
    %c0_51 = arith.constant 0 : index
    %64 = vector.load %arg15[%c0_49, %c0_50, %c0_51] : memref<10x10x256xf32, #tpu.memory_space<vmem>>, vector<8x8x256xf32>
    %65 = vector.shape_cast %64 : vector<8x8x256xf32> to vector<64x256xf32>
    %c0_52 = arith.constant 0 : index
    %c0_53 = arith.constant 0 : index
    %66 = vector.load %arg16[%c0_52, %c0_53] : memref<64x256xf32, #tpu.memory_space<vmem>>, vector<64x256xf32>
    %c0_54 = arith.constant 0 : index
    %c0_55 = arith.constant 0 : index
    %c0_56 = arith.constant 0 : index
    %c0_57 = arith.constant 0 : index
    %67 = vector.load %arg13[%c0_54, %c0_55, %c0_56, %c0_57] : memref<3x3x256x256xf32, #tpu.memory_space<vmem>>, vector<1x1x256x256xf32>
    %68 = vector.shape_cast %67 : vector<1x1x256x256xf32> to vector<256x256xf32>
    %cst_58 = arith.constant dense<0.000000e+00> : vector<64x256xf32>
    %69 = tpu.matmul %65, %68, %cst_58 {dimension_numbers = #tpu.dot_dimension_numbers<[1], [0], [0], [1], [0, 0, 1, 1], [], []>} : vector<64x256xf32>, vector<256x256xf32>, vector<64x256xf32> -> vector<64x256xf32>
    %70 = arith.addf %66, %69 : vector<64x256xf32>
    %c0_59 = arith.constant 0 : index
    %c0_60 = arith.constant 0 : index
    %71 = vector.load %arg16[%c0_59, %c0_60] : memref<64x256xf32, #tpu.memory_space<vmem>>, vector<64x256xf32>
    tpu.vector_store %arg16[%c0_59, %c0_60], %70 {strides = array<i32>} : memref<64x256xf32, #tpu.memory_space<vmem>>, vector<64x256xf32>,
    %c0_61 = arith.constant 0 : index
    %c1_62 = arith.constant 1 : index
    %c0_63 = arith.constant 0 : index
    %72 = vector.load %arg15[%c0_61, %c1_62, %c0_63] : memref<10x10x256xf32, #tpu.memory_space<vmem>>, vector<8x8x256xf32>
    %73 = vector.shape_cast %72 : vector<8x8x256xf32> to vector<64x256xf32>
    %c0_64 = arith.constant 0 : index
    %c0_65 = arith.constant 0 : index
    %74 = vector.load %arg16[%c0_64, %c0_65] : memref<64x256xf32, #tpu.memory_space<vmem>>, vector<64x256xf32>
    %c0_66 = arith.constant 0 : index
    %c1_67 = arith.constant 1 : index
    %c0_68 = arith.constant 0 : index
    %c0_69 = arith.constant 0 : index
    %75 = vector.load %arg13[%c0_66, %c1_67, %c0_68, %c0_69] : memref<3x3x256x256xf32, #tpu.memory_space<vmem>>, vector<1x1x256x256xf32>
    %76 = vector.shape_cast %75 : vector<1x1x256x256xf32> to vector<256x256xf32>
    %cst_70 = arith.constant dense<0.000000e+00> : vector<64x256xf32>
    %77 = tpu.matmul %73, %76, %cst_70 {dimension_numbers = #tpu.dot_dimension_numbers<[1], [0], [0], [1], [0, 0, 1, 1], [], []>} : vector<64x256xf32>, vector<256x256xf32>, vector<64x256xf32> -> vector<64x256xf32>
    %78 = arith.addf %74, %77 : vector<64x256xf32>
    %c0_71 = arith.constant 0 : index
    %c0_72 = arith.constant 0 : index
    %79 = vector.load %arg16[%c0_71, %c0_72] : memref<64x256xf32, #tpu.memory_space<vmem>>, vector<64x256xf32>
    tpu.vector_store %arg16[%c0_71, %c0_72], %78 {strides = array<i32>} : memref<64x256xf32, #tpu.memory_space<vmem>>, vector<64x256xf32>,
    %c0_73 = arith.constant 0 : index
    %c2 = arith.constant 2 : index
    %c0_74 = arith.constant 0 : index
    %80 = vector.load %arg15[%c0_73, %c2, %c0_74] : memref<10x10x256xf32, #tpu.memory_space<vmem>>, vector<8x8x256xf32>
    %81 = vector.shape_cast %80 : vector<8x8x256xf32> to vector<64x256xf32>
    %c0_75 = arith.constant 0 : index
    %c0_76 = arith.constant 0 : index
    %82 = vector.load %arg16[%c0_75, %c0_76] : memref<64x256xf32, #tpu.memory_space<vmem>>, vector<64x256xf32>
    %c0_77 = arith.constant 0 : index
    %c2_78 = arith.constant 2 : index
    %c0_79 = arith.constant 0 : index
    %c0_80 = arith.constant 0 : index
    %83 = vector.load %arg13[%c0_77, %c2_78, %c0_79, %c0_80] : memref<3x3x256x256xf32, #tpu.memory_space<vmem>>, vector<1x1x256x256xf32>
    %84 = vector.shape_cast %83 : vector<1x1x256x256xf32> to vector<256x256xf32>
    %cst_81 = arith.constant dense<0.000000e+00> : vector<64x256xf32>
    %85 = tpu.matmul %81, %84, %cst_81 {dimension_numbers = #tpu.dot_dimension_numbers<[1], [0], [0], [1], [0, 0, 1, 1], [], []>} : vector<64x256xf32>, vector<256x256xf32>, vector<64x256xf32> -> vector<64x256xf32>
    %86 = arith.addf %82, %85 : vector<64x256xf32>
    %c0_82 = arith.constant 0 : index
    %c0_83 = arith.constant 0 : index
    %87 = vector.load %arg16[%c0_82, %c0_83] : memref<64x256xf32, #tpu.memory_space<vmem>>, vector<64x256xf32>
    tpu.vector_store %arg16[%c0_82, %c0_83], %86 {strides = array<i32>} : memref<64x256xf32, #tpu.memory_space<vmem>>, vector<64x256xf32>,
    %c1_84 = arith.constant 1 : index
    %c0_85 = arith.constant 0 : index
    %c0_86 = arith.constant 0 : index
    %88 = vector.load %arg15[%c1_84, %c0_85, %c0_86] : memref<10x10x256xf32, #tpu.memory_space<vmem>>, vector<8x8x256xf32>
    %89 = vector.shape_cast %88 : vector<8x8x256xf32> to vector<64x256xf32>
    %c0_87 = arith.constant 0 : index
    %c0_88 = arith.constant 0 : index
    %90 = vector.load %arg16[%c0_87, %c0_88] : memref<64x256xf32, #tpu.memory_space<vmem>>, vector<64x256xf32>
    %c1_89 = arith.constant 1 : index
    %c0_90 = arith.constant 0 : index
    %c0_91 = arith.constant 0 : index
    %c0_92 = arith.constant 0 : index
    %91 = vector.load %arg13[%c1_89, %c0_90, %c0_91, %c0_92] : memref<3x3x256x256xf32, #tpu.memory_space<vmem>>, vector<1x1x256x256xf32>
    %92 = vector.shape_cast %91 : vector<1x1x256x256xf32> to vector<256x256xf32>
    %cst_93 = arith.constant dense<0.000000e+00> : vector<64x256xf32>
    %93 = tpu.matmul %89, %92, %cst_93 {dimension_numbers = #tpu.dot_dimension_numbers<[1], [0], [0], [1], [0, 0, 1, 1], [], []>} : vector<64x256xf32>, vector<256x256xf32>, vector<64x256xf32> -> vector<64x256xf32>
    %94 = arith.addf %90, %93 : vector<64x256xf32>
    %c0_94 = arith.constant 0 : index
    %c0_95 = arith.constant 0 : index
    %95 = vector.load %arg16[%c0_94, %c0_95] : memref<64x256xf32, #tpu.memory_space<vmem>>, vector<64x256xf32>
    tpu.vector_store %arg16[%c0_94, %c0_95], %94 {strides = array<i32>} : memref<64x256xf32, #tpu.memory_space<vmem>>, vector<64x256xf32>,
    %c1_96 = arith.constant 1 : index
    %c1_97 = arith.constant 1 : index
    %c0_98 = arith.constant 0 : index
    %96 = vector.load %arg15[%c1_96, %c1_97, %c0_98] : memref<10x10x256xf32, #tpu.memory_space<vmem>>, vector<8x8x256xf32>
    %97 = vector.shape_cast %96 : vector<8x8x256xf32> to vector<64x256xf32>
    %c0_99 = arith.constant 0 : index
    %c0_100 = arith.constant 0 : index
    %98 = vector.load %arg16[%c0_99, %c0_100] : memref<64x256xf32, #tpu.memory_space<vmem>>, vector<64x256xf32>
    %c1_101 = arith.constant 1 : index
    %c1_102 = arith.constant 1 : index
    %c0_103 = arith.constant 0 : index
    %c0_104 = arith.constant 0 : index
    %99 = vector.load %arg13[%c1_101, %c1_102, %c0_103, %c0_104] : memref<3x3x256x256xf32, #tpu.memory_space<vmem>>, vector<1x1x256x256xf32>
    %100 = vector.shape_cast %99 : vector<1x1x256x256xf32> to vector<256x256xf32>
    %cst_105 = arith.constant dense<0.000000e+00> : vector<64x256xf32>
    %101 = tpu.matmul %97, %100, %cst_105 {dimension_numbers = #tpu.dot_dimension_numbers<[1], [0], [0], [1], [0, 0, 1, 1], [], []>} : vector<64x256xf32>, vector<256x256xf32>, vector<64x256xf32> -> vector<64x256xf32>
    %102 = arith.addf %98, %101 : vector<64x256xf32>
    %c0_106 = arith.constant 0 : index
    %c0_107 = arith.constant 0 : index
    %103 = vector.load %arg16[%c0_106, %c0_107] : memref<64x256xf32, #tpu.memory_space<vmem>>, vector<64x256xf32>
    tpu.vector_store %arg16[%c0_106, %c0_107], %102 {strides = array<i32>} : memref<64x256xf32, #tpu.memory_space<vmem>>, vector<64x256xf32>,
    %c1_108 = arith.constant 1 : index
    %c2_109 = arith.constant 2 : index
    %c0_110 = arith.constant 0 : index
    %104 = vector.load %arg15[%c1_108, %c2_109, %c0_110] : memref<10x10x256xf32, #tpu.memory_space<vmem>>, vector<8x8x256xf32>
    %105 = vector.shape_cast %104 : vector<8x8x256xf32> to vector<64x256xf32>
    %c0_111 = arith.constant 0 : index
    %c0_112 = arith.constant 0 : index
    %106 = vector.load %arg16[%c0_111, %c0_112] : memref<64x256xf32, #tpu.memory_space<vmem>>, vector<64x256xf32>
    %c1_113 = arith.constant 1 : index
    %c2_114 = arith.constant 2 : index
    %c0_115 = arith.constant 0 : index
    %c0_116 = arith.constant 0 : index
    %107 = vector.load %arg13[%c1_113, %c2_114, %c0_115, %c0_116] : memref<3x3x256x256xf32, #tpu.memory_space<vmem>>, vector<1x1x256x256xf32>
    %108 = vector.shape_cast %107 : vector<1x1x256x256xf32> to vector<256x256xf32>
    %cst_117 = arith.constant dense<0.000000e+00> : vector<64x256xf32>
    %109 = tpu.matmul %105, %108, %cst_117 {dimension_numbers = #tpu.dot_dimension_numbers<[1], [0], [0], [1], [0, 0, 1, 1], [], []>} : vector<64x256xf32>, vector<256x256xf32>, vector<64x256xf32> -> vector<64x256xf32>
    %110 = arith.addf %106, %109 : vector<64x256xf32>
    %c0_118 = arith.constant 0 : index
    %c0_119 = arith.constant 0 : index
    %111 = vector.load %arg16[%c0_118, %c0_119] : memref<64x256xf32, #tpu.memory_space<vmem>>, vector<64x256xf32>
    tpu.vector_store %arg16[%c0_118, %c0_119], %110 {strides = array<i32>} : memref<64x256xf32, #tpu.memory_space<vmem>>, vector<64x256xf32>,
    %c2_120 = arith.constant 2 : index
    %c0_121 = arith.constant 0 : index
    %c0_122 = arith.constant 0 : index
    %112 = vector.load %arg15[%c2_120, %c0_121, %c0_122] : memref<10x10x256xf32, #tpu.memory_space<vmem>>, vector<8x8x256xf32>
    %113 = vector.shape_cast %112 : vector<8x8x256xf32> to vector<64x256xf32>
    %c0_123 = arith.constant 0 : index
    %c0_124 = arith.constant 0 : index
    %114 = vector.load %arg16[%c0_123, %c0_124] : memref<64x256xf32, #tpu.memory_space<vmem>>, vector<64x256xf32>
    %c2_125 = arith.constant 2 : index
    %c0_126 = arith.constant 0 : index
    %c0_127 = arith.constant 0 : index
    %c0_128 = arith.constant 0 : index
    %115 = vector.load %arg13[%c2_125, %c0_126, %c0_127, %c0_128] : memref<3x3x256x256xf32, #tpu.memory_space<vmem>>, vector<1x1x256x256xf32>
    %116 = vector.shape_cast %115 : vector<1x1x256x256xf32> to vector<256x256xf32>
    %cst_129 = arith.constant dense<0.000000e+00> : vector<64x256xf32>
    %117 = tpu.matmul %113, %116, %cst_129 {dimension_numbers = #tpu.dot_dimension_numbers<[1], [0], [0], [1], [0, 0, 1, 1], [], []>} : vector<64x256xf32>, vector<256x256xf32>, vector<64x256xf32> -> vector<64x256xf32>
    %118 = arith.addf %114, %117 : vector<64x256xf32>
    %c0_130 = arith.constant 0 : index
    %c0_131 = arith.constant 0 : index
    %119 = vector.load %arg16[%c0_130, %c0_131] : memref<64x256xf32, #tpu.memory_space<vmem>>, vector<64x256xf32>
    tpu.vector_store %arg16[%c0_130, %c0_131], %118 {strides = array<i32>} : memref<64x256xf32, #tpu.memory_space<vmem>>, vector<64x256xf32>,
    %c2_132 = arith.constant 2 : index
    %c1_133 = arith.constant 1 : index
    %c0_134 = arith.constant 0 : index
    %120 = vector.load %arg15[%c2_132, %c1_133, %c0_134] : memref<10x10x256xf32, #tpu.memory_space<vmem>>, vector<8x8x256xf32>
    %121 = vector.shape_cast %120 : vector<8x8x256xf32> to vector<64x256xf32>
    %c0_135 = arith.constant 0 : index
    %c0_136 = arith.constant 0 : index
    %122 = vector.load %arg16[%c0_135, %c0_136] : memref<64x256xf32, #tpu.memory_space<vmem>>, vector<64x256xf32>
    %c2_137 = arith.constant 2 : index
    %c1_138 = arith.constant 1 : index
    %c0_139 = arith.constant 0 : index
    %c0_140 = arith.constant 0 : index
    %123 = vector.load %arg13[%c2_137, %c1_138, %c0_139, %c0_140] : memref<3x3x256x256xf32, #tpu.memory_space<vmem>>, vector<1x1x256x256xf32>
    %124 = vector.shape_cast %123 : vector<1x1x256x256xf32> to vector<256x256xf32>
    %cst_141 = arith.constant dense<0.000000e+00> : vector<64x256xf32>
    %125 = tpu.matmul %121, %124, %cst_141 {dimension_numbers = #tpu.dot_dimension_numbers<[1], [0], [0], [1], [0, 0, 1, 1], [], []>} : vector<64x256xf32>, vector<256x256xf32>, vector<64x256xf32> -> vector<64x256xf32>
    %126 = arith.addf %122, %125 : vector<64x256xf32>
    %c0_142 = arith.constant 0 : index
    %c0_143 = arith.constant 0 : index
    %127 = vector.load %arg16[%c0_142, %c0_143] : memref<64x256xf32, #tpu.memory_space<vmem>>, vector<64x256xf32>
    tpu.vector_store %arg16[%c0_142, %c0_143], %126 {strides = array<i32>} : memref<64x256xf32, #tpu.memory_space<vmem>>, vector<64x256xf32>,
    %c2_144 = arith.constant 2 : index
    %c2_145 = arith.constant 2 : index
    %c0_146 = arith.constant 0 : index
    %128 = vector.load %arg15[%c2_144, %c2_145, %c0_146] : memref<10x10x256xf32, #tpu.memory_space<vmem>>, vector<8x8x256xf32>
    %129 = vector.shape_cast %128 : vector<8x8x256xf32> to vector<64x256xf32>
    %c0_147 = arith.constant 0 : index
    %c0_148 = arith.constant 0 : index
    %130 = vector.load %arg16[%c0_147, %c0_148] : memref<64x256xf32, #tpu.memory_space<vmem>>, vector<64x256xf32>
    %c2_149 = arith.constant 2 : index
    %c2_150 = arith.constant 2 : index
    %c0_151 = arith.constant 0 : index
    %c0_152 = arith.constant 0 : index
    %131 = vector.load %arg13[%c2_149, %c2_150, %c0_151, %c0_152] : memref<3x3x256x256xf32, #tpu.memory_space<vmem>>, vector<1x1x256x256xf32>
    %132 = vector.shape_cast %131 : vector<1x1x256x256xf32> to vector<256x256xf32>
    %cst_153 = arith.constant dense<0.000000e+00> : vector<64x256xf32>
    %133 = tpu.matmul %129, %132, %cst_153 {dimension_numbers = #tpu.dot_dimension_numbers<[1], [0], [0], [1], [0, 0, 1, 1], [], []>} : vector<64x256xf32>, vector<256x256xf32>, vector<64x256xf32> -> vector<64x256xf32>
    %134 = arith.addf %130, %133 : vector<64x256xf32>
    %c0_154 = arith.constant 0 : index
    %c0_155 = arith.constant 0 : index
    %135 = vector.load %arg16[%c0_154, %c0_155] : memref<64x256xf32, #tpu.memory_space<vmem>>, vector<64x256xf32>
    tpu.vector_store %arg16[%c0_154, %c0_155], %134 {strides = array<i32>} : memref<64x256xf32, #tpu.memory_space<vmem>>, vector<64x256xf32>,
    %c0_156 = arith.constant 0 : index
    %c0_157 = arith.constant 0 : index
    %136 = vector.load %arg16[%c0_156, %c0_157] : memref<64x256xf32, #tpu.memory_space<vmem>>, vector<64x256xf32>
    %c0_158 = arith.constant 0 : index
    %c0_159 = arith.constant 0 : index
    %c0_160 = arith.constant 0 : index
    %c0_161 = arith.constant 0 : index
    %137 = vector.load %arg2[%c0_158, %c0_159, %c0_160, %c0_161] : memref<1x8x8x256xf32, #tpu.memory_space<vmem>>, vector<1x8x8x256xf32>
    %138 = vector.shape_cast %137 : vector<1x8x8x256xf32> to vector<64x256xf32>
    %139 = vector.broadcast %48 : vector<1x256xf32> to vector<64x256xf32>
    %140 = arith.mulf %138, %139 : vector<64x256xf32>
    %141 = arith.addf %136, %140 : vector<64x256xf32>
    %142 = vector.shape_cast %141 : vector<64x256xf32> to vector<1x8x8x256xf32>
    %c0_162 = arith.constant 0 : index
    %c0_163 = arith.constant 0 : index
    %c0_164 = arith.constant 0 : index
    %c0_165 = arith.constant 0 : index
    %143 = vector.load %arg14[%c0_162, %c0_163, %c0_164, %c0_165] : memref<1x8x8x256xf32, #tpu.memory_space<vmem>>, vector<1x8x8x256xf32>
    tpu.vector_store %arg14[%c0_162, %c0_163, %c0_164, %c0_165], %142 {strides = array<i32>} : memref<1x8x8x256xf32, #tpu.memory_space<vmem>>, vector<1x8x8x256xf32>,
    return
  }
  func.func @transform_0(%arg0: i32) -> (i32, i32, i32, i32) {
    %c0_i32 = arith.constant 0 : i32
    %c0_i32_0 = arith.constant 0 : i32
    %c0_i32_1 = arith.constant 0 : i32
    %c0_i32_2 = arith.constant 0 : i32
    return %arg0, %c0_i32, %c0_i32_0, %c0_i32_1 : i32, i32, i32, i32
  }
  func.func @transform_1(%arg0: i32) -> (i32, i32, i32, i32) {
    %c0_i32 = arith.constant 0 : i32
    %c0_i32_0 = arith.constant 0 : i32
    %c0_i32_1 = arith.constant 0 : i32
    %c0_i32_2 = arith.constant 0 : i32
    return %arg0, %c0_i32, %c0_i32_0, %c0_i32_1 : i32, i32, i32, i32
  }
  func.func @transform_2(%arg0: i32) -> (i32, i32, i32) {
    %c0_i32 = arith.constant 0 : i32
    %c0_i32_0 = arith.constant 0 : i32
    %c0_i32_1 = arith.constant 0 : i32
    return %arg0, %c0_i32, %c0_i32_0 : i32, i32, i32
  }
  func.func @transform_3(%arg0: i32) -> (i32, i32) {
    %c0_i32 = arith.constant 0 : i32
    %c0_i32_0 = arith.constant 0 : i32
    %c0_i32_1 = arith.constant 0 : i32
    return %c0_i32, %c0_i32_0 : i32, i32
  }
  func.func @transform_4(%arg0: i32) -> (i32, i32) {
    %c0_i32 = arith.constant 0 : i32
    %c0_i32_0 = arith.constant 0 : i32
    %c0_i32_1 = arith.constant 0 : i32
    return %c0_i32, %c0_i32_0 : i32, i32
  }
  func.func @transform_5(%arg0: i32) -> (i32, i32) {
    %c0_i32 = arith.constant 0 : i32
    %c0_i32_0 = arith.constant 0 : i32
    %c0_i32_1 = arith.constant 0 : i32
    return %c0_i32, %c0_i32_0 : i32, i32
  }
  func.func @transform_6(%arg0: i32) -> (i32, i32) {
    %c0_i32 = arith.constant 0 : i32
    %c0_i32_0 = arith.constant 0 : i32
    %c0_i32_1 = arith.constant 0 : i32
    return %c0_i32, %c0_i32_0 : i32, i32
  }
  func.func @transform_7(%arg0: i32) -> (i32, i32) {
    %c0_i32 = arith.constant 0 : i32
    %c0_i32_0 = arith.constant 0 : i32
    %c0_i32_1 = arith.constant 0 : i32
    return %c0_i32, %c0_i32_0 : i32, i32
  }
  func.func @transform_8(%arg0: i32) -> (i32, i32) {
    %c0_i32 = arith.constant 0 : i32
    %c0_i32_0 = arith.constant 0 : i32
    %c0_i32_1 = arith.constant 0 : i32
    return %c0_i32, %c0_i32_0 : i32, i32
  }
  func.func @transform_9(%arg0: i32) -> (i32, i32) {
    %c0_i32 = arith.constant 0 : i32
    %c0_i32_0 = arith.constant 0 : i32
    %c0_i32_1 = arith.constant 0 : i32
    return %c0_i32, %c0_i32_0 : i32, i32
  }
  func.func @transform_10(%arg0: i32) -> (i32, i32) {
    %c0_i32 = arith.constant 0 : i32
    %c0_i32_0 = arith.constant 0 : i32
    %c0_i32_1 = arith.constant 0 : i32
    return %c0_i32, %c0_i32_0 : i32, i32
  }
  func.func @transform_11(%arg0: i32) -> (i32, i32) {
    %c0_i32 = arith.constant 0 : i32
    %c0_i32_0 = arith.constant 0 : i32
    %c0_i32_1 = arith.constant 0 : i32
    return %c0_i32, %c0_i32_0 : i32, i32
  }
  func.func @transform_12(%arg0: i32) -> (i32, i32, i32, i32) {
    %c0_i32 = arith.constant 0 : i32
    %c0_i32_0 = arith.constant 0 : i32
    %c0_i32_1 = arith.constant 0 : i32
    %c0_i32_2 = arith.constant 0 : i32
    %c0_i32_3 = arith.constant 0 : i32
    return %c0_i32, %c0_i32_0, %c0_i32_1, %c0_i32_2 : i32, i32, i32, i32
  }
  func.func @transform_13(%arg0: i32) -> (i32, i32, i32, i32) {
    %c0_i32 = arith.constant 0 : i32
    %c0_i32_0 = arith.constant 0 : i32
    %c0_i32_1 = arith.constant 0 : i32
    %c0_i32_2 = arith.constant 0 : i32
    return %arg0, %c0_i32, %c0_i32_0, %c0_i32_1 : i32, i32, i32, i32
  }
}

</mosaic_0001>

<llo_original>
// kernel: dyn_no_bottleneck_forward.3
$region0: #{dyn_no_bottleneck_forward.3}
  #allocation0 [shape = 'u32[]', space=smem, size = 0x4, offset = 0x4, fixed_abs, tag = 'smem constant byte address 0x4 - core index']
  #allocation1 [shape = 'u32[72,128]{1,0:T(1,128)}', space=vmem, size = 0x9000, scoped, tag = 'internal scratch']
  #allocation2 [shape = 'f32[10,10,256]{2,1,0:T(8,128)}', space=vmem, size = 0x28000, scoped, tag = 'scratch operand']
  #allocation3 [shape = 'f32[64,256]{1,0:T(8,128)}', space=vmem, size = 0x10000, scoped, tag = 'scratch operand']
  %s0 = inlined_call_operand.vmem [shape: f32[2,8,8,256], index: 0, kind: input, shape index: {}]
  %s1 = inlined_call_operand.vmem [shape: f32[2,8,8,256], index: 1, kind: input, shape index: {}]
  %s2 = inlined_call_operand.vmem [shape: f32[2,1,32], index: 2, kind: input, shape index: {}]
  %s3 = inlined_call_operand.hbm [shape: f32[1,256], index: 3, kind: input, shape index: {}]
  %s4 = inlined_call_operand.hbm [shape: f32[1,256], index: 4, kind: input, shape index: {}]
  %s5 = inlined_call_operand.hbm [shape: f32[1,256], index: 5, kind: input, shape index: {}]
  %s6 = inlined_call_operand.hbm [shape: f32[1,256], index: 6, kind: input, shape index: {}]
  %s7 = inlined_call_operand.vmem [shape: f32[256,16], index: 7, kind: input, shape index: {}]
  %s8 = inlined_call_operand.hbm [shape: f32[16,256], index: 8, kind: input, shape index: {}]
  %s9 = inlined_call_operand.vmem [shape: f32[256,32], index: 9, kind: input, shape index: {}]
  %s10 = inlined_call_operand.hbm [shape: f32[32,256], index: 10, kind: input, shape index: {}]
  %s11 = inlined_call_operand.hbm [shape: f32[32,32], index: 11, kind: input, shape index: {}]
  %s12 = inlined_call_operand.hbm [shape: f32[3,3,256,256], index: 12, kind: input, shape index: {}]
  %s13 = inlined_call_operand.vmem [shape: f32[2,8,8,256], index: 13, kind: output, shape index: {}]
  %s14 = sld [smem:[#allocation0]]
  $region117: #{dyn_no_bottleneck_forward.3} parent=0
    _
  %s16 = ssub.s32 1, %s14
  %s17 = scalar_select 0, %s16, %s14
  $region1: #{dyn_no_bottleneck_forward.3} parent=0
    #allocation4 [shape = 'u8[1024]{0}', space=vmem, size = 0x400, scoped, tag = 'input window, operand 3, single buffered']
    #allocation5 [shape = 's32[2]{0}', space=sflag, size = 0x8, scoped, tag = 'scoped memory for dyn_no_bottleneck_forward.3']
    #allocation6 [shape = 'u8[1024]{0}', space=vmem, size = 0x400, scoped, tag = 'input window, operand 4, single buffered']
    #allocation7 [shape = 's32[1]{0}', space=sflag, size = 0x4, scoped, tag = 'scoped memory for dyn_no_bottleneck_forward.3']
    #allocation8 [shape = 'u8[1024]{0}', space=vmem, size = 0x400, scoped, tag = 'input window, operand 5, single buffered']
    #allocation9 [shape = 'u8[1024]{0}', space=vmem, size = 0x400, scoped, tag = 'input window, operand 6, single buffered']
    #allocation10 [shape = 's32[1]{0}', space=sflag, size = 0x4, scoped, tag = 'scoped memory for dyn_no_bottleneck_forward.3']
    #allocation11 [shape = 'u8[16384]{0}', space=vmem, size = 0x4000, scoped, tag = 'input window, operand 8, single buffered']
    #allocation12 [shape = 'u8[32768]{0}', space=vmem, size = 0x8000, scoped, tag = 'input window, operand 10, single buffered']
    #allocation13 [shape = 's32[1]{0}', space=sflag, size = 0x4, scoped, tag = 'scoped memory for dyn_no_bottleneck_forward.3']
    #allocation14 [shape = 'u8[16384]{0}', space=vmem, size = 0x4000, scoped, tag = 'input window, operand 11, single buffered']
    #allocation15 [shape = 'u8[2359296]{0}', space=vmem, size = 0x240000, scoped, tag = 'input window, operand 12, single buffered']
    #allocation16 [shape = 's32[1]{0}', space=sflag, size = 0x4, scoped, tag = 'scoped memory for dyn_no_bottleneck_forward.3']
    %18 = vsyncpa [#allocation5], 0
    %19 = vsyncpa [#allocation7], 0
    %20 = vsyncpa [#allocation10], 0
    %21 = vsyncpa [#allocation13], 0
    %22 = vsyncpa [#allocation16], 0
    loop: start=0, step=1, limit=4
    $region2: #{dyn_no_bottleneck_forward.3} parent=1 // loop_pre_header
      _
    $region3: #{dyn_no_bottleneck_forward.3} parent=1 // loop_header
      %s24 = sphi 0, %s28
      %p25 = scmp.ge.s32.totalorder %s24, 4
      %s34 = sphi 0, %s36
      %s37 = sphi 0, %s34
      %s38 = sphi 0, %s37
      %s54 = sphi 0, %s38
      %s60 = sphi 0, %s62
      %s63 = sphi 0, %s60
      %s64 = sphi 0, %s63
      %s80 = sphi 0, %s64
      %s86 = sphi 0, %s88
      %s89 = sphi 0, %s86
      %s90 = sphi 0, %s89
      %s106 = sphi 0, %s90
      %s110 = sphi 0, %s110
      %s112 = sphi 0, %s110
      %s113 = sphi 0, %s112
      %s127 = sphi 0, %s113
      %s131 = sphi 0, %s131
      %s133 = sphi 0, %s131
      %s134 = sphi 0, %s133
      %s148 = sphi 0, %s134
      %s152 = sphi 0, %s152
      %s154 = sphi 0, %s152
      %s155 = sphi 0, %s154
      %s169 = sphi 0, %s155
      %s173 = sphi 0, %s173
      %s175 = sphi 0, %s173
      %s176 = sphi 0, %s175
      %s190 = sphi 0, %s176
      %s194 = sphi 0, %s194
      %s196 = sphi 0, %s194
      %s197 = sphi 0, %s196
      %s211 = sphi 0, %s197
      %s215 = sphi 0, %s215
      %s217 = sphi 0, %s215
      %s218 = sphi 0, %s217
      %s232 = sphi 0, %s218
      %s236 = sphi 0, %s236
      %s238 = sphi 0, %s236
      %s239 = sphi 0, %s238
      %s253 = sphi 0, %s239
      %s257 = sphi 0, %s257
      %s259 = sphi 0, %s257
      %s260 = sphi 0, %s259
      %s274 = sphi 0, %s260
      %s278 = sphi 0, %s278
      %s280 = sphi 0, %s278
      %s281 = sphi 0, %s280
      %s295 = sphi 0, %s281
      %s299 = sphi 0, %s299
      %s301 = sphi 0, %s299
      %s302 = sphi 0, %s301
      %s316 = sphi 0, %s302
      %s322 = sphi 0, %s324
      %s325 = sphi 0, %s322
      %s326 = sphi 0, %s325
      %s342 = sphi 0, %s326
    $region4: #{dyn_no_bottleneck_forward.3} parent=1 // loop_header_branch
      %27 = sbr.rel (%p25) target = $region8
    $region5: #{dyn_no_bottleneck_forward.3} parent=1 // loop_body
      %s29 = ssub.s32 %s24, 1
      %s30 = ssub.s32 %s24, 2
      %s31 = sadd.s32 %s24, 1
      %s32 = ssub.s32 %s24, %s31
      %p33 = scmp.eq.s32.totalorder %s32, 0
      %s35 = sadd.s32 %s34, 1
      %s36 = scalar_select %p33, %s34, %s35
      %p39 = pneg %p33
      %p40 = scmp.eq.s32.totalorder %s24, 1
      %p41 = por %p39, %p40
      %p42 = scmp.ne.s32.totalorder %s34, %s37
      %p43 = scmp.eq.s32.totalorder %s24, 0
      %p44 = por %p42, %p43
      %p45 = scmp.ne.s32.totalorder %s34, %s37
      %p46 = scmp.eq.s32.totalorder %s29, 1
      %p47 = por %p45, %p46
      %p48 = scmp.ne.s32.totalorder %s37, %s38
      %p49 = scmp.eq.s32.totalorder %s29, 0
      %p50 = por %p48, %p49
      %p51 = scmp.ne.s32.totalorder %s37, %s38
      %p52 = scmp.eq.s32.totalorder %s30, 1
      %p53 = por %p51, %p52
      %p55 = scmp.ne.s32.totalorder %s38, %s54
      %p56 = scmp.eq.s32.totalorder %s30, 0
      %p57 = por %p55, %p56
      %s58 = ssub.s32 %s24, %s31
      %p59 = scmp.eq.s32.totalorder %s58, 0
      %s61 = sadd.s32 %s60, 1
      %s62 = scalar_select %p59, %s60, %s61
      %p65 = pneg %p59
      %p66 = scmp.eq.s32.totalorder %s24, 1
      %p67 = por %p65, %p66
      %p68 = scmp.ne.s32.totalorder %s60, %s63
      %p69 = scmp.eq.s32.totalorder %s24, 0
      %p70 = por %p68, %p69
      %p71 = scmp.ne.s32.totalorder %s60, %s63
      %p72 = scmp.eq.s32.totalorder %s29, 1
      %p73 = por %p71, %p72
      %p74 = scmp.ne.s32.totalorder %s63, %s64
      %p75 = scmp.eq.s32.totalorder %s29, 0
      %p76 = por %p74, %p75
      %p77 = scmp.ne.s32.totalorder %s63, %s64
      %p78 = scmp.eq.s32.totalorder %s30, 1
      %p79 = por %p77, %p78
      %p81 = scmp.ne.s32.totalorder %s64, %s80
      %p82 = scmp.eq.s32.totalorder %s30, 0
      %p83 = por %p81, %p82
      %s84 = ssub.s32 %s24, %s31
      %p85 = scmp.eq.s32.totalorder %s84, 0
      %s87 = sadd.s32 %s86, 1
      %s88 = scalar_select %p85, %s86, %s87
      %p91 = pneg %p85
      %p92 = scmp.eq.s32.totalorder %s24, 1
      %p93 = por %p91, %p92
      %p94 = scmp.ne.s32.totalorder %s86, %s89
      %p95 = scmp.eq.s32.totalorder %s24, 0
      %p96 = por %p94, %p95
      %p97 = scmp.ne.s32.totalorder %s86, %s89
      %p98 = scmp.eq.s32.totalorder %s29, 1
      %p99 = por %p97, %p98
      %p100 = scmp.ne.s32.totalorder %s89, %s90
      %p101 = scmp.eq.s32.totalorder %s29, 0
      %p102 = por %p100, %p101
      %p103 = scmp.ne.s32.totalorder %s89, %s90
      %p104 = scmp.eq.s32.totalorder %s30, 1
      %p105 = por %p103, %p104
      %p107 = scmp.ne.s32.totalorder %s90, %s106
      %p108 = scmp.eq.s32.totalorder %s30, 0
      %p109 = por %p107, %p108
      %s111 = sadd.s32 %s110, 1
      %p114 = scmp.eq.s32.totalorder %s24, 1
      %p115 = scmp.ne.s32.totalorder %s110, %s112
      %p116 = scmp.eq.s32.totalorder %s24, 0
      %p117 = por %p115, %p116
      %p118 = scmp.ne.s32.totalorder %s110, %s112
      %p119 = scmp.eq.s32.totalorder %s29, 1
      %p120 = por %p118, %p119
      %p121 = scmp.ne.s32.totalorder %s112, %s113
      %p122 = scmp.eq.s32.totalorder %s29, 0
      %p123 = por %p121, %p122
      %p124 = scmp.ne.s32.totalorder %s112, %s113
      %p125 = scmp.eq.s32.totalorder %s30, 1
      %p126 = por %p124, %p125
      %p128 = scmp.ne.s32.totalorder %s113, %s127
      %p129 = scmp.eq.s32.totalorder %s30, 0
      %p130 = por %p128, %p129
      %s132 = sadd.s32 %s131, 1
      %p135 = scmp.eq.s32.totalorder %s24, 1
      %p136 = scmp.ne.s32.totalorder %s131, %s133
      %p137 = scmp.eq.s32.totalorder %s24, 0
      %p138 = por %p136, %p137
      %p139 = scmp.ne.s32.totalorder %s131, %s133
      %p140 = scmp.eq.s32.totalorder %s29, 1
      %p141 = por %p139, %p140
      %p142 = scmp.ne.s32.totalorder %s133, %s134
      %p143 = scmp.eq.s32.totalorder %s29, 0
      %p144 = por %p142, %p143
      %p145 = scmp.ne.s32.totalorder %s133, %s134
      %p146 = scmp.eq.s32.totalorder %s30, 1
      %p147 = por %p145, %p146
      %p149 = scmp.ne.s32.totalorder %s134, %s148
      %p150 = scmp.eq.s32.totalorder %s30, 0
      %p151 = por %p149, %p150
      %s153 = sadd.s32 %s152, 1
      %p156 = scmp.eq.s32.totalorder %s24, 1
      %p157 = scmp.ne.s32.totalorder %s152, %s154
      %p158 = scmp.eq.s32.totalorder %s24, 0
      %p159 = por %p157, %p158
      %p160 = scmp.ne.s32.totalorder %s152, %s154
      %p161 = scmp.eq.s32.totalorder %s29, 1
      %p162 = por %p160, %p161
      %p163 = scmp.ne.s32.totalorder %s154, %s155
      %p164 = scmp.eq.s32.totalorder %s29, 0
      %p165 = por %p163, %p164
      %p166 = scmp.ne.s32.totalorder %s154, %s155
      %p167 = scmp.eq.s32.totalorder %s30, 1
      %p168 = por %p166, %p167
      %p170 = scmp.ne.s32.totalorder %s155, %s169
      %p171 = scmp.eq.s32.totalorder %s30, 0
      %p172 = por %p170, %p171
      %s174 = sadd.s32 %s173, 1
      %p177 = scmp.eq.s32.totalorder %s24, 1
      %p178 = scmp.ne.s32.totalorder %s173, %s175
      %p179 = scmp.eq.s32.totalorder %s24, 0
      %p180 = por %p178, %p179
      %p181 = scmp.ne.s32.totalorder %s173, %s175
      %p182 = scmp.eq.s32.totalorder %s29, 1
      %p183 = por %p181, %p182
      %p184 = scmp.ne.s32.totalorder %s175, %s176
      %p185 = scmp.eq.s32.totalorder %s29, 0
      %p186 = por %p184, %p185
      %p187 = scmp.ne.s32.totalorder %s175, %s176
      %p188 = scmp.eq.s32.totalorder %s30, 1
      %p189 = por %p187, %p188
      %p191 = scmp.ne.s32.totalorder %s176, %s190
      %p192 = scmp.eq.s32.totalorder %s30, 0
      %p193 = por %p191, %p192
      %s195 = sadd.s32 %s194, 1
      %p198 = scmp.eq.s32.totalorder %s24, 1
      %p199 = scmp.ne.s32.totalorder %s194, %s196
      %p200 = scmp.eq.s32.totalorder %s24, 0
      %p201 = por %p199, %p200
      %p202 = scmp.ne.s32.totalorder %s194, %s196
      %p203 = scmp.eq.s32.totalorder %s29, 1
      %p204 = por %p202, %p203
      %p205 = scmp.ne.s32.totalorder %s196, %s197
      %p206 = scmp.eq.s32.totalorder %s29, 0
      %p207 = por %p205, %p206
      %p208 = scmp.ne.s32.totalorder %s196, %s197
      %p209 = scmp.eq.s32.totalorder %s30, 1
      %p210 = por %p208, %p209
      %p212 = scmp.ne.s32.totalorder %s197, %s211
      %p213 = scmp.eq.s32.totalorder %s30, 0
      %p214 = por %p212, %p213
      %s216 = sadd.s32 %s215, 1
      %p219 = scmp.eq.s32.totalorder %s24, 1
      %p220 = scmp.ne.s32.totalorder %s215, %s217
      %p221 = scmp.eq.s32.totalorder %s24, 0
      %p222 = por %p220, %p221
      %p223 = scmp.ne.s32.totalorder %s215, %s217
      %p224 = scmp.eq.s32.totalorder %s29, 1
      %p225 = por %p223, %p224
      %p226 = scmp.ne.s32.totalorder %s217, %s218
      %p227 = scmp.eq.s32.totalorder %s29, 0
      %p228 = por %p226, %p227
      %p229 = scmp.ne.s32.totalorder %s217, %s218
      %p230 = scmp.eq.s32.totalorder %s30, 1
      %p231 = por %p229, %p230
      %p233 = scmp.ne.s32.totalorder %s218, %s232
      %p234 = scmp.eq.s32.totalorder %s30, 0
      %p235 = por %p233, %p234
      %s237 = sadd.s32 %s236, 1
      %p240 = scmp.eq.s32.totalorder %s24, 1
      %p241 = scmp.ne.s32.totalorder %s236, %s238
      %p242 = scmp.eq.s32.totalorder %s24, 0
      %p243 = por %p241, %p242
      %p244 = scmp.ne.s32.totalorder %s236, %s238
      %p245 = scmp.eq.s32.totalorder %s29, 1
      %p246 = por %p244, %p245
      %p247 = scmp.ne.s32.totalorder %s238, %s239
      %p248 = scmp.eq.s32.totalorder %s29, 0
      %p249 = por %p247, %p248
      %p250 = scmp.ne.s32.totalorder %s238, %s239
      %p251 = scmp.eq.s32.totalorder %s30, 1
      %p252 = por %p250, %p251
      %p254 = scmp.ne.s32.totalorder %s239, %s253
      %p255 = scmp.eq.s32.totalorder %s30, 0
      %p256 = por %p254, %p255
      %s258 = sadd.s32 %s257, 1
      %p261 = scmp.eq.s32.totalorder %s24, 1
      %p262 = scmp.ne.s32.totalorder %s257, %s259
      %p263 = scmp.eq.s32.totalorder %s24, 0
      %p264 = por %p262, %p263
      %p265 = scmp.ne.s32.totalorder %s257, %s259
      %p266 = scmp.eq.s32.totalorder %s29, 1
      %p267 = por %p265, %p266
      %p268 = scmp.ne.s32.totalorder %s259, %s260
      %p269 = scmp.eq.s32.totalorder %s29, 0
      %p270 = por %p268, %p269
      %p271 = scmp.ne.s32.totalorder %s259, %s260
      %p272 = scmp.eq.s32.totalorder %s30, 1
      %p273 = por %p271, %p272
      %p275 = scmp.ne.s32.totalorder %s260, %s274
      %p276 = scmp.eq.s32.totalorder %s30, 0
      %p277 = por %p275, %p276
      %s279 = sadd.s32 %s278, 1
      %p282 = scmp.eq.s32.totalorder %s24, 1
      %p283 = scmp.ne.s32.totalorder %s278, %s280
      %p284 = scmp.eq.s32.totalorder %s24, 0
      %p285 = por %p283, %p284
      %p286 = scmp.ne.s32.totalorder %s278, %s280
      %p287 = scmp.eq.s32.totalorder %s29, 1
      %p288 = por %p286, %p287
      %p289 = scmp.ne.s32.totalorder %s280, %s281
      %p290 = scmp.eq.s32.totalorder %s29, 0
      %p291 = por %p289, %p290
      %p292 = scmp.ne.s32.totalorder %s280, %s281
      %p293 = scmp.eq.s32.totalorder %s30, 1
      %p294 = por %p292, %p293
      %p296 = scmp.ne.s32.totalorder %s281, %s295
      %p297 = scmp.eq.s32.totalorder %s30, 0
      %p298 = por %p296, %p297
      %s300 = sadd.s32 %s299, 1
      %p303 = scmp.eq.s32.totalorder %s24, 1
      %p304 = scmp.ne.s32.totalorder %s299, %s301
      %p305 = scmp.eq.s32.totalorder %s24, 0
      %p306 = por %p304, %p305
      %p307 = scmp.ne.s32.totalorder %s299, %s301
      %p308 = scmp.eq.s32.totalorder %s29, 1
      %p309 = por %p307, %p308
      %p310 = scmp.ne.s32.totalorder %s301, %s302
      %p311 = scmp.eq.s32.totalorder %s29, 0
      %p312 = por %p310, %p311
      %p313 = scmp.ne.s32.totalorder %s301, %s302
      %p314 = scmp.eq.s32.totalorder %s30, 1
      %p315 = por %p313, %p314
      %p317 = scmp.ne.s32.totalorder %s302, %s316
      %p318 = scmp.eq.s32.totalorder %s30, 0
      %p319 = por %p317, %p318
      %s320 = ssub.s32 %s24, %s31
      %p321 = scmp.eq.s32.totalorder %s320, 0
      %s323 = sadd.s32 %s322, 1
      %s324 = scalar_select %p321, %s322, %s323
      %p327 = pneg %p321
      %p328 = scmp.eq.s32.totalorder %s24, 1
      %p329 = por %p327, %p328
      %p330 = scmp.ne.s32.totalorder %s322, %s325
      %p331 = scmp.eq.s32.totalorder %s24, 0
      %p332 = por %p330, %p331
      %p333 = scmp.ne.s32.totalorder %s322, %s325
      %p334 = scmp.eq.s32.totalorder %s29, 1
      %p335 = por %p333, %p334
      %p336 = scmp.ne.s32.totalorder %s325, %s326
      %p337 = scmp.eq.s32.totalorder %s29, 0
      %p338 = por %p336, %p337
      %p339 = scmp.ne.s32.totalorder %s325, %s326
      %p340 = scmp.eq.s32.totalorder %s30, 1
      %p341 = por %p339, %p340
      %p343 = scmp.ne.s32.totalorder %s326, %s342
      %p344 = scmp.eq.s32.totalorder %s30, 0
      %p345 = por %p343, %p344
      %p346 = scmp.le.s32.totalorder 1, %s24
      %p347 = scmp.lt.s32.totalorder %s24, 3
      %p348 = pnand %p346, %p347
      %p349 = pneg %p348
      // Predicated region
      $region9: #{dyn_no_bottleneck_forward.3} parent=5 // pred_check
        _
      $region10: #{dyn_no_bottleneck_forward.3} parent=5 // pred_check_branch
        %351 = sbr.rel (%p348) target = $region12
      $region11: #{dyn_no_bottleneck_forward.3} parent=5 // pred_region
        %s352 = ssub.s32 %s24, 1
        // Predicated region
        $region13: #{dyn_no_bottleneck_forward.3} parent=11 // pred_check
          %p353 = pneg %p123
        $region14: #{dyn_no_bottleneck_forward.3} parent=11 // pred_check_branch
          %355 = sbr.rel (%p353) target = $region16
        $region15: #{dyn_no_bottleneck_forward.3} parent=11 // pred_region
          %357 = vsyncadd [#allocation5], 0
          %s359 = sshll.u32 %s3, 4
          %s360 = int_to_ptr.hbm [resolvable:$true] %s359
          %s361 = sshll.u32 [#allocation4], 4
          %s362 = int_to_ptr.vmem [resolvable:$true] %s361
          %364 = dma.hbm_to_vmem [thread:$0]  %s360, 32, %s362, [#allocation5]
        $region16: #{dyn_no_bottleneck_forward.3} parent=11 // pred_fallthru
          _
        // Predicated region
        $region17: #{dyn_no_bottleneck_forward.3} parent=11 // pred_check
          %p365 = pneg %p144
        $region18: #{dyn_no_bottleneck_forward.3} parent=11 // pred_check_branch
          %367 = sbr.rel (%p365) target = $region20
        $region19: #{dyn_no_bottleneck_forward.3} parent=11 // pred_region
          %369 = vsyncadd [#allocation7], 0
          %s371 = sshll.u32 %s4, 4
          %s372 = int_to_ptr.hbm [resolvable:$true] %s371
          %s373 = sshll.u32 [#allocation6], 4
          %s374 = int_to_ptr.vmem [resolvable:$true] %s373
          %376 = dma.hbm_to_vmem [thread:$0]  %s372, 32, %s374, [#allocation7]
        $region20: #{dyn_no_bottleneck_forward.3} parent=11 // pred_fallthru
          _
        // Predicated region
        $region21: #{dyn_no_bottleneck_forward.3} parent=11 // pred_check
          %p377 = pneg %p165
        $region22: #{dyn_no_bottleneck_forward.3} parent=11 // pred_check_branch
          %379 = sbr.rel (%p377) target = $region24
        $region23: #{dyn_no_bottleneck_forward.3} parent=11 // pred_region
          %381 = vsyncadd [#allocation7], 0
          %s383 = sshll.u32 %s5, 4
          %s384 = int_to_ptr.hbm [resolvable:$true] %s383
          %s385 = sshll.u32 [#allocation8], 4
          %s386 = int_to_ptr.vmem [resolvable:$true] %s385
          %388 = dma.hbm_to_vmem [thread:$0]  %s384, 32, %s386, [#allocation7]
        $region24: #{dyn_no_bottleneck_forward.3} parent=11 // pred_fallthru
          _
        // Predicated region
        $region25: #{dyn_no_bottleneck_forward.3} parent=11 // pred_check
          %p389 = pneg %p186
        $region26: #{dyn_no_bottleneck_forward.3} parent=11 // pred_check_branch
          %391 = sbr.rel (%p389) target = $region28
        $region27: #{dyn_no_bottleneck_forward.3} parent=11 // pred_region
          %393 = vsyncadd [#allocation10], 0
          %s395 = sshll.u32 %s6, 4
          %s396 = int_to_ptr.hbm [resolvable:$true] %s395
          %s397 = sshll.u32 [#allocation9], 4
          %s398 = int_to_ptr.vmem [resolvable:$true] %s397
          %400 = dma.hbm_to_vmem [thread:$0]  %s396, 32, %s398, [#allocation10]
        $region28: #{dyn_no_bottleneck_forward.3} parent=11 // pred_fallthru
          _
        // Predicated region
        $region29: #{dyn_no_bottleneck_forward.3} parent=11 // pred_check
          %p401 = pneg %p207
        $region30: #{dyn_no_bottleneck_forward.3} parent=11 // pred_check_branch
          %403 = sbr.rel (%p401) target = $region32
        $region31: #{dyn_no_bottleneck_forward.3} parent=11 // pred_region
          _
        $region32: #{dyn_no_bottleneck_forward.3} parent=11 // pred_fallthru
          _
        // Predicated region
        $region33: #{dyn_no_bottleneck_forward.3} parent=11 // pred_check
          %p404 = pneg %p228
        $region34: #{dyn_no_bottleneck_forward.3} parent=11 // pred_check_branch
          %406 = sbr.rel (%p404) target = $region36
        $region35: #{dyn_no_bottleneck_forward.3} parent=11 // pred_region
          %408 = vsyncadd [#allocation10], 0
          %s409 = sshll.u32 %s8, 4
          %s410 = int_to_ptr.hbm [resolvable:$true] %s409
          %s411 = sshll.u32 [#allocation11], 4
          %s412 = int_to_ptr.vmem [resolvable:$true] %s411
          %417 = dma.hbm_to_vmem [thread:$0]  %s410, 512, %s412, [#allocation10], 256, 256, 16
        $region36: #{dyn_no_bottleneck_forward.3} parent=11 // pred_fallthru
          _
        // Predicated region
        $region37: #{dyn_no_bottleneck_forward.3} parent=11 // pred_check
          %p418 = pneg %p249
        $region38: #{dyn_no_bottleneck_forward.3} parent=11 // pred_check_branch
          %420 = sbr.rel (%p418) target = $region40
        $region39: #{dyn_no_bottleneck_forward.3} parent=11 // pred_region
          _
        $region40: #{dyn_no_bottleneck_forward.3} parent=11 // pred_fallthru
          _
        // Predicated region
        $region41: #{dyn_no_bottleneck_forward.3} parent=11 // pred_check
          %p421 = pneg %p270
        $region42: #{dyn_no_bottleneck_forward.3} parent=11 // pred_check_branch
          %423 = sbr.rel (%p421) target = $region44
        $region43: #{dyn_no_bottleneck_forward.3} parent=11 // pred_region
          %425 = vsyncadd [#allocation13], 0
          %s426 = sshll.u32 %s10, 4
          %s427 = int_to_ptr.hbm [resolvable:$true] %s426
          %s428 = sshll.u32 [#allocation12], 4
          %s429 = int_to_ptr.vmem [resolvable:$true] %s428
          %434 = dma.hbm_to_vmem [thread:$0]  %s427, 1024, %s429, [#allocation13], 256, 256, 16
        $region44: #{dyn_no_bottleneck_forward.3} parent=11 // pred_fallthru
          _
        // Predicated region
        $region45: #{dyn_no_bottleneck_forward.3} parent=11 // pred_check
          %p435 = pneg %p291
        $region46: #{dyn_no_bottleneck_forward.3} parent=11 // pred_check_branch
          %437 = sbr.rel (%p435) target = $region48
        $region47: #{dyn_no_bottleneck_forward.3} parent=11 // pred_region
          %439 = vsyncadd [#allocation13], 0
          %s440 = sshll.u32 %s11, 4
          %s441 = int_to_ptr.hbm [resolvable:$true] %s440
          %s442 = sshll.u32 [#allocation14], 4
          %s443 = int_to_ptr.vmem [resolvable:$true] %s442
          %448 = dma.hbm_to_vmem [thread:$0]  %s441, 512, %s443, [#allocation13], 128, 128, 8
        $region48: #{dyn_no_bottleneck_forward.3} parent=11 // pred_fallthru
          _
        // Predicated region
        $region49: #{dyn_no_bottleneck_forward.3} parent=11 // pred_check
          %p449 = pneg %p312
        $region50: #{dyn_no_bottleneck_forward.3} parent=11 // pred_check_branch
          %451 = sbr.rel (%p449) target = $region52
        $region51: #{dyn_no_bottleneck_forward.3} parent=11 // pred_region
          %453 = vsyncadd [#allocation16], 0
          %s454 = sshll.u32 %s12, 4
          %s455 = int_to_ptr.hbm [resolvable:$true] %s454
          %s456 = sshll.u32 [#allocation15], 4
          %s457 = int_to_ptr.vmem [resolvable:$true] %s456
          %462 = dma.hbm_to_vmem [thread:$0]  %s455, 73728, %s457, [#allocation16], 256, 256, 16
        $region52: #{dyn_no_bottleneck_forward.3} parent=11 // pred_fallthru
          _
      $region12: #{dyn_no_bottleneck_forward.3} parent=5 // pred_fallthru
        _
      %p463 = scmp.lt.s32.totalorder %s24, 2
      // Predicated region
      $region53: #{dyn_no_bottleneck_forward.3} parent=5 // pred_check
        %p464 = pneg %p463
      $region54: #{dyn_no_bottleneck_forward.3} parent=5 // pred_check_branch
        %466 = sbr.rel (%p464) target = $region56
      $region55: #{dyn_no_bottleneck_forward.3} parent=5 // pred_region
        // Predicated region
        $region57: #{dyn_no_bottleneck_forward.3} parent=55 // pred_check
          %p467 = pneg %p44
        $region58: #{dyn_no_bottleneck_forward.3} parent=55 // pred_check_branch
          %469 = sbr.rel (%p467) target = $region60
        $region59: #{dyn_no_bottleneck_forward.3} parent=55 // pred_region
          %p470 = scmp.lt.s32.totalorder %s24, 1
          %s471 = scalar_select %p470, %s24, 1
          %s472 = smul.addr %s471, 16
          %s473 = smul.addr %s472, 8
          %s474 = scalar_lea.vmem %s0, %s473
        $region60: #{dyn_no_bottleneck_forward.3} parent=55 // pred_fallthru
          _
        // Predicated region
        $region61: #{dyn_no_bottleneck_forward.3} parent=55 // pred_check
          %p475 = pneg %p70
        $region62: #{dyn_no_bottleneck_forward.3} parent=55 // pred_check_branch
          %477 = sbr.rel (%p475) target = $region64
        $region63: #{dyn_no_bottleneck_forward.3} parent=55 // pred_region
          %p478 = scmp.lt.s32.totalorder %s24, 1
          %s479 = scalar_select %p478, %s24, 1
          %s480 = smul.addr %s479, 16
          %s481 = smul.addr %s480, 8
          %s482 = scalar_lea.vmem %s1, %s481
        $region64: #{dyn_no_bottleneck_forward.3} parent=55 // pred_fallthru
          _
        // Predicated region
        $region65: #{dyn_no_bottleneck_forward.3} parent=55 // pred_check
          %p483 = pneg %p96
        $region66: #{dyn_no_bottleneck_forward.3} parent=55 // pred_check_branch
          %485 = sbr.rel (%p483) target = $region68
        $region67: #{dyn_no_bottleneck_forward.3} parent=55 // pred_region
          %p486 = scmp.lt.s32.totalorder %s24, 1
          %s487 = scalar_select %p486, %s24, 1
          %s488 = scalar_lea.vmem %s2, %s487
        $region68: #{dyn_no_bottleneck_forward.3} parent=55 // pred_fallthru
          _
      $region56: #{dyn_no_bottleneck_forward.3} parent=5 // pred_fallthru
        _
      %p489 = scmp.le.s32.totalorder 1, %s24
      %p490 = scmp.lt.s32.totalorder %s24, 3
      %p491 = pnand %p489, %p490
      %p492 = pneg %p491
      // Predicated region
      $region69: #{dyn_no_bottleneck_forward.3} parent=5 // pred_check
        _
      $region70: #{dyn_no_bottleneck_forward.3} parent=5 // pred_check_branch
        %494 = sbr.rel (%p491) target = $region72
      $region71: #{dyn_no_bottleneck_forward.3} parent=5 // pred_region
        %s495 = ssub.s32 %s24, 1
        // Predicated region
        $region73: #{dyn_no_bottleneck_forward.3} parent=71 // pred_check
          %p496 = pneg %p123
        $region74: #{dyn_no_bottleneck_forward.3} parent=71 // pred_check_branch
          %498 = sbr.rel (%p496) target = $region76
        $region75: #{dyn_no_bottleneck_forward.3} parent=71 // pred_region
          %500 = dma.done [#allocation5], 32
        $region76: #{dyn_no_bottleneck_forward.3} parent=71 // pred_fallthru
          _
        // Predicated region
        $region77: #{dyn_no_bottleneck_forward.3} parent=71 // pred_check
          %p501 = pneg %p144
        $region78: #{dyn_no_bottleneck_forward.3} parent=71 // pred_check_branch
          %503 = sbr.rel (%p501) target = $region80
        $region79: #{dyn_no_bottleneck_forward.3} parent=71 // pred_region
          %505 = dma.done [#allocation7], 32
        $region80: #{dyn_no_bottleneck_forward.3} parent=71 // pred_fallthru
          _
        // Predicated region
        $region81: #{dyn_no_bottleneck_forward.3} parent=71 // pred_check
          %p506 = pneg %p165
        $region82: #{dyn_no_bottleneck_forward.3} parent=71 // pred_check_branch
          %508 = sbr.rel (%p506) target = $region84
        $region83: #{dyn_no_bottleneck_forward.3} parent=71 // pred_region
          %510 = dma.done [#allocation7], 32
        $region84: #{dyn_no_bottleneck_forward.3} parent=71 // pred_fallthru
          _
        // Predicated region
        $region85: #{dyn_no_bottleneck_forward.3} parent=71 // pred_check
          %p511 = pneg %p186
        $region86: #{dyn_no_bottleneck_forward.3} parent=71 // pred_check_branch
          %513 = sbr.rel (%p511) target = $region88
        $region87: #{dyn_no_bottleneck_forward.3} parent=71 // pred_region
          %515 = dma.done [#allocation10], 32
        $region88: #{dyn_no_bottleneck_forward.3} parent=71 // pred_fallthru
          _
        // Predicated region
        $region89: #{dyn_no_bottleneck_forward.3} parent=71 // pred_check
          %p516 = pneg %p228
        $region90: #{dyn_no_bottleneck_forward.3} parent=71 // pred_check_branch
          %518 = sbr.rel (%p516) target = $region92
        $region91: #{dyn_no_bottleneck_forward.3} parent=71 // pred_region
          %520 = dma.done [#allocation10], 512
        $region92: #{dyn_no_bottleneck_forward.3} parent=71 // pred_fallthru
          _
        // Predicated region
        $region93: #{dyn_no_bottleneck_forward.3} parent=71 // pred_check
          %p521 = pneg %p270
        $region94: #{dyn_no_bottleneck_forward.3} parent=71 // pred_check_branch
          %523 = sbr.rel (%p521) target = $region96
        $region95: #{dyn_no_bottleneck_forward.3} parent=71 // pred_region
          %525 = dma.done [#allocation13], 1024
        $region96: #{dyn_no_bottleneck_forward.3} parent=71 // pred_fallthru
          _
        // Predicated region
        $region97: #{dyn_no_bottleneck_forward.3} parent=71 // pred_check
          %p526 = pneg %p291
        $region98: #{dyn_no_bottleneck_forward.3} parent=71 // pred_check_branch
          %528 = sbr.rel (%p526) target = $region100
        $region99: #{dyn_no_bottleneck_forward.3} parent=71 // pred_region
          %530 = dma.done [#allocation13], 512
        $region100: #{dyn_no_bottleneck_forward.3} parent=71 // pred_fallthru
          _
        // Predicated region
        $region101: #{dyn_no_bottleneck_forward.3} parent=71 // pred_check
          %p531 = pneg %p312
        $region102: #{dyn_no_bottleneck_forward.3} parent=71 // pred_check_branch
          %533 = sbr.rel (%p531) target = $region104
        $region103: #{dyn_no_bottleneck_forward.3} parent=71 // pred_region
          %535 = dma.done [#allocation16], 73728
        $region104: #{dyn_no_bottleneck_forward.3} parent=71 // pred_fallthru
          _
        %p536 = scmp.lt.s32.totalorder %s29, 1
        %s537 = scalar_select %p536, %s29, 1
        %s538 = smul.addr %s537, 16
        %s539 = smul.addr %s538, 8
        %s540 = scalar_lea.vmem %s0, %s539
        %p541 = pneg %p50
        %p542 = pneg %p47
        %p543 = scmp.lt.s32.totalorder %s29, 1
        %s544 = scalar_select %p543, %s29, 1
        %s545 = smul.addr %s544, 16
        %s546 = smul.addr %s545, 8
        %s547 = scalar_lea.vmem %s1, %s546
        %p548 = pneg %p76
        %p549 = pneg %p73
        %p550 = scmp.lt.s32.totalorder %s29, 1
        %s551 = scalar_select %p550, %s29, 1
        %s552 = scalar_lea.vmem %s2, %s551
        %p553 = pneg %p102
        %p554 = pneg %p99
        %p555 = pneg %p123
        %p556 = pneg %p120
        %p557 = pneg %p144
        %p558 = pneg %p141
        %p559 = pneg %p165
        %p560 = pneg %p162
        %p561 = pneg %p186
        %p562 = pneg %p183
        %p563 = pneg %p207
        %p564 = pneg %p204
        %p565 = pneg %p228
        %p566 = pneg %p225
        %p567 = pneg %p249
        %p568 = pneg %p246
        %p569 = pneg %p270
        %p570 = pneg %p267
        %p571 = pneg %p291
        %p572 = pneg %p288
        %p573 = pneg %p312
        %p574 = pneg %p309
        %p575 = pneg %p338
        %p576 = pneg %p335
        %p577 = scmp.lt.s32.totalorder %s29, 1
        %s578 = scalar_select %p577, %s29, 1
        %s579 = smul.addr %s578, 16
        %s580 = smul.addr %s579, 8
        %s581 = scalar_lea.vmem %s13, %s580
        %p582 = scmp.lt.s32.totalorder %s29, 1
        %s583 = scalar_select %p582, %s29, 1
        %s584 = smul.addr %s583, 16
        %s585 = smul.addr %s584, 8
        %s586 = scalar_lea.vmem %s0, %s585
        %p587 = scmp.lt.s32.totalorder %s29, 1
        %s588 = scalar_select %p587, %s29, 1
        %s589 = smul.addr %s588, 16
        %s590 = smul.addr %s589, 8
        %s591 = scalar_lea.vmem %s1, %s590
        %p592 = scmp.lt.s32.totalorder %s29, 1
        %s593 = scalar_select %p592, %s29, 1
        %s594 = scalar_lea.vmem %s2, %s593
        %p595 = scmp.lt.s32.totalorder %s29, 1
        %s596 = scalar_select %p595, %s29, 1
        %s597 = smul.addr %s596, 16
        %s598 = smul.addr %s597, 8
        %s599 = scalar_lea.vmem %s13, %s598
        %v600 = vld [vmem:[%s586] sm:$0xff]
        %v601 = vld [vmem:[%s586 + $0x8] sm:$0xff]
        %v602 = vld [vmem:[%s586 + $0x10] sm:$0xff]
        %v603 = vld [vmem:[%s586 + $0x18] sm:$0xff]
        %v604 = vld [vmem:[%s586 + $0x20] sm:$0xff]
        %v605 = vld [vmem:[%s586 + $0x28] sm:$0xff]
        %v606 = vld [vmem:[%s586 + $0x30] sm:$0xff]
        %v607 = vld [vmem:[%s586 + $0x38] sm:$0xff]
        %v608 = vld [vmem:[%s586 + $0x40] sm:$0xff]
        %v609 = vld [vmem:[%s586 + $0x48] sm:$0xff]
        %v610 = vld [vmem:[%s586 + $0x50] sm:$0xff]
        %v611 = vld [vmem:[%s586 + $0x58] sm:$0xff]
        %v612 = vld [vmem:[%s586 + $0x60] sm:$0xff]
        %v613 = vld [vmem:[%s586 + $0x68] sm:$0xff]
        %v614 = vld [vmem:[%s586 + $0x70] sm:$0xff]
        %v615 = vld [vmem:[%s586 + $0x78] sm:$0xff]
        %v616 = vld [vmem:[%s7] sm:$0xff]
        %v617 = vld [vmem:[%s7 + $0x8] sm:$0xff]
        %v618 = vld [vmem:[%s7 + $0x10] sm:$0xff]
        %v619 = vld [vmem:[%s7 + $0x18] sm:$0xff]
        %v620 = vld [vmem:[%s7 + $0x20] sm:$0xff]
        %v621 = vld [vmem:[%s7 + $0x28] sm:$0xff]
        %v622 = vld [vmem:[%s7 + $0x30] sm:$0xff]
        %v623 = vld [vmem:[%s7 + $0x38] sm:$0xff]
        %v624 = vld [vmem:[%s7 + $0x40] sm:$0xff]
        %v625 = vld [vmem:[%s7 + $0x48] sm:$0xff]
        %v626 = vld [vmem:[%s7 + $0x50] sm:$0xff]
        %v627 = vld [vmem:[%s7 + $0x58] sm:$0xff]
        %v628 = vld [vmem:[%s7 + $0x60] sm:$0xff]
        %v629 = vld [vmem:[%s7 + $0x68] sm:$0xff]
        %v630 = vld [vmem:[%s7 + $0x70] sm:$0xff]
        %v631 = vld [vmem:[%s7 + $0x78] sm:$0xff]
        %v632 = vld [vmem:[%s7 + $0x80] sm:$0xff]
        %v633 = vld [vmem:[%s7 + $0x88] sm:$0xff]
        %v634 = vld [vmem:[%s7 + $0x90] sm:$0xff]
        %v635 = vld [vmem:[%s7 + $0x98] sm:$0xff]
        %v636 = vld [vmem:[%s7 + $0xa0] sm:$0xff]
        %v637 = vld [vmem:[%s7 + $0xa8] sm:$0xff]
        %v638 = vld [vmem:[%s7 + $0xb0] sm:$0xff]
        %v639 = vld [vmem:[%s7 + $0xb8] sm:$0xff]
        %v640 = vld [vmem:[%s7 + $0xc0] sm:$0xff]
        %v641 = vld [vmem:[%s7 + $0xc8] sm:$0xff]
        %v642 = vld [vmem:[%s7 + $0xd0] sm:$0xff]
        %v643 = vld [vmem:[%s7 + $0xd8] sm:$0xff]
        %v644 = vld [vmem:[%s7 + $0xe0] sm:$0xff]
        %v645 = vld [vmem:[%s7 + $0xe8] sm:$0xff]
        %v646 = vld [vmem:[%s7 + $0xf0] sm:$0xff]
        %v647 = vld [vmem:[%s7 + $0xf8] sm:$0xff]
        %v648 = vld [vmem:[#allocation11] sm:$0xff]
        %v649 = vld [vmem:[#allocation11 + $0x8] sm:$0xff]
        %v650 = vld [vmem:[#allocation11 + $0x10] sm:$0xff]
        %v651 = vld [vmem:[#allocation11 + $0x18] sm:$0xff]
        %v652 = vadd.f32 %v600, %v602
        %v653 = vadd.f32 %v652, %v604
        %v654 = vadd.f32 %v653, %v606
        %v655 = vadd.f32 %v654, %v608
        %v656 = vadd.f32 %v655, %v610
        %v657 = vadd.f32 %v656, %v612
        %v658 = vadd.f32 %v657, %v614
        %v659 = vrot.slane %v658, 4
        %v660 = vadd.f32 %v658, %v659
        %v661 = vrot.slane %v660, 2
        %v662 = vadd.f32 %v660, %v661
        %v663 = vrot.slane %v662, 1
        %v664 = vadd.f32 %v662, %v663
        %v665 = vadd.f32 %v601, %v603
        %v666 = vadd.f32 %v665, %v605
        %v667 = vadd.f32 %v666, %v607
        %v668 = vadd.f32 %v667, %v609
        %v669 = vadd.f32 %v668, %v611
        %v670 = vadd.f32 %v669, %v613
        %v671 = vadd.f32 %v670, %v615
        %v672 = vrot.slane %v671, 4
        %v673 = vadd.f32 %v671, %v672
        %v674 = vrot.slane %v673, 2
        %v675 = vadd.f32 %v673, %v674
        %v676 = vrot.slane %v675, 1
        %v677 = vadd.f32 %v675, %v676
        %678 = vmatpush.msra.mxu0 %v631
        %679 = vmatpush.msra.mxu0 %v630
        %680 = vmatpush.msra.mxu0 %v629
        %681 = vmatpush.msra.mxu0 %v628
        %682 = vmatpush.msra.mxu0 %v627
        %683 = vmatpush.msra.mxu0 %v626
        %684 = vmatpush.msra.mxu0 %v625
        %685 = vmatpush.msra.mxu0 %v624
        %686 = vmatpush.msra.mxu0 %v623
        %687 = vmatpush.msra.mxu0 %v622
        %688 = vmatpush.msra.mxu0 %v621
        %689 = vmatpush.msra.mxu0 %v620
        %690 = vmatpush.msra.mxu0 %v619
        %691 = vmatpush.msra.mxu0 %v618
        %692 = vmatpush.msra.mxu0 %v617
        %693 = vmatpush.msra.mxu0 %v616
        %694 = vmatmul.f32.gmra.mxu0 %v664
        %v695 = vpop.f32.mrf.mxu0
        %v696 = vadd.f32 0.0, %v695
        %697 = vdwg.mxu0
        %698 = vmatpush.msra.mxu0 %v647
        %699 = vmatpush.msra.mxu0 %v646
        %700 = vmatpush.msra.mxu0 %v645
        %701 = vmatpush.msra.mxu0 %v644
        %702 = vmatpush.msra.mxu0 %v643
        %703 = vmatpush.msra.mxu0 %v642
        %704 = vmatpush.msra.mxu0 %v641
        %705 = vmatpush.msra.mxu0 %v640
        %706 = vmatpush.msra.mxu0 %v639
        %707 = vmatpush.msra.mxu0 %v638
        %708 = vmatpush.msra.mxu0 %v637
        %709 = vmatpush.msra.mxu0 %v636
        %710 = vmatpush.msra.mxu0 %v635
        %711 = vmatpush.msra.mxu0 %v634
        %712 = vmatpush.msra.mxu0 %v633
        %713 = vmatpush.msra.mxu0 %v632
        %714 = vmatmul.f32.gmra.mxu0 %v677
        %v715 = vpop.f32.mrf.mxu0
        %v716 = vadd.f32 %v696, %v715
        %717 = vdwg.mxu0
        %v718 = vrcp.pop 1024.0
        %v719 = vmul.f32 1024.0, %v718
        %v720 = vsub.f32 1.0, %v719
        %v721 = vmul.f32 %v718, %v720
        %v722 = vadd.f32 %v718, %v721
        %vm723 = vweird.f32 %v718
        %v724 = vsel %vm723, %v718, %v722
        %v725 = vmul.f32 %v716, %v724
        %vm726 = vcmask 130048
        %v728 = vsel %vm726, %v725, 0
        %730 = vmatpush.msra.mxu0 0.0
        %731 = vmatpush.msra.mxu0 0.0
        %732 = vmatpush.msra.mxu0 0.0
        %733 = vmatpush.msra.mxu0 0.0
        %734 = vmatpush.msra.mxu0 0.0
        %735 = vmatpush.msra.mxu0 0.0
        %736 = vmatpush.msra.mxu0 0.0
        %737 = vmatpush.msra.mxu0 0.0
        %738 = vmatpush.msra.mxu0 0.0
        %739 = vmatpush.msra.mxu0 0.0
        %740 = vmatpush.msra.mxu0 0.0
        %741 = vmatpush.msra.mxu0 0.0
        %742 = vmatpush.msra.mxu0 0.0
        %743 = vmatpush.msra.mxu0 0.0
        %744 = vmatpush.msra.mxu0 %v650
        %745 = vmatpush.msra.mxu0 %v648
        %746 = vmatmul.f32.gmra.mxu0 %v728
        %v747 = vpop.f32.mrf.mxu0
        %v748 = vadd.f32 0.0, %v747
        %749 = vdwg.mxu0
        %750 = vmatpush.msra.mxu0 0.0
        %751 = vmatpush.msra.mxu0 0.0
        %752 = vmatpush.msra.mxu0 0.0
        %753 = vmatpush.msra.mxu0 0.0
        %754 = vmatpush.msra.mxu0 0.0
        %755 = vmatpush.msra.mxu0 0.0
        %756 = vmatpush.msra.mxu0 0.0
        %757 = vmatpush.msra.mxu0 0.0
        %758 = vmatpush.msra.mxu0 0.0
        %759 = vmatpush.msra.mxu0 0.0
        %760 = vmatpush.msra.mxu0 0.0
        %761 = vmatpush.msra.mxu0 0.0
        %762 = vmatpush.msra.mxu0 0.0
        %763 = vmatpush.msra.mxu0 0.0
        %764 = vmatpush.msra.mxu0 %v651
        %765 = vmatpush.msra.mxu0 %v649
        %766 = vmatmul.f32.gmra.mxu0 %v728
        %v767 = vpop.f32.mrf.mxu0
        %v768 = vadd.f32 0.0, %v767
        %769 = vdwg.mxu0
        %v770 = vperm.slane %v748, 0
        %v771 = vperm.slane %v768, 0
        %v772 = vsub.f32 %v600, %v770
        %v773 = vsub.f32 %v601, %v771
        %v774 = vsub.f32 %v602, %v770
        %v775 = vsub.f32 %v603, %v771
        %v776 = vsub.f32 %v604, %v770
        %v777 = vsub.f32 %v605, %v771
        %v778 = vsub.f32 %v606, %v770
        %v779 = vsub.f32 %v607, %v771
        %v780 = vsub.f32 %v608, %v770
        %v781 = vsub.f32 %v609, %v771
        %v782 = vsub.f32 %v610, %v770
        %v783 = vsub.f32 %v611, %v771
        %v784 = vsub.f32 %v612, %v770
        %v785 = vsub.f32 %v613, %v771
        %v786 = vsub.f32 %v614, %v770
        %v787 = vsub.f32 %v615, %v771
        %v788 = vmul.f32 %v772, %v772
        %v789 = vmul.f32 %v773, %v773
        %v790 = vmul.f32 %v774, %v774
        %v791 = vmul.f32 %v775, %v775
        %v792 = vmul.f32 %v776, %v776
        %v793 = vmul.f32 %v777, %v777
        %v794 = vmul.f32 %v778, %v778
        %v795 = vmul.f32 %v779, %v779
        %v796 = vmul.f32 %v780, %v780
        %v797 = vmul.f32 %v781, %v781
        %v798 = vmul.f32 %v782, %v782
        %v799 = vmul.f32 %v783, %v783
        %v800 = vmul.f32 %v784, %v784
        %v801 = vmul.f32 %v785, %v785
        %v802 = vmul.f32 %v786, %v786
        %v803 = vmul.f32 %v787, %v787
        %v804 = vadd.f32 %v788, %v790
        %v805 = vadd.f32 %v804, %v792
        %v806 = vadd.f32 %v805, %v794
        %v807 = vadd.f32 %v806, %v796
        %v808 = vadd.f32 %v807, %v798
        %v809 = vadd.f32 %v808, %v800
        %v810 = vadd.f32 %v809, %v802
        %v811 = vrot.slane %v810, 4
        %v812 = vadd.f32 %v810, %v811
        %v813 = vrot.slane %v812, 2
        %v814 = vadd.f32 %v812, %v813
        %v815 = vrot.slane %v814, 1
        %v816 = vadd.f32 %v814, %v815
        %v817 = vadd.f32 %v789, %v791
        %v818 = vadd.f32 %v817, %v793
        %v819 = vadd.f32 %v818, %v795
        %v820 = vadd.f32 %v819, %v797
        %v821 = vadd.f32 %v820, %v799
        %v822 = vadd.f32 %v821, %v801
        %v823 = vadd.f32 %v822, %v803
        %v824 = vrot.slane %v823, 4
        %v825 = vadd.f32 %v823, %v824
        %v826 = vrot.slane %v825, 2
        %v827 = vadd.f32 %v825, %v826
        %v828 = vrot.slane %v827, 1
        %v829 = vadd.f32 %v827, %v828
        %830 = vmatpush.msra.mxu0 %v631
        %831 = vmatpush.msra.mxu0 %v630
        %832 = vmatpush.msra.mxu0 %v629
        %833 = vmatpush.msra.mxu0 %v628
        %834 = vmatpush.msra.mxu0 %v627
        %835 = vmatpush.msra.mxu0 %v626
        %836 = vmatpush.msra.mxu0 %v625
        %837 = vmatpush.msra.mxu0 %v624
        %838 = vmatpush.msra.mxu0 %v623
        %839 = vmatpush.msra.mxu0 %v622
        %840 = vmatpush.msra.mxu0 %v621
        %841 = vmatpush.msra.mxu0 %v620
        %842 = vmatpush.msra.mxu0 %v619
        %843 = vmatpush.msra.mxu0 %v618
        %844 = vmatpush.msra.mxu0 %v617
        %845 = vmatpush.msra.mxu0 %v616
        %846 = vmatmul.f32.gmra.mxu0 %v816
        %v847 = vpop.f32.mrf.mxu0
        %v848 = vadd.f32 0.0, %v847
        %849 = vdwg.mxu0
        %850 = vmatpush.msra.mxu0 %v647
        %851 = vmatpush.msra.mxu0 %v646
        %852 = vmatpush.msra.mxu0 %v645
        %853 = vmatpush.msra.mxu0 %v644
        %854 = vmatpush.msra.mxu0 %v643
        %855 = vmatpush.msra.mxu0 %v642
        %856 = vmatpush.msra.mxu0 %v641
        %857 = vmatpush.msra.mxu0 %v640
        %858 = vmatpush.msra.mxu0 %v639
        %859 = vmatpush.msra.mxu0 %v638
        %860 = vmatpush.msra.mxu0 %v637
        %861 = vmatpush.msra.mxu0 %v636
        %862 = vmatpush.msra.mxu0 %v635
        %863 = vmatpush.msra.mxu0 %v634
        %864 = vmatpush.msra.mxu0 %v633
        %865 = vmatpush.msra.mxu0 %v632
        %866 = vmatmul.f32.gmra.mxu0 %v829
        %v867 = vpop.f32.mrf.mxu0
        %v868 = vadd.f32 %v848, %v867
        %869 = vdwg.mxu0
        %v870 = vmul.f32 %v868, %v724
        %v871 = vadd.f32 %v870, 1e-05
        %v872 = vrsqrt.pop %v871
        %v873 = vmul.f32 %v872, %v871
        %v874 = vmul.f32 %v873, %v872
        %v875 = vmul.f32 0.5, %v874
        %v876 = vsub.f32 1.5, %v875
        %v877 = vmul.f32 %v872, %v876
        %vm878 = vweird.f32 %v871
        %vm879 = vweird.f32 %v872
        %vm880 = vmor %vm878, %vm879
        %v881 = vsel %vm880, %v872, %v877
        %v883 = vsel %vm726, %v881, 0
        %885 = vmatpush.msra.mxu0 0.0
        %886 = vmatpush.msra.mxu0 0.0
        %887 = vmatpush.msra.mxu0 0.0
        %888 = vmatpush.msra.mxu0 0.0
        %889 = vmatpush.msra.mxu0 0.0
        %890 = vmatpush.msra.mxu0 0.0
        %891 = vmatpush.msra.mxu0 0.0
        %892 = vmatpush.msra.mxu0 0.0
        %893 = vmatpush.msra.mxu0 0.0
        %894 = vmatpush.msra.mxu0 0.0
        %895 = vmatpush.msra.mxu0 0.0
        %896 = vmatpush.msra.mxu0 0.0
        %897 = vmatpush.msra.mxu0 0.0
        %898 = vmatpush.msra.mxu0 0.0
        %899 = vmatpush.msra.mxu0 %v650
        %900 = vmatpush.msra.mxu0 %v648
        %901 = vmatmul.f32.gmra.mxu0 %v883
        %v902 = vpop.f32.mrf.mxu0
        %v903 = vadd.f32 0.0, %v902
        %904 = vdwg.mxu0
        %905 = vmatpush.msra.mxu0 0.0
        %906 = vmatpush.msra.mxu0 0.0
        %907 = vmatpush.msra.mxu0 0.0
        %908 = vmatpush.msra.mxu0 0.0
        %909 = vmatpush.msra.mxu0 0.0
        %910 = vmatpush.msra.mxu0 0.0
        %911 = vmatpush.msra.mxu0 0.0
        %912 = vmatpush.msra.mxu0 0.0
        %913 = vmatpush.msra.mxu0 0.0
        %914 = vmatpush.msra.mxu0 0.0
        %915 = vmatpush.msra.mxu0 0.0
        %916 = vmatpush.msra.mxu0 0.0
        %917 = vmatpush.msra.mxu0 0.0
        %918 = vmatpush.msra.mxu0 0.0
        %919 = vmatpush.msra.mxu0 %v651
        %920 = vmatpush.msra.mxu0 %v649
        %921 = vmatmul.f32.gmra.mxu0 %v883
        %v922 = vpop.f32.mrf.mxu0
        %v923 = vadd.f32 0.0, %v922
        %924 = vdwg.mxu0
        %v925 = vld [vmem:[#allocation4] sm:$0x3]
        %v927 = vperm.slane %v925, 0
        %v928 = vperm.slane %v925, 1
        %v931 = vmul.f32 %v903, %v927
        %v932 = vmul.f32 %v923, %v928
        %v933 = vperm.slane %v931, 0
        %v934 = vperm.slane %v932, 0
        %v935 = vmul.f32 %v772, %v933
        %v936 = vmul.f32 %v773, %v934
        %v937 = vmul.f32 %v774, %v933
        %v938 = vmul.f32 %v775, %v934
        %v939 = vmul.f32 %v776, %v933
        %v940 = vmul.f32 %v777, %v934
        %v941 = vmul.f32 %v778, %v933
        %v942 = vmul.f32 %v779, %v934
        %v943 = vmul.f32 %v780, %v933
        %v944 = vmul.f32 %v781, %v934
        %v945 = vmul.f32 %v782, %v933
        %v946 = vmul.f32 %v783, %v934
        %v947 = vmul.f32 %v784, %v933
        %v948 = vmul.f32 %v785, %v934
        %v949 = vmul.f32 %v786, %v933
        %v950 = vmul.f32 %v787, %v934
        %v951 = vld [vmem:[#allocation6] sm:$0x3]
        %v953 = vperm.slane %v951, 0
        %v954 = vperm.slane %v951, 1
        %v957 = vadd.f32 %v935, %v953
        %v958 = vadd.f32 %v936, %v954
        %v959 = vadd.f32 %v937, %v953
        %v960 = vadd.f32 %v938, %v954
        %v961 = vadd.f32 %v939, %v953
        %v962 = vadd.f32 %v940, %v954
        %v963 = vadd.f32 %v941, %v953
        %v964 = vadd.f32 %v942, %v954
        %v965 = vadd.f32 %v943, %v953
        %v966 = vadd.f32 %v944, %v954
        %v967 = vadd.f32 %v945, %v953
        %v968 = vadd.f32 %v946, %v954
        %v969 = vadd.f32 %v947, %v953
        %v970 = vadd.f32 %v948, %v954
        %v971 = vadd.f32 %v949, %v953
        %v972 = vadd.f32 %v950, %v954
        %v973 = vmax.f32 %v957, 0.0
        %v974 = vmax.f32 %v958, 0.0
        %v975 = vmax.f32 %v959, 0.0
        %v976 = vmax.f32 %v960, 0.0
        %v977 = vmax.f32 %v961, 0.0
        %v978 = vmax.f32 %v962, 0.0
        %v979 = vmax.f32 %v963, 0.0
        %v980 = vmax.f32 %v964, 0.0
        %v981 = vmax.f32 %v965, 0.0
        %v982 = vmax.f32 %v966, 0.0
        %v983 = vmax.f32 %v967, 0.0
        %v984 = vmax.f32 %v968, 0.0
        %v985 = vmax.f32 %v969, 0.0
        %v986 = vmax.f32 %v970, 0.0
        %v987 = vmax.f32 %v971, 0.0
        %v988 = vmax.f32 %v972, 0.0
        %v989 = vadd.f32 %v973, %v975
        %v990 = vadd.f32 %v989, %v977
        %v991 = vadd.f32 %v990, %v979
        %v992 = vadd.f32 %v991, %v981
        %v993 = vadd.f32 %v992, %v983
        %v994 = vadd.f32 %v993, %v985
        %v995 = vadd.f32 %v994, %v987
        %v996 = vrot.slane %v995, 4
        %v997 = vadd.f32 %v995, %v996
        %v998 = vrot.slane %v997, 2
        %v999 = vadd.f32 %v997, %v998
        %v1000 = vrot.slane %v999, 1
        %v1001 = vadd.f32 %v999, %v1000
        %v1002 = vadd.f32 %v974, %v976
        %v1003 = vadd.f32 %v1002, %v978
        %v1004 = vadd.f32 %v1003, %v980
        %v1005 = vadd.f32 %v1004, %v982
        %v1006 = vadd.f32 %v1005, %v984
        %v1007 = vadd.f32 %v1006, %v986
        %v1008 = vadd.f32 %v1007, %v988
        %v1009 = vrot.slane %v1008, 4
        %v1010 = vadd.f32 %v1008, %v1009
        %v1011 = vrot.slane %v1010, 2
        %v1012 = vadd.f32 %v1010, %v1011
        %v1013 = vrot.slane %v1012, 1
        %v1014 = vadd.f32 %v1012, %v1013
        %v1015 = vld [vmem:[%s9] sm:$0xff]
        %v1016 = vld [vmem:[%s9 + $0x8] sm:$0xff]
        %v1017 = vld [vmem:[%s9 + $0x10] sm:$0xff]
        %v1018 = vld [vmem:[%s9 + $0x18] sm:$0xff]
        %v1019 = vld [vmem:[%s9 + $0x20] sm:$0xff]
        %v1020 = vld [vmem:[%s9 + $0x28] sm:$0xff]
        %v1021 = vld [vmem:[%s9 + $0x30] sm:$0xff]
        %v1022 = vld [vmem:[%s9 + $0x38] sm:$0xff]
        %v1023 = vld [vmem:[%s9 + $0x40] sm:$0xff]
        %v1024 = vld [vmem:[%s9 + $0x48] sm:$0xff]
        %v1025 = vld [vmem:[%s9 + $0x50] sm:$0xff]
        %v1026 = vld [vmem:[%s9 + $0x58] sm:$0xff]
        %v1027 = vld [vmem:[%s9 + $0x60] sm:$0xff]
        %v1028 = vld [vmem:[%s9 + $0x68] sm:$0xff]
        %v1029 = vld [vmem:[%s9 + $0x70] sm:$0xff]
        %v1030 = vld [vmem:[%s9 + $0x78] sm:$0xff]
        %v1031 = vld [vmem:[%s9 + $0x80] sm:$0xff]
        %v1032 = vld [vmem:[%s9 + $0x88] sm:$0xff]
        %v1033 = vld [vmem:[%s9 + $0x90] sm:$0xff]
        %v1034 = vld [vmem:[%s9 + $0x98] sm:$0xff]
        %v1035 = vld [vmem:[%s9 + $0xa0] sm:$0xff]
        %v1036 = vld [vmem:[%s9 + $0xa8] sm:$0xff]
        %v1037 = vld [vmem:[%s9 + $0xb0] sm:$0xff]
        %v1038 = vld [vmem:[%s9 + $0xb8] sm:$0xff]
        %v1039 = vld [vmem:[%s9 + $0xc0] sm:$0xff]
        %v1040 = vld [vmem:[%s9 + $0xc8] sm:$0xff]
        %v1041 = vld [vmem:[%s9 + $0xd0] sm:$0xff]
        %v1042 = vld [vmem:[%s9 + $0xd8] sm:$0xff]
        %v1043 = vld [vmem:[%s9 + $0xe0] sm:$0xff]
        %v1044 = vld [vmem:[%s9 + $0xe8] sm:$0xff]
        %v1045 = vld [vmem:[%s9 + $0xf0] sm:$0xff]
        %v1046 = vld [vmem:[%s9 + $0xf8] sm:$0xff]
        %1047 = vmatpush.msra.mxu0 %v1030
        %1048 = vmatpush.msra.mxu0 %v1029
        %1049 = vmatpush.msra.mxu0 %v1028
        %1050 = vmatpush.msra.mxu0 %v1027
        %1051 = vmatpush.msra.mxu0 %v1026
        %1052 = vmatpush.msra.mxu0 %v1025
        %1053 = vmatpush.msra.mxu0 %v1024
        %1054 = vmatpush.msra.mxu0 %v1023
        %1055 = vmatpush.msra.mxu0 %v1022
        %1056 = vmatpush.msra.mxu0 %v1021
        %1057 = vmatpush.msra.mxu0 %v1020
        %1058 = vmatpush.msra.mxu0 %v1019
        %1059 = vmatpush.msra.mxu0 %v1018
        %1060 = vmatpush.msra.mxu0 %v1017
        %1061 = vmatpush.msra.mxu0 %v1016
        %1062 = vmatpush.msra.mxu0 %v1015
        %1063 = vmatmul.f32.gmra.mxu0 %v1001
        %v1064 = vpop.f32.mrf.mxu0
        %v1065 = vadd.f32 0.0, %v1064
        %1066 = vdwg.mxu0
        %1067 = vmatpush.msra.mxu0 %v1046
        %1068 = vmatpush.msra.mxu0 %v1045
        %1069 = vmatpush.msra.mxu0 %v1044
        %1070 = vmatpush.msra.mxu0 %v1043
        %1071 = vmatpush.msra.mxu0 %v1042
        %1072 = vmatpush.msra.mxu0 %v1041
        %1073 = vmatpush.msra.mxu0 %v1040
        %1074 = vmatpush.msra.mxu0 %v1039
        %1075 = vmatpush.msra.mxu0 %v1038
        %1076 = vmatpush.msra.mxu0 %v1037
        %1077 = vmatpush.msra.mxu0 %v1036
        %1078 = vmatpush.msra.mxu0 %v1035
        %1079 = vmatpush.msra.mxu0 %v1034
        %1080 = vmatpush.msra.mxu0 %v1033
        %1081 = vmatpush.msra.mxu0 %v1032
        %1082 = vmatpush.msra.mxu0 %v1031
        %1083 = vmatmul.f32.gmra.mxu0 %v1014
        %v1084 = vpop.f32.mrf.mxu0
        %v1085 = vadd.f32 %v1065, %v1084
        %1086 = vdwg.mxu0
        %v1087 = vrcp.pop 512.0
        %v1088 = vmul.f32 512.0, %v1087
        %v1089 = vsub.f32 1.0, %v1088
        %v1090 = vmul.f32 %v1087, %v1089
        %v1091 = vadd.f32 %v1087, %v1090
        %vm1092 = vweird.f32 %v1087
        %v1093 = vsel %vm1092, %v1087, %v1091
        %v1094 = vmul.f32 %v1085, %v1093
        %v1095 = vld [vmem:[#allocation14] sm:$0xff]
        %v1096 = vld [vmem:[#allocation14 + $0x8] sm:$0xff]
        %v1097 = vld [vmem:[#allocation14 + $0x10] sm:$0xff]
        %v1098 = vld [vmem:[#allocation14 + $0x18] sm:$0xff]
        %v1099 = vld [vmem:[%s594] sm:$0x1]
        %vm1100 = vcmask 261120
        %v1102 = vsel %vm1100, %v1094, 0
        %1104 = vmatpush.msra.mxu0 0.0
        %1105 = vmatpush.msra.mxu0 0.0
        %1106 = vmatpush.msra.mxu0 0.0
        %1107 = vmatpush.msra.mxu0 0.0
        %1108 = vmatpush.msra.mxu0 0.0
        %1109 = vmatpush.msra.mxu0 0.0
        %1110 = vmatpush.msra.mxu0 0.0
        %1111 = vmatpush.msra.mxu0 0.0
        %1112 = vmatpush.msra.mxu0 0.0
        %1113 = vmatpush.msra.mxu0 0.0
        %1114 = vmatpush.msra.mxu0 0.0
        %1115 = vmatpush.msra.mxu0 0.0
        %1116 = vmatpush.msra.mxu0 %v1098
        %1117 = vmatpush.msra.mxu0 %v1097
        %1118 = vmatpush.msra.mxu0 %v1096
        %1119 = vmatpush.msra.mxu0 %v1095
        %1120 = vmatmul.f32.gmra.mxu0 %v1102
        %v1121 = vpop.f32.mrf.mxu0
        %v1122 = vadd.f32 %v1099, %v1121
        %1123 = vdwg.mxu0
        %v1124 = vxor.u32 %v1122, 2147483648
        %v1125 = vmul.f32 %v1124, 1.442695
        %v1126 = vpow.pop %v1125
        %v1127 = vadd.f32 %v1126, 1.0
        %v1128 = vrcp.pop %v1127
        %v1129 = vmul.f32 %v1127, %v1128
        %v1130 = vsub.f32 1.0, %v1129
        %v1131 = vmul.f32 %v1128, %v1130
        %v1132 = vadd.f32 %v1128, %v1131
        %vm1133 = vweird.f32 %v1127
        %vm1134 = vweird.f32 %v1128
        %vm1135 = vmor %vm1133, %vm1134
        %v1136 = vsel %vm1135, %v1128, %v1132
        %v1137 = vand.u32 2147483647, %v1127
        %vm1138 = vcmp.eq.f32.partialorder %v1137, 8.507059e+37
        %v1139 = vand.u32 %v1127, 2147483648
        %v1140 = vor.u32 1.1754944e-38, %v1139
        %v1141 = vsel %vm1138, %v1140, %v1136
        %v1142 = vmul.f32 1.0, %v1141
        %v1143 = vld [vmem:[#allocation12] sm:$0xff]
        %v1144 = vld [vmem:[#allocation12 + $0x8] sm:$0xff]
        %v1145 = vld [vmem:[#allocation12 + $0x10] sm:$0xff]
        %v1146 = vld [vmem:[#allocation12 + $0x18] sm:$0xff]
        %v1147 = vld [vmem:[#allocation12 + $0x20] sm:$0xff]
        %v1148 = vld [vmem:[#allocation12 + $0x28] sm:$0xff]
        %v1149 = vld [vmem:[#allocation12 + $0x30] sm:$0xff]
        %v1150 = vld [vmem:[#allocation12 + $0x38] sm:$0xff]
        %v1152 = vsel %vm1100, %v1142, 0
        %1154 = vmatpush.msra.mxu0 0.0
        %1155 = vmatpush.msra.mxu0 0.0
        %1156 = vmatpush.msra.mxu0 0.0
        %1157 = vmatpush.msra.mxu0 0.0
        %1158 = vmatpush.msra.mxu0 0.0
        %1159 = vmatpush.msra.mxu0 0.0
        %1160 = vmatpush.msra.mxu0 0.0
        %1161 = vmatpush.msra.mxu0 0.0
        %1162 = vmatpush.msra.mxu0 0.0
        %1163 = vmatpush.msra.mxu0 0.0
        %1164 = vmatpush.msra.mxu0 0.0
        %1165 = vmatpush.msra.mxu0 0.0
        %1166 = vmatpush.msra.mxu0 %v1149
        %1167 = vmatpush.msra.mxu0 %v1147
        %1168 = vmatpush.msra.mxu0 %v1145
        %1169 = vmatpush.msra.mxu0 %v1143
        %1170 = vmatmul.f32.gmra.mxu0 %v1152
        %v1171 = vpop.f32.mrf.mxu0
        %v1172 = vadd.f32 0.0, %v1171
        %1173 = vdwg.mxu0
        %1174 = vmatpush.msra.mxu0 0.0
        %1175 = vmatpush.msra.mxu0 0.0
        %1176 = vmatpush.msra.mxu0 0.0
        %1177 = vmatpush.msra.mxu0 0.0
        %1178 = vmatpush.msra.mxu0 0.0
        %1179 = vmatpush.msra.mxu0 0.0
        %1180 = vmatpush.msra.mxu0 0.0
        %1181 = vmatpush.msra.mxu0 0.0
        %1182 = vmatpush.msra.mxu0 0.0
        %1183 = vmatpush.msra.mxu0 0.0
        %1184 = vmatpush.msra.mxu0 0.0
        %1185 = vmatpush.msra.mxu0 0.0
        %1186 = vmatpush.msra.mxu0 %v1150
        %1187 = vmatpush.msra.mxu0 %v1148
        %1188 = vmatpush.msra.mxu0 %v1146
        %1189 = vmatpush.msra.mxu0 %v1144
        %1190 = vmatmul.f32.gmra.mxu0 %v1152
        %v1191 = vpop.f32.mrf.mxu0
        %v1192 = vadd.f32 0.0, %v1191
        %1193 = vdwg.mxu0
        %v1194 = vld [vmem:[#allocation8] sm:$0x3]
        %v1196 = vperm.slane %v1194, 0
        %v1197 = vperm.slane %v1194, 1
        %v1200 = vmul.f32 %v903, %v1196
        %v1201 = vmul.f32 %v923, %v1197
        %v1202 = vperm.slane %v1200, 0
        %v1203 = vperm.slane %v1201, 0
        %v1204 = vmul.f32 %v772, %v1202
        %v1205 = vmul.f32 %v773, %v1203
        %v1206 = vmul.f32 %v774, %v1202
        %v1207 = vmul.f32 %v775, %v1203
        %v1208 = vmul.f32 %v776, %v1202
        %v1209 = vmul.f32 %v777, %v1203
        %v1210 = vmul.f32 %v778, %v1202
        %v1211 = vmul.f32 %v779, %v1203
        %v1212 = vmul.f32 %v780, %v1202
        %v1213 = vmul.f32 %v781, %v1203
        %v1214 = vmul.f32 %v782, %v1202
        %v1215 = vmul.f32 %v783, %v1203
        %v1216 = vmul.f32 %v784, %v1202
        %v1217 = vmul.f32 %v785, %v1203
        %v1218 = vmul.f32 %v786, %v1202
        %v1219 = vmul.f32 %v787, %v1203
        %v1220 = vld [vmem:[#allocation9] sm:$0x3]
        %v1222 = vperm.slane %v1220, 0
        %v1223 = vperm.slane %v1220, 1
        %v1226 = vadd.f32 %v1204, %v1222
        %v1227 = vadd.f32 %v1205, %v1223
        %v1228 = vadd.f32 %v1206, %v1222
        %v1229 = vadd.f32 %v1207, %v1223
        %v1230 = vadd.f32 %v1208, %v1222
        %v1231 = vadd.f32 %v1209, %v1223
        %v1232 = vadd.f32 %v1210, %v1222
        %v1233 = vadd.f32 %v1211, %v1223
        %v1234 = vadd.f32 %v1212, %v1222
        %v1235 = vadd.f32 %v1213, %v1223
        %v1236 = vadd.f32 %v1214, %v1222
        %v1237 = vadd.f32 %v1215, %v1223
        %v1238 = vadd.f32 %v1216, %v1222
        %v1239 = vadd.f32 %v1217, %v1223
        %v1240 = vadd.f32 %v1218, %v1222
        %v1241 = vadd.f32 %v1219, %v1223
        %v1242 = vmax.f32 %v1226, 0.0
        %v1243 = vmax.f32 %v1227, 0.0
        %v1244 = vmax.f32 %v1228, 0.0
        %v1245 = vmax.f32 %v1229, 0.0
        %v1246 = vmax.f32 %v1230, 0.0
        %v1247 = vmax.f32 %v1231, 0.0
        %v1248 = vmax.f32 %v1232, 0.0
        %v1249 = vmax.f32 %v1233, 0.0
        %v1250 = vmax.f32 %v1234, 0.0
        %v1251 = vmax.f32 %v1235, 0.0
        %v1252 = vmax.f32 %v1236, 0.0
        %v1253 = vmax.f32 %v1237, 0.0
        %v1254 = vmax.f32 %v1238, 0.0
        %v1255 = vmax.f32 %v1239, 0.0
        %v1256 = vmax.f32 %v1240, 0.0
        %v1257 = vmax.f32 %v1241, 0.0
        %1258 = vst [vmem:[#allocation2] sm:$0xff] 0.0
        %1259 = vst [vmem:[#allocation2 + $0x8] sm:$0xff] 0.0
        %1260 = vst [vmem:[#allocation2 + $0x10] sm:$0x3] 0.0
        %1261 = vst [vmem:[#allocation2 + $0x18] sm:$0x3] 0.0
        %1262 = vst [vmem:[#allocation2 + $0x20] sm:$0xff] 0.0
        %1263 = vst [vmem:[#allocation2 + $0x28] sm:$0xff] 0.0
        %1264 = vst [vmem:[#allocation2 + $0x30] sm:$0x3] 0.0
        %1265 = vst [vmem:[#allocation2 + $0x38] sm:$0x3] 0.0
        %1266 = vst [vmem:[#allocation2 + $0x40] sm:$0xff] 0.0
        %1267 = vst [vmem:[#allocation2 + $0x48] sm:$0xff] 0.0
        %1268 = vst [vmem:[#allocation2 + $0x50] sm:$0x3] 0.0
        %1269 = vst [vmem:[#allocation2 + $0x58] sm:$0x3] 0.0
        %1270 = vst [vmem:[#allocation2 + $0x60] sm:$0xff] 0.0
        %1271 = vst [vmem:[#allocation2 + $0x68] sm:$0xff] 0.0
        %1272 = vst [vmem:[#allocation2 + $0x70] sm:$0x3] 0.0
        %1273 = vst [vmem:[#allocation2 + $0x78] sm:$0x3] 0.0
        %1274 = vst [vmem:[#allocation2 + $0x80] sm:$0xff] 0.0
        %1275 = vst [vmem:[#allocation2 + $0x88] sm:$0xff] 0.0
        %1276 = vst [vmem:[#allocation2 + $0x90] sm:$0x3] 0.0
        %1277 = vst [vmem:[#allocation2 + $0x98] sm:$0x3] 0.0
        %1278 = vst [vmem:[#allocation2 + $0xa0] sm:$0xff] 0.0
        %1279 = vst [vmem:[#allocation2 + $0xa8] sm:$0xff] 0.0
        %1280 = vst [vmem:[#allocation2 + $0xb0] sm:$0x3] 0.0
        %1281 = vst [vmem:[#allocation2 + $0xb8] sm:$0x3] 0.0
        %1282 = vst [vmem:[#allocation2 + $0xc0] sm:$0xff] 0.0
        %1283 = vst [vmem:[#allocation2 + $0xc8] sm:$0xff] 0.0
        %1284 = vst [vmem:[#allocation2 + $0xd0] sm:$0x3] 0.0
        %1285 = vst [vmem:[#allocation2 + $0xd8] sm:$0x3] 0.0
        %1286 = vst [vmem:[#allocation2 + $0xe0] sm:$0xff] 0.0
        %1287 = vst [vmem:[#allocation2 + $0xe8] sm:$0xff] 0.0
        %1288 = vst [vmem:[#allocation2 + $0xf0] sm:$0x3] 0.0
        %1289 = vst [vmem:[#allocation2 + $0xf8] sm:$0x3] 0.0
        %1290 = vst [vmem:[#allocation2 + $0x100] sm:$0xff] 0.0
        %1291 = vst [vmem:[#allocation2 + $0x108] sm:$0xff] 0.0
        %1292 = vst [vmem:[#allocation2 + $0x110] sm:$0x3] 0.0
        %1293 = vst [vmem:[#allocation2 + $0x118] sm:$0x3] 0.0
        %1294 = vst [vmem:[#allocation2 + $0x120] sm:$0xff] 0.0
        %1295 = vst [vmem:[#allocation2 + $0x128] sm:$0xff] 0.0
        %1296 = vst [vmem:[#allocation2 + $0x130] sm:$0x3] 0.0
        %1297 = vst [vmem:[#allocation2 + $0x138] sm:$0x3] 0.0
        %v1314 = vrot.slane %v1242, 7
        %v1315 = vrot.slane %v1243, 7
        %v1316 = vrot.slane %v1244, 7
        %v1317 = vrot.slane %v1245, 7
        %v1318 = vrot.slane %v1246, 7
        %v1319 = vrot.slane %v1247, 7
        %v1320 = vrot.slane %v1248, 7
        %v1321 = vrot.slane %v1249, 7
        %v1322 = vrot.slane %v1250, 7
        %v1323 = vrot.slane %v1251, 7
        %v1324 = vrot.slane %v1252, 7
        %v1325 = vrot.slane %v1253, 7
        %v1326 = vrot.slane %v1254, 7
        %v1327 = vrot.slane %v1255, 7
        %v1328 = vrot.slane %v1256, 7
        %v1329 = vrot.slane %v1257, 7
        %s1346 = scalar_lea.vmem [#allocation2], 32
        %1347 = vst [vmem:[%s1346] sm:$0xfe] %v1314
        %1348 = vst [vmem:[%s1346 + $0x8] sm:$0xfe] %v1315
        %1349 = vst [vmem:[%s1346 + $0x10] sm:$0x1] %v1314
        %1350 = vst [vmem:[%s1346 + $0x18] sm:$0x1] %v1315
        %1351 = vst [vmem:[%s1346 + $0x20] sm:$0xfe] %v1316
        %1352 = vst [vmem:[%s1346 + $0x28] sm:$0xfe] %v1317
        %1353 = vst [vmem:[%s1346 + $0x30] sm:$0x1] %v1316
        %1354 = vst [vmem:[%s1346 + $0x38] sm:$0x1] %v1317
        %1355 = vst [vmem:[%s1346 + $0x40] sm:$0xfe] %v1318
        %1356 = vst [vmem:[%s1346 + $0x48] sm:$0xfe] %v1319
        %1357 = vst [vmem:[%s1346 + $0x50] sm:$0x1] %v1318
        %1358 = vst [vmem:[%s1346 + $0x58] sm:$0x1] %v1319
        %1359 = vst [vmem:[%s1346 + $0x60] sm:$0xfe] %v1320
        %1360 = vst [vmem:[%s1346 + $0x68] sm:$0xfe] %v1321
        %1361 = vst [vmem:[%s1346 + $0x70] sm:$0x1] %v1320
        %1362 = vst [vmem:[%s1346 + $0x78] sm:$0x1] %v1321
        %1363 = vst [vmem:[%s1346 + $0x80] sm:$0xfe] %v1322
        %1364 = vst [vmem:[%s1346 + $0x88] sm:$0xfe] %v1323
        %1365 = vst [vmem:[%s1346 + $0x90] sm:$0x1] %v1322
        %1366 = vst [vmem:[%s1346 + $0x98] sm:$0x1] %v1323
        %1367 = vst [vmem:[%s1346 + $0xa0] sm:$0xfe] %v1324
        %1368 = vst [vmem:[%s1346 + $0xa8] sm:$0xfe] %v1325
        %1369 = vst [vmem:[%s1346 + $0xb0] sm:$0x1] %v1324
        %1370 = vst [vmem:[%s1346 + $0xb8] sm:$0x1] %v1325
        %1371 = vst [vmem:[%s1346 + $0xc0] sm:$0xfe] %v1326
        %1372 = vst [vmem:[%s1346 + $0xc8] sm:$0xfe] %v1327
        %1373 = vst [vmem:[%s1346 + $0xd0] sm:$0x1] %v1326
        %1374 = vst [vmem:[%s1346 + $0xd8] sm:$0x1] %v1327
        %1375 = vst [vmem:[%s1346 + $0xe0] sm:$0xfe] %v1328
        %1376 = vst [vmem:[%s1346 + $0xe8] sm:$0xfe] %v1329
        %1377 = vst [vmem:[%s1346 + $0xf0] sm:$0x1] %v1328
        %1378 = vst [vmem:[%s1346 + $0xf8] sm:$0x1] %v1329
        %1379 = vst [vmem:[#allocation3] sm:$0xff] 0.0
        %1380 = vst [vmem:[#allocation3 + $0x8] sm:$0xff] 0.0
        %1381 = vst [vmem:[#allocation3 + $0x10] sm:$0xff] 0.0
        %1382 = vst [vmem:[#allocation3 + $0x18] sm:$0xff] 0.0
        %1383 = vst [vmem:[#allocation3 + $0x20] sm:$0xff] 0.0
        %1384 = vst [vmem:[#allocation3 + $0x28] sm:$0xff] 0.0
        %1385 = vst [vmem:[#allocation3 + $0x30] sm:$0xff] 0.0
        %1386 = vst [vmem:[#allocation3 + $0x38] sm:$0xff] 0.0
        %1387 = vst [vmem:[#allocation3 + $0x40] sm:$0xff] 0.0
        %1388 = vst [vmem:[#allocation3 + $0x48] sm:$0xff] 0.0
        %1389 = vst [vmem:[#allocation3 + $0x50] sm:$0xff] 0.0
        %1390 = vst [vmem:[#allocation3 + $0x58] sm:$0xff] 0.0
        %1391 = vst [vmem:[#allocation3 + $0x60] sm:$0xff] 0.0
        %1392 = vst [vmem:[#allocation3 + $0x68] sm:$0xff] 0.0
        %1393 = vst [vmem:[#allocation3 + $0x70] sm:$0xff] 0.0
        %1394 = vst [vmem:[#allocation3 + $0x78] sm:$0xff] 0.0
        %v1395 = vld [vmem:[#allocation2] sm:$0xff]
        %v1396 = vld [vmem:[#allocation2 + $0x8] sm:$0xff]
        %v1397 = vld [vmem:[#allocation2 + $0x20] sm:$0xff]
        %v1398 = vld [vmem:[#allocation2 + $0x28] sm:$0xff]
        %v1399 = vld [vmem:[#allocation2 + $0x40] sm:$0xff]
        %v1400 = vld [vmem:[#allocation2 + $0x48] sm:$0xff]
        %v1401 = vld [vmem:[#allocation2 + $0x60] sm:$0xff]
        %v1402 = vld [vmem:[#allocation2 + $0x68] sm:$0xff]
        %v1403 = vld [vmem:[#allocation2 + $0x80] sm:$0xff]
        %v1404 = vld [vmem:[#allocation2 + $0x88] sm:$0xff]
        %v1405 = vld [vmem:[#allocation2 + $0xa0] sm:$0xff]
        %v1406 = vld [vmem:[#allocation2 + $0xa8] sm:$0xff]
        %v1407 = vld [vmem:[#allocation2 + $0xc0] sm:$0xff]
        %v1408 = vld [vmem:[#allocation2 + $0xc8] sm:$0xff]
        %v1409 = vld [vmem:[#allocation2 + $0xe0] sm:$0xff]
        %v1410 = vld [vmem:[#allocation2 + $0xe8] sm:$0xff]
        %v1411 = vld [vmem:[#allocation3] sm:$0xff]
        %v1412 = vld [vmem:[#allocation3 + $0x8] sm:$0xff]
        %v1413 = vld [vmem:[#allocation3 + $0x10] sm:$0xff]
        %v1414 = vld [vmem:[#allocation3 + $0x18] sm:$0xff]
        %v1415 = vld [vmem:[#allocation3 + $0x20] sm:$0xff]
        %v1416 = vld [vmem:[#allocation3 + $0x28] sm:$0xff]
        %v1417 = vld [vmem:[#allocation3 + $0x30] sm:$0xff]
        %v1418 = vld [vmem:[#allocation3 + $0x38] sm:$0xff]
        %v1419 = vld [vmem:[#allocation3 + $0x40] sm:$0xff]
        %v1420 = vld [vmem:[#allocation3 + $0x48] sm:$0xff]
        %v1421 = vld [vmem:[#allocation3 + $0x50] sm:$0xff]
        %v1422 = vld [vmem:[#allocation3 + $0x58] sm:$0xff]
        %v1423 = vld [vmem:[#allocation3 + $0x60] sm:$0xff]
        %v1424 = vld [vmem:[#allocation3 + $0x68] sm:$0xff]
        %v1425 = vld [vmem:[#allocation3 + $0x70] sm:$0xff]
        %v1426 = vld [vmem:[#allocation3 + $0x78] sm:$0xff]
        %v1427 = vld [vmem:[#allocation15] sm:$0xff]
        %v1428 = vld [vmem:[#allocation15 + $0x8] sm:$0xff]
        %v1429 = vld [vmem:[#allocation15 + $0x10] sm:$0xff]
        %v1430 = vld [vmem:[#allocation15 + $0x18] sm:$0xff]
        %v1431 = vld [vmem:[#allocation15 + $0x20] sm:$0xff]
        %v1432 = vld [vmem:[#allocation15 + $0x28] sm:$0xff]
        %v1433 = vld [vmem:[#allocation15 + $0x30] sm:$0xff]
        %v1434 = vld [vmem:[#allocation15 + $0x38] sm:$0xff]
        %v1435 = vld [vmem:[#allocation15 + $0x40] sm:$0xff]
        %v1436 = vld [vmem:[#allocation15 + $0x48] sm:$0xff]
        %v1437 = vld [vmem:[#allocation15 + $0x50] sm:$0xff]
        %v1438 = vld [vmem:[#allocation15 + $0x58] sm:$0xff]
        %v1439 = vld [vmem:[#allocation15 + $0x60] sm:$0xff]
        %v1440 = vld [vmem:[#allocation15 + $0x68] sm:$0xff]
        %v1441 = vld [vmem:[#allocation15 + $0x70] sm:$0xff]
        %v1442 = vld [vmem:[#allocation15 + $0x78] sm:$0xff]
        %v1443 = vld [vmem:[#allocation15 + $0x80] sm:$0xff]
        %v1444 = vld [vmem:[#allocation15 + $0x88] sm:$0xff]
        %v1445 = vld [vmem:[#allocation15 + $0x90] sm:$0xff]
        %v1446 = vld [vmem:[#allocation15 + $0x98] sm:$0xff]
        %v1447 = vld [vmem:[#allocation15 + $0xa0] sm:$0xff]
        %v1448 = vld [vmem:[#allocation15 + $0xa8] sm:$0xff]
        %v1449 = vld [vmem:[#allocation15 + $0xb0] sm:$0xff]
        %v1450 = vld [vmem:[#allocation15 + $0xb8] sm:$0xff]
        %v1451 = vld [vmem:[#allocation15 + $0xc0] sm:$0xff]
        %v1452 = vld [vmem:[#allocation15 + $0xc8] sm:$0xff]
        %v1453 = vld [vmem:[#allocation15 + $0xd0] sm:$0xff]
        %v1454 = vld [vmem:[#allocation15 + $0xd8] sm:$0xff]
        %v1455 = vld [vmem:[#allocation15 + $0xe0] sm:$0xff]
        %v1456 = vld [vmem:[#allocation15 + $0xe8] sm:$0xff]
        %v1457 = vld [vmem:[#allocation15 + $0xf0] sm:$0xff]
        %v1458 = vld [vmem:[#allocation15 + $0xf8] sm:$0xff]
        %v1459 = vld [vmem:[#allocation15 + $0x100] sm:$0xff]
        %v1460 = vld [vmem:[#allocation15 + $0x108] sm:$0xff]
        %v1461 = vld [vmem:[#allocation15 + $0x110] sm:$0xff]
        %v1462 = vld [vmem:[#allocation15 + $0x118] sm:$0xff]
        %v1463 = vld [vmem:[#allocation15 + $0x120] sm:$0xff]
        %v1464 = vld [vmem:[#allocation15 + $0x128] sm:$0xff]
        %v1465 = vld [vmem:[#allocation15 + $0x130] sm:$0xff]
        %v1466 = vld [vmem:[#allocation15 + $0x138] sm:$0xff]
        %v1467 = vld [vmem:[#allocation15 + $0x140] sm:$0xff]
        %v1468 = vld [vmem:[#allocation15 + $0x148] sm:$0xff]
        %v1469 = vld [vmem:[#allocation15 + $0x150] sm:$0xff]
        %v1470 = vld [vmem:[#allocation15 + $0x158] sm:$0xff]
        %v1471 = vld [vmem:[#allocation15 + $0x160] sm:$0xff]
        %v1472 = vld [vmem:[#allocation15 + $0x168] sm:$0xff]
        %v1473 = vld [vmem:[#allocation15 + $0x170] sm:$0xff]
        %v1474 = vld [vmem:[#allocation15 + $0x178] sm:$0xff]
        %v1475 = vld [vmem:[#allocation15 + $0x180] sm:$0xff]
        %v1476 = vld [vmem:[#allocation15 + $0x188] sm:$0xff]
        %v1477 = vld [vmem:[#allocation15 + $0x190] sm:$0xff]
        %v1478 = vld [vmem:[#allocation15 + $0x198] sm:$0xff]
        %v1479 = vld [vmem:[#allocation15 + $0x1a0] sm:$0xff]
        %v1480 = vld [vmem:[#allocation15 + $0x1a8] sm:$0xff]
        %v1481 = vld [vmem:[#allocation15 + $0x1b0] sm:$0xff]
        %v1482 = vld [vmem:[#allocation15 + $0x1b8] sm:$0xff]
        %v1483 = vld [vmem:[#allocation15 + $0x1c0] sm:$0xff]
        %v1484 = vld [vmem:[#allocation15 + $0x1c8] sm:$0xff]
        %v1485 = vld [vmem:[#allocation15 + $0x1d0] sm:$0xff]
        %v1486 = vld [vmem:[#allocation15 + $0x1d8] sm:$0xff]
        %v1487 = vld [vmem:[#allocation15 + $0x1e0] sm:$0xff]
        %v1488 = vld [vmem:[#allocation15 + $0x1e8] sm:$0xff]
        %v1489 = vld [vmem:[#allocation15 + $0x1f0] sm:$0xff]
        %v1490 = vld [vmem:[#allocation15 + $0x1f8] sm:$0xff]
        %1491 = vmatpush.msra.mxu0 %v1457
        %1492 = vmatpush.msra.mxu0 %v1455
        %1493 = vmatpush.msra.mxu0 %v1453
        %1494 = vmatpush.msra.mxu0 %v1451
        %1495 = vmatpush.msra.mxu0 %v1449
        %1496 = vmatpush.msra.mxu0 %v1447
        %1497 = vmatpush.msra.mxu0 %v1445
        %1498 = vmatpush.msra.mxu0 %v1443
        %1499 = vmatpush.msra.mxu0 %v1441
        %1500 = vmatpush.msra.mxu0 %v1439
        %1501 = vmatpush.msra.mxu0 %v1437
        %1502 = vmatpush.msra.mxu0 %v1435
        %1503 = vmatpush.msra.mxu0 %v1433
        %1504 = vmatpush.msra.mxu0 %v1431
        %1505 = vmatpush.msra.mxu0 %v1429
        %1506 = vmatpush.msra.mxu0 %v1427
        %1507 = vmatmul.f32.gmra.mxu0 %v1395
        %v1508 = vpop.f32.mrf.mxu0
        %v1509 = vadd.f32 0.0, %v1508
        %1510 = vmatmul.f32.gmra.mxu0 %v1397
        %v1511 = vpop.f32.mrf.mxu0
        %v1512 = vadd.f32 0.0, %v1511
        %1513 = vmatmul.f32.gmra.mxu0 %v1399
        %v1514 = vpop.f32.mrf.mxu0
        %v1515 = vadd.f32 0.0, %v1514
        %1516 = vmatmul.f32.gmra.mxu0 %v1401
        %v1517 = vpop.f32.mrf.mxu0
        %v1518 = vadd.f32 0.0, %v1517
        %1519 = vmatmul.f32.gmra.mxu0 %v1403
        %v1520 = vpop.f32.mrf.mxu0
        %v1521 = vadd.f32 0.0, %v1520
        %1522 = vmatmul.f32.gmra.mxu0 %v1405
        %v1523 = vpop.f32.mrf.mxu0
        %v1524 = vadd.f32 0.0, %v1523
        %1525 = vmatmul.f32.gmra.mxu0 %v1407
        %v1526 = vpop.f32.mrf.mxu0
        %v1527 = vadd.f32 0.0, %v1526
        %1528 = vmatmul.f32.gmra.mxu0 %v1409
        %v1529 = vpop.f32.mrf.mxu0
        %v1530 = vadd.f32 0.0, %v1529
        %1531 = vdwg.mxu0
        %1532 = vmatpush.msra.mxu0 %v1489
        %1533 = vmatpush.msra.mxu0 %v1487
        %1534 = vmatpush.msra.mxu0 %v1485
        %1535 = vmatpush.msra.mxu0 %v1483
        %1536 = vmatpush.msra.mxu0 %v1481
        %1537 = vmatpush.msra.mxu0 %v1479
        %1538 = vmatpush.msra.mxu0 %v1477
        %1539 = vmatpush.msra.mxu0 %v1475
        %1540 = vmatpush.msra.mxu0 %v1473
        %1541 = vmatpush.msra.mxu0 %v1471
        %1542 = vmatpush.msra.mxu0 %v1469
        %1543 = vmatpush.msra.mxu0 %v1467
        %1544 = vmatpush.msra.mxu0 %v1465
        %1545 = vmatpush.msra.mxu0 %v1463
        %1546 = vmatpush.msra.mxu0 %v1461
        %1547 = vmatpush.msra.mxu0 %v1459
        %1548 = vmatmul.f32.gmra.mxu0 %v1396
        %v1549 = vpop.f32.mrf.mxu0
        %v1550 = vadd.f32 %v1509, %v1549
        %1551 = vmatmul.f32.gmra.mxu0 %v1398
        %v1552 = vpop.f32.mrf.mxu0
        %v1553 = vadd.f32 %v1512, %v1552
        %1554 = vmatmul.f32.gmra.mxu0 %v1400
        %v1555 = vpop.f32.mrf.mxu0
        %v1556 = vadd.f32 %v1515, %v1555
        %1557 = vmatmul.f32.gmra.mxu0 %v1402
        %v1558 = vpop.f32.mrf.mxu0
        %v1559 = vadd.f32 %v1518, %v1558
        %1560 = vmatmul.f32.gmra.mxu0 %v1404
        %v1561 = vpop.f32.mrf.mxu0
        %v1562 = vadd.f32 %v1521, %v1561
        %1563 = vmatmul.f32.gmra.mxu0 %v1406
        %v1564 = vpop.f32.mrf.mxu0
        %v1565 = vadd.f32 %v1524, %v1564
        %1566 = vmatmul.f32.gmra.mxu0 %v1408
        %v1567 = vpop.f32.mrf.mxu0
        %v1568 = vadd.f32 %v1527, %v1567
        %1569 = vmatmul.f32.gmra.mxu0 %v1410
        %v1570 = vpop.f32.mrf.mxu0
        %v1571 = vadd.f32 %v1530, %v1570
        %1572 = vdwg.mxu0
        %1573 = vmatpush.msra.mxu0 %v1458
        %1574 = vmatpush.msra.mxu0 %v1456
        %1575 = vmatpush.msra.mxu0 %v1454
        %1576 = vmatpush.msra.mxu0 %v1452
        %1577 = vmatpush.msra.mxu0 %v1450
        %1578 = vmatpush.msra.mxu0 %v1448
        %1579 = vmatpush.msra.mxu0 %v1446
        %1580 = vmatpush.msra.mxu0 %v1444
        %1581 = vmatpush.msra.mxu0 %v1442
        %1582 = vmatpush.msra.mxu0 %v1440
        %1583 = vmatpush.msra.mxu0 %v1438
        %1584 = vmatpush.msra.mxu0 %v1436
        %1585 = vmatpush.msra.mxu0 %v1434
        %1586 = vmatpush.msra.mxu0 %v1432
        %1587 = vmatpush.msra.mxu0 %v1430
        %1588 = vmatpush.msra.mxu0 %v1428
        %1589 = vmatmul.f32.gmra.mxu0 %v1395
        %v1590 = vpop.f32.mrf.mxu0
        %v1591 = vadd.f32 0.0, %v1590
        %1592 = vmatmul.f32.gmra.mxu0 %v1397
        %v1593 = vpop.f32.mrf.mxu0
        %v1594 = vadd.f32 0.0, %v1593
        %1595 = vmatmul.f32.gmra.mxu0 %v1399
        %v1596 = vpop.f32.mrf.mxu0
        %v1597 = vadd.f32 0.0, %v1596
        %1598 = vmatmul.f32.gmra.mxu0 %v1401
        %v1599 = vpop.f32.mrf.mxu0
        %v1600 = vadd.f32 0.0, %v1599
        %1601 = vmatmul.f32.gmra.mxu0 %v1403
        %v1602 = vpop.f32.mrf.mxu0
        %v1603 = vadd.f32 0.0, %v1602
        %1604 = vmatmul.f32.gmra.mxu0 %v1405
        %v1605 = vpop.f32.mrf.mxu0
        %v1606 = vadd.f32 0.0, %v1605
        %1607 = vmatmul.f32.gmra.mxu0 %v1407
        %v1608 = vpop.f32.mrf.mxu0
        %v1609 = vadd.f32 0.0, %v1608
        %1610 = vmatmul.f32.gmra.mxu0 %v1409
        %v1611 = vpop.f32.mrf.mxu0
        %v1612 = vadd.f32 0.0, %v1611
        %1613 = vdwg.mxu0
        %1614 = vmatpush.msra.mxu0 %v1490
        %1615 = vmatpush.msra.mxu0 %v1488
        %1616 = vmatpush.msra.mxu0 %v1486
        %1617 = vmatpush.msra.mxu0 %v1484
        %1618 = vmatpush.msra.mxu0 %v1482
        %1619 = vmatpush.msra.mxu0 %v1480
        %1620 = vmatpush.msra.mxu0 %v1478
        %1621 = vmatpush.msra.mxu0 %v1476
        %1622 = vmatpush.msra.mxu0 %v1474
        %1623 = vmatpush.msra.mxu0 %v1472
        %1624 = vmatpush.msra.mxu0 %v1470
        %1625 = vmatpush.msra.mxu0 %v1468
        %1626 = vmatpush.msra.mxu0 %v1466
        %1627 = vmatpush.msra.mxu0 %v1464
        %1628 = vmatpush.msra.mxu0 %v1462
        %1629 = vmatpush.msra.mxu0 %v1460
        %1630 = vmatmul.f32.gmra.mxu0 %v1396
        %v1631 = vpop.f32.mrf.mxu0
        %v1632 = vadd.f32 %v1591, %v1631
        %1633 = vmatmul.f32.gmra.mxu0 %v1398
        %v1634 = vpop.f32.mrf.mxu0
        %v1635 = vadd.f32 %v1594, %v1634
        %1636 = vmatmul.f32.gmra.mxu0 %v1400
        %v1637 = vpop.f32.mrf.mxu0
        %v1638 = vadd.f32 %v1597, %v1637
        %1639 = vmatmul.f32.gmra.mxu0 %v1402
        %v1640 = vpop.f32.mrf.mxu0
        %v1641 = vadd.f32 %v1600, %v1640
        %1642 = vmatmul.f32.gmra.mxu0 %v1404
        %v1643 = vpop.f32.mrf.mxu0
        %v1644 = vadd.f32 %v1603, %v1643
        %1645 = vmatmul.f32.gmra.mxu0 %v1406
        %v1646 = vpop.f32.mrf.mxu0
        %v1647 = vadd.f32 %v1606, %v1646
        %1648 = vmatmul.f32.gmra.mxu0 %v1408
        %v1649 = vpop.f32.mrf.mxu0
        %v1650 = vadd.f32 %v1609, %v1649
        %1651 = vmatmul.f32.gmra.mxu0 %v1410
        %v1652 = vpop.f32.mrf.mxu0
        %v1653 = vadd.f32 %v1612, %v1652
        %1654 = vdwg.mxu0
        %v1655 = vadd.f32 %v1411, %v1550
        %v1656 = vadd.f32 %v1412, %v1632
        %v1657 = vadd.f32 %v1413, %v1553
        %v1658 = vadd.f32 %v1414, %v1635
        %v1659 = vadd.f32 %v1415, %v1556
        %v1660 = vadd.f32 %v1416, %v1638
        %v1661 = vadd.f32 %v1417, %v1559
        %v1662 = vadd.f32 %v1418, %v1641
        %v1663 = vadd.f32 %v1419, %v1562
        %v1664 = vadd.f32 %v1420, %v1644
        %v1665 = vadd.f32 %v1421, %v1565
        %v1666 = vadd.f32 %v1422, %v1647
        %v1667 = vadd.f32 %v1423, %v1568
        %v1668 = vadd.f32 %v1424, %v1650
        %v1669 = vadd.f32 %v1425, %v1571
        %v1670 = vadd.f32 %v1426, %v1653
        %1671 = vst [vmem:[#allocation3] sm:$0xff] %v1655
        %1672 = vst [vmem:[#allocation3 + $0x8] sm:$0xff] %v1656
        %1673 = vst [vmem:[#allocation3 + $0x10] sm:$0xff] %v1657
        %1674 = vst [vmem:[#allocation3 + $0x18] sm:$0xff] %v1658
        %1675 = vst [vmem:[#allocation3 + $0x20] sm:$0xff] %v1659
        %1676 = vst [vmem:[#allocation3 + $0x28] sm:$0xff] %v1660
        %1677 = vst [vmem:[#allocation3 + $0x30] sm:$0xff] %v1661
        %1678 = vst [vmem:[#allocation3 + $0x38] sm:$0xff] %v1662
        %1679 = vst [vmem:[#allocation3 + $0x40] sm:$0xff] %v1663
        %1680 = vst [vmem:[#allocation3 + $0x48] sm:$0xff] %v1664
        %1681 = vst [vmem:[#allocation3 + $0x50] sm:$0xff] %v1665
        %1682 = vst [vmem:[#allocation3 + $0x58] sm:$0xff] %v1666
        %1683 = vst [vmem:[#allocation3 + $0x60] sm:$0xff] %v1667
        %1684 = vst [vmem:[#allocation3 + $0x68] sm:$0xff] %v1668
        %1685 = vst [vmem:[#allocation3 + $0x70] sm:$0xff] %v1669
        %1686 = vst [vmem:[#allocation3 + $0x78] sm:$0xff] %v1670
        %v1687 = vld [vmem:[#allocation2] sm:$0xfe]
        %v1688 = vld [vmem:[#allocation2 + $0x8] sm:$0xfe]
        %v1689 = vld [vmem:[#allocation2 + $0x10] sm:$0x1]
        %v1690 = vld [vmem:[#allocation2 + $0x18] sm:$0x1]
        %v1691 = vld [vmem:[#allocation2 + $0x20] sm:$0xfe]
        %v1692 = vld [vmem:[#allocation2 + $0x28] sm:$0xfe]
        %v1693 = vld [vmem:[#allocation2 + $0x30] sm:$0x1]
        %v1694 = vld [vmem:[#allocation2 + $0x38] sm:$0x1]
        %v1695 = vld [vmem:[#allocation2 + $0x40] sm:$0xfe]
        %v1696 = vld [vmem:[#allocation2 + $0x48] sm:$0xfe]
        %v1697 = vld [vmem:[#allocation2 + $0x50] sm:$0x1]
        %v1698 = vld [vmem:[#allocation2 + $0x58] sm:$0x1]
        %v1699 = vld [vmem:[#allocation2 + $0x60] sm:$0xfe]
        %v1700 = vld [vmem:[#allocation2 + $0x68] sm:$0xfe]
        %v1701 = vld [vmem:[#allocation2 + $0x70] sm:$0x1]
        %v1702 = vld [vmem:[#allocation2 + $0x78] sm:$0x1]
        %v1703 = vld [vmem:[#allocation2 + $0x80] sm:$0xfe]
        %v1704 = vld [vmem:[#allocation2 + $0x88] sm:$0xfe]
        %v1705 = vld [vmem:[#allocation2 + $0x90] sm:$0x1]
        %v1706 = vld [vmem:[#allocation2 + $0x98] sm:$0x1]
        %v1707 = vld [vmem:[#allocation2 + $0xa0] sm:$0xfe]
        %v1708 = vld [vmem:[#allocation2 + $0xa8] sm:$0xfe]
        %v1709 = vld [vmem:[#allocation2 + $0xb0] sm:$0x1]
        %v1710 = vld [vmem:[#allocation2 + $0xb8] sm:$0x1]
        %v1711 = vld [vmem:[#allocation2 + $0xc0] sm:$0xfe]
        %v1712 = vld [vmem:[#allocation2 + $0xc8] sm:$0xfe]
        %v1713 = vld [vmem:[#allocation2 + $0xd0] sm:$0x1]
        %v1714 = vld [vmem:[#allocation2 + $0xd8] sm:$0x1]
        %v1715 = vld [vmem:[#allocation2 + $0xe0] sm:$0xfe]
        %v1716 = vld [vmem:[#allocation2 + $0xe8] sm:$0xfe]
        %v1717 = vld [vmem:[#allocation2 + $0xf0] sm:$0x1]
        %v1718 = vld [vmem:[#allocation2 + $0xf8] sm:$0x1]
        %vm1751 = vcmask 1046528
        %v1752 = vrot.slane %v1687, 1
        %v1753 = vrot.slane %v1689, 1
        %v1754 = vsel %vm1751, %v1752, %v1753
        %v1755 = vrot.slane %v1688, 1
        %v1756 = vrot.slane %v1690, 1
        %v1757 = vsel %vm1751, %v1755, %v1756
        %v1758 = vrot.slane %v1691, 1
        %v1759 = vrot.slane %v1693, 1
        %v1760 = vsel %vm1751, %v1758, %v1759
        %v1761 = vrot.slane %v1692, 1
        %v1762 = vrot.slane %v1694, 1
        %v1763 = vsel %vm1751, %v1761, %v1762
        %v1764 = vrot.slane %v1695, 1
        %v1765 = vrot.slane %v1697, 1
        %v1766 = vsel %vm1751, %v1764, %v1765
        %v1767 = vrot.slane %v1696, 1
        %v1768 = vrot.slane %v1698, 1
        %v1769 = vsel %vm1751, %v1767, %v1768
        %v1770 = vrot.slane %v1699, 1
        %v1771 = vrot.slane %v1701, 1
        %v1772 = vsel %vm1751, %v1770, %v1771
        %v1773 = vrot.slane %v1700, 1
        %v1774 = vrot.slane %v1702, 1
        %v1775 = vsel %vm1751, %v1773, %v1774
        %v1776 = vrot.slane %v1703, 1
        %v1777 = vrot.slane %v1705, 1
        %v1778 = vsel %vm1751, %v1776, %v1777
        %v1779 = vrot.slane %v1704, 1
        %v1780 = vrot.slane %v1706, 1
        %v1781 = vsel %vm1751, %v1779, %v1780
        %v1782 = vrot.slane %v1707, 1
        %v1783 = vrot.slane %v1709, 1
        %v1784 = vsel %vm1751, %v1782, %v1783
        %v1785 = vrot.slane %v1708, 1
        %v1786 = vrot.slane %v1710, 1
        %v1787 = vsel %vm1751, %v1785, %v1786
        %v1788 = vrot.slane %v1711, 1
        %v1789 = vrot.slane %v1713, 1
        %v1790 = vsel %vm1751, %v1788, %v1789
        %v1791 = vrot.slane %v1712, 1
        %v1792 = vrot.slane %v1714, 1
        %v1793 = vsel %vm1751, %v1791, %v1792
        %v1794 = vrot.slane %v1715, 1
        %v1795 = vrot.slane %v1717, 1
        %v1796 = vsel %vm1751, %v1794, %v1795
        %v1797 = vrot.slane %v1716, 1
        %v1798 = vrot.slane %v1718, 1
        %v1799 = vsel %vm1751, %v1797, %v1798
        %v1816 = vld [vmem:[#allocation3] sm:$0xff]
        %v1817 = vld [vmem:[#allocation3 + $0x8] sm:$0xff]
        %v1818 = vld [vmem:[#allocation3 + $0x10] sm:$0xff]
        %v1819 = vld [vmem:[#allocation3 + $0x18] sm:$0xff]
        %v1820 = vld [vmem:[#allocation3 + $0x20] sm:$0xff]
        %v1821 = vld [vmem:[#allocation3 + $0x28] sm:$0xff]
        %v1822 = vld [vmem:[#allocation3 + $0x30] sm:$0xff]
        %v1823 = vld [vmem:[#allocation3 + $0x38] sm:$0xff]
        %v1824 = vld [vmem:[#allocation3 + $0x40] sm:$0xff]
        %v1825 = vld [vmem:[#allocation3 + $0x48] sm:$0xff]
        %v1826 = vld [vmem:[#allocation3 + $0x50] sm:$0xff]
        %v1827 = vld [vmem:[#allocation3 + $0x58] sm:$0xff]
        %v1828 = vld [vmem:[#allocation3 + $0x60] sm:$0xff]
        %v1829 = vld [vmem:[#allocation3 + $0x68] sm:$0xff]
        %v1830 = vld [vmem:[#allocation3 + $0x70] sm:$0xff]
        %v1831 = vld [vmem:[#allocation3 + $0x78] sm:$0xff]
        %s1832 = scalar_lea.vmem [#allocation15], 512
        %v1833 = vld [vmem:[%s1832] sm:$0xff]
        %v1834 = vld [vmem:[%s1832 + $0x8] sm:$0xff]
        %v1835 = vld [vmem:[%s1832 + $0x10] sm:$0xff]
        %v1836 = vld [vmem:[%s1832 + $0x18] sm:$0xff]
        %v1837 = vld [vmem:[%s1832 + $0x20] sm:$0xff]
        %v1838 = vld [vmem:[%s1832 + $0x28] sm:$0xff]
        %v1839 = vld [vmem:[%s1832 + $0x30] sm:$0xff]
        %v1840 = vld [vmem:[%s1832 + $0x38] sm:$0xff]
        %v1841 = vld [vmem:[%s1832 + $0x40] sm:$0xff]
        %v1842 = vld [vmem:[%s1832 + $0x48] sm:$0xff]
        %v1843 = vld [vmem:[%s1832 + $0x50] sm:$0xff]
        %v1844 = vld [vmem:[%s1832 + $0x58] sm:$0xff]
        %v1845 = vld [vmem:[%s1832 + $0x60] sm:$0xff]
        %v1846 = vld [vmem:[%s1832 + $0x68] sm:$0xff]
        %v1847 = vld [vmem:[%s1832 + $0x70] sm:$0xff]
        %v1848 = vld [vmem:[%s1832 + $0x78] sm:$0xff]
        %v1849 = vld [vmem:[%s1832 + $0x80] sm:$0xff]
        %v1850 = vld [vmem:[%s1832 + $0x88] sm:$0xff]
        %v1851 = vld [vmem:[%s1832 + $0x90] sm:$0xff]
        %v1852 = vld [vmem:[%s1832 + $0x98] sm:$0xff]
        %v1853 = vld [vmem:[%s1832 + $0xa0] sm:$0xff]
        %v1854 = vld [vmem:[%s1832 + $0xa8] sm:$0xff]
        %v1855 = vld [vmem:[%s1832 + $0xb0] sm:$0xff]
        %v1856 = vld [vmem:[%s1832 + $0xb8] sm:$0xff]
        %v1857 = vld [vmem:[%s1832 + $0xc0] sm:$0xff]
        %v1858 = vld [vmem:[%s1832 + $0xc8] sm:$0xff]
        %v1859 = vld [vmem:[%s1832 + $0xd0] sm:$0xff]
        %v1860 = vld [vmem:[%s1832 + $0xd8] sm:$0xff]
        %v1861 = vld [vmem:[%s1832 + $0xe0] sm:$0xff]
        %v1862 = vld [vmem:[%s1832 + $0xe8] sm:$0xff]
        %v1863 = vld [vmem:[%s1832 + $0xf0] sm:$0xff]
        %v1864 = vld [vmem:[%s1832 + $0xf8] sm:$0xff]
        %v1865 = vld [vmem:[%s1832 + $0x100] sm:$0xff]
        %v1866 = vld [vmem:[%s1832 + $0x108] sm:$0xff]
        %v1867 = vld [vmem:[%s1832 + $0x110] sm:$0xff]
        %v1868 = vld [vmem:[%s1832 + $0x118] sm:$0xff]
        %v1869 = vld [vmem:[%s1832 + $0x120] sm:$0xff]
        %v1870 = vld [vmem:[%s1832 + $0x128] sm:$0xff]
        %v1871 = vld [vmem:[%s1832 + $0x130] sm:$0xff]
        %v1872 = vld [vmem:[%s1832 + $0x138] sm:$0xff]
        %v1873 = vld [vmem:[%s1832 + $0x140] sm:$0xff]
        %v1874 = vld [vmem:[%s1832 + $0x148] sm:$0xff]
        %v1875 = vld [vmem:[%s1832 + $0x150] sm:$0xff]
        %v1876 = vld [vmem:[%s1832 + $0x158] sm:$0xff]
        %v1877 = vld [vmem:[%s1832 + $0x160] sm:$0xff]
        %v1878 = vld [vmem:[%s1832 + $0x168] sm:$0xff]
        %v1879 = vld [vmem:[%s1832 + $0x170] sm:$0xff]
        %v1880 = vld [vmem:[%s1832 + $0x178] sm:$0xff]
        %v1881 = vld [vmem:[%s1832 + $0x180] sm:$0xff]
        %v1882 = vld [vmem:[%s1832 + $0x188] sm:$0xff]
        %v1883 = vld [vmem:[%s1832 + $0x190] sm:$0xff]
        %v1884 = vld [vmem:[%s1832 + $0x198] sm:$0xff]
        %v1885 = vld [vmem:[%s1832 + $0x1a0] sm:$0xff]
        %v1886 = vld [vmem:[%s1832 + $0x1a8] sm:$0xff]
        %v1887 = vld [vmem:[%s1832 + $0x1b0] sm:$0xff]
        %v1888 = vld [vmem:[%s1832 + $0x1b8] sm:$0xff]
        %v1889 = vld [vmem:[%s1832 + $0x1c0] sm:$0xff]
        %v1890 = vld [vmem:[%s1832 + $0x1c8] sm:$0xff]
        %v1891 = vld [vmem:[%s1832 + $0x1d0] sm:$0xff]
        %v1892 = vld [vmem:[%s1832 + $0x1d8] sm:$0xff]
        %v1893 = vld [vmem:[%s1832 + $0x1e0] sm:$0xff]
        %v1894 = vld [vmem:[%s1832 + $0x1e8] sm:$0xff]
        %v1895 = vld [vmem:[%s1832 + $0x1f0] sm:$0xff]
        %v1896 = vld [vmem:[%s1832 + $0x1f8] sm:$0xff]
        %1897 = vmatpush.msra.mxu0 %v1863
        %1898 = vmatpush.msra.mxu0 %v1861
        %1899 = vmatpush.msra.mxu0 %v1859
        %1900 = vmatpush.msra.mxu0 %v1857
        %1901 = vmatpush.msra.mxu0 %v1855
        %1902 = vmatpush.msra.mxu0 %v1853
        %1903 = vmatpush.msra.mxu0 %v1851
        %1904 = vmatpush.msra.mxu0 %v1849
        %1905 = vmatpush.msra.mxu0 %v1847
        %1906 = vmatpush.msra.mxu0 %v1845
        %1907 = vmatpush.msra.mxu0 %v1843
        %1908 = vmatpush.msra.mxu0 %v1841
        %1909 = vmatpush.msra.mxu0 %v1839
        %1910 = vmatpush.msra.mxu0 %v1837
        %1911 = vmatpush.msra.mxu0 %v1835
        %1912 = vmatpush.msra.mxu0 %v1833
        %1913 = vmatmul.f32.gmra.mxu0 %v1754
        %v1914 = vpop.f32.mrf.mxu0
        %v1915 = vadd.f32 0.0, %v1914
        %1916 = vmatmul.f32.gmra.mxu0 %v1760
        %v1917 = vpop.f32.mrf.mxu0
        %v1918 = vadd.f32 0.0, %v1917
        %1919 = vmatmul.f32.gmra.mxu0 %v1766
        %v1920 = vpop.f32.mrf.mxu0
        %v1921 = vadd.f32 0.0, %v1920
        %1922 = vmatmul.f32.gmra.mxu0 %v1772
        %v1923 = vpop.f32.mrf.mxu0
        %v1924 = vadd.f32 0.0, %v1923
        %1925 = vmatmul.f32.gmra.mxu0 %v1778
        %v1926 = vpop.f32.mrf.mxu0
        %v1927 = vadd.f32 0.0, %v1926
        %1928 = vmatmul.f32.gmra.mxu0 %v1784
        %v1929 = vpop.f32.mrf.mxu0
        %v1930 = vadd.f32 0.0, %v1929
        %1931 = vmatmul.f32.gmra.mxu0 %v1790
        %v1932 = vpop.f32.mrf.mxu0
        %v1933 = vadd.f32 0.0, %v1932
        %1934 = vmatmul.f32.gmra.mxu0 %v1796
        %v1935 = vpop.f32.mrf.mxu0
        %v1936 = vadd.f32 0.0, %v1935
        %1937 = vdwg.mxu0
        %1938 = vmatpush.msra.mxu0 %v1895
        %1939 = vmatpush.msra.mxu0 %v1893
        %1940 = vmatpush.msra.mxu0 %v1891
        %1941 = vmatpush.msra.mxu0 %v1889
        %1942 = vmatpush.msra.mxu0 %v1887
        %1943 = vmatpush.msra.mxu0 %v1885
        %1944 = vmatpush.msra.mxu0 %v1883
        %1945 = vmatpush.msra.mxu0 %v1881
        %1946 = vmatpush.msra.mxu0 %v1879
        %1947 = vmatpush.msra.mxu0 %v1877
        %1948 = vmatpush.msra.mxu0 %v1875
        %1949 = vmatpush.msra.mxu0 %v1873
        %1950 = vmatpush.msra.mxu0 %v1871
        %1951 = vmatpush.msra.mxu0 %v1869
        %1952 = vmatpush.msra.mxu0 %v1867
        %1953 = vmatpush.msra.mxu0 %v1865
        %1954 = vmatmul.f32.gmra.mxu0 %v1757
        %v1955 = vpop.f32.mrf.mxu0
        %v1956 = vadd.f32 %v1915, %v1955
        %1957 = vmatmul.f32.gmra.mxu0 %v1763
        %v1958 = vpop.f32.mrf.mxu0
        %v1959 = vadd.f32 %v1918, %v1958
        %1960 = vmatmul.f32.gmra.mxu0 %v1769
        %v1961 = vpop.f32.mrf.mxu0
        %v1962 = vadd.f32 %v1921, %v1961
        %1963 = vmatmul.f32.gmra.mxu0 %v1775
        %v1964 = vpop.f32.mrf.mxu0
        %v1965 = vadd.f32 %v1924, %v1964
        %1966 = vmatmul.f32.gmra.mxu0 %v1781
        %v1967 = vpop.f32.mrf.mxu0
        %v1968 = vadd.f32 %v1927, %v1967
        %1969 = vmatmul.f32.gmra.mxu0 %v1787
        %v1970 = vpop.f32.mrf.mxu0
        %v1971 = vadd.f32 %v1930, %v1970
        %1972 = vmatmul.f32.gmra.mxu0 %v1793
        %v1973 = vpop.f32.mrf.mxu0
        %v1974 = vadd.f32 %v1933, %v1973
        %1975 = vmatmul.f32.gmra.mxu0 %v1799
        %v1976 = vpop.f32.mrf.mxu0
        %v1977 = vadd.f32 %v1936, %v1976
        %1978 = vdwg.mxu0
        %1979 = vmatpush.msra.mxu0 %v1864
        %1980 = vmatpush.msra.mxu0 %v1862
        %1981 = vmatpush.msra.mxu0 %v1860
        %1982 = vmatpush.msra.mxu0 %v1858
        %1983 = vmatpush.msra.mxu0 %v1856
        %1984 = vmatpush.msra.mxu0 %v1854
        %1985 = vmatpush.msra.mxu0 %v1852
        %1986 = vmatpush.msra.mxu0 %v1850
        %1987 = vmatpush.msra.mxu0 %v1848
        %1988 = vmatpush.msra.mxu0 %v1846
        %1989 = vmatpush.msra.mxu0 %v1844
        %1990 = vmatpush.msra.mxu0 %v1842
        %1991 = vmatpush.msra.mxu0 %v1840
        %1992 = vmatpush.msra.mxu0 %v1838
        %1993 = vmatpush.msra.mxu0 %v1836
        %1994 = vmatpush.msra.mxu0 %v1834
        %1995 = vmatmul.f32.gmra.mxu0 %v1754
        %v1996 = vpop.f32.mrf.mxu0
        %v1997 = vadd.f32 0.0, %v1996
        %1998 = vmatmul.f32.gmra.mxu0 %v1760
        %v1999 = vpop.f32.mrf.mxu0
        %v2000 = vadd.f32 0.0, %v1999
        %2001 = vmatmul.f32.gmra.mxu0 %v1766
        %v2002 = vpop.f32.mrf.mxu0
        %v2003 = vadd.f32 0.0, %v2002
        %2004 = vmatmul.f32.gmra.mxu0 %v1772
        %v2005 = vpop.f32.mrf.mxu0
        %v2006 = vadd.f32 0.0, %v2005
        %2007 = vmatmul.f32.gmra.mxu0 %v1778
        %v2008 = vpop.f32.mrf.mxu0
        %v2009 = vadd.f32 0.0, %v2008
        %2010 = vmatmul.f32.gmra.mxu0 %v1784
        %v2011 = vpop.f32.mrf.mxu0
        %v2012 = vadd.f32 0.0, %v2011
        %2013 = vmatmul.f32.gmra.mxu0 %v1790
        %v2014 = vpop.f32.mrf.mxu0
        %v2015 = vadd.f32 0.0, %v2014
        %2016 = vmatmul.f32.gmra.mxu0 %v1796
        %v2017 = vpop.f32.mrf.mxu0
        %v2018 = vadd.f32 0.0, %v2017
        %2019 = vdwg.mxu0
        %2020 = vmatpush.msra.mxu0 %v1896
        %2021 = vmatpush.msra.mxu0 %v1894
        %2022 = vmatpush.msra.mxu0 %v1892
        %2023 = vmatpush.msra.mxu0 %v1890
        %2024 = vmatpush.msra.mxu0 %v1888
        %2025 = vmatpush.msra.mxu0 %v1886
        %2026 = vmatpush.msra.mxu0 %v1884
        %2027 = vmatpush.msra.mxu0 %v1882
        %2028 = vmatpush.msra.mxu0 %v1880
        %2029 = vmatpush.msra.mxu0 %v1878
        %2030 = vmatpush.msra.mxu0 %v1876
        %2031 = vmatpush.msra.mxu0 %v1874
        %2032 = vmatpush.msra.mxu0 %v1872
        %2033 = vmatpush.msra.mxu0 %v1870
        %2034 = vmatpush.msra.mxu0 %v1868
        %2035 = vmatpush.msra.mxu0 %v1866
        %2036 = vmatmul.f32.gmra.mxu0 %v1757
        %v2037 = vpop.f32.mrf.mxu0
        %v2038 = vadd.f32 %v1997, %v2037
        %2039 = vmatmul.f32.gmra.mxu0 %v1763
        %v2040 = vpop.f32.mrf.mxu0
        %v2041 = vadd.f32 %v2000, %v2040
        %2042 = vmatmul.f32.gmra.mxu0 %v1769
        %v2043 = vpop.f32.mrf.mxu0
        %v2044 = vadd.f32 %v2003, %v2043
        %2045 = vmatmul.f32.gmra.mxu0 %v1775
        %v2046 = vpop.f32.mrf.mxu0
        %v2047 = vadd.f32 %v2006, %v2046
        %2048 = vmatmul.f32.gmra.mxu0 %v1781
        %v2049 = vpop.f32.mrf.mxu0
        %v2050 = vadd.f32 %v2009, %v2049
        %2051 = vmatmul.f32.gmra.mxu0 %v1787
        %v2052 = vpop.f32.mrf.mxu0
        %v2053 = vadd.f32 %v2012, %v2052
        %2054 = vmatmul.f32.gmra.mxu0 %v1793
        %v2055 = vpop.f32.mrf.mxu0
        %v2056 = vadd.f32 %v2015, %v2055
        %2057 = vmatmul.f32.gmra.mxu0 %v1799
        %v2058 = vpop.f32.mrf.mxu0
        %v2059 = vadd.f32 %v2018, %v2058
        %2060 = vdwg.mxu0
        %v2061 = vadd.f32 %v1816, %v1956
        %v2062 = vadd.f32 %v1817, %v2038
        %v2063 = vadd.f32 %v1818, %v1959
        %v2064 = vadd.f32 %v1819, %v2041
        %v2065 = vadd.f32 %v1820, %v1962
        %v2066 = vadd.f32 %v1821, %v2044
        %v2067 = vadd.f32 %v1822, %v1965
        %v2068 = vadd.f32 %v1823, %v2047
        %v2069 = vadd.f32 %v1824, %v1968
        %v2070 = vadd.f32 %v1825, %v2050
        %v2071 = vadd.f32 %v1826, %v1971
        %v2072 = vadd.f32 %v1827, %v2053
        %v2073 = vadd.f32 %v1828, %v1974
        %v2074 = vadd.f32 %v1829, %v2056
        %v2075 = vadd.f32 %v1830, %v1977
        %v2076 = vadd.f32 %v1831, %v2059
        %2077 = vst [vmem:[#allocation3] sm:$0xff] %v2061
        %2078 = vst [vmem:[#allocation3 + $0x8] sm:$0xff] %v2062
        %2079 = vst [vmem:[#allocation3 + $0x10] sm:$0xff] %v2063
        %2080 = vst [vmem:[#allocation3 + $0x18] sm:$0xff] %v2064
        %2081 = vst [vmem:[#allocation3 + $0x20] sm:$0xff] %v2065
        %2082 = vst [vmem:[#allocation3 + $0x28] sm:$0xff] %v2066
        %2083 = vst [vmem:[#allocation3 + $0x30] sm:$0xff] %v2067
        %2084 = vst [vmem:[#allocation3 + $0x38] sm:$0xff] %v2068
        %2085 = vst [vmem:[#allocation3 + $0x40] sm:$0xff] %v2069
        %2086 = vst [vmem:[#allocation3 + $0x48] sm:$0xff] %v2070
        %2087 = vst [vmem:[#allocation3 + $0x50] sm:$0xff] %v2071
        %2088 = vst [vmem:[#allocation3 + $0x58] sm:$0xff] %v2072
        %2089 = vst [vmem:[#allocation3 + $0x60] sm:$0xff] %v2073
        %2090 = vst [vmem:[#allocation3 + $0x68] sm:$0xff] %v2074
        %2091 = vst [vmem:[#allocation3 + $0x70] sm:$0xff] %v2075
        %2092 = vst [vmem:[#allocation3 + $0x78] sm:$0xff] %v2076
        %v2093 = vld [vmem:[#allocation2] sm:$0xfc]
        %v2094 = vld [vmem:[#allocation2 + $0x8] sm:$0xfc]
        %v2095 = vld [vmem:[#allocation2 + $0x10] sm:$0x3]
        %v2096 = vld [vmem:[#allocation2 + $0x18] sm:$0x3]
        %v2097 = vld [vmem:[#allocation2 + $0x20] sm:$0xfc]
        %v2098 = vld [vmem:[#allocation2 + $0x28] sm:$0xfc]
        %v2099 = vld [vmem:[#allocation2 + $0x30] sm:$0x3]
        %v2100 = vld [vmem:[#allocation2 + $0x38] sm:$0x3]
        %v2101 = vld [vmem:[#allocation2 + $0x40] sm:$0xfc]
        %v2102 = vld [vmem:[#allocation2 + $0x48] sm:$0xfc]
        %v2103 = vld [vmem:[#allocation2 + $0x50] sm:$0x3]
        %v2104 = vld [vmem:[#allocation2 + $0x58] sm:$0x3]
        %v2105 = vld [vmem:[#allocation2 + $0x60] sm:$0xfc]
        %v2106 = vld [vmem:[#allocation2 + $0x68] sm:$0xfc]
        %v2107 = vld [vmem:[#allocation2 + $0x70] sm:$0x3]
        %v2108 = vld [vmem:[#allocation2 + $0x78] sm:$0x3]
        %v2109 = vld [vmem:[#allocation2 + $0x80] sm:$0xfc]
        %v2110 = vld [vmem:[#allocation2 + $0x88] sm:$0xfc]
        %v2111 = vld [vmem:[#allocation2 + $0x90] sm:$0x3]
        %v2112 = vld [vmem:[#allocation2 + $0x98] sm:$0x3]
        %v2113 = vld [vmem:[#allocation2 + $0xa0] sm:$0xfc]
        %v2114 = vld [vmem:[#allocation2 + $0xa8] sm:$0xfc]
        %v2115 = vld [vmem:[#allocation2 + $0xb0] sm:$0x3]
        %v2116 = vld [vmem:[#allocation2 + $0xb8] sm:$0x3]
        %v2117 = vld [vmem:[#allocation2 + $0xc0] sm:$0xfc]
        %v2118 = vld [vmem:[#allocation2 + $0xc8] sm:$0xfc]
        %v2119 = vld [vmem:[#allocation2 + $0xd0] sm:$0x3]
        %v2120 = vld [vmem:[#allocation2 + $0xd8] sm:$0x3]
        %v2121 = vld [vmem:[#allocation2 + $0xe0] sm:$0xfc]
        %v2122 = vld [vmem:[#allocation2 + $0xe8] sm:$0xfc]
        %v2123 = vld [vmem:[#allocation2 + $0xf0] sm:$0x3]
        %v2124 = vld [vmem:[#allocation2 + $0xf8] sm:$0x3]
        %vm2157 = vcmask 1045504
        %v2158 = vrot.slane %v2093, 2
        %v2159 = vrot.slane %v2095, 2
        %v2160 = vsel %vm2157, %v2158, %v2159
        %v2161 = vrot.slane %v2094, 2
        %v2162 = vrot.slane %v2096, 2
        %v2163 = vsel %vm2157, %v2161, %v2162
        %v2164 = vrot.slane %v2097, 2
        %v2165 = vrot.slane %v2099, 2
        %v2166 = vsel %vm2157, %v2164, %v2165
        %v2167 = vrot.slane %v2098, 2
        %v2168 = vrot.slane %v2100, 2
        %v2169 = vsel %vm2157, %v2167, %v2168
        %v2170 = vrot.slane %v2101, 2
        %v2171 = vrot.slane %v2103, 2
        %v2172 = vsel %vm2157, %v2170, %v2171
        %v2173 = vrot.slane %v2102, 2
        %v2174 = vrot.slane %v2104, 2
        %v2175 = vsel %vm2157, %v2173, %v2174
        %v2176 = vrot.slane %v2105, 2
        %v2177 = vrot.slane %v2107, 2
        %v2178 = vsel %vm2157, %v2176, %v2177
        %v2179 = vrot.slane %v2106, 2
        %v2180 = vrot.slane %v2108, 2
        %v2181 = vsel %vm2157, %v2179, %v2180
        %v2182 = vrot.slane %v2109, 2
        %v2183 = vrot.slane %v2111, 2
        %v2184 = vsel %vm2157, %v2182, %v2183
        %v2185 = vrot.slane %v2110, 2
        %v2186 = vrot.slane %v2112, 2
        %v2187 = vsel %vm2157, %v2185, %v2186
        %v2188 = vrot.slane %v2113, 2
        %v2189 = vrot.slane %v2115, 2
        %v2190 = vsel %vm2157, %v2188, %v2189
        %v2191 = vrot.slane %v2114, 2
        %v2192 = vrot.slane %v2116, 2
        %v2193 = vsel %vm2157, %v2191, %v2192
        %v2194 = vrot.slane %v2117, 2
        %v2195 = vrot.slane %v2119, 2
        %v2196 = vsel %vm2157, %v2194, %v2195
        %v2197 = vrot.slane %v2118, 2
        %v2198 = vrot.slane %v2120, 2
        %v2199 = vsel %vm2157, %v2197, %v2198
        %v2200 = vrot.slane %v2121, 2
        %v2201 = vrot.slane %v2123, 2
        %v2202 = vsel %vm2157, %v2200, %v2201
        %v2203 = vrot.slane %v2122, 2
        %v2204 = vrot.slane %v2124, 2
        %v2205 = vsel %vm2157, %v2203, %v2204
        %v2222 = vld [vmem:[#allocation3] sm:$0xff]
        %v2223 = vld [vmem:[#allocation3 + $0x8] sm:$0xff]
        %v2224 = vld [vmem:[#allocation3 + $0x10] sm:$0xff]
        %v2225 = vld [vmem:[#allocation3 + $0x18] sm:$0xff]
        %v2226 = vld [vmem:[#allocation3 + $0x20] sm:$0xff]
        %v2227 = vld [vmem:[#allocation3 + $0x28] sm:$0xff]
        %v2228 = vld [vmem:[#allocation3 + $0x30] sm:$0xff]
        %v2229 = vld [vmem:[#allocation3 + $0x38] sm:$0xff]
        %v2230 = vld [vmem:[#allocation3 + $0x40] sm:$0xff]
        %v2231 = vld [vmem:[#allocation3 + $0x48] sm:$0xff]
        %v2232 = vld [vmem:[#allocation3 + $0x50] sm:$0xff]
        %v2233 = vld [vmem:[#allocation3 + $0x58] sm:$0xff]
        %v2234 = vld [vmem:[#allocation3 + $0x60] sm:$0xff]
        %v2235 = vld [vmem:[#allocation3 + $0x68] sm:$0xff]
        %v2236 = vld [vmem:[#allocation3 + $0x70] sm:$0xff]
        %v2237 = vld [vmem:[#allocation3 + $0x78] sm:$0xff]
        %s2238 = scalar_lea.vmem [#allocation15], 1024
        %v2239 = vld [vmem:[%s2238] sm:$0xff]
        %v2240 = vld [vmem:[%s2238 + $0x8] sm:$0xff]
        %v2241 = vld [vmem:[%s2238 + $0x10] sm:$0xff]
        %v2242 = vld [vmem:[%s2238 + $0x18] sm:$0xff]
        %v2243 = vld [vmem:[%s2238 + $0x20] sm:$0xff]
        %v2244 = vld [vmem:[%s2238 + $0x28] sm:$0xff]
        %v2245 = vld [vmem:[%s2238 + $0x30] sm:$0xff]
        %v2246 = vld [vmem:[%s2238 + $0x38] sm:$0xff]
        %v2247 = vld [vmem:[%s2238 + $0x40] sm:$0xff]
        %v2248 = vld [vmem:[%s2238 + $0x48] sm:$0xff]
        %v2249 = vld [vmem:[%s2238 + $0x50] sm:$0xff]
        %v2250 = vld [vmem:[%s2238 + $0x58] sm:$0xff]
        %v2251 = vld [vmem:[%s2238 + $0x60] sm:$0xff]
        %v2252 = vld [vmem:[%s2238 + $0x68] sm:$0xff]
        %v2253 = vld [vmem:[%s2238 + $0x70] sm:$0xff]
        %v2254 = vld [vmem:[%s2238 + $0x78] sm:$0xff]
        %v2255 = vld [vmem:[%s2238 + $0x80] sm:$0xff]
        %v2256 = vld [vmem:[%s2238 + $0x88] sm:$0xff]
        %v2257 = vld [vmem:[%s2238 + $0x90] sm:$0xff]
        %v2258 = vld [vmem:[%s2238 + $0x98] sm:$0xff]
        %v2259 = vld [vmem:[%s2238 + $0xa0] sm:$0xff]
        %v2260 = vld [vmem:[%s2238 + $0xa8] sm:$0xff]
        %v2261 = vld [vmem:[%s2238 + $0xb0] sm:$0xff]
        %v2262 = vld [vmem:[%s2238 + $0xb8] sm:$0xff]
        %v2263 = vld [vmem:[%s2238 + $0xc0] sm:$0xff]
        %v2264 = vld [vmem:[%s2238 + $0xc8] sm:$0xff]
        %v2265 = vld [vmem:[%s2238 + $0xd0] sm:$0xff]
        %v2266 = vld [vmem:[%s2238 + $0xd8] sm:$0xff]
        %v2267 = vld [vmem:[%s2238 + $0xe0] sm:$0xff]
        %v2268 = vld [vmem:[%s2238 + $0xe8] sm:$0xff]
        %v2269 = vld [vmem:[%s2238 + $0xf0] sm:$0xff]
        %v2270 = vld [vmem:[%s2238 + $0xf8] sm:$0xff]
        %v2271 = vld [vmem:[%s2238 + $0x100] sm:$0xff]
        %v2272 = vld [vmem:[%s2238 + $0x108] sm:$0xff]
        %v2273 = vld [vmem:[%s2238 + $0x110] sm:$0xff]
        %v2274 = vld [vmem:[%s2238 + $0x118] sm:$0xff]
        %v2275 = vld [vmem:[%s2238 + $0x120] sm:$0xff]
        %v2276 = vld [vmem:[%s2238 + $0x128] sm:$0xff]
        %v2277 = vld [vmem:[%s2238 + $0x130] sm:$0xff]
        %v2278 = vld [vmem:[%s2238 + $0x138] sm:$0xff]
        %v2279 = vld [vmem:[%s2238 + $0x140] sm:$0xff]
        %v2280 = vld [vmem:[%s2238 + $0x148] sm:$0xff]
        %v2281 = vld [vmem:[%s2238 + $0x150] sm:$0xff]
        %v2282 = vld [vmem:[%s2238 + $0x158] sm:$0xff]
        %v2283 = vld [vmem:[%s2238 + $0x160] sm:$0xff]
        %v2284 = vld [vmem:[%s2238 + $0x168] sm:$0xff]
        %v2285 = vld [vmem:[%s2238 + $0x170] sm:$0xff]
        %v2286 = vld [vmem:[%s2238 + $0x178] sm:$0xff]
        %v2287 = vld [vmem:[%s2238 + $0x180] sm:$0xff]
        %v2288 = vld [vmem:[%s2238 + $0x188] sm:$0xff]
        %v2289 = vld [vmem:[%s2238 + $0x190] sm:$0xff]
        %v2290 = vld [vmem:[%s2238 + $0x198] sm:$0xff]
        %v2291 = vld [vmem:[%s2238 + $0x1a0] sm:$0xff]
        %v2292 = vld [vmem:[%s2238 + $0x1a8] sm:$0xff]
        %v2293 = vld [vmem:[%s2238 + $0x1b0] sm:$0xff]
        %v2294 = vld [vmem:[%s2238 + $0x1b8] sm:$0xff]
        %v2295 = vld [vmem:[%s2238 + $0x1c0] sm:$0xff]
        %v2296 = vld [vmem:[%s2238 + $0x1c8] sm:$0xff]
        %v2297 = vld [vmem:[%s2238 + $0x1d0] sm:$0xff]
        %v2298 = vld [vmem:[%s2238 + $0x1d8] sm:$0xff]
        %v2299 = vld [vmem:[%s2238 + $0x1e0] sm:$0xff]
        %v2300 = vld [vmem:[%s2238 + $0x1e8] sm:$0xff]
        %v2301 = vld [vmem:[%s2238 + $0x1f0] sm:$0xff]
        %v2302 = vld [vmem:[%s2238 + $0x1f8] sm:$0xff]
        %2303 = vmatpush.msra.mxu0 %v2269
        %2304 = vmatpush.msra.mxu0 %v2267
        %2305 = vmatpush.msra.mxu0 %v2265
        %2306 = vmatpush.msra.mxu0 %v2263
        %2307 = vmatpush.msra.mxu0 %v2261
        %2308 = vmatpush.msra.mxu0 %v2259
        %2309 = vmatpush.msra.mxu0 %v2257
        %2310 = vmatpush.msra.mxu0 %v2255
        %2311 = vmatpush.msra.mxu0 %v2253
        %2312 = vmatpush.msra.mxu0 %v2251
        %2313 = vmatpush.msra.mxu0 %v2249
        %2314 = vmatpush.msra.mxu0 %v2247
        %2315 = vmatpush.msra.mxu0 %v2245
        %2316 = vmatpush.msra.mxu0 %v2243
        %2317 = vmatpush.msra.mxu0 %v2241
        %2318 = vmatpush.msra.mxu0 %v2239
        %2319 = vmatmul.f32.gmra.mxu0 %v2160
        %v2320 = vpop.f32.mrf.mxu0
        %v2321 = vadd.f32 0.0, %v2320
        %2322 = vmatmul.f32.gmra.mxu0 %v2166
        %v2323 = vpop.f32.mrf.mxu0
        %v2324 = vadd.f32 0.0, %v2323
        %2325 = vmatmul.f32.gmra.mxu0 %v2172
        %v2326 = vpop.f32.mrf.mxu0
        %v2327 = vadd.f32 0.0, %v2326
        %2328 = vmatmul.f32.gmra.mxu0 %v2178
        %v2329 = vpop.f32.mrf.mxu0
        %v2330 = vadd.f32 0.0, %v2329
        %2331 = vmatmul.f32.gmra.mxu0 %v2184
        %v2332 = vpop.f32.mrf.mxu0
        %v2333 = vadd.f32 0.0, %v2332
        %2334 = vmatmul.f32.gmra.mxu0 %v2190
        %v2335 = vpop.f32.mrf.mxu0
        %v2336 = vadd.f32 0.0, %v2335
        %2337 = vmatmul.f32.gmra.mxu0 %v2196
        %v2338 = vpop.f32.mrf.mxu0
        %v2339 = vadd.f32 0.0, %v2338
        %2340 = vmatmul.f32.gmra.mxu0 %v2202
        %v2341 = vpop.f32.mrf.mxu0
        %v2342 = vadd.f32 0.0, %v2341
        %2343 = vdwg.mxu0
        %2344 = vmatpush.msra.mxu0 %v2301
        %2345 = vmatpush.msra.mxu0 %v2299
        %2346 = vmatpush.msra.mxu0 %v2297
        %2347 = vmatpush.msra.mxu0 %v2295
        %2348 = vmatpush.msra.mxu0 %v2293
        %2349 = vmatpush.msra.mxu0 %v2291
        %2350 = vmatpush.msra.mxu0 %v2289
        %2351 = vmatpush.msra.mxu0 %v2287
        %2352 = vmatpush.msra.mxu0 %v2285
        %2353 = vmatpush.msra.mxu0 %v2283
        %2354 = vmatpush.msra.mxu0 %v2281
        %2355 = vmatpush.msra.mxu0 %v2279
        %2356 = vmatpush.msra.mxu0 %v2277
        %2357 = vmatpush.msra.mxu0 %v2275
        %2358 = vmatpush.msra.mxu0 %v2273
        %2359 = vmatpush.msra.mxu0 %v2271
        %2360 = vmatmul.f32.gmra.mxu0 %v2163
        %v2361 = vpop.f32.mrf.mxu0
        %v2362 = vadd.f32 %v2321, %v2361
        %2363 = vmatmul.f32.gmra.mxu0 %v2169
        %v2364 = vpop.f32.mrf.mxu0
        %v2365 = vadd.f32 %v2324, %v2364
        %2366 = vmatmul.f32.gmra.mxu0 %v2175
        %v2367 = vpop.f32.mrf.mxu0
        %v2368 = vadd.f32 %v2327, %v2367
        %2369 = vmatmul.f32.gmra.mxu0 %v2181
        %v2370 = vpop.f32.mrf.mxu0
        %v2371 = vadd.f32 %v2330, %v2370
        %2372 = vmatmul.f32.gmra.mxu0 %v2187
        %v2373 = vpop.f32.mrf.mxu0
        %v2374 = vadd.f32 %v2333, %v2373
        %2375 = vmatmul.f32.gmra.mxu0 %v2193
        %v2376 = vpop.f32.mrf.mxu0
        %v2377 = vadd.f32 %v2336, %v2376
        %2378 = vmatmul.f32.gmra.mxu0 %v2199
        %v2379 = vpop.f32.mrf.mxu0
        %v2380 = vadd.f32 %v2339, %v2379
        %2381 = vmatmul.f32.gmra.mxu0 %v2205
        %v2382 = vpop.f32.mrf.mxu0
        %v2383 = vadd.f32 %v2342, %v2382
        %2384 = vdwg.mxu0
        %2385 = vmatpush.msra.mxu0 %v2270
        %2386 = vmatpush.msra.mxu0 %v2268
        %2387 = vmatpush.msra.mxu0 %v2266
        %2388 = vmatpush.msra.mxu0 %v2264
        %2389 = vmatpush.msra.mxu0 %v2262
        %2390 = vmatpush.msra.mxu0 %v2260
        %2391 = vmatpush.msra.mxu0 %v2258
        %2392 = vmatpush.msra.mxu0 %v2256
        %2393 = vmatpush.msra.mxu0 %v2254
        %2394 = vmatpush.msra.mxu0 %v2252
        %2395 = vmatpush.msra.mxu0 %v2250
        %2396 = vmatpush.msra.mxu0 %v2248
        %2397 = vmatpush.msra.mxu0 %v2246
        %2398 = vmatpush.msra.mxu0 %v2244
        %2399 = vmatpush.msra.mxu0 %v2242
        %2400 = vmatpush.msra.mxu0 %v2240
        %2401 = vmatmul.f32.gmra.mxu0 %v2160
        %v2402 = vpop.f32.mrf.mxu0
        %v2403 = vadd.f32 0.0, %v2402
        %2404 = vmatmul.f32.gmra.mxu0 %v2166
        %v2405 = vpop.f32.mrf.mxu0
        %v2406 = vadd.f32 0.0, %v2405
        %2407 = vmatmul.f32.gmra.mxu0 %v2172
        %v2408 = vpop.f32.mrf.mxu0
        %v2409 = vadd.f32 0.0, %v2408
        %2410 = vmatmul.f32.gmra.mxu0 %v2178
        %v2411 = vpop.f32.mrf.mxu0
        %v2412 = vadd.f32 0.0, %v2411
        %2413 = vmatmul.f32.gmra.mxu0 %v2184
        %v2414 = vpop.f32.mrf.mxu0
        %v2415 = vadd.f32 0.0, %v2414
        %2416 = vmatmul.f32.gmra.mxu0 %v2190
        %v2417 = vpop.f32.mrf.mxu0
        %v2418 = vadd.f32 0.0, %v2417
        %2419 = vmatmul.f32.gmra.mxu0 %v2196
        %v2420 = vpop.f32.mrf.mxu0
        %v2421 = vadd.f32 0.0, %v2420
        %2422 = vmatmul.f32.gmra.mxu0 %v2202
        %v2423 = vpop.f32.mrf.mxu0
        %v2424 = vadd.f32 0.0, %v2423
        %2425 = vdwg.mxu0
        %2426 = vmatpush.msra.mxu0 %v2302
        %2427 = vmatpush.msra.mxu0 %v2300
        %2428 = vmatpush.msra.mxu0 %v2298
        %2429 = vmatpush.msra.mxu0 %v2296
        %2430 = vmatpush.msra.mxu0 %v2294
        %2431 = vmatpush.msra.mxu0 %v2292
        %2432 = vmatpush.msra.mxu0 %v2290
        %2433 = vmatpush.msra.mxu0 %v2288
        %2434 = vmatpush.msra.mxu0 %v2286
        %2435 = vmatpush.msra.mxu0 %v2284
        %2436 = vmatpush.msra.mxu0 %v2282
        %2437 = vmatpush.msra.mxu0 %v2280
        %2438 = vmatpush.msra.mxu0 %v2278
        %2439 = vmatpush.msra.mxu0 %v2276
        %2440 = vmatpush.msra.mxu0 %v2274
        %2441 = vmatpush.msra.mxu0 %v2272
        %2442 = vmatmul.f32.gmra.mxu0 %v2163
        %v2443 = vpop.f32.mrf.mxu0
        %v2444 = vadd.f32 %v2403, %v2443
        %2445 = vmatmul.f32.gmra.mxu0 %v2169
        %v2446 = vpop.f32.mrf.mxu0
        %v2447 = vadd.f32 %v2406, %v2446
        %2448 = vmatmul.f32.gmra.mxu0 %v2175
        %v2449 = vpop.f32.mrf.mxu0
        %v2450 = vadd.f32 %v2409, %v2449
        %2451 = vmatmul.f32.gmra.mxu0 %v2181
        %v2452 = vpop.f32.mrf.mxu0
        %v2453 = vadd.f32 %v2412, %v2452
        %2454 = vmatmul.f32.gmra.mxu0 %v2187
        %v2455 = vpop.f32.mrf.mxu0
        %v2456 = vadd.f32 %v2415, %v2455
        %2457 = vmatmul.f32.gmra.mxu0 %v2193
        %v2458 = vpop.f32.mrf.mxu0
        %v2459 = vadd.f32 %v2418, %v2458
        %2460 = vmatmul.f32.gmra.mxu0 %v2199
        %v2461 = vpop.f32.mrf.mxu0
        %v2462 = vadd.f32 %v2421, %v2461
        %2463 = vmatmul.f32.gmra.mxu0 %v2205
        %v2464 = vpop.f32.mrf.mxu0
        %v2465 = vadd.f32 %v2424, %v2464
        %2466 = vdwg.mxu0
        %v2467 = vadd.f32 %v2222, %v2362
        %v2468 = vadd.f32 %v2223, %v2444
        %v2469 = vadd.f32 %v2224, %v2365
        %v2470 = vadd.f32 %v2225, %v2447
        %v2471 = vadd.f32 %v2226, %v2368
        %v2472 = vadd.f32 %v2227, %v2450
        %v2473 = vadd.f32 %v2228, %v2371
        %v2474 = vadd.f32 %v2229, %v2453
        %v2475 = vadd.f32 %v2230, %v2374
        %v2476 = vadd.f32 %v2231, %v2456
        %v2477 = vadd.f32 %v2232, %v2377
        %v2478 = vadd.f32 %v2233, %v2459
        %v2479 = vadd.f32 %v2234, %v2380
        %v2480 = vadd.f32 %v2235, %v2462
        %v2481 = vadd.f32 %v2236, %v2383
        %v2482 = vadd.f32 %v2237, %v2465
        %2483 = vst [vmem:[#allocation3] sm:$0xff] %v2467
        %2484 = vst [vmem:[#allocation3 + $0x8] sm:$0xff] %v2468
        %2485 = vst [vmem:[#allocation3 + $0x10] sm:$0xff] %v2469
        %2486 = vst [vmem:[#allocation3 + $0x18] sm:$0xff] %v2470
        %2487 = vst [vmem:[#allocation3 + $0x20] sm:$0xff] %v2471
        %2488 = vst [vmem:[#allocation3 + $0x28] sm:$0xff] %v2472
        %2489 = vst [vmem:[#allocation3 + $0x30] sm:$0xff] %v2473
        %2490 = vst [vmem:[#allocation3 + $0x38] sm:$0xff] %v2474
        %2491 = vst [vmem:[#allocation3 + $0x40] sm:$0xff] %v2475
        %2492 = vst [vmem:[#allocation3 + $0x48] sm:$0xff] %v2476
        %2493 = vst [vmem:[#allocation3 + $0x50] sm:$0xff] %v2477
        %2494 = vst [vmem:[#allocation3 + $0x58] sm:$0xff] %v2478
        %2495 = vst [vmem:[#allocation3 + $0x60] sm:$0xff] %v2479
        %2496 = vst [vmem:[#allocation3 + $0x68] sm:$0xff] %v2480
        %2497 = vst [vmem:[#allocation3 + $0x70] sm:$0xff] %v2481
        %2498 = vst [vmem:[#allocation3 + $0x78] sm:$0xff] %v2482
        %v2499 = vld [vmem:[%s1346] sm:$0xff]
        %v2500 = vld [vmem:[%s1346 + $0x8] sm:$0xff]
        %v2501 = vld [vmem:[%s1346 + $0x20] sm:$0xff]
        %v2502 = vld [vmem:[%s1346 + $0x28] sm:$0xff]
        %v2503 = vld [vmem:[%s1346 + $0x40] sm:$0xff]
        %v2504 = vld [vmem:[%s1346 + $0x48] sm:$0xff]
        %v2505 = vld [vmem:[%s1346 + $0x60] sm:$0xff]
        %v2506 = vld [vmem:[%s1346 + $0x68] sm:$0xff]
        %v2507 = vld [vmem:[%s1346 + $0x80] sm:$0xff]
        %v2508 = vld [vmem:[%s1346 + $0x88] sm:$0xff]
        %v2509 = vld [vmem:[%s1346 + $0xa0] sm:$0xff]
        %v2510 = vld [vmem:[%s1346 + $0xa8] sm:$0xff]
        %v2511 = vld [vmem:[%s1346 + $0xc0] sm:$0xff]
        %v2512 = vld [vmem:[%s1346 + $0xc8] sm:$0xff]
        %v2513 = vld [vmem:[%s1346 + $0xe0] sm:$0xff]
        %v2514 = vld [vmem:[%s1346 + $0xe8] sm:$0xff]
        %v2515 = vld [vmem:[#allocation3] sm:$0xff]
        %v2516 = vld [vmem:[#allocation3 + $0x8] sm:$0xff]
        %v2517 = vld [vmem:[#allocation3 + $0x10] sm:$0xff]
        %v2518 = vld [vmem:[#allocation3 + $0x18] sm:$0xff]
        %v2519 = vld [vmem:[#allocation3 + $0x20] sm:$0xff]
        %v2520 = vld [vmem:[#allocation3 + $0x28] sm:$0xff]
        %v2521 = vld [vmem:[#allocation3 + $0x30] sm:$0xff]
        %v2522 = vld [vmem:[#allocation3 + $0x38] sm:$0xff]
        %v2523 = vld [vmem:[#allocation3 + $0x40] sm:$0xff]
        %v2524 = vld [vmem:[#allocation3 + $0x48] sm:$0xff]
        %v2525 = vld [vmem:[#allocation3 + $0x50] sm:$0xff]
        %v2526 = vld [vmem:[#allocation3 + $0x58] sm:$0xff]
        %v2527 = vld [vmem:[#allocation3 + $0x60] sm:$0xff]
        %v2528 = vld [vmem:[#allocation3 + $0x68] sm:$0xff]
        %v2529 = vld [vmem:[#allocation3 + $0x70] sm:$0xff]
        %v2530 = vld [vmem:[#allocation3 + $0x78] sm:$0xff]
        %s2531 = scalar_lea.vmem [#allocation15], 1536
        %v2532 = vld [vmem:[%s2531] sm:$0xff]
        %v2533 = vld [vmem:[%s2531 + $0x8] sm:$0xff]
        %v2534 = vld [vmem:[%s2531 + $0x10] sm:$0xff]
        %v2535 = vld [vmem:[%s2531 + $0x18] sm:$0xff]
        %v2536 = vld [vmem:[%s2531 + $0x20] sm:$0xff]
        %v2537 = vld [vmem:[%s2531 + $0x28] sm:$0xff]
        %v2538 = vld [vmem:[%s2531 + $0x30] sm:$0xff]
        %v2539 = vld [vmem:[%s2531 + $0x38] sm:$0xff]
        %v2540 = vld [vmem:[%s2531 + $0x40] sm:$0xff]
        %v2541 = vld [vmem:[%s2531 + $0x48] sm:$0xff]
        %v2542 = vld [vmem:[%s2531 + $0x50] sm:$0xff]
        %v2543 = vld [vmem:[%s2531 + $0x58] sm:$0xff]
        %v2544 = vld [vmem:[%s2531 + $0x60] sm:$0xff]
        %v2545 = vld [vmem:[%s2531 + $0x68] sm:$0xff]
        %v2546 = vld [vmem:[%s2531 + $0x70] sm:$0xff]
        %v2547 = vld [vmem:[%s2531 + $0x78] sm:$0xff]
        %v2548 = vld [vmem:[%s2531 + $0x80] sm:$0xff]
        %v2549 = vld [vmem:[%s2531 + $0x88] sm:$0xff]
        %v2550 = vld [vmem:[%s2531 + $0x90] sm:$0xff]
        %v2551 = vld [vmem:[%s2531 + $0x98] sm:$0xff]
        %v2552 = vld [vmem:[%s2531 + $0xa0] sm:$0xff]
        %v2553 = vld [vmem:[%s2531 + $0xa8] sm:$0xff]
        %v2554 = vld [vmem:[%s2531 + $0xb0] sm:$0xff]
        %v2555 = vld [vmem:[%s2531 + $0xb8] sm:$0xff]
        %v2556 = vld [vmem:[%s2531 + $0xc0] sm:$0xff]
        %v2557 = vld [vmem:[%s2531 + $0xc8] sm:$0xff]
        %v2558 = vld [vmem:[%s2531 + $0xd0] sm:$0xff]
        %v2559 = vld [vmem:[%s2531 + $0xd8] sm:$0xff]
        %v2560 = vld [vmem:[%s2531 + $0xe0] sm:$0xff]
        %v2561 = vld [vmem:[%s2531 + $0xe8] sm:$0xff]
        %v2562 = vld [vmem:[%s2531 + $0xf0] sm:$0xff]
        %v2563 = vld [vmem:[%s2531 + $0xf8] sm:$0xff]
        %v2564 = vld [vmem:[%s2531 + $0x100] sm:$0xff]
        %v2565 = vld [vmem:[%s2531 + $0x108] sm:$0xff]
        %v2566 = vld [vmem:[%s2531 + $0x110] sm:$0xff]
        %v2567 = vld [vmem:[%s2531 + $0x118] sm:$0xff]
        %v2568 = vld [vmem:[%s2531 + $0x120] sm:$0xff]
        %v2569 = vld [vmem:[%s2531 + $0x128] sm:$0xff]
        %v2570 = vld [vmem:[%s2531 + $0x130] sm:$0xff]
        %v2571 = vld [vmem:[%s2531 + $0x138] sm:$0xff]
        %v2572 = vld [vmem:[%s2531 + $0x140] sm:$0xff]
        %v2573 = vld [vmem:[%s2531 + $0x148] sm:$0xff]
        %v2574 = vld [vmem:[%s2531 + $0x150] sm:$0xff]
        %v2575 = vld [vmem:[%s2531 + $0x158] sm:$0xff]
        %v2576 = vld [vmem:[%s2531 + $0x160] sm:$0xff]
        %v2577 = vld [vmem:[%s2531 + $0x168] sm:$0xff]
        %v2578 = vld [vmem:[%s2531 + $0x170] sm:$0xff]
        %v2579 = vld [vmem:[%s2531 + $0x178] sm:$0xff]
        %v2580 = vld [vmem:[%s2531 + $0x180] sm:$0xff]
        %v2581 = vld [vmem:[%s2531 + $0x188] sm:$0xff]
        %v2582 = vld [vmem:[%s2531 + $0x190] sm:$0xff]
        %v2583 = vld [vmem:[%s2531 + $0x198] sm:$0xff]
        %v2584 = vld [vmem:[%s2531 + $0x1a0] sm:$0xff]
        %v2585 = vld [vmem:[%s2531 + $0x1a8] sm:$0xff]
        %v2586 = vld [vmem:[%s2531 + $0x1b0] sm:$0xff]
        %v2587 = vld [vmem:[%s2531 + $0x1b8] sm:$0xff]
        %v2588 = vld [vmem:[%s2531 + $0x1c0] sm:$0xff]
        %v2589 = vld [vmem:[%s2531 + $0x1c8] sm:$0xff]
        %v2590 = vld [vmem:[%s2531 + $0x1d0] sm:$0xff]
        %v2591 = vld [vmem:[%s2531 + $0x1d8] sm:$0xff]
        %v2592 = vld [vmem:[%s2531 + $0x1e0] sm:$0xff]
        %v2593 = vld [vmem:[%s2531 + $0x1e8] sm:$0xff]
        %v2594 = vld [vmem:[%s2531 + $0x1f0] sm:$0xff]
        %v2595 = vld [vmem:[%s2531 + $0x1f8] sm:$0xff]
        %2596 = vmatpush.msra.mxu0 %v2562
        %2597 = vmatpush.msra.mxu0 %v2560
        %2598 = vmatpush.msra.mxu0 %v2558
        %2599 = vmatpush.msra.mxu0 %v2556
        %2600 = vmatpush.msra.mxu0 %v2554
        %2601 = vmatpush.msra.mxu0 %v2552
        %2602 = vmatpush.msra.mxu0 %v2550
        %2603 = vmatpush.msra.mxu0 %v2548
        %2604 = vmatpush.msra.mxu0 %v2546
        %2605 = vmatpush.msra.mxu0 %v2544
        %2606 = vmatpush.msra.mxu0 %v2542
        %2607 = vmatpush.msra.mxu0 %v2540
        %2608 = vmatpush.msra.mxu0 %v2538
        %2609 = vmatpush.msra.mxu0 %v2536
        %2610 = vmatpush.msra.mxu0 %v2534
        %2611 = vmatpush.msra.mxu0 %v2532
        %2612 = vmatmul.f32.gmra.mxu0 %v2499
        %v2613 = vpop.f32.mrf.mxu0
        %v2614 = vadd.f32 0.0, %v2613
        %2615 = vmatmul.f32.gmra.mxu0 %v2501
        %v2616 = vpop.f32.mrf.mxu0
        %v2617 = vadd.f32 0.0, %v2616
        %2618 = vmatmul.f32.gmra.mxu0 %v2503
        %v2619 = vpop.f32.mrf.mxu0
        %v2620 = vadd.f32 0.0, %v2619
        %2621 = vmatmul.f32.gmra.mxu0 %v2505
        %v2622 = vpop.f32.mrf.mxu0
        %v2623 = vadd.f32 0.0, %v2622
        %2624 = vmatmul.f32.gmra.mxu0 %v2507
        %v2625 = vpop.f32.mrf.mxu0
        %v2626 = vadd.f32 0.0, %v2625
        %2627 = vmatmul.f32.gmra.mxu0 %v2509
        %v2628 = vpop.f32.mrf.mxu0
        %v2629 = vadd.f32 0.0, %v2628
        %2630 = vmatmul.f32.gmra.mxu0 %v2511
        %v2631 = vpop.f32.mrf.mxu0
        %v2632 = vadd.f32 0.0, %v2631
        %2633 = vmatmul.f32.gmra.mxu0 %v2513
        %v2634 = vpop.f32.mrf.mxu0
        %v2635 = vadd.f32 0.0, %v2634
        %2636 = vdwg.mxu0
        %2637 = vmatpush.msra.mxu0 %v2594
        %2638 = vmatpush.msra.mxu0 %v2592
        %2639 = vmatpush.msra.mxu0 %v2590
        %2640 = vmatpush.msra.mxu0 %v2588
        %2641 = vmatpush.msra.mxu0 %v2586
        %2642 = vmatpush.msra.mxu0 %v2584
        %2643 = vmatpush.msra.mxu0 %v2582
        %2644 = vmatpush.msra.mxu0 %v2580
        %2645 = vmatpush.msra.mxu0 %v2578
        %2646 = vmatpush.msra.mxu0 %v2576
        %2647 = vmatpush.msra.mxu0 %v2574
        %2648 = vmatpush.msra.mxu0 %v2572
        %2649 = vmatpush.msra.mxu0 %v2570
        %2650 = vmatpush.msra.mxu0 %v2568
        %2651 = vmatpush.msra.mxu0 %v2566
        %2652 = vmatpush.msra.mxu0 %v2564
        %2653 = vmatmul.f32.gmra.mxu0 %v2500
        %v2654 = vpop.f32.mrf.mxu0
        %v2655 = vadd.f32 %v2614, %v2654
        %2656 = vmatmul.f32.gmra.mxu0 %v2502
        %v2657 = vpop.f32.mrf.mxu0
        %v2658 = vadd.f32 %v2617, %v2657
        %2659 = vmatmul.f32.gmra.mxu0 %v2504
        %v2660 = vpop.f32.mrf.mxu0
        %v2661 = vadd.f32 %v2620, %v2660
        %2662 = vmatmul.f32.gmra.mxu0 %v2506
        %v2663 = vpop.f32.mrf.mxu0
        %v2664 = vadd.f32 %v2623, %v2663
        %2665 = vmatmul.f32.gmra.mxu0 %v2508
        %v2666 = vpop.f32.mrf.mxu0
        %v2667 = vadd.f32 %v2626, %v2666
        %2668 = vmatmul.f32.gmra.mxu0 %v2510
        %v2669 = vpop.f32.mrf.mxu0
        %v2670 = vadd.f32 %v2629, %v2669
        %2671 = vmatmul.f32.gmra.mxu0 %v2512
        %v2672 = vpop.f32.mrf.mxu0
        %v2673 = vadd.f32 %v2632, %v2672
        %2674 = vmatmul.f32.gmra.mxu0 %v2514
        %v2675 = vpop.f32.mrf.mxu0
        %v2676 = vadd.f32 %v2635, %v2675
        %2677 = vdwg.mxu0
        %2678 = vmatpush.msra.mxu0 %v2563
        %2679 = vmatpush.msra.mxu0 %v2561
        %2680 = vmatpush.msra.mxu0 %v2559
        %2681 = vmatpush.msra.mxu0 %v2557
        %2682 = vmatpush.msra.mxu0 %v2555
        %2683 = vmatpush.msra.mxu0 %v2553
        %2684 = vmatpush.msra.mxu0 %v2551
        %2685 = vmatpush.msra.mxu0 %v2549
        %2686 = vmatpush.msra.mxu0 %v2547
        %2687 = vmatpush.msra.mxu0 %v2545
        %2688 = vmatpush.msra.mxu0 %v2543
        %2689 = vmatpush.msra.mxu0 %v2541
        %2690 = vmatpush.msra.mxu0 %v2539
        %2691 = vmatpush.msra.mxu0 %v2537
        %2692 = vmatpush.msra.mxu0 %v2535
        %2693 = vmatpush.msra.mxu0 %v2533
        %2694 = vmatmul.f32.gmra.mxu0 %v2499
        %v2695 = vpop.f32.mrf.mxu0
        %v2696 = vadd.f32 0.0, %v2695
        %2697 = vmatmul.f32.gmra.mxu0 %v2501
        %v2698 = vpop.f32.mrf.mxu0
        %v2699 = vadd.f32 0.0, %v2698
        %2700 = vmatmul.f32.gmra.mxu0 %v2503
        %v2701 = vpop.f32.mrf.mxu0
        %v2702 = vadd.f32 0.0, %v2701
        %2703 = vmatmul.f32.gmra.mxu0 %v2505
        %v2704 = vpop.f32.mrf.mxu0
        %v2705 = vadd.f32 0.0, %v2704
        %2706 = vmatmul.f32.gmra.mxu0 %v2507
        %v2707 = vpop.f32.mrf.mxu0
        %v2708 = vadd.f32 0.0, %v2707
        %2709 = vmatmul.f32.gmra.mxu0 %v2509
        %v2710 = vpop.f32.mrf.mxu0
        %v2711 = vadd.f32 0.0, %v2710
        %2712 = vmatmul.f32.gmra.mxu0 %v2511
        %v2713 = vpop.f32.mrf.mxu0
        %v2714 = vadd.f32 0.0, %v2713
        %2715 = vmatmul.f32.gmra.mxu0 %v2513
        %v2716 = vpop.f32.mrf.mxu0
        %v2717 = vadd.f32 0.0, %v2716
        %2718 = vdwg.mxu0
        %2719 = vmatpush.msra.mxu0 %v2595
        %2720 = vmatpush.msra.mxu0 %v2593
        %2721 = vmatpush.msra.mxu0 %v2591
        %2722 = vmatpush.msra.mxu0 %v2589
        %2723 = vmatpush.msra.mxu0 %v2587
        %2724 = vmatpush.msra.mxu0 %v2585
        %2725 = vmatpush.msra.mxu0 %v2583
        %2726 = vmatpush.msra.mxu0 %v2581
        %2727 = vmatpush.msra.mxu0 %v2579
        %2728 = vmatpush.msra.mxu0 %v2577
        %2729 = vmatpush.msra.mxu0 %v2575
        %2730 = vmatpush.msra.mxu0 %v2573
        %2731 = vmatpush.msra.mxu0 %v2571
        %2732 = vmatpush.msra.mxu0 %v2569
        %2733 = vmatpush.msra.mxu0 %v2567
        %2734 = vmatpush.msra.mxu0 %v2565
        %2735 = vmatmul.f32.gmra.mxu0 %v2500
        %v2736 = vpop.f32.mrf.mxu0
        %v2737 = vadd.f32 %v2696, %v2736
        %2738 = vmatmul.f32.gmra.mxu0 %v2502
        %v2739 = vpop.f32.mrf.mxu0
        %v2740 = vadd.f32 %v2699, %v2739
        %2741 = vmatmul.f32.gmra.mxu0 %v2504
        %v2742 = vpop.f32.mrf.mxu0
        %v2743 = vadd.f32 %v2702, %v2742
        %2744 = vmatmul.f32.gmra.mxu0 %v2506
        %v2745 = vpop.f32.mrf.mxu0
        %v2746 = vadd.f32 %v2705, %v2745
        %2747 = vmatmul.f32.gmra.mxu0 %v2508
        %v2748 = vpop.f32.mrf.mxu0
        %v2749 = vadd.f32 %v2708, %v2748
        %2750 = vmatmul.f32.gmra.mxu0 %v2510
        %v2751 = vpop.f32.mrf.mxu0
        %v2752 = vadd.f32 %v2711, %v2751
        %2753 = vmatmul.f32.gmra.mxu0 %v2512
        %v2754 = vpop.f32.mrf.mxu0
        %v2755 = vadd.f32 %v2714, %v2754
        %2756 = vmatmul.f32.gmra.mxu0 %v2514
        %v2757 = vpop.f32.mrf.mxu0
        %v2758 = vadd.f32 %v2717, %v2757
        %2759 = vdwg.mxu0
        %v2760 = vadd.f32 %v2515, %v2655
        %v2761 = vadd.f32 %v2516, %v2737
        %v2762 = vadd.f32 %v2517, %v2658
        %v2763 = vadd.f32 %v2518, %v2740
        %v2764 = vadd.f32 %v2519, %v2661
        %v2765 = vadd.f32 %v2520, %v2743
        %v2766 = vadd.f32 %v2521, %v2664
        %v2767 = vadd.f32 %v2522, %v2746
        %v2768 = vadd.f32 %v2523, %v2667
        %v2769 = vadd.f32 %v2524, %v2749
        %v2770 = vadd.f32 %v2525, %v2670
        %v2771 = vadd.f32 %v2526, %v2752
        %v2772 = vadd.f32 %v2527, %v2673
        %v2773 = vadd.f32 %v2528, %v2755
        %v2774 = vadd.f32 %v2529, %v2676
        %v2775 = vadd.f32 %v2530, %v2758
        %2776 = vst [vmem:[#allocation3] sm:$0xff] %v2760
        %2777 = vst [vmem:[#allocation3 + $0x8] sm:$0xff] %v2761
        %2778 = vst [vmem:[#allocation3 + $0x10] sm:$0xff] %v2762
        %2779 = vst [vmem:[#allocation3 + $0x18] sm:$0xff] %v2763
        %2780 = vst [vmem:[#allocation3 + $0x20] sm:$0xff] %v2764
        %2781 = vst [vmem:[#allocation3 + $0x28] sm:$0xff] %v2765
        %2782 = vst [vmem:[#allocation3 + $0x30] sm:$0xff] %v2766
        %2783 = vst [vmem:[#allocation3 + $0x38] sm:$0xff] %v2767
        %2784 = vst [vmem:[#allocation3 + $0x40] sm:$0xff] %v2768
        %2785 = vst [vmem:[#allocation3 + $0x48] sm:$0xff] %v2769
        %2786 = vst [vmem:[#allocation3 + $0x50] sm:$0xff] %v2770
        %2787 = vst [vmem:[#allocation3 + $0x58] sm:$0xff] %v2771
        %2788 = vst [vmem:[#allocation3 + $0x60] sm:$0xff] %v2772
        %2789 = vst [vmem:[#allocation3 + $0x68] sm:$0xff] %v2773
        %2790 = vst [vmem:[#allocation3 + $0x70] sm:$0xff] %v2774
        %2791 = vst [vmem:[#allocation3 + $0x78] sm:$0xff] %v2775
        %v2792 = vld [vmem:[%s1346] sm:$0xfe]
        %v2793 = vld [vmem:[%s1346 + $0x8] sm:$0xfe]
        %v2794 = vld [vmem:[%s1346 + $0x10] sm:$0x1]
        %v2795 = vld [vmem:[%s1346 + $0x18] sm:$0x1]
        %v2796 = vld [vmem:[%s1346 + $0x20] sm:$0xfe]
        %v2797 = vld [vmem:[%s1346 + $0x28] sm:$0xfe]
        %v2798 = vld [vmem:[%s1346 + $0x30] sm:$0x1]
        %v2799 = vld [vmem:[%s1346 + $0x38] sm:$0x1]
        %v2800 = vld [vmem:[%s1346 + $0x40] sm:$0xfe]
        %v2801 = vld [vmem:[%s1346 + $0x48] sm:$0xfe]
        %v2802 = vld [vmem:[%s1346 + $0x50] sm:$0x1]
        %v2803 = vld [vmem:[%s1346 + $0x58] sm:$0x1]
        %v2804 = vld [vmem:[%s1346 + $0x60] sm:$0xfe]
        %v2805 = vld [vmem:[%s1346 + $0x68] sm:$0xfe]
        %v2806 = vld [vmem:[%s1346 + $0x70] sm:$0x1]
        %v2807 = vld [vmem:[%s1346 + $0x78] sm:$0x1]
        %v2808 = vld [vmem:[%s1346 + $0x80] sm:$0xfe]
        %v2809 = vld [vmem:[%s1346 + $0x88] sm:$0xfe]
        %v2810 = vld [vmem:[%s1346 + $0x90] sm:$0x1]
        %v2811 = vld [vmem:[%s1346 + $0x98] sm:$0x1]
        %v2812 = vld [vmem:[%s1346 + $0xa0] sm:$0xfe]
        %v2813 = vld [vmem:[%s1346 + $0xa8] sm:$0xfe]
        %v2814 = vld [vmem:[%s1346 + $0xb0] sm:$0x1]
        %v2815 = vld [vmem:[%s1346 + $0xb8] sm:$0x1]
        %v2816 = vld [vmem:[%s1346 + $0xc0] sm:$0xfe]
        %v2817 = vld [vmem:[%s1346 + $0xc8] sm:$0xfe]
        %v2818 = vld [vmem:[%s1346 + $0xd0] sm:$0x1]
        %v2819 = vld [vmem:[%s1346 + $0xd8] sm:$0x1]
        %v2820 = vld [vmem:[%s1346 + $0xe0] sm:$0xfe]
        %v2821 = vld [vmem:[%s1346 + $0xe8] sm:$0xfe]
        %v2822 = vld [vmem:[%s1346 + $0xf0] sm:$0x1]
        %v2823 = vld [vmem:[%s1346 + $0xf8] sm:$0x1]
        %v2856 = vrot.slane %v2792, 1
        %v2857 = vrot.slane %v2794, 1
        %v2858 = vsel %vm1751, %v2856, %v2857
        %v2859 = vrot.slane %v2793, 1
        %v2860 = vrot.slane %v2795, 1
        %v2861 = vsel %vm1751, %v2859, %v2860
        %v2862 = vrot.slane %v2796, 1
        %v2863 = vrot.slane %v2798, 1
        %v2864 = vsel %vm1751, %v2862, %v2863
        %v2865 = vrot.slane %v2797, 1
        %v2866 = vrot.slane %v2799, 1
        %v2867 = vsel %vm1751, %v2865, %v2866
        %v2868 = vrot.slane %v2800, 1
        %v2869 = vrot.slane %v2802, 1
        %v2870 = vsel %vm1751, %v2868, %v2869
        %v2871 = vrot.slane %v2801, 1
        %v2872 = vrot.slane %v2803, 1
        %v2873 = vsel %vm1751, %v2871, %v2872
        %v2874 = vrot.slane %v2804, 1
        %v2875 = vrot.slane %v2806, 1
        %v2876 = vsel %vm1751, %v2874, %v2875
        %v2877 = vrot.slane %v2805, 1
        %v2878 = vrot.slane %v2807, 1
        %v2879 = vsel %vm1751, %v2877, %v2878
        %v2880 = vrot.slane %v2808, 1
        %v2881 = vrot.slane %v2810, 1
        %v2882 = vsel %vm1751, %v2880, %v2881
        %v2883 = vrot.slane %v2809, 1
        %v2884 = vrot.slane %v2811, 1
        %v2885 = vsel %vm1751, %v2883, %v2884
        %v2886 = vrot.slane %v2812, 1
        %v2887 = vrot.slane %v2814, 1
        %v2888 = vsel %vm1751, %v2886, %v2887
        %v2889 = vrot.slane %v2813, 1
        %v2890 = vrot.slane %v2815, 1
        %v2891 = vsel %vm1751, %v2889, %v2890
        %v2892 = vrot.slane %v2816, 1
        %v2893 = vrot.slane %v2818, 1
        %v2894 = vsel %vm1751, %v2892, %v2893
        %v2895 = vrot.slane %v2817, 1
        %v2896 = vrot.slane %v2819, 1
        %v2897 = vsel %vm1751, %v2895, %v2896
        %v2898 = vrot.slane %v2820, 1
        %v2899 = vrot.slane %v2822, 1
        %v2900 = vsel %vm1751, %v2898, %v2899
        %v2901 = vrot.slane %v2821, 1
        %v2902 = vrot.slane %v2823, 1
        %v2903 = vsel %vm1751, %v2901, %v2902
        %v2920 = vld [vmem:[#allocation3] sm:$0xff]
        %v2921 = vld [vmem:[#allocation3 + $0x8] sm:$0xff]
        %v2922 = vld [vmem:[#allocation3 + $0x10] sm:$0xff]
        %v2923 = vld [vmem:[#allocation3 + $0x18] sm:$0xff]
        %v2924 = vld [vmem:[#allocation3 + $0x20] sm:$0xff]
        %v2925 = vld [vmem:[#allocation3 + $0x28] sm:$0xff]
        %v2926 = vld [vmem:[#allocation3 + $0x30] sm:$0xff]
        %v2927 = vld [vmem:[#allocation3 + $0x38] sm:$0xff]
        %v2928 = vld [vmem:[#allocation3 + $0x40] sm:$0xff]
        %v2929 = vld [vmem:[#allocation3 + $0x48] sm:$0xff]
        %v2930 = vld [vmem:[#allocation3 + $0x50] sm:$0xff]
        %v2931 = vld [vmem:[#allocation3 + $0x58] sm:$0xff]
        %v2932 = vld [vmem:[#allocation3 + $0x60] sm:$0xff]
        %v2933 = vld [vmem:[#allocation3 + $0x68] sm:$0xff]
        %v2934 = vld [vmem:[#allocation3 + $0x70] sm:$0xff]
        %v2935 = vld [vmem:[#allocation3 + $0x78] sm:$0xff]
        %s2936 = scalar_lea.vmem [#allocation15], 2048
        %v2937 = vld [vmem:[%s2936] sm:$0xff]
        %v2938 = vld [vmem:[%s2936 + $0x8] sm:$0xff]
        %v2939 = vld [vmem:[%s2936 + $0x10] sm:$0xff]
        %v2940 = vld [vmem:[%s2936 + $0x18] sm:$0xff]
        %v2941 = vld [vmem:[%s2936 + $0x20] sm:$0xff]
        %v2942 = vld [vmem:[%s2936 + $0x28] sm:$0xff]
        %v2943 = vld [vmem:[%s2936 + $0x30] sm:$0xff]
        %v2944 = vld [vmem:[%s2936 + $0x38] sm:$0xff]
        %v2945 = vld [vmem:[%s2936 + $0x40] sm:$0xff]
        %v2946 = vld [vmem:[%s2936 + $0x48] sm:$0xff]
        %v2947 = vld [vmem:[%s2936 + $0x50] sm:$0xff]
        %v2948 = vld [vmem:[%s2936 + $0x58] sm:$0xff]
        %v2949 = vld [vmem:[%s2936 + $0x60] sm:$0xff]
        %v2950 = vld [vmem:[%s2936 + $0x68] sm:$0xff]
        %v2951 = vld [vmem:[%s2936 + $0x70] sm:$0xff]
        %v2952 = vld [vmem:[%s2936 + $0x78] sm:$0xff]
        %v2953 = vld [vmem:[%s2936 + $0x80] sm:$0xff]
        %v2954 = vld [vmem:[%s2936 + $0x88] sm:$0xff]
        %v2955 = vld [vmem:[%s2936 + $0x90] sm:$0xff]
        %v2956 = vld [vmem:[%s2936 + $0x98] sm:$0xff]
        %v2957 = vld [vmem:[%s2936 + $0xa0] sm:$0xff]
        %v2958 = vld [vmem:[%s2936 + $0xa8] sm:$0xff]
        %v2959 = vld [vmem:[%s2936 + $0xb0] sm:$0xff]
        %v2960 = vld [vmem:[%s2936 + $0xb8] sm:$0xff]
        %v2961 = vld [vmem:[%s2936 + $0xc0] sm:$0xff]
        %v2962 = vld [vmem:[%s2936 + $0xc8] sm:$0xff]
        %v2963 = vld [vmem:[%s2936 + $0xd0] sm:$0xff]
        %v2964 = vld [vmem:[%s2936 + $0xd8] sm:$0xff]
        %v2965 = vld [vmem:[%s2936 + $0xe0] sm:$0xff]
        %v2966 = vld [vmem:[%s2936 + $0xe8] sm:$0xff]
        %v2967 = vld [vmem:[%s2936 + $0xf0] sm:$0xff]
        %v2968 = vld [vmem:[%s2936 + $0xf8] sm:$0xff]
        %v2969 = vld [vmem:[%s2936 + $0x100] sm:$0xff]
        %v2970 = vld [vmem:[%s2936 + $0x108] sm:$0xff]
        %v2971 = vld [vmem:[%s2936 + $0x110] sm:$0xff]
        %v2972 = vld [vmem:[%s2936 + $0x118] sm:$0xff]
        %v2973 = vld [vmem:[%s2936 + $0x120] sm:$0xff]
        %v2974 = vld [vmem:[%s2936 + $0x128] sm:$0xff]
        %v2975 = vld [vmem:[%s2936 + $0x130] sm:$0xff]
        %v2976 = vld [vmem:[%s2936 + $0x138] sm:$0xff]
        %v2977 = vld [vmem:[%s2936 + $0x140] sm:$0xff]
        %v2978 = vld [vmem:[%s2936 + $0x148] sm:$0xff]
        %v2979 = vld [vmem:[%s2936 + $0x150] sm:$0xff]
        %v2980 = vld [vmem:[%s2936 + $0x158] sm:$0xff]
        %v2981 = vld [vmem:[%s2936 + $0x160] sm:$0xff]
        %v2982 = vld [vmem:[%s2936 + $0x168] sm:$0xff]
        %v2983 = vld [vmem:[%s2936 + $0x170] sm:$0xff]
        %v2984 = vld [vmem:[%s2936 + $0x178] sm:$0xff]
        %v2985 = vld [vmem:[%s2936 + $0x180] sm:$0xff]
        %v2986 = vld [vmem:[%s2936 + $0x188] sm:$0xff]
        %v2987 = vld [vmem:[%s2936 + $0x190] sm:$0xff]
        %v2988 = vld [vmem:[%s2936 + $0x198] sm:$0xff]
        %v2989 = vld [vmem:[%s2936 + $0x1a0] sm:$0xff]
        %v2990 = vld [vmem:[%s2936 + $0x1a8] sm:$0xff]
        %v2991 = vld [vmem:[%s2936 + $0x1b0] sm:$0xff]
        %v2992 = vld [vmem:[%s2936 + $0x1b8] sm:$0xff]
        %v2993 = vld [vmem:[%s2936 + $0x1c0] sm:$0xff]
        %v2994 = vld [vmem:[%s2936 + $0x1c8] sm:$0xff]
        %v2995 = vld [vmem:[%s2936 + $0x1d0] sm:$0xff]
        %v2996 = vld [vmem:[%s2936 + $0x1d8] sm:$0xff]
        %v2997 = vld [vmem:[%s2936 + $0x1e0] sm:$0xff]
        %v2998 = vld [vmem:[%s2936 + $0x1e8] sm:$0xff]
        %v2999 = vld [vmem:[%s2936 + $0x1f0] sm:$0xff]
        %v3000 = vld [vmem:[%s2936 + $0x1f8] sm:$0xff]
        %3001 = vmatpush.msra.mxu0 %v2967
        %3002 = vmatpush.msra.mxu0 %v2965
        %3003 = vmatpush.msra.mxu0 %v2963
        %3004 = vmatpush.msra.mxu0 %v2961
        %3005 = vmatpush.msra.mxu0 %v2959
        %3006 = vmatpush.msra.mxu0 %v2957
        %3007 = vmatpush.msra.mxu0 %v2955
        %3008 = vmatpush.msra.mxu0 %v2953
        %3009 = vmatpush.msra.mxu0 %v2951
        %3010 = vmatpush.msra.mxu0 %v2949
        %3011 = vmatpush.msra.mxu0 %v2947
        %3012 = vmatpush.msra.mxu0 %v2945
        %3013 = vmatpush.msra.mxu0 %v2943
        %3014 = vmatpush.msra.mxu0 %v2941
        %3015 = vmatpush.msra.mxu0 %v2939
        %3016 = vmatpush.msra.mxu0 %v2937
        %3017 = vmatmul.f32.gmra.mxu0 %v2858
        %v3018 = vpop.f32.mrf.mxu0
        %v3019 = vadd.f32 0.0, %v3018
        %3020 = vmatmul.f32.gmra.mxu0 %v2864
        %v3021 = vpop.f32.mrf.mxu0
        %v3022 = vadd.f32 0.0, %v3021
        %3023 = vmatmul.f32.gmra.mxu0 %v2870
        %v3024 = vpop.f32.mrf.mxu0
        %v3025 = vadd.f32 0.0, %v3024
        %3026 = vmatmul.f32.gmra.mxu0 %v2876
        %v3027 = vpop.f32.mrf.mxu0
        %v3028 = vadd.f32 0.0, %v3027
        %3029 = vmatmul.f32.gmra.mxu0 %v2882
        %v3030 = vpop.f32.mrf.mxu0
        %v3031 = vadd.f32 0.0, %v3030
        %3032 = vmatmul.f32.gmra.mxu0 %v2888
        %v3033 = vpop.f32.mrf.mxu0
        %v3034 = vadd.f32 0.0, %v3033
        %3035 = vmatmul.f32.gmra.mxu0 %v2894
        %v3036 = vpop.f32.mrf.mxu0
        %v3037 = vadd.f32 0.0, %v3036
        %3038 = vmatmul.f32.gmra.mxu0 %v2900
        %v3039 = vpop.f32.mrf.mxu0
        %v3040 = vadd.f32 0.0, %v3039
        %3041 = vdwg.mxu0
        %3042 = vmatpush.msra.mxu0 %v2999
        %3043 = vmatpush.msra.mxu0 %v2997
        %3044 = vmatpush.msra.mxu0 %v2995
        %3045 = vmatpush.msra.mxu0 %v2993
        %3046 = vmatpush.msra.mxu0 %v2991
        %3047 = vmatpush.msra.mxu0 %v2989
        %3048 = vmatpush.msra.mxu0 %v2987
        %3049 = vmatpush.msra.mxu0 %v2985
        %3050 = vmatpush.msra.mxu0 %v2983
        %3051 = vmatpush.msra.mxu0 %v2981
        %3052 = vmatpush.msra.mxu0 %v2979
        %3053 = vmatpush.msra.mxu0 %v2977
        %3054 = vmatpush.msra.mxu0 %v2975
        %3055 = vmatpush.msra.mxu0 %v2973
        %3056 = vmatpush.msra.mxu0 %v2971
        %3057 = vmatpush.msra.mxu0 %v2969
        %3058 = vmatmul.f32.gmra.mxu0 %v2861
        %v3059 = vpop.f32.mrf.mxu0
        %v3060 = vadd.f32 %v3019, %v3059
        %3061 = vmatmul.f32.gmra.mxu0 %v2867
        %v3062 = vpop.f32.mrf.mxu0
        %v3063 = vadd.f32 %v3022, %v3062
        %3064 = vmatmul.f32.gmra.mxu0 %v2873
        %v3065 = vpop.f32.mrf.mxu0
        %v3066 = vadd.f32 %v3025, %v3065
        %3067 = vmatmul.f32.gmra.mxu0 %v2879
        %v3068 = vpop.f32.mrf.mxu0
        %v3069 = vadd.f32 %v3028, %v3068
        %3070 = vmatmul.f32.gmra.mxu0 %v2885
        %v3071 = vpop.f32.mrf.mxu0
        %v3072 = vadd.f32 %v3031, %v3071
        %3073 = vmatmul.f32.gmra.mxu0 %v2891
        %v3074 = vpop.f32.mrf.mxu0
        %v3075 = vadd.f32 %v3034, %v3074
        %3076 = vmatmul.f32.gmra.mxu0 %v2897
        %v3077 = vpop.f32.mrf.mxu0
        %v3078 = vadd.f32 %v3037, %v3077
        %3079 = vmatmul.f32.gmra.mxu0 %v2903
        %v3080 = vpop.f32.mrf.mxu0
        %v3081 = vadd.f32 %v3040, %v3080
        %3082 = vdwg.mxu0
        %3083 = vmatpush.msra.mxu0 %v2968
        %3084 = vmatpush.msra.mxu0 %v2966
        %3085 = vmatpush.msra.mxu0 %v2964
        %3086 = vmatpush.msra.mxu0 %v2962
        %3087 = vmatpush.msra.mxu0 %v2960
        %3088 = vmatpush.msra.mxu0 %v2958
        %3089 = vmatpush.msra.mxu0 %v2956
        %3090 = vmatpush.msra.mxu0 %v2954
        %3091 = vmatpush.msra.mxu0 %v2952
        %3092 = vmatpush.msra.mxu0 %v2950
        %3093 = vmatpush.msra.mxu0 %v2948
        %3094 = vmatpush.msra.mxu0 %v2946
        %3095 = vmatpush.msra.mxu0 %v2944
        %3096 = vmatpush.msra.mxu0 %v2942
        %3097 = vmatpush.msra.mxu0 %v2940
        %3098 = vmatpush.msra.mxu0 %v2938
        %3099 = vmatmul.f32.gmra.mxu0 %v2858
        %v3100 = vpop.f32.mrf.mxu0
        %v3101 = vadd.f32 0.0, %v3100
        %3102 = vmatmul.f32.gmra.mxu0 %v2864
        %v3103 = vpop.f32.mrf.mxu0
        %v3104 = vadd.f32 0.0, %v3103
        %3105 = vmatmul.f32.gmra.mxu0 %v2870
        %v3106 = vpop.f32.mrf.mxu0
        %v3107 = vadd.f32 0.0, %v3106
        %3108 = vmatmul.f32.gmra.mxu0 %v2876
        %v3109 = vpop.f32.mrf.mxu0
        %v3110 = vadd.f32 0.0, %v3109
        %3111 = vmatmul.f32.gmra.mxu0 %v2882
        %v3112 = vpop.f32.mrf.mxu0
        %v3113 = vadd.f32 0.0, %v3112
        %3114 = vmatmul.f32.gmra.mxu0 %v2888
        %v3115 = vpop.f32.mrf.mxu0
        %v3116 = vadd.f32 0.0, %v3115
        %3117 = vmatmul.f32.gmra.mxu0 %v2894
        %v3118 = vpop.f32.mrf.mxu0
        %v3119 = vadd.f32 0.0, %v3118
        %3120 = vmatmul.f32.gmra.mxu0 %v2900
        %v3121 = vpop.f32.mrf.mxu0
        %v3122 = vadd.f32 0.0, %v3121
        %3123 = vdwg.mxu0
        %3124 = vmatpush.msra.mxu0 %v3000
        %3125 = vmatpush.msra.mxu0 %v2998
        %3126 = vmatpush.msra.mxu0 %v2996
        %3127 = vmatpush.msra.mxu0 %v2994
        %3128 = vmatpush.msra.mxu0 %v2992
        %3129 = vmatpush.msra.mxu0 %v2990
        %3130 = vmatpush.msra.mxu0 %v2988
        %3131 = vmatpush.msra.mxu0 %v2986
        %3132 = vmatpush.msra.mxu0 %v2984
        %3133 = vmatpush.msra.mxu0 %v2982
        %3134 = vmatpush.msra.mxu0 %v2980
        %3135 = vmatpush.msra.mxu0 %v2978
        %3136 = vmatpush.msra.mxu0 %v2976
        %3137 = vmatpush.msra.mxu0 %v2974
        %3138 = vmatpush.msra.mxu0 %v2972
        %3139 = vmatpush.msra.mxu0 %v2970
        %3140 = vmatmul.f32.gmra.mxu0 %v2861
        %v3141 = vpop.f32.mrf.mxu0
        %v3142 = vadd.f32 %v3101, %v3141
        %3143 = vmatmul.f32.gmra.mxu0 %v2867
        %v3144 = vpop.f32.mrf.mxu0
        %v3145 = vadd.f32 %v3104, %v3144
        %3146 = vmatmul.f32.gmra.mxu0 %v2873
        %v3147 = vpop.f32.mrf.mxu0
        %v3148 = vadd.f32 %v3107, %v3147
        %3149 = vmatmul.f32.gmra.mxu0 %v2879
        %v3150 = vpop.f32.mrf.mxu0
        %v3151 = vadd.f32 %v3110, %v3150
        %3152 = vmatmul.f32.gmra.mxu0 %v2885
        %v3153 = vpop.f32.mrf.mxu0
        %v3154 = vadd.f32 %v3113, %v3153
        %3155 = vmatmul.f32.gmra.mxu0 %v2891
        %v3156 = vpop.f32.mrf.mxu0
        %v3157 = vadd.f32 %v3116, %v3156
        %3158 = vmatmul.f32.gmra.mxu0 %v2897
        %v3159 = vpop.f32.mrf.mxu0
        %v3160 = vadd.f32 %v3119, %v3159
        %3161 = vmatmul.f32.gmra.mxu0 %v2903
        %v3162 = vpop.f32.mrf.mxu0
        %v3163 = vadd.f32 %v3122, %v3162
        %3164 = vdwg.mxu0
        %v3165 = vadd.f32 %v2920, %v3060
        %v3166 = vadd.f32 %v2921, %v3142
        %v3167 = vadd.f32 %v2922, %v3063
        %v3168 = vadd.f32 %v2923, %v3145
        %v3169 = vadd.f32 %v2924, %v3066
        %v3170 = vadd.f32 %v2925, %v3148
        %v3171 = vadd.f32 %v2926, %v3069
        %v3172 = vadd.f32 %v2927, %v3151
        %v3173 = vadd.f32 %v2928, %v3072
        %v3174 = vadd.f32 %v2929, %v3154
        %v3175 = vadd.f32 %v2930, %v3075
        %v3176 = vadd.f32 %v2931, %v3157
        %v3177 = vadd.f32 %v2932, %v3078
        %v3178 = vadd.f32 %v2933, %v3160
        %v3179 = vadd.f32 %v2934, %v3081
        %v3180 = vadd.f32 %v2935, %v3163
        %3181 = vst [vmem:[#allocation3] sm:$0xff] %v3165
        %3182 = vst [vmem:[#allocation3 + $0x8] sm:$0xff] %v3166
        %3183 = vst [vmem:[#allocation3 + $0x10] sm:$0xff] %v3167
        %3184 = vst [vmem:[#allocation3 + $0x18] sm:$0xff] %v3168
        %3185 = vst [vmem:[#allocation3 + $0x20] sm:$0xff] %v3169
        %3186 = vst [vmem:[#allocation3 + $0x28] sm:$0xff] %v3170
        %3187 = vst [vmem:[#allocation3 + $0x30] sm:$0xff] %v3171
        %3188 = vst [vmem:[#allocation3 + $0x38] sm:$0xff] %v3172
        %3189 = vst [vmem:[#allocation3 + $0x40] sm:$0xff] %v3173
        %3190 = vst [vmem:[#allocation3 + $0x48] sm:$0xff] %v3174
        %3191 = vst [vmem:[#allocation3 + $0x50] sm:$0xff] %v3175
        %3192 = vst [vmem:[#allocation3 + $0x58] sm:$0xff] %v3176
        %3193 = vst [vmem:[#allocation3 + $0x60] sm:$0xff] %v3177
        %3194 = vst [vmem:[#allocation3 + $0x68] sm:$0xff] %v3178
        %3195 = vst [vmem:[#allocation3 + $0x70] sm:$0xff] %v3179
        %3196 = vst [vmem:[#allocation3 + $0x78] sm:$0xff] %v3180
        %v3197 = vld [vmem:[%s1346] sm:$0xfc]
        %v3198 = vld [vmem:[%s1346 + $0x8] sm:$0xfc]
        %v3199 = vld [vmem:[%s1346 + $0x10] sm:$0x3]
        %v3200 = vld [vmem:[%s1346 + $0x18] sm:$0x3]
        %v3201 = vld [vmem:[%s1346 + $0x20] sm:$0xfc]
        %v3202 = vld [vmem:[%s1346 + $0x28] sm:$0xfc]
        %v3203 = vld [vmem:[%s1346 + $0x30] sm:$0x3]
        %v3204 = vld [vmem:[%s1346 + $0x38] sm:$0x3]
        %v3205 = vld [vmem:[%s1346 + $0x40] sm:$0xfc]
        %v3206 = vld [vmem:[%s1346 + $0x48] sm:$0xfc]
        %v3207 = vld [vmem:[%s1346 + $0x50] sm:$0x3]
        %v3208 = vld [vmem:[%s1346 + $0x58] sm:$0x3]
        %v3209 = vld [vmem:[%s1346 + $0x60] sm:$0xfc]
        %v3210 = vld [vmem:[%s1346 + $0x68] sm:$0xfc]
        %v3211 = vld [vmem:[%s1346 + $0x70] sm:$0x3]
        %v3212 = vld [vmem:[%s1346 + $0x78] sm:$0x3]
        %v3213 = vld [vmem:[%s1346 + $0x80] sm:$0xfc]
        %v3214 = vld [vmem:[%s1346 + $0x88] sm:$0xfc]
        %v3215 = vld [vmem:[%s1346 + $0x90] sm:$0x3]
        %v3216 = vld [vmem:[%s1346 + $0x98] sm:$0x3]
        %v3217 = vld [vmem:[%s1346 + $0xa0] sm:$0xfc]
        %v3218 = vld [vmem:[%s1346 + $0xa8] sm:$0xfc]
        %v3219 = vld [vmem:[%s1346 + $0xb0] sm:$0x3]
        %v3220 = vld [vmem:[%s1346 + $0xb8] sm:$0x3]
        %v3221 = vld [vmem:[%s1346 + $0xc0] sm:$0xfc]
        %v3222 = vld [vmem:[%s1346 + $0xc8] sm:$0xfc]
        %v3223 = vld [vmem:[%s1346 + $0xd0] sm:$0x3]
        %v3224 = vld [vmem:[%s1346 + $0xd8] sm:$0x3]
        %v3225 = vld [vmem:[%s1346 + $0xe0] sm:$0xfc]
        %v3226 = vld [vmem:[%s1346 + $0xe8] sm:$0xfc]
        %v3227 = vld [vmem:[%s1346 + $0xf0] sm:$0x3]
        %v3228 = vld [vmem:[%s1346 + $0xf8] sm:$0x3]
        %v3261 = vrot.slane %v3197, 2
        %v3262 = vrot.slane %v3199, 2
        %v3263 = vsel %vm2157, %v3261, %v3262
        %v3264 = vrot.slane %v3198, 2
        %v3265 = vrot.slane %v3200, 2
        %v3266 = vsel %vm2157, %v3264, %v3265
        %v3267 = vrot.slane %v3201, 2
        %v3268 = vrot.slane %v3203, 2
        %v3269 = vsel %vm2157, %v3267, %v3268
        %v3270 = vrot.slane %v3202, 2
        %v3271 = vrot.slane %v3204, 2
        %v3272 = vsel %vm2157, %v3270, %v3271
        %v3273 = vrot.slane %v3205, 2
        %v3274 = vrot.slane %v3207, 2
        %v3275 = vsel %vm2157, %v3273, %v3274
        %v3276 = vrot.slane %v3206, 2
        %v3277 = vrot.slane %v3208, 2
        %v3278 = vsel %vm2157, %v3276, %v3277
        %v3279 = vrot.slane %v3209, 2
        %v3280 = vrot.slane %v3211, 2
        %v3281 = vsel %vm2157, %v3279, %v3280
        %v3282 = vrot.slane %v3210, 2
        %v3283 = vrot.slane %v3212, 2
        %v3284 = vsel %vm2157, %v3282, %v3283
        %v3285 = vrot.slane %v3213, 2
        %v3286 = vrot.slane %v3215, 2
        %v3287 = vsel %vm2157, %v3285, %v3286
        %v3288 = vrot.slane %v3214, 2
        %v3289 = vrot.slane %v3216, 2
        %v3290 = vsel %vm2157, %v3288, %v3289
        %v3291 = vrot.slane %v3217, 2
        %v3292 = vrot.slane %v3219, 2
        %v3293 = vsel %vm2157, %v3291, %v3292
        %v3294 = vrot.slane %v3218, 2
        %v3295 = vrot.slane %v3220, 2
        %v3296 = vsel %vm2157, %v3294, %v3295
        %v3297 = vrot.slane %v3221, 2
        %v3298 = vrot.slane %v3223, 2
        %v3299 = vsel %vm2157, %v3297, %v3298
        %v3300 = vrot.slane %v3222, 2
        %v3301 = vrot.slane %v3224, 2
        %v3302 = vsel %vm2157, %v3300, %v3301
        %v3303 = vrot.slane %v3225, 2
        %v3304 = vrot.slane %v3227, 2
        %v3305 = vsel %vm2157, %v3303, %v3304
        %v3306 = vrot.slane %v3226, 2
        %v3307 = vrot.slane %v3228, 2
        %v3308 = vsel %vm2157, %v3306, %v3307
        %v3325 = vld [vmem:[#allocation3] sm:$0xff]
        %v3326 = vld [vmem:[#allocation3 + $0x8] sm:$0xff]
        %v3327 = vld [vmem:[#allocation3 + $0x10] sm:$0xff]
        %v3328 = vld [vmem:[#allocation3 + $0x18] sm:$0xff]
        %v3329 = vld [vmem:[#allocation3 + $0x20] sm:$0xff]
        %v3330 = vld [vmem:[#allocation3 + $0x28] sm:$0xff]
        %v3331 = vld [vmem:[#allocation3 + $0x30] sm:$0xff]
        %v3332 = vld [vmem:[#allocation3 + $0x38] sm:$0xff]
        %v3333 = vld [vmem:[#allocation3 + $0x40] sm:$0xff]
        %v3334 = vld [vmem:[#allocation3 + $0x48] sm:$0xff]
        %v3335 = vld [vmem:[#allocation3 + $0x50] sm:$0xff]
        %v3336 = vld [vmem:[#allocation3 + $0x58] sm:$0xff]
        %v3337 = vld [vmem:[#allocation3 + $0x60] sm:$0xff]
        %v3338 = vld [vmem:[#allocation3 + $0x68] sm:$0xff]
        %v3339 = vld [vmem:[#allocation3 + $0x70] sm:$0xff]
        %v3340 = vld [vmem:[#allocation3 + $0x78] sm:$0xff]
        %s3341 = scalar_lea.vmem [#allocation15], 2560
        %v3342 = vld [vmem:[%s3341] sm:$0xff]
        %v3343 = vld [vmem:[%s3341 + $0x8] sm:$0xff]
        %v3344 = vld [vmem:[%s3341 + $0x10] sm:$0xff]
        %v3345 = vld [vmem:[%s3341 + $0x18] sm:$0xff]
        %v3346 = vld [vmem:[%s3341 + $0x20] sm:$0xff]
        %v3347 = vld [vmem:[%s3341 + $0x28] sm:$0xff]
        %v3348 = vld [vmem:[%s3341 + $0x30] sm:$0xff]
        %v3349 = vld [vmem:[%s3341 + $0x38] sm:$0xff]
        %v3350 = vld [vmem:[%s3341 + $0x40] sm:$0xff]
        %v3351 = vld [vmem:[%s3341 + $0x48] sm:$0xff]
        %v3352 = vld [vmem:[%s3341 + $0x50] sm:$0xff]
        %v3353 = vld [vmem:[%s3341 + $0x58] sm:$0xff]
        %v3354 = vld [vmem:[%s3341 + $0x60] sm:$0xff]
        %v3355 = vld [vmem:[%s3341 + $0x68] sm:$0xff]
        %v3356 = vld [vmem:[%s3341 + $0x70] sm:$0xff]
        %v3357 = vld [vmem:[%s3341 + $0x78] sm:$0xff]
        %v3358 = vld [vmem:[%s3341 + $0x80] sm:$0xff]
        %v3359 = vld [vmem:[%s3341 + $0x88] sm:$0xff]
        %v3360 = vld [vmem:[%s3341 + $0x90] sm:$0xff]
        %v3361 = vld [vmem:[%s3341 + $0x98] sm:$0xff]
        %v3362 = vld [vmem:[%s3341 + $0xa0] sm:$0xff]
        %v3363 = vld [vmem:[%s3341 + $0xa8] sm:$0xff]
        %v3364 = vld [vmem:[%s3341 + $0xb0] sm:$0xff]
        %v3365 = vld [vmem:[%s3341 + $0xb8] sm:$0xff]
        %v3366 = vld [vmem:[%s3341 + $0xc0] sm:$0xff]
        %v3367 = vld [vmem:[%s3341 + $0xc8] sm:$0xff]
        %v3368 = vld [vmem:[%s3341 + $0xd0] sm:$0xff]
        %v3369 = vld [vmem:[%s3341 + $0xd8] sm:$0xff]
        %v3370 = vld [vmem:[%s3341 + $0xe0] sm:$0xff]
        %v3371 = vld [vmem:[%s3341 + $0xe8] sm:$0xff]
        %v3372 = vld [vmem:[%s3341 + $0xf0] sm:$0xff]
        %v3373 = vld [vmem:[%s3341 + $0xf8] sm:$0xff]
        %v3374 = vld [vmem:[%s3341 + $0x100] sm:$0xff]
        %v3375 = vld [vmem:[%s3341 + $0x108] sm:$0xff]
        %v3376 = vld [vmem:[%s3341 + $0x110] sm:$0xff]
        %v3377 = vld [vmem:[%s3341 + $0x118] sm:$0xff]
        %v3378 = vld [vmem:[%s3341 + $0x120] sm:$0xff]
        %v3379 = vld [vmem:[%s3341 + $0x128] sm:$0xff]
        %v3380 = vld [vmem:[%s3341 + $0x130] sm:$0xff]
        %v3381 = vld [vmem:[%s3341 + $0x138] sm:$0xff]
        %v3382 = vld [vmem:[%s3341 + $0x140] sm:$0xff]
        %v3383 = vld [vmem:[%s3341 + $0x148] sm:$0xff]
        %v3384 = vld [vmem:[%s3341 + $0x150] sm:$0xff]
        %v3385 = vld [vmem:[%s3341 + $0x158] sm:$0xff]
        %v3386 = vld [vmem:[%s3341 + $0x160] sm:$0xff]
        %v3387 = vld [vmem:[%s3341 + $0x168] sm:$0xff]
        %v3388 = vld [vmem:[%s3341 + $0x170] sm:$0xff]
        %v3389 = vld [vmem:[%s3341 + $0x178] sm:$0xff]
        %v3390 = vld [vmem:[%s3341 + $0x180] sm:$0xff]
        %v3391 = vld [vmem:[%s3341 + $0x188] sm:$0xff]
        %v3392 = vld [vmem:[%s3341 + $0x190] sm:$0xff]
        %v3393 = vld [vmem:[%s3341 + $0x198] sm:$0xff]
        %v3394 = vld [vmem:[%s3341 + $0x1a0] sm:$0xff]
        %v3395 = vld [vmem:[%s3341 + $0x1a8] sm:$0xff]
        %v3396 = vld [vmem:[%s3341 + $0x1b0] sm:$0xff]
        %v3397 = vld [vmem:[%s3341 + $0x1b8] sm:$0xff]
        %v3398 = vld [vmem:[%s3341 + $0x1c0] sm:$0xff]
        %v3399 = vld [vmem:[%s3341 + $0x1c8] sm:$0xff]
        %v3400 = vld [vmem:[%s3341 + $0x1d0] sm:$0xff]
        %v3401 = vld [vmem:[%s3341 + $0x1d8] sm:$0xff]
        %v3402 = vld [vmem:[%s3341 + $0x1e0] sm:$0xff]
        %v3403 = vld [vmem:[%s3341 + $0x1e8] sm:$0xff]
        %v3404 = vld [vmem:[%s3341 + $0x1f0] sm:$0xff]
        %v3405 = vld [vmem:[%s3341 + $0x1f8] sm:$0xff]
        %3406 = vmatpush.msra.mxu0 %v3372
        %3407 = vmatpush.msra.mxu0 %v3370
        %3408 = vmatpush.msra.mxu0 %v3368
        %3409 = vmatpush.msra.mxu0 %v3366
        %3410 = vmatpush.msra.mxu0 %v3364
        %3411 = vmatpush.msra.mxu0 %v3362
        %3412 = vmatpush.msra.mxu0 %v3360
        %3413 = vmatpush.msra.mxu0 %v3358
        %3414 = vmatpush.msra.mxu0 %v3356
        %3415 = vmatpush.msra.mxu0 %v3354
        %3416 = vmatpush.msra.mxu0 %v3352
        %3417 = vmatpush.msra.mxu0 %v3350
        %3418 = vmatpush.msra.mxu0 %v3348
        %3419 = vmatpush.msra.mxu0 %v3346
        %3420 = vmatpush.msra.mxu0 %v3344
        %3421 = vmatpush.msra.mxu0 %v3342
        %3422 = vmatmul.f32.gmra.mxu0 %v3263
        %v3423 = vpop.f32.mrf.mxu0
        %v3424 = vadd.f32 0.0, %v3423
        %3425 = vmatmul.f32.gmra.mxu0 %v3269
        %v3426 = vpop.f32.mrf.mxu0
        %v3427 = vadd.f32 0.0, %v3426
        %3428 = vmatmul.f32.gmra.mxu0 %v3275
        %v3429 = vpop.f32.mrf.mxu0
        %v3430 = vadd.f32 0.0, %v3429
        %3431 = vmatmul.f32.gmra.mxu0 %v3281
        %v3432 = vpop.f32.mrf.mxu0
        %v3433 = vadd.f32 0.0, %v3432
        %3434 = vmatmul.f32.gmra.mxu0 %v3287
        %v3435 = vpop.f32.mrf.mxu0
        %v3436 = vadd.f32 0.0, %v3435
        %3437 = vmatmul.f32.gmra.mxu0 %v3293
        %v3438 = vpop.f32.mrf.mxu0
        %v3439 = vadd.f32 0.0, %v3438
        %3440 = vmatmul.f32.gmra.mxu0 %v3299
        %v3441 = vpop.f32.mrf.mxu0
        %v3442 = vadd.f32 0.0, %v3441
        %3443 = vmatmul.f32.gmra.mxu0 %v3305
        %v3444 = vpop.f32.mrf.mxu0
        %v3445 = vadd.f32 0.0, %v3444
        %3446 = vdwg.mxu0
        %3447 = vmatpush.msra.mxu0 %v3404
        %3448 = vmatpush.msra.mxu0 %v3402
        %3449 = vmatpush.msra.mxu0 %v3400
        %3450 = vmatpush.msra.mxu0 %v3398
        %3451 = vmatpush.msra.mxu0 %v3396
        %3452 = vmatpush.msra.mxu0 %v3394
        %3453 = vmatpush.msra.mxu0 %v3392
        %3454 = vmatpush.msra.mxu0 %v3390
        %3455 = vmatpush.msra.mxu0 %v3388
        %3456 = vmatpush.msra.mxu0 %v3386
        %3457 = vmatpush.msra.mxu0 %v3384
        %3458 = vmatpush.msra.mxu0 %v3382
        %3459 = vmatpush.msra.mxu0 %v3380
        %3460 = vmatpush.msra.mxu0 %v3378
        %3461 = vmatpush.msra.mxu0 %v3376
        %3462 = vmatpush.msra.mxu0 %v3374
        %3463 = vmatmul.f32.gmra.mxu0 %v3266
        %v3464 = vpop.f32.mrf.mxu0
        %v3465 = vadd.f32 %v3424, %v3464
        %3466 = vmatmul.f32.gmra.mxu0 %v3272
        %v3467 = vpop.f32.mrf.mxu0
        %v3468 = vadd.f32 %v3427, %v3467
        %3469 = vmatmul.f32.gmra.mxu0 %v3278
        %v3470 = vpop.f32.mrf.mxu0
        %v3471 = vadd.f32 %v3430, %v3470
        %3472 = vmatmul.f32.gmra.mxu0 %v3284
        %v3473 = vpop.f32.mrf.mxu0
        %v3474 = vadd.f32 %v3433, %v3473
        %3475 = vmatmul.f32.gmra.mxu0 %v3290
        %v3476 = vpop.f32.mrf.mxu0
        %v3477 = vadd.f32 %v3436, %v3476
        %3478 = vmatmul.f32.gmra.mxu0 %v3296
        %v3479 = vpop.f32.mrf.mxu0
        %v3480 = vadd.f32 %v3439, %v3479
        %3481 = vmatmul.f32.gmra.mxu0 %v3302
        %v3482 = vpop.f32.mrf.mxu0
        %v3483 = vadd.f32 %v3442, %v3482
        %3484 = vmatmul.f32.gmra.mxu0 %v3308
        %v3485 = vpop.f32.mrf.mxu0
        %v3486 = vadd.f32 %v3445, %v3485
        %3487 = vdwg.mxu0
        %3488 = vmatpush.msra.mxu0 %v3373
        %3489 = vmatpush.msra.mxu0 %v3371
        %3490 = vmatpush.msra.mxu0 %v3369
        %3491 = vmatpush.msra.mxu0 %v3367
        %3492 = vmatpush.msra.mxu0 %v3365
        %3493 = vmatpush.msra.mxu0 %v3363
        %3494 = vmatpush.msra.mxu0 %v3361
        %3495 = vmatpush.msra.mxu0 %v3359
        %3496 = vmatpush.msra.mxu0 %v3357
        %3497 = vmatpush.msra.mxu0 %v3355
        %3498 = vmatpush.msra.mxu0 %v3353
        %3499 = vmatpush.msra.mxu0 %v3351
        %3500 = vmatpush.msra.mxu0 %v3349
        %3501 = vmatpush.msra.mxu0 %v3347
        %3502 = vmatpush.msra.mxu0 %v3345
        %3503 = vmatpush.msra.mxu0 %v3343
        %3504 = vmatmul.f32.gmra.mxu0 %v3263
        %v3505 = vpop.f32.mrf.mxu0
        %v3506 = vadd.f32 0.0, %v3505
        %3507 = vmatmul.f32.gmra.mxu0 %v3269
        %v3508 = vpop.f32.mrf.mxu0
        %v3509 = vadd.f32 0.0, %v3508
        %3510 = vmatmul.f32.gmra.mxu0 %v3275
        %v3511 = vpop.f32.mrf.mxu0
        %v3512 = vadd.f32 0.0, %v3511
        %3513 = vmatmul.f32.gmra.mxu0 %v3281
        %v3514 = vpop.f32.mrf.mxu0
        %v3515 = vadd.f32 0.0, %v3514
        %3516 = vmatmul.f32.gmra.mxu0 %v3287
        %v3517 = vpop.f32.mrf.mxu0
        %v3518 = vadd.f32 0.0, %v3517
        %3519 = vmatmul.f32.gmra.mxu0 %v3293
        %v3520 = vpop.f32.mrf.mxu0
        %v3521 = vadd.f32 0.0, %v3520
        %3522 = vmatmul.f32.gmra.mxu0 %v3299
        %v3523 = vpop.f32.mrf.mxu0
        %v3524 = vadd.f32 0.0, %v3523
        %3525 = vmatmul.f32.gmra.mxu0 %v3305
        %v3526 = vpop.f32.mrf.mxu0
        %v3527 = vadd.f32 0.0, %v3526
        %3528 = vdwg.mxu0
        %3529 = vmatpush.msra.mxu0 %v3405
        %3530 = vmatpush.msra.mxu0 %v3403
        %3531 = vmatpush.msra.mxu0 %v3401
        %3532 = vmatpush.msra.mxu0 %v3399
        %3533 = vmatpush.msra.mxu0 %v3397
        %3534 = vmatpush.msra.mxu0 %v3395
        %3535 = vmatpush.msra.mxu0 %v3393
        %3536 = vmatpush.msra.mxu0 %v3391
        %3537 = vmatpush.msra.mxu0 %v3389
        %3538 = vmatpush.msra.mxu0 %v3387
        %3539 = vmatpush.msra.mxu0 %v3385
        %3540 = vmatpush.msra.mxu0 %v3383
        %3541 = vmatpush.msra.mxu0 %v3381
        %3542 = vmatpush.msra.mxu0 %v3379
        %3543 = vmatpush.msra.mxu0 %v3377
        %3544 = vmatpush.msra.mxu0 %v3375
        %3545 = vmatmul.f32.gmra.mxu0 %v3266
        %v3546 = vpop.f32.mrf.mxu0
        %v3547 = vadd.f32 %v3506, %v3546
        %3548 = vmatmul.f32.gmra.mxu0 %v3272
        %v3549 = vpop.f32.mrf.mxu0
        %v3550 = vadd.f32 %v3509, %v3549
        %3551 = vmatmul.f32.gmra.mxu0 %v3278
        %v3552 = vpop.f32.mrf.mxu0
        %v3553 = vadd.f32 %v3512, %v3552
        %3554 = vmatmul.f32.gmra.mxu0 %v3284
        %v3555 = vpop.f32.mrf.mxu0
        %v3556 = vadd.f32 %v3515, %v3555
        %3557 = vmatmul.f32.gmra.mxu0 %v3290
        %v3558 = vpop.f32.mrf.mxu0
        %v3559 = vadd.f32 %v3518, %v3558
        %3560 = vmatmul.f32.gmra.mxu0 %v3296
        %v3561 = vpop.f32.mrf.mxu0
        %v3562 = vadd.f32 %v3521, %v3561
        %3563 = vmatmul.f32.gmra.mxu0 %v3302
        %v3564 = vpop.f32.mrf.mxu0
        %v3565 = vadd.f32 %v3524, %v3564
        %3566 = vmatmul.f32.gmra.mxu0 %v3308
        %v3567 = vpop.f32.mrf.mxu0
        %v3568 = vadd.f32 %v3527, %v3567
        %3569 = vdwg.mxu0
        %v3570 = vadd.f32 %v3325, %v3465
        %v3571 = vadd.f32 %v3326, %v3547
        %v3572 = vadd.f32 %v3327, %v3468
        %v3573 = vadd.f32 %v3328, %v3550
        %v3574 = vadd.f32 %v3329, %v3471
        %v3575 = vadd.f32 %v3330, %v3553
        %v3576 = vadd.f32 %v3331, %v3474
        %v3577 = vadd.f32 %v3332, %v3556
        %v3578 = vadd.f32 %v3333, %v3477
        %v3579 = vadd.f32 %v3334, %v3559
        %v3580 = vadd.f32 %v3335, %v3480
        %v3581 = vadd.f32 %v3336, %v3562
        %v3582 = vadd.f32 %v3337, %v3483
        %v3583 = vadd.f32 %v3338, %v3565
        %v3584 = vadd.f32 %v3339, %v3486
        %v3585 = vadd.f32 %v3340, %v3568
        %3586 = vst [vmem:[#allocation3] sm:$0xff] %v3570
        %3587 = vst [vmem:[#allocation3 + $0x8] sm:$0xff] %v3571
        %3588 = vst [vmem:[#allocation3 + $0x10] sm:$0xff] %v3572
        %3589 = vst [vmem:[#allocation3 + $0x18] sm:$0xff] %v3573
        %3590 = vst [vmem:[#allocation3 + $0x20] sm:$0xff] %v3574
        %3591 = vst [vmem:[#allocation3 + $0x28] sm:$0xff] %v3575
        %3592 = vst [vmem:[#allocation3 + $0x30] sm:$0xff] %v3576
        %3593 = vst [vmem:[#allocation3 + $0x38] sm:$0xff] %v3577
        %3594 = vst [vmem:[#allocation3 + $0x40] sm:$0xff] %v3578
        %3595 = vst [vmem:[#allocation3 + $0x48] sm:$0xff] %v3579
        %3596 = vst [vmem:[#allocation3 + $0x50] sm:$0xff] %v3580
        %3597 = vst [vmem:[#allocation3 + $0x58] sm:$0xff] %v3581
        %3598 = vst [vmem:[#allocation3 + $0x60] sm:$0xff] %v3582
        %3599 = vst [vmem:[#allocation3 + $0x68] sm:$0xff] %v3583
        %3600 = vst [vmem:[#allocation3 + $0x70] sm:$0xff] %v3584
        %3601 = vst [vmem:[#allocation3 + $0x78] sm:$0xff] %v3585
        %s3602 = scalar_lea.vmem [#allocation2], 64
        %v3603 = vld [vmem:[%s3602] sm:$0xff]
        %v3604 = vld [vmem:[%s3602 + $0x8] sm:$0xff]
        %v3605 = vld [vmem:[%s3602 + $0x20] sm:$0xff]
        %v3606 = vld [vmem:[%s3602 + $0x28] sm:$0xff]
        %v3607 = vld [vmem:[%s3602 + $0x40] sm:$0xff]
        %v3608 = vld [vmem:[%s3602 + $0x48] sm:$0xff]
        %v3609 = vld [vmem:[%s3602 + $0x60] sm:$0xff]
        %v3610 = vld [vmem:[%s3602 + $0x68] sm:$0xff]
        %v3611 = vld [vmem:[%s3602 + $0x80] sm:$0xff]
        %v3612 = vld [vmem:[%s3602 + $0x88] sm:$0xff]
        %v3613 = vld [vmem:[%s3602 + $0xa0] sm:$0xff]
        %v3614 = vld [vmem:[%s3602 + $0xa8] sm:$0xff]
        %v3615 = vld [vmem:[%s3602 + $0xc0] sm:$0xff]
        %v3616 = vld [vmem:[%s3602 + $0xc8] sm:$0xff]
        %v3617 = vld [vmem:[%s3602 + $0xe0] sm:$0xff]
        %v3618 = vld [vmem:[%s3602 + $0xe8] sm:$0xff]
        %v3619 = vld [vmem:[#allocation3] sm:$0xff]
        %v3620 = vld [vmem:[#allocation3 + $0x8] sm:$0xff]
        %v3621 = vld [vmem:[#allocation3 + $0x10] sm:$0xff]
        %v3622 = vld [vmem:[#allocation3 + $0x18] sm:$0xff]
        %v3623 = vld [vmem:[#allocation3 + $0x20] sm:$0xff]
        %v3624 = vld [vmem:[#allocation3 + $0x28] sm:$0xff]
        %v3625 = vld [vmem:[#allocation3 + $0x30] sm:$0xff]
        %v3626 = vld [vmem:[#allocation3 + $0x38] sm:$0xff]
        %v3627 = vld [vmem:[#allocation3 + $0x40] sm:$0xff]
        %v3628 = vld [vmem:[#allocation3 + $0x48] sm:$0xff]
        %v3629 = vld [vmem:[#allocation3 + $0x50] sm:$0xff]
        %v3630 = vld [vmem:[#allocation3 + $0x58] sm:$0xff]
        %v3631 = vld [vmem:[#allocation3 + $0x60] sm:$0xff]
        %v3632 = vld [vmem:[#allocation3 + $0x68] sm:$0xff]
        %v3633 = vld [vmem:[#allocation3 + $0x70] sm:$0xff]
        %v3634 = vld [vmem:[#allocation3 + $0x78] sm:$0xff]
        %s3635 = scalar_lea.vmem [#allocation15], 3072
        %v3636 = vld [vmem:[%s3635] sm:$0xff]
        %v3637 = vld [vmem:[%s3635 + $0x8] sm:$0xff]
        %v3638 = vld [vmem:[%s3635 + $0x10] sm:$0xff]
        %v3639 = vld [vmem:[%s3635 + $0x18] sm:$0xff]
        %v3640 = vld [vmem:[%s3635 + $0x20] sm:$0xff]
        %v3641 = vld [vmem:[%s3635 + $0x28] sm:$0xff]
        %v3642 = vld [vmem:[%s3635 + $0x30] sm:$0xff]
        %v3643 = vld [vmem:[%s3635 + $0x38] sm:$0xff]
        %v3644 = vld [vmem:[%s3635 + $0x40] sm:$0xff]
        %v3645 = vld [vmem:[%s3635 + $0x48] sm:$0xff]
        %v3646 = vld [vmem:[%s3635 + $0x50] sm:$0xff]
        %v3647 = vld [vmem:[%s3635 + $0x58] sm:$0xff]
        %v3648 = vld [vmem:[%s3635 + $0x60] sm:$0xff]
        %v3649 = vld [vmem:[%s3635 + $0x68] sm:$0xff]
        %v3650 = vld [vmem:[%s3635 + $0x70] sm:$0xff]
        %v3651 = vld [vmem:[%s3635 + $0x78] sm:$0xff]
        %v3652 = vld [vmem:[%s3635 + $0x80] sm:$0xff]
        %v3653 = vld [vmem:[%s3635 + $0x88] sm:$0xff]
        %v3654 = vld [vmem:[%s3635 + $0x90] sm:$0xff]
        %v3655 = vld [vmem:[%s3635 + $0x98] sm:$0xff]
        %v3656 = vld [vmem:[%s3635 + $0xa0] sm:$0xff]
        %v3657 = vld [vmem:[%s3635 + $0xa8] sm:$0xff]
        %v3658 = vld [vmem:[%s3635 + $0xb0] sm:$0xff]
        %v3659 = vld [vmem:[%s3635 + $0xb8] sm:$0xff]
        %v3660 = vld [vmem:[%s3635 + $0xc0] sm:$0xff]
        %v3661 = vld [vmem:[%s3635 + $0xc8] sm:$0xff]
        %v3662 = vld [vmem:[%s3635 + $0xd0] sm:$0xff]
        %v3663 = vld [vmem:[%s3635 + $0xd8] sm:$0xff]
        %v3664 = vld [vmem:[%s3635 + $0xe0] sm:$0xff]
        %v3665 = vld [vmem:[%s3635 + $0xe8] sm:$0xff]
        %v3666 = vld [vmem:[%s3635 + $0xf0] sm:$0xff]
        %v3667 = vld [vmem:[%s3635 + $0xf8] sm:$0xff]
        %v3668 = vld [vmem:[%s3635 + $0x100] sm:$0xff]
        %v3669 = vld [vmem:[%s3635 + $0x108] sm:$0xff]
        %v3670 = vld [vmem:[%s3635 + $0x110] sm:$0xff]
        %v3671 = vld [vmem:[%s3635 + $0x118] sm:$0xff]
        %v3672 = vld [vmem:[%s3635 + $0x120] sm:$0xff]
        %v3673 = vld [vmem:[%s3635 + $0x128] sm:$0xff]
        %v3674 = vld [vmem:[%s3635 + $0x130] sm:$0xff]
        %v3675 = vld [vmem:[%s3635 + $0x138] sm:$0xff]
        %v3676 = vld [vmem:[%s3635 + $0x140] sm:$0xff]
        %v3677 = vld [vmem:[%s3635 + $0x148] sm:$0xff]
        %v3678 = vld [vmem:[%s3635 + $0x150] sm:$0xff]
        %v3679 = vld [vmem:[%s3635 + $0x158] sm:$0xff]
        %v3680 = vld [vmem:[%s3635 + $0x160] sm:$0xff]
        %v3681 = vld [vmem:[%s3635 + $0x168] sm:$0xff]
        %v3682 = vld [vmem:[%s3635 + $0x170] sm:$0xff]
        %v3683 = vld [vmem:[%s3635 + $0x178] sm:$0xff]
        %v3684 = vld [vmem:[%s3635 + $0x180] sm:$0xff]
        %v3685 = vld [vmem:[%s3635 + $0x188] sm:$0xff]
        %v3686 = vld [vmem:[%s3635 + $0x190] sm:$0xff]
        %v3687 = vld [vmem:[%s3635 + $0x198] sm:$0xff]
        %v3688 = vld [vmem:[%s3635 + $0x1a0] sm:$0xff]
        %v3689 = vld [vmem:[%s3635 + $0x1a8] sm:$0xff]
        %v3690 = vld [vmem:[%s3635 + $0x1b0] sm:$0xff]
        %v3691 = vld [vmem:[%s3635 + $0x1b8] sm:$0xff]
        %v3692 = vld [vmem:[%s3635 + $0x1c0] sm:$0xff]
        %v3693 = vld [vmem:[%s3635 + $0x1c8] sm:$0xff]
        %v3694 = vld [vmem:[%s3635 + $0x1d0] sm:$0xff]
        %v3695 = vld [vmem:[%s3635 + $0x1d8] sm:$0xff]
        %v3696 = vld [vmem:[%s3635 + $0x1e0] sm:$0xff]
        %v3697 = vld [vmem:[%s3635 + $0x1e8] sm:$0xff]
        %v3698 = vld [vmem:[%s3635 + $0x1f0] sm:$0xff]
        %v3699 = vld [vmem:[%s3635 + $0x1f8] sm:$0xff]
        %3700 = vmatpush.msra.mxu0 %v3666
        %3701 = vmatpush.msra.mxu0 %v3664
        %3702 = vmatpush.msra.mxu0 %v3662
        %3703 = vmatpush.msra.mxu0 %v3660
        %3704 = vmatpush.msra.mxu0 %v3658
        %3705 = vmatpush.msra.mxu0 %v3656
        %3706 = vmatpush.msra.mxu0 %v3654
        %3707 = vmatpush.msra.mxu0 %v3652
        %3708 = vmatpush.msra.mxu0 %v3650
        %3709 = vmatpush.msra.mxu0 %v3648
        %3710 = vmatpush.msra.mxu0 %v3646
        %3711 = vmatpush.msra.mxu0 %v3644
        %3712 = vmatpush.msra.mxu0 %v3642
        %3713 = vmatpush.msra.mxu0 %v3640
        %3714 = vmatpush.msra.mxu0 %v3638
        %3715 = vmatpush.msra.mxu0 %v3636
        %3716 = vmatmul.f32.gmra.mxu0 %v3603
        %v3717 = vpop.f32.mrf.mxu0
        %v3718 = vadd.f32 0.0, %v3717
        %3719 = vmatmul.f32.gmra.mxu0 %v3605
        %v3720 = vpop.f32.mrf.mxu0
        %v3721 = vadd.f32 0.0, %v3720
        %3722 = vmatmul.f32.gmra.mxu0 %v3607
        %v3723 = vpop.f32.mrf.mxu0
        %v3724 = vadd.f32 0.0, %v3723
        %3725 = vmatmul.f32.gmra.mxu0 %v3609
        %v3726 = vpop.f32.mrf.mxu0
        %v3727 = vadd.f32 0.0, %v3726
        %3728 = vmatmul.f32.gmra.mxu0 %v3611
        %v3729 = vpop.f32.mrf.mxu0
        %v3730 = vadd.f32 0.0, %v3729
        %3731 = vmatmul.f32.gmra.mxu0 %v3613
        %v3732 = vpop.f32.mrf.mxu0
        %v3733 = vadd.f32 0.0, %v3732
        %3734 = vmatmul.f32.gmra.mxu0 %v3615
        %v3735 = vpop.f32.mrf.mxu0
        %v3736 = vadd.f32 0.0, %v3735
        %3737 = vmatmul.f32.gmra.mxu0 %v3617
        %v3738 = vpop.f32.mrf.mxu0
        %v3739 = vadd.f32 0.0, %v3738
        %3740 = vdwg.mxu0
        %3741 = vmatpush.msra.mxu0 %v3698
        %3742 = vmatpush.msra.mxu0 %v3696
        %3743 = vmatpush.msra.mxu0 %v3694
        %3744 = vmatpush.msra.mxu0 %v3692
        %3745 = vmatpush.msra.mxu0 %v3690
        %3746 = vmatpush.msra.mxu0 %v3688
        %3747 = vmatpush.msra.mxu0 %v3686
        %3748 = vmatpush.msra.mxu0 %v3684
        %3749 = vmatpush.msra.mxu0 %v3682
        %3750 = vmatpush.msra.mxu0 %v3680
        %3751 = vmatpush.msra.mxu0 %v3678
        %3752 = vmatpush.msra.mxu0 %v3676
        %3753 = vmatpush.msra.mxu0 %v3674
        %3754 = vmatpush.msra.mxu0 %v3672
        %3755 = vmatpush.msra.mxu0 %v3670
        %3756 = vmatpush.msra.mxu0 %v3668
        %3757 = vmatmul.f32.gmra.mxu0 %v3604
        %v3758 = vpop.f32.mrf.mxu0
        %v3759 = vadd.f32 %v3718, %v3758
        %3760 = vmatmul.f32.gmra.mxu0 %v3606
        %v3761 = vpop.f32.mrf.mxu0
        %v3762 = vadd.f32 %v3721, %v3761
        %3763 = vmatmul.f32.gmra.mxu0 %v3608
        %v3764 = vpop.f32.mrf.mxu0
        %v3765 = vadd.f32 %v3724, %v3764
        %3766 = vmatmul.f32.gmra.mxu0 %v3610
        %v3767 = vpop.f32.mrf.mxu0
        %v3768 = vadd.f32 %v3727, %v3767
        %3769 = vmatmul.f32.gmra.mxu0 %v3612
        %v3770 = vpop.f32.mrf.mxu0
        %v3771 = vadd.f32 %v3730, %v3770
        %3772 = vmatmul.f32.gmra.mxu0 %v3614
        %v3773 = vpop.f32.mrf.mxu0
        %v3774 = vadd.f32 %v3733, %v3773
        %3775 = vmatmul.f32.gmra.mxu0 %v3616
        %v3776 = vpop.f32.mrf.mxu0
        %v3777 = vadd.f32 %v3736, %v3776
        %3778 = vmatmul.f32.gmra.mxu0 %v3618
        %v3779 = vpop.f32.mrf.mxu0
        %v3780 = vadd.f32 %v3739, %v3779
        %3781 = vdwg.mxu0
        %3782 = vmatpush.msra.mxu0 %v3667
        %3783 = vmatpush.msra.mxu0 %v3665
        %3784 = vmatpush.msra.mxu0 %v3663
        %3785 = vmatpush.msra.mxu0 %v3661
        %3786 = vmatpush.msra.mxu0 %v3659
        %3787 = vmatpush.msra.mxu0 %v3657
        %3788 = vmatpush.msra.mxu0 %v3655
        %3789 = vmatpush.msra.mxu0 %v3653
        %3790 = vmatpush.msra.mxu0 %v3651
        %3791 = vmatpush.msra.mxu0 %v3649
        %3792 = vmatpush.msra.mxu0 %v3647
        %3793 = vmatpush.msra.mxu0 %v3645
        %3794 = vmatpush.msra.mxu0 %v3643
        %3795 = vmatpush.msra.mxu0 %v3641
        %3796 = vmatpush.msra.mxu0 %v3639
        %3797 = vmatpush.msra.mxu0 %v3637
        %3798 = vmatmul.f32.gmra.mxu0 %v3603
        %v3799 = vpop.f32.mrf.mxu0
        %v3800 = vadd.f32 0.0, %v3799
        %3801 = vmatmul.f32.gmra.mxu0 %v3605
        %v3802 = vpop.f32.mrf.mxu0
        %v3803 = vadd.f32 0.0, %v3802
        %3804 = vmatmul.f32.gmra.mxu0 %v3607
        %v3805 = vpop.f32.mrf.mxu0
        %v3806 = vadd.f32 0.0, %v3805
        %3807 = vmatmul.f32.gmra.mxu0 %v3609
        %v3808 = vpop.f32.mrf.mxu0
        %v3809 = vadd.f32 0.0, %v3808
        %3810 = vmatmul.f32.gmra.mxu0 %v3611
        %v3811 = vpop.f32.mrf.mxu0
        %v3812 = vadd.f32 0.0, %v3811
        %3813 = vmatmul.f32.gmra.mxu0 %v3613
        %v3814 = vpop.f32.mrf.mxu0
        %v3815 = vadd.f32 0.0, %v3814
        %3816 = vmatmul.f32.gmra.mxu0 %v3615
        %v3817 = vpop.f32.mrf.mxu0
        %v3818 = vadd.f32 0.0, %v3817
        %3819 = vmatmul.f32.gmra.mxu0 %v3617
        %v3820 = vpop.f32.mrf.mxu0
        %v3821 = vadd.f32 0.0, %v3820
        %3822 = vdwg.mxu0
        %3823 = vmatpush.msra.mxu0 %v3699
        %3824 = vmatpush.msra.mxu0 %v3697
        %3825 = vmatpush.msra.mxu0 %v3695
        %3826 = vmatpush.msra.mxu0 %v3693
        %3827 = vmatpush.msra.mxu0 %v3691
        %3828 = vmatpush.msra.mxu0 %v3689
        %3829 = vmatpush.msra.mxu0 %v3687
        %3830 = vmatpush.msra.mxu0 %v3685
        %3831 = vmatpush.msra.mxu0 %v3683
        %3832 = vmatpush.msra.mxu0 %v3681
        %3833 = vmatpush.msra.mxu0 %v3679
        %3834 = vmatpush.msra.mxu0 %v3677
        %3835 = vmatpush.msra.mxu0 %v3675
        %3836 = vmatpush.msra.mxu0 %v3673
        %3837 = vmatpush.msra.mxu0 %v3671
        %3838 = vmatpush.msra.mxu0 %v3669
        %3839 = vmatmul.f32.gmra.mxu0 %v3604
        %v3840 = vpop.f32.mrf.mxu0
        %v3841 = vadd.f32 %v3800, %v3840
        %3842 = vmatmul.f32.gmra.mxu0 %v3606
        %v3843 = vpop.f32.mrf.mxu0
        %v3844 = vadd.f32 %v3803, %v3843
        %3845 = vmatmul.f32.gmra.mxu0 %v3608
        %v3846 = vpop.f32.mrf.mxu0
        %v3847 = vadd.f32 %v3806, %v3846
        %3848 = vmatmul.f32.gmra.mxu0 %v3610
        %v3849 = vpop.f32.mrf.mxu0
        %v3850 = vadd.f32 %v3809, %v3849
        %3851 = vmatmul.f32.gmra.mxu0 %v3612
        %v3852 = vpop.f32.mrf.mxu0
        %v3853 = vadd.f32 %v3812, %v3852
        %3854 = vmatmul.f32.gmra.mxu0 %v3614
        %v3855 = vpop.f32.mrf.mxu0
        %v3856 = vadd.f32 %v3815, %v3855
        %3857 = vmatmul.f32.gmra.mxu0 %v3616
        %v3858 = vpop.f32.mrf.mxu0
        %v3859 = vadd.f32 %v3818, %v3858
        %3860 = vmatmul.f32.gmra.mxu0 %v3618
        %v3861 = vpop.f32.mrf.mxu0
        %v3862 = vadd.f32 %v3821, %v3861
        %3863 = vdwg.mxu0
        %v3864 = vadd.f32 %v3619, %v3759
        %v3865 = vadd.f32 %v3620, %v3841
        %v3866 = vadd.f32 %v3621, %v3762
        %v3867 = vadd.f32 %v3622, %v3844
        %v3868 = vadd.f32 %v3623, %v3765
        %v3869 = vadd.f32 %v3624, %v3847
        %v3870 = vadd.f32 %v3625, %v3768
        %v3871 = vadd.f32 %v3626, %v3850
        %v3872 = vadd.f32 %v3627, %v3771
        %v3873 = vadd.f32 %v3628, %v3853
        %v3874 = vadd.f32 %v3629, %v3774
        %v3875 = vadd.f32 %v3630, %v3856
        %v3876 = vadd.f32 %v3631, %v3777
        %v3877 = vadd.f32 %v3632, %v3859
        %v3878 = vadd.f32 %v3633, %v3780
        %v3879 = vadd.f32 %v3634, %v3862
        %3880 = vst [vmem:[#allocation3] sm:$0xff] %v3864
        %3881 = vst [vmem:[#allocation3 + $0x8] sm:$0xff] %v3865
        %3882 = vst [vmem:[#allocation3 + $0x10] sm:$0xff] %v3866
        %3883 = vst [vmem:[#allocation3 + $0x18] sm:$0xff] %v3867
        %3884 = vst [vmem:[#allocation3 + $0x20] sm:$0xff] %v3868
        %3885 = vst [vmem:[#allocation3 + $0x28] sm:$0xff] %v3869
        %3886 = vst [vmem:[#allocation3 + $0x30] sm:$0xff] %v3870
        %3887 = vst [vmem:[#allocation3 + $0x38] sm:$0xff] %v3871
        %3888 = vst [vmem:[#allocation3 + $0x40] sm:$0xff] %v3872
        %3889 = vst [vmem:[#allocation3 + $0x48] sm:$0xff] %v3873
        %3890 = vst [vmem:[#allocation3 + $0x50] sm:$0xff] %v3874
        %3891 = vst [vmem:[#allocation3 + $0x58] sm:$0xff] %v3875
        %3892 = vst [vmem:[#allocation3 + $0x60] sm:$0xff] %v3876
        %3893 = vst [vmem:[#allocation3 + $0x68] sm:$0xff] %v3877
        %3894 = vst [vmem:[#allocation3 + $0x70] sm:$0xff] %v3878
        %3895 = vst [vmem:[#allocation3 + $0x78] sm:$0xff] %v3879
        %v3896 = vld [vmem:[%s3602] sm:$0xfe]
        %v3897 = vld [vmem:[%s3602 + $0x8] sm:$0xfe]
        %v3898 = vld [vmem:[%s3602 + $0x10] sm:$0x1]
        %v3899 = vld [vmem:[%s3602 + $0x18] sm:$0x1]
        %v3900 = vld [vmem:[%s3602 + $0x20] sm:$0xfe]
        %v3901 = vld [vmem:[%s3602 + $0x28] sm:$0xfe]
        %v3902 = vld [vmem:[%s3602 + $0x30] sm:$0x1]
        %v3903 = vld [vmem:[%s3602 + $0x38] sm:$0x1]
        %v3904 = vld [vmem:[%s3602 + $0x40] sm:$0xfe]
        %v3905 = vld [vmem:[%s3602 + $0x48] sm:$0xfe]
        %v3906 = vld [vmem:[%s3602 + $0x50] sm:$0x1]
        %v3907 = vld [vmem:[%s3602 + $0x58] sm:$0x1]
        %v3908 = vld [vmem:[%s3602 + $0x60] sm:$0xfe]
        %v3909 = vld [vmem:[%s3602 + $0x68] sm:$0xfe]
        %v3910 = vld [vmem:[%s3602 + $0x70] sm:$0x1]
        %v3911 = vld [vmem:[%s3602 + $0x78] sm:$0x1]
        %v3912 = vld [vmem:[%s3602 + $0x80] sm:$0xfe]
        %v3913 = vld [vmem:[%s3602 + $0x88] sm:$0xfe]
        %v3914 = vld [vmem:[%s3602 + $0x90] sm:$0x1]
        %v3915 = vld [vmem:[%s3602 + $0x98] sm:$0x1]
        %v3916 = vld [vmem:[%s3602 + $0xa0] sm:$0xfe]
        %v3917 = vld [vmem:[%s3602 + $0xa8] sm:$0xfe]
        %v3918 = vld [vmem:[%s3602 + $0xb0] sm:$0x1]
        %v3919 = vld [vmem:[%s3602 + $0xb8] sm:$0x1]
        %v3920 = vld [vmem:[%s3602 + $0xc0] sm:$0xfe]
        %v3921 = vld [vmem:[%s3602 + $0xc8] sm:$0xfe]
        %v3922 = vld [vmem:[%s3602 + $0xd0] sm:$0x1]
        %v3923 = vld [vmem:[%s3602 + $0xd8] sm:$0x1]
        %v3924 = vld [vmem:[%s3602 + $0xe0] sm:$0xfe]
        %v3925 = vld [vmem:[%s3602 + $0xe8] sm:$0xfe]
        %v3926 = vld [vmem:[%s3602 + $0xf0] sm:$0x1]
        %v3927 = vld [vmem:[%s3602 + $0xf8] sm:$0x1]
        %v3960 = vrot.slane %v3896, 1
        %v3961 = vrot.slane %v3898, 1
        %v3962 = vsel %vm1751, %v3960, %v3961
        %v3963 = vrot.slane %v3897, 1
        %v3964 = vrot.slane %v3899, 1
        %v3965 = vsel %vm1751, %v3963, %v3964
        %v3966 = vrot.slane %v3900, 1
        %v3967 = vrot.slane %v3902, 1
        %v3968 = vsel %vm1751, %v3966, %v3967
        %v3969 = vrot.slane %v3901, 1
        %v3970 = vrot.slane %v3903, 1
        %v3971 = vsel %vm1751, %v3969, %v3970
        %v3972 = vrot.slane %v3904, 1
        %v3973 = vrot.slane %v3906, 1
        %v3974 = vsel %vm1751, %v3972, %v3973
        %v3975 = vrot.slane %v3905, 1
        %v3976 = vrot.slane %v3907, 1
        %v3977 = vsel %vm1751, %v3975, %v3976
        %v3978 = vrot.slane %v3908, 1
        %v3979 = vrot.slane %v3910, 1
        %v3980 = vsel %vm1751, %v3978, %v3979
        %v3981 = vrot.slane %v3909, 1
        %v3982 = vrot.slane %v3911, 1
        %v3983 = vsel %vm1751, %v3981, %v3982
        %v3984 = vrot.slane %v3912, 1
        %v3985 = vrot.slane %v3914, 1
        %v3986 = vsel %vm1751, %v3984, %v3985
        %v3987 = vrot.slane %v3913, 1
        %v3988 = vrot.slane %v3915, 1
        %v3989 = vsel %vm1751, %v3987, %v3988
        %v3990 = vrot.slane %v3916, 1
        %v3991 = vrot.slane %v3918, 1
        %v3992 = vsel %vm1751, %v3990, %v3991
        %v3993 = vrot.slane %v3917, 1
        %v3994 = vrot.slane %v3919, 1
        %v3995 = vsel %vm1751, %v3993, %v3994
        %v3996 = vrot.slane %v3920, 1
        %v3997 = vrot.slane %v3922, 1
        %v3998 = vsel %vm1751, %v3996, %v3997
        %v3999 = vrot.slane %v3921, 1
        %v4000 = vrot.slane %v3923, 1
        %v4001 = vsel %vm1751, %v3999, %v4000
        %v4002 = vrot.slane %v3924, 1
        %v4003 = vrot.slane %v3926, 1
        %v4004 = vsel %vm1751, %v4002, %v4003
        %v4005 = vrot.slane %v3925, 1
        %v4006 = vrot.slane %v3927, 1
        %v4007 = vsel %vm1751, %v4005, %v4006
        %v4024 = vld [vmem:[#allocation3] sm:$0xff]
        %v4025 = vld [vmem:[#allocation3 + $0x8] sm:$0xff]
        %v4026 = vld [vmem:[#allocation3 + $0x10] sm:$0xff]
        %v4027 = vld [vmem:[#allocation3 + $0x18] sm:$0xff]
        %v4028 = vld [vmem:[#allocation3 + $0x20] sm:$0xff]
        %v4029 = vld [vmem:[#allocation3 + $0x28] sm:$0xff]
        %v4030 = vld [vmem:[#allocation3 + $0x30] sm:$0xff]
        %v4031 = vld [vmem:[#allocation3 + $0x38] sm:$0xff]
        %v4032 = vld [vmem:[#allocation3 + $0x40] sm:$0xff]
        %v4033 = vld [vmem:[#allocation3 + $0x48] sm:$0xff]
        %v4034 = vld [vmem:[#allocation3 + $0x50] sm:$0xff]
        %v4035 = vld [vmem:[#allocation3 + $0x58] sm:$0xff]
        %v4036 = vld [vmem:[#allocation3 + $0x60] sm:$0xff]
        %v4037 = vld [vmem:[#allocation3 + $0x68] sm:$0xff]
        %v4038 = vld [vmem:[#allocation3 + $0x70] sm:$0xff]
        %v4039 = vld [vmem:[#allocation3 + $0x78] sm:$0xff]
        %s4040 = scalar_lea.vmem [#allocation15], 3584
        %v4041 = vld [vmem:[%s4040] sm:$0xff]
        %v4042 = vld [vmem:[%s4040 + $0x8] sm:$0xff]
        %v4043 = vld [vmem:[%s4040 + $0x10] sm:$0xff]
        %v4044 = vld [vmem:[%s4040 + $0x18] sm:$0xff]
        %v4045 = vld [vmem:[%s4040 + $0x20] sm:$0xff]
        %v4046 = vld [vmem:[%s4040 + $0x28] sm:$0xff]
        %v4047 = vld [vmem:[%s4040 + $0x30] sm:$0xff]
        %v4048 = vld [vmem:[%s4040 + $0x38] sm:$0xff]
        %v4049 = vld [vmem:[%s4040 + $0x40] sm:$0xff]
        %v4050 = vld [vmem:[%s4040 + $0x48] sm:$0xff]
        %v4051 = vld [vmem:[%s4040 + $0x50] sm:$0xff]
        %v4052 = vld [vmem:[%s4040 + $0x58] sm:$0xff]
        %v4053 = vld [vmem:[%s4040 + $0x60] sm:$0xff]
        %v4054 = vld [vmem:[%s4040 + $0x68] sm:$0xff]
        %v4055 = vld [vmem:[%s4040 + $0x70] sm:$0xff]
        %v4056 = vld [vmem:[%s4040 + $0x78] sm:$0xff]
        %v4057 = vld [vmem:[%s4040 + $0x80] sm:$0xff]
        %v4058 = vld [vmem:[%s4040 + $0x88] sm:$0xff]
        %v4059 = vld [vmem:[%s4040 + $0x90] sm:$0xff]
        %v4060 = vld [vmem:[%s4040 + $0x98] sm:$0xff]
        %v4061 = vld [vmem:[%s4040 + $0xa0] sm:$0xff]
        %v4062 = vld [vmem:[%s4040 + $0xa8] sm:$0xff]
        %v4063 = vld [vmem:[%s4040 + $0xb0] sm:$0xff]
        %v4064 = vld [vmem:[%s4040 + $0xb8] sm:$0xff]
        %v4065 = vld [vmem:[%s4040 + $0xc0] sm:$0xff]
        %v4066 = vld [vmem:[%s4040 + $0xc8] sm:$0xff]
        %v4067 = vld [vmem:[%s4040 + $0xd0] sm:$0xff]
        %v4068 = vld [vmem:[%s4040 + $0xd8] sm:$0xff]
        %v4069 = vld [vmem:[%s4040 + $0xe0] sm:$0xff]
        %v4070 = vld [vmem:[%s4040 + $0xe8] sm:$0xff]
        %v4071 = vld [vmem:[%s4040 + $0xf0] sm:$0xff]
        %v4072 = vld [vmem:[%s4040 + $0xf8] sm:$0xff]
        %v4073 = vld [vmem:[%s4040 + $0x100] sm:$0xff]
        %v4074 = vld [vmem:[%s4040 + $0x108] sm:$0xff]
        %v4075 = vld [vmem:[%s4040 + $0x110] sm:$0xff]
        %v4076 = vld [vmem:[%s4040 + $0x118] sm:$0xff]
        %v4077 = vld [vmem:[%s4040 + $0x120] sm:$0xff]
        %v4078 = vld [vmem:[%s4040 + $0x128] sm:$0xff]
        %v4079 = vld [vmem:[%s4040 + $0x130] sm:$0xff]
        %v4080 = vld [vmem:[%s4040 + $0x138] sm:$0xff]
        %v4081 = vld [vmem:[%s4040 + $0x140] sm:$0xff]
        %v4082 = vld [vmem:[%s4040 + $0x148] sm:$0xff]
        %v4083 = vld [vmem:[%s4040 + $0x150] sm:$0xff]
        %v4084 = vld [vmem:[%s4040 + $0x158] sm:$0xff]
        %v4085 = vld [vmem:[%s4040 + $0x160] sm:$0xff]
        %v4086 = vld [vmem:[%s4040 + $0x168] sm:$0xff]
        %v4087 = vld [vmem:[%s4040 + $0x170] sm:$0xff]
        %v4088 = vld [vmem:[%s4040 + $0x178] sm:$0xff]
        %v4089 = vld [vmem:[%s4040 + $0x180] sm:$0xff]
        %v4090 = vld [vmem:[%s4040 + $0x188] sm:$0xff]
        %v4091 = vld [vmem:[%s4040 + $0x190] sm:$0xff]
        %v4092 = vld [vmem:[%s4040 + $0x198] sm:$0xff]
        %v4093 = vld [vmem:[%s4040 + $0x1a0] sm:$0xff]
        %v4094 = vld [vmem:[%s4040 + $0x1a8] sm:$0xff]
        %v4095 = vld [vmem:[%s4040 + $0x1b0] sm:$0xff]
        %v4096 = vld [vmem:[%s4040 + $0x1b8] sm:$0xff]
        %v4097 = vld [vmem:[%s4040 + $0x1c0] sm:$0xff]
        %v4098 = vld [vmem:[%s4040 + $0x1c8] sm:$0xff]
        %v4099 = vld [vmem:[%s4040 + $0x1d0] sm:$0xff]
        %v4100 = vld [vmem:[%s4040 + $0x1d8] sm:$0xff]
        %v4101 = vld [vmem:[%s4040 + $0x1e0] sm:$0xff]
        %v4102 = vld [vmem:[%s4040 + $0x1e8] sm:$0xff]
        %v4103 = vld [vmem:[%s4040 + $0x1f0] sm:$0xff]
        %v4104 = vld [vmem:[%s4040 + $0x1f8] sm:$0xff]
        %4105 = vmatpush.msra.mxu0 %v4071
        %4106 = vmatpush.msra.mxu0 %v4069
        %4107 = vmatpush.msra.mxu0 %v4067
        %4108 = vmatpush.msra.mxu0 %v4065
        %4109 = vmatpush.msra.mxu0 %v4063
        %4110 = vmatpush.msra.mxu0 %v4061
        %4111 = vmatpush.msra.mxu0 %v4059
        %4112 = vmatpush.msra.mxu0 %v4057
        %4113 = vmatpush.msra.mxu0 %v4055
        %4114 = vmatpush.msra.mxu0 %v4053
        %4115 = vmatpush.msra.mxu0 %v4051
        %4116 = vmatpush.msra.mxu0 %v4049
        %4117 = vmatpush.msra.mxu0 %v4047
        %4118 = vmatpush.msra.mxu0 %v4045
        %4119 = vmatpush.msra.mxu0 %v4043
        %4120 = vmatpush.msra.mxu0 %v4041
        %4121 = vmatmul.f32.gmra.mxu0 %v3962
        %v4122 = vpop.f32.mrf.mxu0
        %v4123 = vadd.f32 0.0, %v4122
        %4124 = vmatmul.f32.gmra.mxu0 %v3968
        %v4125 = vpop.f32.mrf.mxu0
        %v4126 = vadd.f32 0.0, %v4125
        %4127 = vmatmul.f32.gmra.mxu0 %v3974
        %v4128 = vpop.f32.mrf.mxu0
        %v4129 = vadd.f32 0.0, %v4128
        %4130 = vmatmul.f32.gmra.mxu0 %v3980
        %v4131 = vpop.f32.mrf.mxu0
        %v4132 = vadd.f32 0.0, %v4131
        %4133 = vmatmul.f32.gmra.mxu0 %v3986
        %v4134 = vpop.f32.mrf.mxu0
        %v4135 = vadd.f32 0.0, %v4134
        %4136 = vmatmul.f32.gmra.mxu0 %v3992
        %v4137 = vpop.f32.mrf.mxu0
        %v4138 = vadd.f32 0.0, %v4137
        %4139 = vmatmul.f32.gmra.mxu0 %v3998
        %v4140 = vpop.f32.mrf.mxu0
        %v4141 = vadd.f32 0.0, %v4140
        %4142 = vmatmul.f32.gmra.mxu0 %v4004
        %v4143 = vpop.f32.mrf.mxu0
        %v4144 = vadd.f32 0.0, %v4143
        %4145 = vdwg.mxu0
        %4146 = vmatpush.msra.mxu0 %v4103
        %4147 = vmatpush.msra.mxu0 %v4101
        %4148 = vmatpush.msra.mxu0 %v4099
        %4149 = vmatpush.msra.mxu0 %v4097
        %4150 = vmatpush.msra.mxu0 %v4095
        %4151 = vmatpush.msra.mxu0 %v4093
        %4152 = vmatpush.msra.mxu0 %v4091
        %4153 = vmatpush.msra.mxu0 %v4089
        %4154 = vmatpush.msra.mxu0 %v4087
        %4155 = vmatpush.msra.mxu0 %v4085
        %4156 = vmatpush.msra.mxu0 %v4083
        %4157 = vmatpush.msra.mxu0 %v4081
        %4158 = vmatpush.msra.mxu0 %v4079
        %4159 = vmatpush.msra.mxu0 %v4077
        %4160 = vmatpush.msra.mxu0 %v4075
        %4161 = vmatpush.msra.mxu0 %v4073
        %4162 = vmatmul.f32.gmra.mxu0 %v3965
        %v4163 = vpop.f32.mrf.mxu0
        %v4164 = vadd.f32 %v4123, %v4163
        %4165 = vmatmul.f32.gmra.mxu0 %v3971
        %v4166 = vpop.f32.mrf.mxu0
        %v4167 = vadd.f32 %v4126, %v4166
        %4168 = vmatmul.f32.gmra.mxu0 %v3977
        %v4169 = vpop.f32.mrf.mxu0
        %v4170 = vadd.f32 %v4129, %v4169
        %4171 = vmatmul.f32.gmra.mxu0 %v3983
        %v4172 = vpop.f32.mrf.mxu0
        %v4173 = vadd.f32 %v4132, %v4172
        %4174 = vmatmul.f32.gmra.mxu0 %v3989
        %v4175 = vpop.f32.mrf.mxu0
        %v4176 = vadd.f32 %v4135, %v4175
        %4177 = vmatmul.f32.gmra.mxu0 %v3995
        %v4178 = vpop.f32.mrf.mxu0
        %v4179 = vadd.f32 %v4138, %v4178
        %4180 = vmatmul.f32.gmra.mxu0 %v4001
        %v4181 = vpop.f32.mrf.mxu0
        %v4182 = vadd.f32 %v4141, %v4181
        %4183 = vmatmul.f32.gmra.mxu0 %v4007
        %v4184 = vpop.f32.mrf.mxu0
        %v4185 = vadd.f32 %v4144, %v4184
        %4186 = vdwg.mxu0
        %4187 = vmatpush.msra.mxu0 %v4072
        %4188 = vmatpush.msra.mxu0 %v4070
        %4189 = vmatpush.msra.mxu0 %v4068
        %4190 = vmatpush.msra.mxu0 %v4066
        %4191 = vmatpush.msra.mxu0 %v4064
        %4192 = vmatpush.msra.mxu0 %v4062
        %4193 = vmatpush.msra.mxu0 %v4060
        %4194 = vmatpush.msra.mxu0 %v4058
        %4195 = vmatpush.msra.mxu0 %v4056
        %4196 = vmatpush.msra.mxu0 %v4054
        %4197 = vmatpush.msra.mxu0 %v4052
        %4198 = vmatpush.msra.mxu0 %v4050
        %4199 = vmatpush.msra.mxu0 %v4048
        %4200 = vmatpush.msra.mxu0 %v4046
        %4201 = vmatpush.msra.mxu0 %v4044
        %4202 = vmatpush.msra.mxu0 %v4042
        %4203 = vmatmul.f32.gmra.mxu0 %v3962
        %v4204 = vpop.f32.mrf.mxu0
        %v4205 = vadd.f32 0.0, %v4204
        %4206 = vmatmul.f32.gmra.mxu0 %v3968
        %v4207 = vpop.f32.mrf.mxu0
        %v4208 = vadd.f32 0.0, %v4207
        %4209 = vmatmul.f32.gmra.mxu0 %v3974
        %v4210 = vpop.f32.mrf.mxu0
        %v4211 = vadd.f32 0.0, %v4210
        %4212 = vmatmul.f32.gmra.mxu0 %v3980
        %v4213 = vpop.f32.mrf.mxu0
        %v4214 = vadd.f32 0.0, %v4213
        %4215 = vmatmul.f32.gmra.mxu0 %v3986
        %v4216 = vpop.f32.mrf.mxu0
        %v4217 = vadd.f32 0.0, %v4216
        %4218 = vmatmul.f32.gmra.mxu0 %v3992
        %v4219 = vpop.f32.mrf.mxu0
        %v4220 = vadd.f32 0.0, %v4219
        %4221 = vmatmul.f32.gmra.mxu0 %v3998
        %v4222 = vpop.f32.mrf.mxu0
        %v4223 = vadd.f32 0.0, %v4222
        %4224 = vmatmul.f32.gmra.mxu0 %v4004
        %v4225 = vpop.f32.mrf.mxu0
        %v4226 = vadd.f32 0.0, %v4225
        %4227 = vdwg.mxu0
        %4228 = vmatpush.msra.mxu0 %v4104
        %4229 = vmatpush.msra.mxu0 %v4102
        %4230 = vmatpush.msra.mxu0 %v4100
        %4231 = vmatpush.msra.mxu0 %v4098
        %4232 = vmatpush.msra.mxu0 %v4096
        %4233 = vmatpush.msra.mxu0 %v4094
        %4234 = vmatpush.msra.mxu0 %v4092
        %4235 = vmatpush.msra.mxu0 %v4090
        %4236 = vmatpush.msra.mxu0 %v4088
        %4237 = vmatpush.msra.mxu0 %v4086
        %4238 = vmatpush.msra.mxu0 %v4084
        %4239 = vmatpush.msra.mxu0 %v4082
        %4240 = vmatpush.msra.mxu0 %v4080
        %4241 = vmatpush.msra.mxu0 %v4078
        %4242 = vmatpush.msra.mxu0 %v4076
        %4243 = vmatpush.msra.mxu0 %v4074
        %4244 = vmatmul.f32.gmra.mxu0 %v3965
        %v4245 = vpop.f32.mrf.mxu0
        %v4246 = vadd.f32 %v4205, %v4245
        %4247 = vmatmul.f32.gmra.mxu0 %v3971
        %v4248 = vpop.f32.mrf.mxu0
        %v4249 = vadd.f32 %v4208, %v4248
        %4250 = vmatmul.f32.gmra.mxu0 %v3977
        %v4251 = vpop.f32.mrf.mxu0
        %v4252 = vadd.f32 %v4211, %v4251
        %4253 = vmatmul.f32.gmra.mxu0 %v3983
        %v4254 = vpop.f32.mrf.mxu0
        %v4255 = vadd.f32 %v4214, %v4254
        %4256 = vmatmul.f32.gmra.mxu0 %v3989
        %v4257 = vpop.f32.mrf.mxu0
        %v4258 = vadd.f32 %v4217, %v4257
        %4259 = vmatmul.f32.gmra.mxu0 %v3995
        %v4260 = vpop.f32.mrf.mxu0
        %v4261 = vadd.f32 %v4220, %v4260
        %4262 = vmatmul.f32.gmra.mxu0 %v4001
        %v4263 = vpop.f32.mrf.mxu0
        %v4264 = vadd.f32 %v4223, %v4263
        %4265 = vmatmul.f32.gmra.mxu0 %v4007
        %v4266 = vpop.f32.mrf.mxu0
        %v4267 = vadd.f32 %v4226, %v4266
        %4268 = vdwg.mxu0
        %v4269 = vadd.f32 %v4024, %v4164
        %v4270 = vadd.f32 %v4025, %v4246
        %v4271 = vadd.f32 %v4026, %v4167
        %v4272 = vadd.f32 %v4027, %v4249
        %v4273 = vadd.f32 %v4028, %v4170
        %v4274 = vadd.f32 %v4029, %v4252
        %v4275 = vadd.f32 %v4030, %v4173
        %v4276 = vadd.f32 %v4031, %v4255
        %v4277 = vadd.f32 %v4032, %v4176
        %v4278 = vadd.f32 %v4033, %v4258
        %v4279 = vadd.f32 %v4034, %v4179
        %v4280 = vadd.f32 %v4035, %v4261
        %v4281 = vadd.f32 %v4036, %v4182
        %v4282 = vadd.f32 %v4037, %v4264
        %v4283 = vadd.f32 %v4038, %v4185
        %v4284 = vadd.f32 %v4039, %v4267
        %4285 = vst [vmem:[#allocation3] sm:$0xff] %v4269
        %4286 = vst [vmem:[#allocation3 + $0x8] sm:$0xff] %v4270
        %4287 = vst [vmem:[#allocation3 + $0x10] sm:$0xff] %v4271
        %4288 = vst [vmem:[#allocation3 + $0x18] sm:$0xff] %v4272
        %4289 = vst [vmem:[#allocation3 + $0x20] sm:$0xff] %v4273
        %4290 = vst [vmem:[#allocation3 + $0x28] sm:$0xff] %v4274
        %4291 = vst [vmem:[#allocation3 + $0x30] sm:$0xff] %v4275
        %4292 = vst [vmem:[#allocation3 + $0x38] sm:$0xff] %v4276
        %4293 = vst [vmem:[#allocation3 + $0x40] sm:$0xff] %v4277
        %4294 = vst [vmem:[#allocation3 + $0x48] sm:$0xff] %v4278
        %4295 = vst [vmem:[#allocation3 + $0x50] sm:$0xff] %v4279
        %4296 = vst [vmem:[#allocation3 + $0x58] sm:$0xff] %v4280
        %4297 = vst [vmem:[#allocation3 + $0x60] sm:$0xff] %v4281
        %4298 = vst [vmem:[#allocation3 + $0x68] sm:$0xff] %v4282
        %4299 = vst [vmem:[#allocation3 + $0x70] sm:$0xff] %v4283
        %4300 = vst [vmem:[#allocation3 + $0x78] sm:$0xff] %v4284
        %v4301 = vld [vmem:[%s3602] sm:$0xfc]
        %v4302 = vld [vmem:[%s3602 + $0x8] sm:$0xfc]
        %v4303 = vld [vmem:[%s3602 + $0x10] sm:$0x3]
        %v4304 = vld [vmem:[%s3602 + $0x18] sm:$0x3]
        %v4305 = vld [vmem:[%s3602 + $0x20] sm:$0xfc]
        %v4306 = vld [vmem:[%s3602 + $0x28] sm:$0xfc]
        %v4307 = vld [vmem:[%s3602 + $0x30] sm:$0x3]
        %v4308 = vld [vmem:[%s3602 + $0x38] sm:$0x3]
        %v4309 = vld [vmem:[%s3602 + $0x40] sm:$0xfc]
        %v4310 = vld [vmem:[%s3602 + $0x48] sm:$0xfc]
        %v4311 = vld [vmem:[%s3602 + $0x50] sm:$0x3]
        %v4312 = vld [vmem:[%s3602 + $0x58] sm:$0x3]
        %v4313 = vld [vmem:[%s3602 + $0x60] sm:$0xfc]
        %v4314 = vld [vmem:[%s3602 + $0x68] sm:$0xfc]
        %v4315 = vld [vmem:[%s3602 + $0x70] sm:$0x3]
        %v4316 = vld [vmem:[%s3602 + $0x78] sm:$0x3]
        %v4317 = vld [vmem:[%s3602 + $0x80] sm:$0xfc]
        %v4318 = vld [vmem:[%s3602 + $0x88] sm:$0xfc]
        %v4319 = vld [vmem:[%s3602 + $0x90] sm:$0x3]
        %v4320 = vld [vmem:[%s3602 + $0x98] sm:$0x3]
        %v4321 = vld [vmem:[%s3602 + $0xa0] sm:$0xfc]
        %v4322 = vld [vmem:[%s3602 + $0xa8] sm:$0xfc]
        %v4323 = vld [vmem:[%s3602 + $0xb0] sm:$0x3]
        %v4324 = vld [vmem:[%s3602 + $0xb8] sm:$0x3]
        %v4325 = vld [vmem:[%s3602 + $0xc0] sm:$0xfc]
        %v4326 = vld [vmem:[%s3602 + $0xc8] sm:$0xfc]
        %v4327 = vld [vmem:[%s3602 + $0xd0] sm:$0x3]
        %v4328 = vld [vmem:[%s3602 + $0xd8] sm:$0x3]
        %v4329 = vld [vmem:[%s3602 + $0xe0] sm:$0xfc]
        %v4330 = vld [vmem:[%s3602 + $0xe8] sm:$0xfc]
        %v4331 = vld [vmem:[%s3602 + $0xf0] sm:$0x3]
        %v4332 = vld [vmem:[%s3602 + $0xf8] sm:$0x3]
        %v4365 = vrot.slane %v4301, 2
        %v4366 = vrot.slane %v4303, 2
        %v4367 = vsel %vm2157, %v4365, %v4366
        %v4368 = vrot.slane %v4302, 2
        %v4369 = vrot.slane %v4304, 2
        %v4370 = vsel %vm2157, %v4368, %v4369
        %v4371 = vrot.slane %v4305, 2
        %v4372 = vrot.slane %v4307, 2
        %v4373 = vsel %vm2157, %v4371, %v4372
        %v4374 = vrot.slane %v4306, 2
        %v4375 = vrot.slane %v4308, 2
        %v4376 = vsel %vm2157, %v4374, %v4375
        %v4377 = vrot.slane %v4309, 2
        %v4378 = vrot.slane %v4311, 2
        %v4379 = vsel %vm2157, %v4377, %v4378
        %v4380 = vrot.slane %v4310, 2
        %v4381 = vrot.slane %v4312, 2
        %v4382 = vsel %vm2157, %v4380, %v4381
        %v4383 = vrot.slane %v4313, 2
        %v4384 = vrot.slane %v4315, 2
        %v4385 = vsel %vm2157, %v4383, %v4384
        %v4386 = vrot.slane %v4314, 2
        %v4387 = vrot.slane %v4316, 2
        %v4388 = vsel %vm2157, %v4386, %v4387
        %v4389 = vrot.slane %v4317, 2
        %v4390 = vrot.slane %v4319, 2
        %v4391 = vsel %vm2157, %v4389, %v4390
        %v4392 = vrot.slane %v4318, 2
        %v4393 = vrot.slane %v4320, 2
        %v4394 = vsel %vm2157, %v4392, %v4393
        %v4395 = vrot.slane %v4321, 2
        %v4396 = vrot.slane %v4323, 2
        %v4397 = vsel %vm2157, %v4395, %v4396
        %v4398 = vrot.slane %v4322, 2
        %v4399 = vrot.slane %v4324, 2
        %v4400 = vsel %vm2157, %v4398, %v4399
        %v4401 = vrot.slane %v4325, 2
        %v4402 = vrot.slane %v4327, 2
        %v4403 = vsel %vm2157, %v4401, %v4402
        %v4404 = vrot.slane %v4326, 2
        %v4405 = vrot.slane %v4328, 2
        %v4406 = vsel %vm2157, %v4404, %v4405
        %v4407 = vrot.slane %v4329, 2
        %v4408 = vrot.slane %v4331, 2
        %v4409 = vsel %vm2157, %v4407, %v4408
        %v4410 = vrot.slane %v4330, 2
        %v4411 = vrot.slane %v4332, 2
        %v4412 = vsel %vm2157, %v4410, %v4411
        %v4429 = vld [vmem:[#allocation3] sm:$0xff]
        %v4430 = vld [vmem:[#allocation3 + $0x8] sm:$0xff]
        %v4431 = vld [vmem:[#allocation3 + $0x10] sm:$0xff]
        %v4432 = vld [vmem:[#allocation3 + $0x18] sm:$0xff]
        %v4433 = vld [vmem:[#allocation3 + $0x20] sm:$0xff]
        %v4434 = vld [vmem:[#allocation3 + $0x28] sm:$0xff]
        %v4435 = vld [vmem:[#allocation3 + $0x30] sm:$0xff]
        %v4436 = vld [vmem:[#allocation3 + $0x38] sm:$0xff]
        %v4437 = vld [vmem:[#allocation3 + $0x40] sm:$0xff]
        %v4438 = vld [vmem:[#allocation3 + $0x48] sm:$0xff]
        %v4439 = vld [vmem:[#allocation3 + $0x50] sm:$0xff]
        %v4440 = vld [vmem:[#allocation3 + $0x58] sm:$0xff]
        %v4441 = vld [vmem:[#allocation3 + $0x60] sm:$0xff]
        %v4442 = vld [vmem:[#allocation3 + $0x68] sm:$0xff]
        %v4443 = vld [vmem:[#allocation3 + $0x70] sm:$0xff]
        %v4444 = vld [vmem:[#allocation3 + $0x78] sm:$0xff]
        %s4445 = scalar_lea.vmem [#allocation15], 4096
        %v4446 = vld [vmem:[%s4445] sm:$0xff]
        %v4447 = vld [vmem:[%s4445 + $0x8] sm:$0xff]
        %v4448 = vld [vmem:[%s4445 + $0x10] sm:$0xff]
        %v4449 = vld [vmem:[%s4445 + $0x18] sm:$0xff]
        %v4450 = vld [vmem:[%s4445 + $0x20] sm:$0xff]
        %v4451 = vld [vmem:[%s4445 + $0x28] sm:$0xff]
        %v4452 = vld [vmem:[%s4445 + $0x30] sm:$0xff]
        %v4453 = vld [vmem:[%s4445 + $0x38] sm:$0xff]
        %v4454 = vld [vmem:[%s4445 + $0x40] sm:$0xff]
        %v4455 = vld [vmem:[%s4445 + $0x48] sm:$0xff]
        %v4456 = vld [vmem:[%s4445 + $0x50] sm:$0xff]
        %v4457 = vld [vmem:[%s4445 + $0x58] sm:$0xff]
        %v4458 = vld [vmem:[%s4445 + $0x60] sm:$0xff]
        %v4459 = vld [vmem:[%s4445 + $0x68] sm:$0xff]
        %v4460 = vld [vmem:[%s4445 + $0x70] sm:$0xff]
        %v4461 = vld [vmem:[%s4445 + $0x78] sm:$0xff]
        %v4462 = vld [vmem:[%s4445 + $0x80] sm:$0xff]
        %v4463 = vld [vmem:[%s4445 + $0x88] sm:$0xff]
        %v4464 = vld [vmem:[%s4445 + $0x90] sm:$0xff]
        %v4465 = vld [vmem:[%s4445 + $0x98] sm:$0xff]
        %v4466 = vld [vmem:[%s4445 + $0xa0] sm:$0xff]
        %v4467 = vld [vmem:[%s4445 + $0xa8] sm:$0xff]
        %v4468 = vld [vmem:[%s4445 + $0xb0] sm:$0xff]
        %v4469 = vld [vmem:[%s4445 + $0xb8] sm:$0xff]
        %v4470 = vld [vmem:[%s4445 + $0xc0] sm:$0xff]
        %v4471 = vld [vmem:[%s4445 + $0xc8] sm:$0xff]
        %v4472 = vld [vmem:[%s4445 + $0xd0] sm:$0xff]
        %v4473 = vld [vmem:[%s4445 + $0xd8] sm:$0xff]
        %v4474 = vld [vmem:[%s4445 + $0xe0] sm:$0xff]
        %v4475 = vld [vmem:[%s4445 + $0xe8] sm:$0xff]
        %v4476 = vld [vmem:[%s4445 + $0xf0] sm:$0xff]
        %v4477 = vld [vmem:[%s4445 + $0xf8] sm:$0xff]
        %v4478 = vld [vmem:[%s4445 + $0x100] sm:$0xff]
        %v4479 = vld [vmem:[%s4445 + $0x108] sm:$0xff]
        %v4480 = vld [vmem:[%s4445 + $0x110] sm:$0xff]
        %v4481 = vld [vmem:[%s4445 + $0x118] sm:$0xff]
        %v4482 = vld [vmem:[%s4445 + $0x120] sm:$0xff]
        %v4483 = vld [vmem:[%s4445 + $0x128] sm:$0xff]
        %v4484 = vld [vmem:[%s4445 + $0x130] sm:$0xff]
        %v4485 = vld [vmem:[%s4445 + $0x138] sm:$0xff]
        %v4486 = vld [vmem:[%s4445 + $0x140] sm:$0xff]
        %v4487 = vld [vmem:[%s4445 + $0x148] sm:$0xff]
        %v4488 = vld [vmem:[%s4445 + $0x150] sm:$0xff]
        %v4489 = vld [vmem:[%s4445 + $0x158] sm:$0xff]
        %v4490 = vld [vmem:[%s4445 + $0x160] sm:$0xff]
        %v4491 = vld [vmem:[%s4445 + $0x168] sm:$0xff]
        %v4492 = vld [vmem:[%s4445 + $0x170] sm:$0xff]
        %v4493 = vld [vmem:[%s4445 + $0x178] sm:$0xff]
        %v4494 = vld [vmem:[%s4445 + $0x180] sm:$0xff]
        %v4495 = vld [vmem:[%s4445 + $0x188] sm:$0xff]
        %v4496 = vld [vmem:[%s4445 + $0x190] sm:$0xff]
        %v4497 = vld [vmem:[%s4445 + $0x198] sm:$0xff]
        %v4498 = vld [vmem:[%s4445 + $0x1a0] sm:$0xff]
        %v4499 = vld [vmem:[%s4445 + $0x1a8] sm:$0xff]
        %v4500 = vld [vmem:[%s4445 + $0x1b0] sm:$0xff]
        %v4501 = vld [vmem:[%s4445 + $0x1b8] sm:$0xff]
        %v4502 = vld [vmem:[%s4445 + $0x1c0] sm:$0xff]
        %v4503 = vld [vmem:[%s4445 + $0x1c8] sm:$0xff]
        %v4504 = vld [vmem:[%s4445 + $0x1d0] sm:$0xff]
        %v4505 = vld [vmem:[%s4445 + $0x1d8] sm:$0xff]
        %v4506 = vld [vmem:[%s4445 + $0x1e0] sm:$0xff]
        %v4507 = vld [vmem:[%s4445 + $0x1e8] sm:$0xff]
        %v4508 = vld [vmem:[%s4445 + $0x1f0] sm:$0xff]
        %v4509 = vld [vmem:[%s4445 + $0x1f8] sm:$0xff]
        %4510 = vmatpush.msra.mxu0 %v4476
        %4511 = vmatpush.msra.mxu0 %v4474
        %4512 = vmatpush.msra.mxu0 %v4472
        %4513 = vmatpush.msra.mxu0 %v4470
        %4514 = vmatpush.msra.mxu0 %v4468
        %4515 = vmatpush.msra.mxu0 %v4466
        %4516 = vmatpush.msra.mxu0 %v4464
        %4517 = vmatpush.msra.mxu0 %v4462
        %4518 = vmatpush.msra.mxu0 %v4460
        %4519 = vmatpush.msra.mxu0 %v4458
        %4520 = vmatpush.msra.mxu0 %v4456
        %4521 = vmatpush.msra.mxu0 %v4454
        %4522 = vmatpush.msra.mxu0 %v4452
        %4523 = vmatpush.msra.mxu0 %v4450
        %4524 = vmatpush.msra.mxu0 %v4448
        %4525 = vmatpush.msra.mxu0 %v4446
        %4526 = vmatmul.f32.gmra.mxu0 %v4367
        %v4527 = vpop.f32.mrf.mxu0
        %v4528 = vadd.f32 0.0, %v4527
        %4529 = vmatmul.f32.gmra.mxu0 %v4373
        %v4530 = vpop.f32.mrf.mxu0
        %v4531 = vadd.f32 0.0, %v4530
        %4532 = vmatmul.f32.gmra.mxu0 %v4379
        %v4533 = vpop.f32.mrf.mxu0
        %v4534 = vadd.f32 0.0, %v4533
        %4535 = vmatmul.f32.gmra.mxu0 %v4385
        %v4536 = vpop.f32.mrf.mxu0
        %v4537 = vadd.f32 0.0, %v4536
        %4538 = vmatmul.f32.gmra.mxu0 %v4391
        %v4539 = vpop.f32.mrf.mxu0
        %v4540 = vadd.f32 0.0, %v4539
        %4541 = vmatmul.f32.gmra.mxu0 %v4397
        %v4542 = vpop.f32.mrf.mxu0
        %v4543 = vadd.f32 0.0, %v4542
        %4544 = vmatmul.f32.gmra.mxu0 %v4403
        %v4545 = vpop.f32.mrf.mxu0
        %v4546 = vadd.f32 0.0, %v4545
        %4547 = vmatmul.f32.gmra.mxu0 %v4409
        %v4548 = vpop.f32.mrf.mxu0
        %v4549 = vadd.f32 0.0, %v4548
        %4550 = vdwg.mxu0
        %4551 = vmatpush.msra.mxu0 %v4508
        %4552 = vmatpush.msra.mxu0 %v4506
        %4553 = vmatpush.msra.mxu0 %v4504
        %4554 = vmatpush.msra.mxu0 %v4502
        %4555 = vmatpush.msra.mxu0 %v4500
        %4556 = vmatpush.msra.mxu0 %v4498
        %4557 = vmatpush.msra.mxu0 %v4496
        %4558 = vmatpush.msra.mxu0 %v4494
        %4559 = vmatpush.msra.mxu0 %v4492
        %4560 = vmatpush.msra.mxu0 %v4490
        %4561 = vmatpush.msra.mxu0 %v4488
        %4562 = vmatpush.msra.mxu0 %v4486
        %4563 = vmatpush.msra.mxu0 %v4484
        %4564 = vmatpush.msra.mxu0 %v4482
        %4565 = vmatpush.msra.mxu0 %v4480
        %4566 = vmatpush.msra.mxu0 %v4478
        %4567 = vmatmul.f32.gmra.mxu0 %v4370
        %v4568 = vpop.f32.mrf.mxu0
        %v4569 = vadd.f32 %v4528, %v4568
        %4570 = vmatmul.f32.gmra.mxu0 %v4376
        %v4571 = vpop.f32.mrf.mxu0
        %v4572 = vadd.f32 %v4531, %v4571
        %4573 = vmatmul.f32.gmra.mxu0 %v4382
        %v4574 = vpop.f32.mrf.mxu0
        %v4575 = vadd.f32 %v4534, %v4574
        %4576 = vmatmul.f32.gmra.mxu0 %v4388
        %v4577 = vpop.f32.mrf.mxu0
        %v4578 = vadd.f32 %v4537, %v4577
        %4579 = vmatmul.f32.gmra.mxu0 %v4394
        %v4580 = vpop.f32.mrf.mxu0
        %v4581 = vadd.f32 %v4540, %v4580
        %4582 = vmatmul.f32.gmra.mxu0 %v4400
        %v4583 = vpop.f32.mrf.mxu0
        %v4584 = vadd.f32 %v4543, %v4583
        %4585 = vmatmul.f32.gmra.mxu0 %v4406
        %v4586 = vpop.f32.mrf.mxu0
        %v4587 = vadd.f32 %v4546, %v4586
        %4588 = vmatmul.f32.gmra.mxu0 %v4412
        %v4589 = vpop.f32.mrf.mxu0
        %v4590 = vadd.f32 %v4549, %v4589
        %4591 = vdwg.mxu0
        %4592 = vmatpush.msra.mxu0 %v4477
        %4593 = vmatpush.msra.mxu0 %v4475
        %4594 = vmatpush.msra.mxu0 %v4473
        %4595 = vmatpush.msra.mxu0 %v4471
        %4596 = vmatpush.msra.mxu0 %v4469
        %4597 = vmatpush.msra.mxu0 %v4467
        %4598 = vmatpush.msra.mxu0 %v4465
        %4599 = vmatpush.msra.mxu0 %v4463
        %4600 = vmatpush.msra.mxu0 %v4461
        %4601 = vmatpush.msra.mxu0 %v4459
        %4602 = vmatpush.msra.mxu0 %v4457
        %4603 = vmatpush.msra.mxu0 %v4455
        %4604 = vmatpush.msra.mxu0 %v4453
        %4605 = vmatpush.msra.mxu0 %v4451
        %4606 = vmatpush.msra.mxu0 %v4449
        %4607 = vmatpush.msra.mxu0 %v4447
        %4608 = vmatmul.f32.gmra.mxu0 %v4367
        %v4609 = vpop.f32.mrf.mxu0
        %v4610 = vadd.f32 0.0, %v4609
        %4611 = vmatmul.f32.gmra.mxu0 %v4373
        %v4612 = vpop.f32.mrf.mxu0
        %v4613 = vadd.f32 0.0, %v4612
        %4614 = vmatmul.f32.gmra.mxu0 %v4379
        %v4615 = vpop.f32.mrf.mxu0
        %v4616 = vadd.f32 0.0, %v4615
        %4617 = vmatmul.f32.gmra.mxu0 %v4385
        %v4618 = vpop.f32.mrf.mxu0
        %v4619 = vadd.f32 0.0, %v4618
        %4620 = vmatmul.f32.gmra.mxu0 %v4391
        %v4621 = vpop.f32.mrf.mxu0
        %v4622 = vadd.f32 0.0, %v4621
        %4623 = vmatmul.f32.gmra.mxu0 %v4397
        %v4624 = vpop.f32.mrf.mxu0
        %v4625 = vadd.f32 0.0, %v4624
        %4626 = vmatmul.f32.gmra.mxu0 %v4403
        %v4627 = vpop.f32.mrf.mxu0
        %v4628 = vadd.f32 0.0, %v4627
        %4629 = vmatmul.f32.gmra.mxu0 %v4409
        %v4630 = vpop.f32.mrf.mxu0
        %v4631 = vadd.f32 0.0, %v4630
        %4632 = vdwg.mxu0
        %4633 = vmatpush.msra.mxu0 %v4509
        %4634 = vmatpush.msra.mxu0 %v4507
        %4635 = vmatpush.msra.mxu0 %v4505
        %4636 = vmatpush.msra.mxu0 %v4503
        %4637 = vmatpush.msra.mxu0 %v4501
        %4638 = vmatpush.msra.mxu0 %v4499
        %4639 = vmatpush.msra.mxu0 %v4497
        %4640 = vmatpush.msra.mxu0 %v4495
        %4641 = vmatpush.msra.mxu0 %v4493
        %4642 = vmatpush.msra.mxu0 %v4491
        %4643 = vmatpush.msra.mxu0 %v4489
        %4644 = vmatpush.msra.mxu0 %v4487
        %4645 = vmatpush.msra.mxu0 %v4485
        %4646 = vmatpush.msra.mxu0 %v4483
        %4647 = vmatpush.msra.mxu0 %v4481
        %4648 = vmatpush.msra.mxu0 %v4479
        %4649 = vmatmul.f32.gmra.mxu0 %v4370
        %v4650 = vpop.f32.mrf.mxu0
        %v4651 = vadd.f32 %v4610, %v4650
        %4652 = vmatmul.f32.gmra.mxu0 %v4376
        %v4653 = vpop.f32.mrf.mxu0
        %v4654 = vadd.f32 %v4613, %v4653
        %4655 = vmatmul.f32.gmra.mxu0 %v4382
        %v4656 = vpop.f32.mrf.mxu0
        %v4657 = vadd.f32 %v4616, %v4656
        %4658 = vmatmul.f32.gmra.mxu0 %v4388
        %v4659 = vpop.f32.mrf.mxu0
        %v4660 = vadd.f32 %v4619, %v4659
        %4661 = vmatmul.f32.gmra.mxu0 %v4394
        %v4662 = vpop.f32.mrf.mxu0
        %v4663 = vadd.f32 %v4622, %v4662
        %4664 = vmatmul.f32.gmra.mxu0 %v4400
        %v4665 = vpop.f32.mrf.mxu0
        %v4666 = vadd.f32 %v4625, %v4665
        %4667 = vmatmul.f32.gmra.mxu0 %v4406
        %v4668 = vpop.f32.mrf.mxu0
        %v4669 = vadd.f32 %v4628, %v4668
        %4670 = vmatmul.f32.gmra.mxu0 %v4412
        %v4671 = vpop.f32.mrf.mxu0
        %v4672 = vadd.f32 %v4631, %v4671
        %4673 = vdwg.mxu0
        %v4674 = vadd.f32 %v4429, %v4569
        %v4675 = vadd.f32 %v4430, %v4651
        %v4676 = vadd.f32 %v4431, %v4572
        %v4677 = vadd.f32 %v4432, %v4654
        %v4678 = vadd.f32 %v4433, %v4575
        %v4679 = vadd.f32 %v4434, %v4657
        %v4680 = vadd.f32 %v4435, %v4578
        %v4681 = vadd.f32 %v4436, %v4660
        %v4682 = vadd.f32 %v4437, %v4581
        %v4683 = vadd.f32 %v4438, %v4663
        %v4684 = vadd.f32 %v4439, %v4584
        %v4685 = vadd.f32 %v4440, %v4666
        %v4686 = vadd.f32 %v4441, %v4587
        %v4687 = vadd.f32 %v4442, %v4669
        %v4688 = vadd.f32 %v4443, %v4590
        %v4689 = vadd.f32 %v4444, %v4672
        %4690 = vst [vmem:[#allocation3] sm:$0xff] %v4674
        %4691 = vst [vmem:[#allocation3 + $0x8] sm:$0xff] %v4675
        %4692 = vst [vmem:[#allocation3 + $0x10] sm:$0xff] %v4676
        %4693 = vst [vmem:[#allocation3 + $0x18] sm:$0xff] %v4677
        %4694 = vst [vmem:[#allocation3 + $0x20] sm:$0xff] %v4678
        %4695 = vst [vmem:[#allocation3 + $0x28] sm:$0xff] %v4679
        %4696 = vst [vmem:[#allocation3 + $0x30] sm:$0xff] %v4680
        %4697 = vst [vmem:[#allocation3 + $0x38] sm:$0xff] %v4681
        %4698 = vst [vmem:[#allocation3 + $0x40] sm:$0xff] %v4682
        %4699 = vst [vmem:[#allocation3 + $0x48] sm:$0xff] %v4683
        %4700 = vst [vmem:[#allocation3 + $0x50] sm:$0xff] %v4684
        %4701 = vst [vmem:[#allocation3 + $0x58] sm:$0xff] %v4685
        %4702 = vst [vmem:[#allocation3 + $0x60] sm:$0xff] %v4686
        %4703 = vst [vmem:[#allocation3 + $0x68] sm:$0xff] %v4687
        %4704 = vst [vmem:[#allocation3 + $0x70] sm:$0xff] %v4688
        %4705 = vst [vmem:[#allocation3 + $0x78] sm:$0xff] %v4689
        %v4706 = vld [vmem:[#allocation3] sm:$0xff]
        %v4707 = vld [vmem:[#allocation3 + $0x8] sm:$0xff]
        %v4708 = vld [vmem:[#allocation3 + $0x10] sm:$0xff]
        %v4709 = vld [vmem:[#allocation3 + $0x18] sm:$0xff]
        %v4710 = vld [vmem:[#allocation3 + $0x20] sm:$0xff]
        %v4711 = vld [vmem:[#allocation3 + $0x28] sm:$0xff]
        %v4712 = vld [vmem:[#allocation3 + $0x30] sm:$0xff]
        %v4713 = vld [vmem:[#allocation3 + $0x38] sm:$0xff]
        %v4714 = vld [vmem:[#allocation3 + $0x40] sm:$0xff]
        %v4715 = vld [vmem:[#allocation3 + $0x48] sm:$0xff]
        %v4716 = vld [vmem:[#allocation3 + $0x50] sm:$0xff]
        %v4717 = vld [vmem:[#allocation3 + $0x58] sm:$0xff]
        %v4718 = vld [vmem:[#allocation3 + $0x60] sm:$0xff]
        %v4719 = vld [vmem:[#allocation3 + $0x68] sm:$0xff]
        %v4720 = vld [vmem:[#allocation3 + $0x70] sm:$0xff]
        %v4721 = vld [vmem:[#allocation3 + $0x78] sm:$0xff]
        %v4722 = vld [vmem:[%s591] sm:$0xff]
        %v4723 = vld [vmem:[%s591 + $0x8] sm:$0xff]
        %v4724 = vld [vmem:[%s591 + $0x10] sm:$0xff]
        %v4725 = vld [vmem:[%s591 + $0x18] sm:$0xff]
        %v4726 = vld [vmem:[%s591 + $0x20] sm:$0xff]
        %v4727 = vld [vmem:[%s591 + $0x28] sm:$0xff]
        %v4728 = vld [vmem:[%s591 + $0x30] sm:$0xff]
        %v4729 = vld [vmem:[%s591 + $0x38] sm:$0xff]
        %v4730 = vld [vmem:[%s591 + $0x40] sm:$0xff]
        %v4731 = vld [vmem:[%s591 + $0x48] sm:$0xff]
        %v4732 = vld [vmem:[%s591 + $0x50] sm:$0xff]
        %v4733 = vld [vmem:[%s591 + $0x58] sm:$0xff]
        %v4734 = vld [vmem:[%s591 + $0x60] sm:$0xff]
        %v4735 = vld [vmem:[%s591 + $0x68] sm:$0xff]
        %v4736 = vld [vmem:[%s591 + $0x70] sm:$0xff]
        %v4737 = vld [vmem:[%s591 + $0x78] sm:$0xff]
        %v4738 = vperm.slane %v1172, 0
        %v4739 = vperm.slane %v1192, 0
        %v4740 = vmul.f32 %v4722, %v4738
        %v4741 = vmul.f32 %v4723, %v4739
        %v4742 = vmul.f32 %v4724, %v4738
        %v4743 = vmul.f32 %v4725, %v4739
        %v4744 = vmul.f32 %v4726, %v4738
        %v4745 = vmul.f32 %v4727, %v4739
        %v4746 = vmul.f32 %v4728, %v4738
        %v4747 = vmul.f32 %v4729, %v4739
        %v4748 = vmul.f32 %v4730, %v4738
        %v4749 = vmul.f32 %v4731, %v4739
        %v4750 = vmul.f32 %v4732, %v4738
        %v4751 = vmul.f32 %v4733, %v4739
        %v4752 = vmul.f32 %v4734, %v4738
        %v4753 = vmul.f32 %v4735, %v4739
        %v4754 = vmul.f32 %v4736, %v4738
        %v4755 = vmul.f32 %v4737, %v4739
        %v4756 = vadd.f32 %v4706, %v4740
        %v4757 = vadd.f32 %v4707, %v4741
        %v4758 = vadd.f32 %v4708, %v4742
        %v4759 = vadd.f32 %v4709, %v4743
        %v4760 = vadd.f32 %v4710, %v4744
        %v4761 = vadd.f32 %v4711, %v4745
        %v4762 = vadd.f32 %v4712, %v4746
        %v4763 = vadd.f32 %v4713, %v4747
        %v4764 = vadd.f32 %v4714, %v4748
        %v4765 = vadd.f32 %v4715, %v4749
        %v4766 = vadd.f32 %v4716, %v4750
        %v4767 = vadd.f32 %v4717, %v4751
        %v4768 = vadd.f32 %v4718, %v4752
        %v4769 = vadd.f32 %v4719, %v4753
        %v4770 = vadd.f32 %v4720, %v4754
        %v4771 = vadd.f32 %v4721, %v4755
        %4772 = vst [vmem:[%s599] sm:$0xff] %v4756
        %4773 = vst [vmem:[%s599 + $0x8] sm:$0xff] %v4757
        %4774 = vst [vmem:[%s599 + $0x10] sm:$0xff] %v4758
        %4775 = vst [vmem:[%s599 + $0x18] sm:$0xff] %v4759
        %4776 = vst [vmem:[%s599 + $0x20] sm:$0xff] %v4760
        %4777 = vst [vmem:[%s599 + $0x28] sm:$0xff] %v4761
        %4778 = vst [vmem:[%s599 + $0x30] sm:$0xff] %v4762
        %4779 = vst [vmem:[%s599 + $0x38] sm:$0xff] %v4763
        %4780 = vst [vmem:[%s599 + $0x40] sm:$0xff] %v4764
        %4781 = vst [vmem:[%s599 + $0x48] sm:$0xff] %v4765
        %4782 = vst [vmem:[%s599 + $0x50] sm:$0xff] %v4766
        %4783 = vst [vmem:[%s599 + $0x58] sm:$0xff] %v4767
        %4784 = vst [vmem:[%s599 + $0x60] sm:$0xff] %v4768
        %4785 = vst [vmem:[%s599 + $0x68] sm:$0xff] %v4769
        %4786 = vst [vmem:[%s599 + $0x70] sm:$0xff] %v4770
        %4787 = vst [vmem:[%s599 + $0x78] sm:$0xff] %v4771
        %p4788 = scmp.lt.s32.totalorder %s29, 1
        %s4789 = scalar_select %p4788, %s29, 1
        %s4790 = smul.addr %s4789, 16
        %s4791 = smul.addr %s4790, 8
        %s4792 = scalar_lea.vmem %s13, %s4791
        // Predicated region
        $region105: #{dyn_no_bottleneck_forward.3} parent=71 // pred_check
          %p4793 = pneg %p335
        $region106: #{dyn_no_bottleneck_forward.3} parent=71 // pred_check_branch
          %4795 = sbr.rel (%p4793) target = $region108
        $region107: #{dyn_no_bottleneck_forward.3} parent=71 // pred_region
          _
        $region108: #{dyn_no_bottleneck_forward.3} parent=71 // pred_fallthru
          _
      $region72: #{dyn_no_bottleneck_forward.3} parent=5 // pred_fallthru
        _
      %p4796 = scmp.le.s32.totalorder 2, %s24
      // Predicated region
      $region109: #{dyn_no_bottleneck_forward.3} parent=5 // pred_check
        %p4797 = pneg %p4796
      $region110: #{dyn_no_bottleneck_forward.3} parent=5 // pred_check_branch
        %4799 = sbr.rel (%p4797) target = $region112
      $region111: #{dyn_no_bottleneck_forward.3} parent=5 // pred_region
        %s4800 = ssub.s32 %s24, 2
        // Predicated region
        $region113: #{dyn_no_bottleneck_forward.3} parent=111 // pred_check
          %p4801 = pneg %p341
        $region114: #{dyn_no_bottleneck_forward.3} parent=111 // pred_check_branch
          %4803 = sbr.rel (%p4801) target = $region116
        $region115: #{dyn_no_bottleneck_forward.3} parent=111 // pred_region
          %p4804 = scmp.lt.s32.totalorder %s30, 1
          %s4805 = scalar_select %p4804, %s30, 1
          %s4806 = smul.addr %s4805, 16
          %s4807 = smul.addr %s4806, 8
          %s4808 = scalar_lea.vmem %s13, %s4807
        $region116: #{dyn_no_bottleneck_forward.3} parent=111 // pred_fallthru
          _
      $region112: #{dyn_no_bottleneck_forward.3} parent=5 // pred_fallthru
        _
    $region6: #{dyn_no_bottleneck_forward.3} parent=1 // loop_footer
      %s28 = sadd.s32 1, %s24
    $region7: #{dyn_no_bottleneck_forward.3} parent=1 // loop_footer_branch
      %23 = sbr.rel target = $region3
    $region8: #{dyn_no_bottleneck_forward.3} parent=1 // loop_exit
      _
    %4809 = vsyncpa [#allocation5], 1
    %s4810 = scalar_lea.sflag [#allocation5], 1
    %4811 = vsyncpa %s4810, 1
    %4812 = vsyncpa [#allocation7], 1
    %4813 = vsyncpa [#allocation10], 1
    %4814 = vsyncpa [#allocation13], 1
    %4815 = vsyncpa [#allocation16], 1

// kernel: dyn_no_bottleneck_forward.2
$region0: #{dyn_no_bottleneck_forward.2}
  #allocation0 [shape = 'u32[]', space=smem, size = 0x4, offset = 0x4, fixed_abs, tag = 'smem constant byte address 0x4 - core index']
  #allocation1 [shape = 'u32[72,128]{1,0:T(1,128)}', space=vmem, size = 0x9000, scoped, tag = 'internal scratch']
  #allocation2 [shape = 'f32[10,10,256]{2,1,0:T(8,128)}', space=vmem, size = 0x28000, scoped, tag = 'scratch operand']
  #allocation3 [shape = 'f32[64,256]{1,0:T(8,128)}', space=vmem, size = 0x10000, scoped, tag = 'scratch operand']
  %s0 = inlined_call_operand.vmem [shape: f32[2,8,8,256], index: 0, kind: input, shape index: {}]
  %s1 = inlined_call_operand.hbm [shape: f32[1,256], index: 1, kind: input, shape index: {}]
  %s2 = inlined_call_operand.hbm [shape: f32[1,256], index: 2, kind: input, shape index: {}]
  %s3 = inlined_call_operand.vmem [shape: f32[256,16], index: 3, kind: input, shape index: {}]
  %s4 = inlined_call_operand.hbm [shape: f32[16,256], index: 4, kind: input, shape index: {}]
  %s5 = inlined_call_operand.hbm [shape: f32[3,3,256,256], index: 5, kind: input, shape index: {}]
  %s6 = inlined_call_operand.vmem [shape: f32[2,8,8,256], index: 6, kind: output, shape index: {}]
  %s7 = sld [smem:[#allocation0]]
  $region73: #{dyn_no_bottleneck_forward.2} parent=0
    _
  %s9 = ssub.s32 1, %s7
  %s10 = scalar_select 0, %s9, %s7
  $region1: #{dyn_no_bottleneck_forward.2} parent=0
    #allocation4 [shape = 'u8[1024]{0}', space=vmem, size = 0x400, scoped, tag = 'input window, operand 1, single buffered']
    #allocation5 [shape = 's32[2]{0}', space=sflag, size = 0x8, scoped, tag = 'scoped memory for dyn_no_bottleneck_forward.2']
    #allocation6 [shape = 'u8[1024]{0}', space=vmem, size = 0x400, scoped, tag = 'input window, operand 2, single buffered']
    #allocation7 [shape = 's32[1]{0}', space=sflag, size = 0x4, scoped, tag = 'scoped memory for dyn_no_bottleneck_forward.2']
    #allocation8 [shape = 'u8[16384]{0}', space=vmem, size = 0x4000, scoped, tag = 'input window, operand 4, single buffered']
    #allocation9 [shape = 'u8[2359296]{0}', space=vmem, size = 0x240000, scoped, tag = 'input window, operand 5, single buffered']
    #allocation10 [shape = 's32[1]{0}', space=sflag, size = 0x4, scoped, tag = 'scoped memory for dyn_no_bottleneck_forward.2']
    %11 = vsyncpa [#allocation5], 0
    %12 = vsyncpa [#allocation7], 0
    %13 = vsyncpa [#allocation10], 0
    loop: start=0, step=1, limit=4
    $region2: #{dyn_no_bottleneck_forward.2} parent=1 // loop_pre_header
      _
    $region3: #{dyn_no_bottleneck_forward.2} parent=1 // loop_header
      %s15 = sphi 0, %s19
      %p16 = scmp.ge.s32.totalorder %s15, 4
      %s25 = sphi 0, %s27
      %s28 = sphi 0, %s25
      %s29 = sphi 0, %s28
      %s45 = sphi 0, %s29
      %s49 = sphi 0, %s49
      %s51 = sphi 0, %s49
      %s52 = sphi 0, %s51
      %s66 = sphi 0, %s52
      %s70 = sphi 0, %s70
      %s72 = sphi 0, %s70
      %s73 = sphi 0, %s72
      %s87 = sphi 0, %s73
      %s91 = sphi 0, %s91
      %s93 = sphi 0, %s91
      %s94 = sphi 0, %s93
      %s108 = sphi 0, %s94
      %s112 = sphi 0, %s112
      %s114 = sphi 0, %s112
      %s115 = sphi 0, %s114
      %s129 = sphi 0, %s115
      %s133 = sphi 0, %s133
      %s135 = sphi 0, %s133
      %s136 = sphi 0, %s135
      %s150 = sphi 0, %s136
      %s156 = sphi 0, %s158
      %s159 = sphi 0, %s156
      %s160 = sphi 0, %s159
      %s176 = sphi 0, %s160
    $region4: #{dyn_no_bottleneck_forward.2} parent=1 // loop_header_branch
      %18 = sbr.rel (%p16) target = $region8
    $region5: #{dyn_no_bottleneck_forward.2} parent=1 // loop_body
      %s20 = ssub.s32 %s15, 1
      %s21 = ssub.s32 %s15, 2
      %s22 = sadd.s32 %s15, 1
      %s23 = ssub.s32 %s15, %s22
      %p24 = scmp.eq.s32.totalorder %s23, 0
      %s26 = sadd.s32 %s25, 1
      %s27 = scalar_select %p24, %s25, %s26
      %p30 = pneg %p24
      %p31 = scmp.eq.s32.totalorder %s15, 1
      %p32 = por %p30, %p31
      %p33 = scmp.ne.s32.totalorder %s25, %s28
      %p34 = scmp.eq.s32.totalorder %s15, 0
      %p35 = por %p33, %p34
      %p36 = scmp.ne.s32.totalorder %s25, %s28
      %p37 = scmp.eq.s32.totalorder %s20, 1
      %p38 = por %p36, %p37
      %p39 = scmp.ne.s32.totalorder %s28, %s29
      %p40 = scmp.eq.s32.totalorder %s20, 0
      %p41 = por %p39, %p40
      %p42 = scmp.ne.s32.totalorder %s28, %s29
      %p43 = scmp.eq.s32.totalorder %s21, 1
      %p44 = por %p42, %p43
      %p46 = scmp.ne.s32.totalorder %s29, %s45
      %p47 = scmp.eq.s32.totalorder %s21, 0
      %p48 = por %p46, %p47
      %s50 = sadd.s32 %s49, 1
      %p53 = scmp.eq.s32.totalorder %s15, 1
      %p54 = scmp.ne.s32.totalorder %s49, %s51
      %p55 = scmp.eq.s32.totalorder %s15, 0
      %p56 = por %p54, %p55
      %p57 = scmp.ne.s32.totalorder %s49, %s51
      %p58 = scmp.eq.s32.totalorder %s20, 1
      %p59 = por %p57, %p58
      %p60 = scmp.ne.s32.totalorder %s51, %s52
      %p61 = scmp.eq.s32.totalorder %s20, 0
      %p62 = por %p60, %p61
      %p63 = scmp.ne.s32.totalorder %s51, %s52
      %p64 = scmp.eq.s32.totalorder %s21, 1
      %p65 = por %p63, %p64
      %p67 = scmp.ne.s32.totalorder %s52, %s66
      %p68 = scmp.eq.s32.totalorder %s21, 0
      %p69 = por %p67, %p68
      %s71 = sadd.s32 %s70, 1
      %p74 = scmp.eq.s32.totalorder %s15, 1
      %p75 = scmp.ne.s32.totalorder %s70, %s72
      %p76 = scmp.eq.s32.totalorder %s15, 0
      %p77 = por %p75, %p76
      %p78 = scmp.ne.s32.totalorder %s70, %s72
      %p79 = scmp.eq.s32.totalorder %s20, 1
      %p80 = por %p78, %p79
      %p81 = scmp.ne.s32.totalorder %s72, %s73
      %p82 = scmp.eq.s32.totalorder %s20, 0
      %p83 = por %p81, %p82
      %p84 = scmp.ne.s32.totalorder %s72, %s73
      %p85 = scmp.eq.s32.totalorder %s21, 1
      %p86 = por %p84, %p85
      %p88 = scmp.ne.s32.totalorder %s73, %s87
      %p89 = scmp.eq.s32.totalorder %s21, 0
      %p90 = por %p88, %p89
      %s92 = sadd.s32 %s91, 1
      %p95 = scmp.eq.s32.totalorder %s15, 1
      %p96 = scmp.ne.s32.totalorder %s91, %s93
      %p97 = scmp.eq.s32.totalorder %s15, 0
      %p98 = por %p96, %p97
      %p99 = scmp.ne.s32.totalorder %s91, %s93
      %p100 = scmp.eq.s32.totalorder %s20, 1
      %p101 = por %p99, %p100
      %p102 = scmp.ne.s32.totalorder %s93, %s94
      %p103 = scmp.eq.s32.totalorder %s20, 0
      %p104 = por %p102, %p103
      %p105 = scmp.ne.s32.totalorder %s93, %s94
      %p106 = scmp.eq.s32.totalorder %s21, 1
      %p107 = por %p105, %p106
      %p109 = scmp.ne.s32.totalorder %s94, %s108
      %p110 = scmp.eq.s32.totalorder %s21, 0
      %p111 = por %p109, %p110
      %s113 = sadd.s32 %s112, 1
      %p116 = scmp.eq.s32.totalorder %s15, 1
      %p117 = scmp.ne.s32.totalorder %s112, %s114
      %p118 = scmp.eq.s32.totalorder %s15, 0
      %p119 = por %p117, %p118
      %p120 = scmp.ne.s32.totalorder %s112, %s114
      %p121 = scmp.eq.s32.totalorder %s20, 1
      %p122 = por %p120, %p121
      %p123 = scmp.ne.s32.totalorder %s114, %s115
      %p124 = scmp.eq.s32.totalorder %s20, 0
      %p125 = por %p123, %p124
      %p126 = scmp.ne.s32.totalorder %s114, %s115
      %p127 = scmp.eq.s32.totalorder %s21, 1
      %p128 = por %p126, %p127
      %p130 = scmp.ne.s32.totalorder %s115, %s129
      %p131 = scmp.eq.s32.totalorder %s21, 0
      %p132 = por %p130, %p131
      %s134 = sadd.s32 %s133, 1
      %p137 = scmp.eq.s32.totalorder %s15, 1
      %p138 = scmp.ne.s32.totalorder %s133, %s135
      %p139 = scmp.eq.s32.totalorder %s15, 0
      %p140 = por %p138, %p139
      %p141 = scmp.ne.s32.totalorder %s133, %s135
      %p142 = scmp.eq.s32.totalorder %s20, 1
      %p143 = por %p141, %p142
      %p144 = scmp.ne.s32.totalorder %s135, %s136
      %p145 = scmp.eq.s32.totalorder %s20, 0
      %p146 = por %p144, %p145
      %p147 = scmp.ne.s32.totalorder %s135, %s136
      %p148 = scmp.eq.s32.totalorder %s21, 1
      %p149 = por %p147, %p148
      %p151 = scmp.ne.s32.totalorder %s136, %s150
      %p152 = scmp.eq.s32.totalorder %s21, 0
      %p153 = por %p151, %p152
      %s154 = ssub.s32 %s15, %s22
      %p155 = scmp.eq.s32.totalorder %s154, 0
      %s157 = sadd.s32 %s156, 1
      %s158 = scalar_select %p155, %s156, %s157
      %p161 = pneg %p155
      %p162 = scmp.eq.s32.totalorder %s15, 1
      %p163 = por %p161, %p162
      %p164 = scmp.ne.s32.totalorder %s156, %s159
      %p165 = scmp.eq.s32.totalorder %s15, 0
      %p166 = por %p164, %p165
      %p167 = scmp.ne.s32.totalorder %s156, %s159
      %p168 = scmp.eq.s32.totalorder %s20, 1
      %p169 = por %p167, %p168
      %p170 = scmp.ne.s32.totalorder %s159, %s160
      %p171 = scmp.eq.s32.totalorder %s20, 0
      %p172 = por %p170, %p171
      %p173 = scmp.ne.s32.totalorder %s159, %s160
      %p174 = scmp.eq.s32.totalorder %s21, 1
      %p175 = por %p173, %p174
      %p177 = scmp.ne.s32.totalorder %s160, %s176
      %p178 = scmp.eq.s32.totalorder %s21, 0
      %p179 = por %p177, %p178
      %p180 = scmp.le.s32.totalorder 1, %s15
      %p181 = scmp.lt.s32.totalorder %s15, 3
      %p182 = pnand %p180, %p181
      %p183 = pneg %p182
      // Predicated region
      $region9: #{dyn_no_bottleneck_forward.2} parent=5 // pred_check
        _
      $region10: #{dyn_no_bottleneck_forward.2} parent=5 // pred_check_branch
        %185 = sbr.rel (%p182) target = $region12
      $region11: #{dyn_no_bottleneck_forward.2} parent=5 // pred_region
        %s186 = ssub.s32 %s15, 1
        // Predicated region
        $region13: #{dyn_no_bottleneck_forward.2} parent=11 // pred_check
          %p187 = pneg %p62
        $region14: #{dyn_no_bottleneck_forward.2} parent=11 // pred_check_branch
          %189 = sbr.rel (%p187) target = $region16
        $region15: #{dyn_no_bottleneck_forward.2} parent=11 // pred_region
          %191 = vsyncadd [#allocation5], 0
          %s193 = sshll.u32 %s1, 4
          %s194 = int_to_ptr.hbm [resolvable:$true] %s193
          %s195 = sshll.u32 [#allocation4], 4
          %s196 = int_to_ptr.vmem [resolvable:$true] %s195
          %198 = dma.hbm_to_vmem [thread:$0]  %s194, 32, %s196, [#allocation5]
        $region16: #{dyn_no_bottleneck_forward.2} parent=11 // pred_fallthru
          _
        // Predicated region
        $region17: #{dyn_no_bottleneck_forward.2} parent=11 // pred_check
          %p199 = pneg %p83
        $region18: #{dyn_no_bottleneck_forward.2} parent=11 // pred_check_branch
          %201 = sbr.rel (%p199) target = $region20
        $region19: #{dyn_no_bottleneck_forward.2} parent=11 // pred_region
          %203 = vsyncadd [#allocation7], 0
          %s205 = sshll.u32 %s2, 4
          %s206 = int_to_ptr.hbm [resolvable:$true] %s205
          %s207 = sshll.u32 [#allocation6], 4
          %s208 = int_to_ptr.vmem [resolvable:$true] %s207
          %210 = dma.hbm_to_vmem [thread:$0]  %s206, 32, %s208, [#allocation7]
        $region20: #{dyn_no_bottleneck_forward.2} parent=11 // pred_fallthru
          _
        // Predicated region
        $region21: #{dyn_no_bottleneck_forward.2} parent=11 // pred_check
          %p211 = pneg %p104
        $region22: #{dyn_no_bottleneck_forward.2} parent=11 // pred_check_branch
          %213 = sbr.rel (%p211) target = $region24
        $region23: #{dyn_no_bottleneck_forward.2} parent=11 // pred_region
          _
        $region24: #{dyn_no_bottleneck_forward.2} parent=11 // pred_fallthru
          _
        // Predicated region
        $region25: #{dyn_no_bottleneck_forward.2} parent=11 // pred_check
          %p214 = pneg %p125
        $region26: #{dyn_no_bottleneck_forward.2} parent=11 // pred_check_branch
          %216 = sbr.rel (%p214) target = $region28
        $region27: #{dyn_no_bottleneck_forward.2} parent=11 // pred_region
          %218 = vsyncadd [#allocation7], 0
          %s219 = sshll.u32 %s4, 4
          %s220 = int_to_ptr.hbm [resolvable:$true] %s219
          %s221 = sshll.u32 [#allocation8], 4
          %s222 = int_to_ptr.vmem [resolvable:$true] %s221
          %227 = dma.hbm_to_vmem [thread:$0]  %s220, 512, %s222, [#allocation7], 256, 256, 16
        $region28: #{dyn_no_bottleneck_forward.2} parent=11 // pred_fallthru
          _
        // Predicated region
        $region29: #{dyn_no_bottleneck_forward.2} parent=11 // pred_check
          %p228 = pneg %p146
        $region30: #{dyn_no_bottleneck_forward.2} parent=11 // pred_check_branch
          %230 = sbr.rel (%p228) target = $region32
        $region31: #{dyn_no_bottleneck_forward.2} parent=11 // pred_region
          %232 = vsyncadd [#allocation10], 0
          %s233 = sshll.u32 %s5, 4
          %s234 = int_to_ptr.hbm [resolvable:$true] %s233
          %s235 = sshll.u32 [#allocation9], 4
          %s236 = int_to_ptr.vmem [resolvable:$true] %s235
          %241 = dma.hbm_to_vmem [thread:$0]  %s234, 73728, %s236, [#allocation10], 256, 256, 16
        $region32: #{dyn_no_bottleneck_forward.2} parent=11 // pred_fallthru
          _
      $region12: #{dyn_no_bottleneck_forward.2} parent=5 // pred_fallthru
        _
      %p242 = scmp.lt.s32.totalorder %s15, 2
      // Predicated region
      $region33: #{dyn_no_bottleneck_forward.2} parent=5 // pred_check
        %p243 = pneg %p242
      $region34: #{dyn_no_bottleneck_forward.2} parent=5 // pred_check_branch
        %245 = sbr.rel (%p243) target = $region36
      $region35: #{dyn_no_bottleneck_forward.2} parent=5 // pred_region
        // Predicated region
        $region37: #{dyn_no_bottleneck_forward.2} parent=35 // pred_check
          %p246 = pneg %p35
        $region38: #{dyn_no_bottleneck_forward.2} parent=35 // pred_check_branch
          %248 = sbr.rel (%p246) target = $region40
        $region39: #{dyn_no_bottleneck_forward.2} parent=35 // pred_region
          %p249 = scmp.lt.s32.totalorder %s15, 1
          %s250 = scalar_select %p249, %s15, 1
          %s251 = smul.addr %s250, 16
          %s252 = smul.addr %s251, 8
          %s253 = scalar_lea.vmem %s0, %s252
        $region40: #{dyn_no_bottleneck_forward.2} parent=35 // pred_fallthru
          _
      $region36: #{dyn_no_bottleneck_forward.2} parent=5 // pred_fallthru
        _
      %p254 = scmp.le.s32.totalorder 1, %s15
      %p255 = scmp.lt.s32.totalorder %s15, 3
      %p256 = pnand %p254, %p255
      %p257 = pneg %p256
      // Predicated region
      $region41: #{dyn_no_bottleneck_forward.2} parent=5 // pred_check
        _
      $region42: #{dyn_no_bottleneck_forward.2} parent=5 // pred_check_branch
        %259 = sbr.rel (%p256) target = $region44
      $region43: #{dyn_no_bottleneck_forward.2} parent=5 // pred_region
        %s260 = ssub.s32 %s15, 1
        // Predicated region
        $region45: #{dyn_no_bottleneck_forward.2} parent=43 // pred_check
          %p261 = pneg %p62
        $region46: #{dyn_no_bottleneck_forward.2} parent=43 // pred_check_branch
          %263 = sbr.rel (%p261) target = $region48
        $region47: #{dyn_no_bottleneck_forward.2} parent=43 // pred_region
          %265 = dma.done [#allocation5], 32
        $region48: #{dyn_no_bottleneck_forward.2} parent=43 // pred_fallthru
          _
        // Predicated region
        $region49: #{dyn_no_bottleneck_forward.2} parent=43 // pred_check
          %p266 = pneg %p83
        $region50: #{dyn_no_bottleneck_forward.2} parent=43 // pred_check_branch
          %268 = sbr.rel (%p266) target = $region52
        $region51: #{dyn_no_bottleneck_forward.2} parent=43 // pred_region
          %270 = dma.done [#allocation7], 32
        $region52: #{dyn_no_bottleneck_forward.2} parent=43 // pred_fallthru
          _
        // Predicated region
        $region53: #{dyn_no_bottleneck_forward.2} parent=43 // pred_check
          %p271 = pneg %p125
        $region54: #{dyn_no_bottleneck_forward.2} parent=43 // pred_check_branch
          %273 = sbr.rel (%p271) target = $region56
        $region55: #{dyn_no_bottleneck_forward.2} parent=43 // pred_region
          %275 = dma.done [#allocation7], 512
        $region56: #{dyn_no_bottleneck_forward.2} parent=43 // pred_fallthru
          _
        // Predicated region
        $region57: #{dyn_no_bottleneck_forward.2} parent=43 // pred_check
          %p276 = pneg %p146
        $region58: #{dyn_no_bottleneck_forward.2} parent=43 // pred_check_branch
          %278 = sbr.rel (%p276) target = $region60
        $region59: #{dyn_no_bottleneck_forward.2} parent=43 // pred_region
          %280 = dma.done [#allocation10], 73728
        $region60: #{dyn_no_bottleneck_forward.2} parent=43 // pred_fallthru
          _
        %p281 = scmp.lt.s32.totalorder %s20, 1
        %s282 = scalar_select %p281, %s20, 1
        %s283 = smul.addr %s282, 16
        %s284 = smul.addr %s283, 8
        %s285 = scalar_lea.vmem %s0, %s284
        %p286 = pneg %p41
        %p287 = pneg %p38
        %p288 = pneg %p62
        %p289 = pneg %p59
        %p290 = pneg %p83
        %p291 = pneg %p80
        %p292 = pneg %p104
        %p293 = pneg %p101
        %p294 = pneg %p125
        %p295 = pneg %p122
        %p296 = pneg %p146
        %p297 = pneg %p143
        %p298 = pneg %p172
        %p299 = pneg %p169
        %p300 = scmp.lt.s32.totalorder %s20, 1
        %s301 = scalar_select %p300, %s20, 1
        %s302 = smul.addr %s301, 16
        %s303 = smul.addr %s302, 8
        %s304 = scalar_lea.vmem %s6, %s303
        %p305 = scmp.lt.s32.totalorder %s20, 1
        %s306 = scalar_select %p305, %s20, 1
        %s307 = smul.addr %s306, 16
        %s308 = smul.addr %s307, 8
        %s309 = scalar_lea.vmem %s0, %s308
        %p310 = scmp.lt.s32.totalorder %s20, 1
        %s311 = scalar_select %p310, %s20, 1
        %s312 = smul.addr %s311, 16
        %s313 = smul.addr %s312, 8
        %s314 = scalar_lea.vmem %s6, %s313
        %v315 = vld [vmem:[%s309] sm:$0xff]
        %v316 = vld [vmem:[%s309 + $0x8] sm:$0xff]
        %v317 = vld [vmem:[%s309 + $0x10] sm:$0xff]
        %v318 = vld [vmem:[%s309 + $0x18] sm:$0xff]
        %v319 = vld [vmem:[%s309 + $0x20] sm:$0xff]
        %v320 = vld [vmem:[%s309 + $0x28] sm:$0xff]
        %v321 = vld [vmem:[%s309 + $0x30] sm:$0xff]
        %v322 = vld [vmem:[%s309 + $0x38] sm:$0xff]
        %v323 = vld [vmem:[%s309 + $0x40] sm:$0xff]
        %v324 = vld [vmem:[%s309 + $0x48] sm:$0xff]
        %v325 = vld [vmem:[%s309 + $0x50] sm:$0xff]
        %v326 = vld [vmem:[%s309 + $0x58] sm:$0xff]
        %v327 = vld [vmem:[%s309 + $0x60] sm:$0xff]
        %v328 = vld [vmem:[%s309 + $0x68] sm:$0xff]
        %v329 = vld [vmem:[%s309 + $0x70] sm:$0xff]
        %v330 = vld [vmem:[%s309 + $0x78] sm:$0xff]
        %v331 = vld [vmem:[%s3] sm:$0xff]
        %v332 = vld [vmem:[%s3 + $0x8] sm:$0xff]
        %v333 = vld [vmem:[%s3 + $0x10] sm:$0xff]
        %v334 = vld [vmem:[%s3 + $0x18] sm:$0xff]
        %v335 = vld [vmem:[%s3 + $0x20] sm:$0xff]
        %v336 = vld [vmem:[%s3 + $0x28] sm:$0xff]
        %v337 = vld [vmem:[%s3 + $0x30] sm:$0xff]
        %v338 = vld [vmem:[%s3 + $0x38] sm:$0xff]
        %v339 = vld [vmem:[%s3 + $0x40] sm:$0xff]
        %v340 = vld [vmem:[%s3 + $0x48] sm:$0xff]
        %v341 = vld [vmem:[%s3 + $0x50] sm:$0xff]
        %v342 = vld [vmem:[%s3 + $0x58] sm:$0xff]
        %v343 = vld [vmem:[%s3 + $0x60] sm:$0xff]
        %v344 = vld [vmem:[%s3 + $0x68] sm:$0xff]
        %v345 = vld [vmem:[%s3 + $0x70] sm:$0xff]
        %v346 = vld [vmem:[%s3 + $0x78] sm:$0xff]
        %v347 = vld [vmem:[%s3 + $0x80] sm:$0xff]
        %v348 = vld [vmem:[%s3 + $0x88] sm:$0xff]
        %v349 = vld [vmem:[%s3 + $0x90] sm:$0xff]
        %v350 = vld [vmem:[%s3 + $0x98] sm:$0xff]
        %v351 = vld [vmem:[%s3 + $0xa0] sm:$0xff]
        %v352 = vld [vmem:[%s3 + $0xa8] sm:$0xff]
        %v353 = vld [vmem:[%s3 + $0xb0] sm:$0xff]
        %v354 = vld [vmem:[%s3 + $0xb8] sm:$0xff]
        %v355 = vld [vmem:[%s3 + $0xc0] sm:$0xff]
        %v356 = vld [vmem:[%s3 + $0xc8] sm:$0xff]
        %v357 = vld [vmem:[%s3 + $0xd0] sm:$0xff]
        %v358 = vld [vmem:[%s3 + $0xd8] sm:$0xff]
        %v359 = vld [vmem:[%s3 + $0xe0] sm:$0xff]
        %v360 = vld [vmem:[%s3 + $0xe8] sm:$0xff]
        %v361 = vld [vmem:[%s3 + $0xf0] sm:$0xff]
        %v362 = vld [vmem:[%s3 + $0xf8] sm:$0xff]
        %v363 = vld [vmem:[#allocation8] sm:$0xff]
        %v364 = vld [vmem:[#allocation8 + $0x8] sm:$0xff]
        %v365 = vld [vmem:[#allocation8 + $0x10] sm:$0xff]
        %v366 = vld [vmem:[#allocation8 + $0x18] sm:$0xff]
        %v367 = vadd.f32 %v315, %v317
        %v368 = vadd.f32 %v367, %v319
        %v369 = vadd.f32 %v368, %v321
        %v370 = vadd.f32 %v369, %v323
        %v371 = vadd.f32 %v370, %v325
        %v372 = vadd.f32 %v371, %v327
        %v373 = vadd.f32 %v372, %v329
        %v374 = vrot.slane %v373, 4
        %v375 = vadd.f32 %v373, %v374
        %v376 = vrot.slane %v375, 2
        %v377 = vadd.f32 %v375, %v376
        %v378 = vrot.slane %v377, 1
        %v379 = vadd.f32 %v377, %v378
        %v380 = vadd.f32 %v316, %v318
        %v381 = vadd.f32 %v380, %v320
        %v382 = vadd.f32 %v381, %v322
        %v383 = vadd.f32 %v382, %v324
        %v384 = vadd.f32 %v383, %v326
        %v385 = vadd.f32 %v384, %v328
        %v386 = vadd.f32 %v385, %v330
        %v387 = vrot.slane %v386, 4
        %v388 = vadd.f32 %v386, %v387
        %v389 = vrot.slane %v388, 2
        %v390 = vadd.f32 %v388, %v389
        %v391 = vrot.slane %v390, 1
        %v392 = vadd.f32 %v390, %v391
        %393 = vmatpush.msra.mxu0 %v346
        %394 = vmatpush.msra.mxu0 %v345
        %395 = vmatpush.msra.mxu0 %v344
        %396 = vmatpush.msra.mxu0 %v343
        %397 = vmatpush.msra.mxu0 %v342
        %398 = vmatpush.msra.mxu0 %v341
        %399 = vmatpush.msra.mxu0 %v340
        %400 = vmatpush.msra.mxu0 %v339
        %401 = vmatpush.msra.mxu0 %v338
        %402 = vmatpush.msra.mxu0 %v337
        %403 = vmatpush.msra.mxu0 %v336
        %404 = vmatpush.msra.mxu0 %v335
        %405 = vmatpush.msra.mxu0 %v334
        %406 = vmatpush.msra.mxu0 %v333
        %407 = vmatpush.msra.mxu0 %v332
        %408 = vmatpush.msra.mxu0 %v331
        %409 = vmatmul.f32.gmra.mxu0 %v379
        %v410 = vpop.f32.mrf.mxu0
        %v411 = vadd.f32 0.0, %v410
        %412 = vdwg.mxu0
        %413 = vmatpush.msra.mxu0 %v362
        %414 = vmatpush.msra.mxu0 %v361
        %415 = vmatpush.msra.mxu0 %v360
        %416 = vmatpush.msra.mxu0 %v359
        %417 = vmatpush.msra.mxu0 %v358
        %418 = vmatpush.msra.mxu0 %v357
        %419 = vmatpush.msra.mxu0 %v356
        %420 = vmatpush.msra.mxu0 %v355
        %421 = vmatpush.msra.mxu0 %v354
        %422 = vmatpush.msra.mxu0 %v353
        %423 = vmatpush.msra.mxu0 %v352
        %424 = vmatpush.msra.mxu0 %v351
        %425 = vmatpush.msra.mxu0 %v350
        %426 = vmatpush.msra.mxu0 %v349
        %427 = vmatpush.msra.mxu0 %v348
        %428 = vmatpush.msra.mxu0 %v347
        %429 = vmatmul.f32.gmra.mxu0 %v392
        %v430 = vpop.f32.mrf.mxu0
        %v431 = vadd.f32 %v411, %v430
        %432 = vdwg.mxu0
        %v433 = vrcp.pop 1024.0
        %v434 = vmul.f32 1024.0, %v433
        %v435 = vsub.f32 1.0, %v434
        %v436 = vmul.f32 %v433, %v435
        %v437 = vadd.f32 %v433, %v436
        %vm438 = vweird.f32 %v433
        %v439 = vsel %vm438, %v433, %v437
        %v440 = vmul.f32 %v431, %v439
        %vm441 = vcmask 130048
        %v443 = vsel %vm441, %v440, 0
        %445 = vmatpush.msra.mxu0 0.0
        %446 = vmatpush.msra.mxu0 0.0
        %447 = vmatpush.msra.mxu0 0.0
        %448 = vmatpush.msra.mxu0 0.0
        %449 = vmatpush.msra.mxu0 0.0
        %450 = vmatpush.msra.mxu0 0.0
        %451 = vmatpush.msra.mxu0 0.0
        %452 = vmatpush.msra.mxu0 0.0
        %453 = vmatpush.msra.mxu0 0.0
        %454 = vmatpush.msra.mxu0 0.0
        %455 = vmatpush.msra.mxu0 0.0
        %456 = vmatpush.msra.mxu0 0.0
        %457 = vmatpush.msra.mxu0 0.0
        %458 = vmatpush.msra.mxu0 0.0
        %459 = vmatpush.msra.mxu0 %v365
        %460 = vmatpush.msra.mxu0 %v363
        %461 = vmatmul.f32.gmra.mxu0 %v443
        %v462 = vpop.f32.mrf.mxu0
        %v463 = vadd.f32 0.0, %v462
        %464 = vdwg.mxu0
        %465 = vmatpush.msra.mxu0 0.0
        %466 = vmatpush.msra.mxu0 0.0
        %467 = vmatpush.msra.mxu0 0.0
        %468 = vmatpush.msra.mxu0 0.0
        %469 = vmatpush.msra.mxu0 0.0
        %470 = vmatpush.msra.mxu0 0.0
        %471 = vmatpush.msra.mxu0 0.0
        %472 = vmatpush.msra.mxu0 0.0
        %473 = vmatpush.msra.mxu0 0.0
        %474 = vmatpush.msra.mxu0 0.0
        %475 = vmatpush.msra.mxu0 0.0
        %476 = vmatpush.msra.mxu0 0.0
        %477 = vmatpush.msra.mxu0 0.0
        %478 = vmatpush.msra.mxu0 0.0
        %479 = vmatpush.msra.mxu0 %v366
        %480 = vmatpush.msra.mxu0 %v364
        %481 = vmatmul.f32.gmra.mxu0 %v443
        %v482 = vpop.f32.mrf.mxu0
        %v483 = vadd.f32 0.0, %v482
        %484 = vdwg.mxu0
        %v485 = vperm.slane %v463, 0
        %v486 = vperm.slane %v483, 0
        %v487 = vsub.f32 %v315, %v485
        %v488 = vsub.f32 %v316, %v486
        %v489 = vsub.f32 %v317, %v485
        %v490 = vsub.f32 %v318, %v486
        %v491 = vsub.f32 %v319, %v485
        %v492 = vsub.f32 %v320, %v486
        %v493 = vsub.f32 %v321, %v485
        %v494 = vsub.f32 %v322, %v486
        %v495 = vsub.f32 %v323, %v485
        %v496 = vsub.f32 %v324, %v486
        %v497 = vsub.f32 %v325, %v485
        %v498 = vsub.f32 %v326, %v486
        %v499 = vsub.f32 %v327, %v485
        %v500 = vsub.f32 %v328, %v486
        %v501 = vsub.f32 %v329, %v485
        %v502 = vsub.f32 %v330, %v486
        %v503 = vmul.f32 %v487, %v487
        %v504 = vmul.f32 %v488, %v488
        %v505 = vmul.f32 %v489, %v489
        %v506 = vmul.f32 %v490, %v490
        %v507 = vmul.f32 %v491, %v491
        %v508 = vmul.f32 %v492, %v492
        %v509 = vmul.f32 %v493, %v493
        %v510 = vmul.f32 %v494, %v494
        %v511 = vmul.f32 %v495, %v495
        %v512 = vmul.f32 %v496, %v496
        %v513 = vmul.f32 %v497, %v497
        %v514 = vmul.f32 %v498, %v498
        %v515 = vmul.f32 %v499, %v499
        %v516 = vmul.f32 %v500, %v500
        %v517 = vmul.f32 %v501, %v501
        %v518 = vmul.f32 %v502, %v502
        %v519 = vadd.f32 %v503, %v505
        %v520 = vadd.f32 %v519, %v507
        %v521 = vadd.f32 %v520, %v509
        %v522 = vadd.f32 %v521, %v511
        %v523 = vadd.f32 %v522, %v513
        %v524 = vadd.f32 %v523, %v515
        %v525 = vadd.f32 %v524, %v517
        %v526 = vrot.slane %v525, 4
        %v527 = vadd.f32 %v525, %v526
        %v528 = vrot.slane %v527, 2
        %v529 = vadd.f32 %v527, %v528
        %v530 = vrot.slane %v529, 1
        %v531 = vadd.f32 %v529, %v530
        %v532 = vadd.f32 %v504, %v506
        %v533 = vadd.f32 %v532, %v508
        %v534 = vadd.f32 %v533, %v510
        %v535 = vadd.f32 %v534, %v512
        %v536 = vadd.f32 %v535, %v514
        %v537 = vadd.f32 %v536, %v516
        %v538 = vadd.f32 %v537, %v518
        %v539 = vrot.slane %v538, 4
        %v540 = vadd.f32 %v538, %v539
        %v541 = vrot.slane %v540, 2
        %v542 = vadd.f32 %v540, %v541
        %v543 = vrot.slane %v542, 1
        %v544 = vadd.f32 %v542, %v543
        %545 = vmatpush.msra.mxu0 %v346
        %546 = vmatpush.msra.mxu0 %v345
        %547 = vmatpush.msra.mxu0 %v344
        %548 = vmatpush.msra.mxu0 %v343
        %549 = vmatpush.msra.mxu0 %v342
        %550 = vmatpush.msra.mxu0 %v341
        %551 = vmatpush.msra.mxu0 %v340
        %552 = vmatpush.msra.mxu0 %v339
        %553 = vmatpush.msra.mxu0 %v338
        %554 = vmatpush.msra.mxu0 %v337
        %555 = vmatpush.msra.mxu0 %v336
        %556 = vmatpush.msra.mxu0 %v335
        %557 = vmatpush.msra.mxu0 %v334
        %558 = vmatpush.msra.mxu0 %v333
        %559 = vmatpush.msra.mxu0 %v332
        %560 = vmatpush.msra.mxu0 %v331
        %561 = vmatmul.f32.gmra.mxu0 %v531
        %v562 = vpop.f32.mrf.mxu0
        %v563 = vadd.f32 0.0, %v562
        %564 = vdwg.mxu0
        %565 = vmatpush.msra.mxu0 %v362
        %566 = vmatpush.msra.mxu0 %v361
        %567 = vmatpush.msra.mxu0 %v360
        %568 = vmatpush.msra.mxu0 %v359
        %569 = vmatpush.msra.mxu0 %v358
        %570 = vmatpush.msra.mxu0 %v357
        %571 = vmatpush.msra.mxu0 %v356
        %572 = vmatpush.msra.mxu0 %v355
        %573 = vmatpush.msra.mxu0 %v354
        %574 = vmatpush.msra.mxu0 %v353
        %575 = vmatpush.msra.mxu0 %v352
        %576 = vmatpush.msra.mxu0 %v351
        %577 = vmatpush.msra.mxu0 %v350
        %578 = vmatpush.msra.mxu0 %v349
        %579 = vmatpush.msra.mxu0 %v348
        %580 = vmatpush.msra.mxu0 %v347
        %581 = vmatmul.f32.gmra.mxu0 %v544
        %v582 = vpop.f32.mrf.mxu0
        %v583 = vadd.f32 %v563, %v582
        %584 = vdwg.mxu0
        %v585 = vmul.f32 %v583, %v439
        %v586 = vadd.f32 %v585, 1e-05
        %v587 = vrsqrt.pop %v586
        %v588 = vmul.f32 %v587, %v586
        %v589 = vmul.f32 %v588, %v587
        %v590 = vmul.f32 0.5, %v589
        %v591 = vsub.f32 1.5, %v590
        %v592 = vmul.f32 %v587, %v591
        %vm593 = vweird.f32 %v586
        %vm594 = vweird.f32 %v587
        %vm595 = vmor %vm593, %vm594
        %v596 = vsel %vm595, %v587, %v592
        %v598 = vsel %vm441, %v596, 0
        %600 = vmatpush.msra.mxu0 0.0
        %601 = vmatpush.msra.mxu0 0.0
        %602 = vmatpush.msra.mxu0 0.0
        %603 = vmatpush.msra.mxu0 0.0
        %604 = vmatpush.msra.mxu0 0.0
        %605 = vmatpush.msra.mxu0 0.0
        %606 = vmatpush.msra.mxu0 0.0
        %607 = vmatpush.msra.mxu0 0.0
        %608 = vmatpush.msra.mxu0 0.0
        %609 = vmatpush.msra.mxu0 0.0
        %610 = vmatpush.msra.mxu0 0.0
        %611 = vmatpush.msra.mxu0 0.0
        %612 = vmatpush.msra.mxu0 0.0
        %613 = vmatpush.msra.mxu0 0.0
        %614 = vmatpush.msra.mxu0 %v365
        %615 = vmatpush.msra.mxu0 %v363
        %616 = vmatmul.f32.gmra.mxu0 %v598
        %v617 = vpop.f32.mrf.mxu0
        %v618 = vadd.f32 0.0, %v617
        %619 = vdwg.mxu0
        %620 = vmatpush.msra.mxu0 0.0
        %621 = vmatpush.msra.mxu0 0.0
        %622 = vmatpush.msra.mxu0 0.0
        %623 = vmatpush.msra.mxu0 0.0
        %624 = vmatpush.msra.mxu0 0.0
        %625 = vmatpush.msra.mxu0 0.0
        %626 = vmatpush.msra.mxu0 0.0
        %627 = vmatpush.msra.mxu0 0.0
        %628 = vmatpush.msra.mxu0 0.0
        %629 = vmatpush.msra.mxu0 0.0
        %630 = vmatpush.msra.mxu0 0.0
        %631 = vmatpush.msra.mxu0 0.0
        %632 = vmatpush.msra.mxu0 0.0
        %633 = vmatpush.msra.mxu0 0.0
        %634 = vmatpush.msra.mxu0 %v366
        %635 = vmatpush.msra.mxu0 %v364
        %636 = vmatmul.f32.gmra.mxu0 %v598
        %v637 = vpop.f32.mrf.mxu0
        %v638 = vadd.f32 0.0, %v637
        %639 = vdwg.mxu0
        %v640 = vld [vmem:[#allocation4] sm:$0x3]
        %v642 = vperm.slane %v640, 0
        %v643 = vperm.slane %v640, 1
        %v646 = vmul.f32 %v618, %v642
        %v647 = vmul.f32 %v638, %v643
        %v648 = vperm.slane %v646, 0
        %v649 = vperm.slane %v647, 0
        %v650 = vmul.f32 %v487, %v648
        %v651 = vmul.f32 %v488, %v649
        %v652 = vmul.f32 %v489, %v648
        %v653 = vmul.f32 %v490, %v649
        %v654 = vmul.f32 %v491, %v648
        %v655 = vmul.f32 %v492, %v649
        %v656 = vmul.f32 %v493, %v648
        %v657 = vmul.f32 %v494, %v649
        %v658 = vmul.f32 %v495, %v648
        %v659 = vmul.f32 %v496, %v649
        %v660 = vmul.f32 %v497, %v648
        %v661 = vmul.f32 %v498, %v649
        %v662 = vmul.f32 %v499, %v648
        %v663 = vmul.f32 %v500, %v649
        %v664 = vmul.f32 %v501, %v648
        %v665 = vmul.f32 %v502, %v649
        %v666 = vld [vmem:[#allocation6] sm:$0x3]
        %v668 = vperm.slane %v666, 0
        %v669 = vperm.slane %v666, 1
        %v672 = vadd.f32 %v650, %v668
        %v673 = vadd.f32 %v651, %v669
        %v674 = vadd.f32 %v652, %v668
        %v675 = vadd.f32 %v653, %v669
        %v676 = vadd.f32 %v654, %v668
        %v677 = vadd.f32 %v655, %v669
        %v678 = vadd.f32 %v656, %v668
        %v679 = vadd.f32 %v657, %v669
        %v680 = vadd.f32 %v658, %v668
        %v681 = vadd.f32 %v659, %v669
        %v682 = vadd.f32 %v660, %v668
        %v683 = vadd.f32 %v661, %v669
        %v684 = vadd.f32 %v662, %v668
        %v685 = vadd.f32 %v663, %v669
        %v686 = vadd.f32 %v664, %v668
        %v687 = vadd.f32 %v665, %v669
        %v688 = vmax.f32 %v672, 0.0
        %v689 = vmax.f32 %v673, 0.0
        %v690 = vmax.f32 %v674, 0.0
        %v691 = vmax.f32 %v675, 0.0
        %v692 = vmax.f32 %v676, 0.0
        %v693 = vmax.f32 %v677, 0.0
        %v694 = vmax.f32 %v678, 0.0
        %v695 = vmax.f32 %v679, 0.0
        %v696 = vmax.f32 %v680, 0.0
        %v697 = vmax.f32 %v681, 0.0
        %v698 = vmax.f32 %v682, 0.0
        %v699 = vmax.f32 %v683, 0.0
        %v700 = vmax.f32 %v684, 0.0
        %v701 = vmax.f32 %v685, 0.0
        %v702 = vmax.f32 %v686, 0.0
        %v703 = vmax.f32 %v687, 0.0
        %704 = vst [vmem:[#allocation2] sm:$0xff] 0.0
        %705 = vst [vmem:[#allocation2 + $0x8] sm:$0xff] 0.0
        %706 = vst [vmem:[#allocation2 + $0x10] sm:$0x3] 0.0
        %707 = vst [vmem:[#allocation2 + $0x18] sm:$0x3] 0.0
        %708 = vst [vmem:[#allocation2 + $0x20] sm:$0xff] 0.0
        %709 = vst [vmem:[#allocation2 + $0x28] sm:$0xff] 0.0
        %710 = vst [vmem:[#allocation2 + $0x30] sm:$0x3] 0.0
        %711 = vst [vmem:[#allocation2 + $0x38] sm:$0x3] 0.0
        %712 = vst [vmem:[#allocation2 + $0x40] sm:$0xff] 0.0
        %713 = vst [vmem:[#allocation2 + $0x48] sm:$0xff] 0.0
        %714 = vst [vmem:[#allocation2 + $0x50] sm:$0x3] 0.0
        %715 = vst [vmem:[#allocation2 + $0x58] sm:$0x3] 0.0
        %716 = vst [vmem:[#allocation2 + $0x60] sm:$0xff] 0.0
        %717 = vst [vmem:[#allocation2 + $0x68] sm:$0xff] 0.0
        %718 = vst [vmem:[#allocation2 + $0x70] sm:$0x3] 0.0
        %719 = vst [vmem:[#allocation2 + $0x78] sm:$0x3] 0.0
        %720 = vst [vmem:[#allocation2 + $0x80] sm:$0xff] 0.0
        %721 = vst [vmem:[#allocation2 + $0x88] sm:$0xff] 0.0
        %722 = vst [vmem:[#allocation2 + $0x90] sm:$0x3] 0.0
        %723 = vst [vmem:[#allocation2 + $0x98] sm:$0x3] 0.0
        %724 = vst [vmem:[#allocation2 + $0xa0] sm:$0xff] 0.0
        %725 = vst [vmem:[#allocation2 + $0xa8] sm:$0xff] 0.0
        %726 = vst [vmem:[#allocation2 + $0xb0] sm:$0x3] 0.0
        %727 = vst [vmem:[#allocation2 + $0xb8] sm:$0x3] 0.0
        %728 = vst [vmem:[#allocation2 + $0xc0] sm:$0xff] 0.0
        %729 = vst [vmem:[#allocation2 + $0xc8] sm:$0xff] 0.0
        %730 = vst [vmem:[#allocation2 + $0xd0] sm:$0x3] 0.0
        %731 = vst [vmem:[#allocation2 + $0xd8] sm:$0x3] 0.0
        %732 = vst [vmem:[#allocation2 + $0xe0] sm:$0xff] 0.0
        %733 = vst [vmem:[#allocation2 + $0xe8] sm:$0xff] 0.0
        %734 = vst [vmem:[#allocation2 + $0xf0] sm:$0x3] 0.0
        %735 = vst [vmem:[#allocation2 + $0xf8] sm:$0x3] 0.0
        %736 = vst [vmem:[#allocation2 + $0x100] sm:$0xff] 0.0
        %737 = vst [vmem:[#allocation2 + $0x108] sm:$0xff] 0.0
        %738 = vst [vmem:[#allocation2 + $0x110] sm:$0x3] 0.0
        %739 = vst [vmem:[#allocation2 + $0x118] sm:$0x3] 0.0
        %740 = vst [vmem:[#allocation2 + $0x120] sm:$0xff] 0.0
        %741 = vst [vmem:[#allocation2 + $0x128] sm:$0xff] 0.0
        %742 = vst [vmem:[#allocation2 + $0x130] sm:$0x3] 0.0
        %743 = vst [vmem:[#allocation2 + $0x138] sm:$0x3] 0.0
        %v760 = vrot.slane %v688, 7
        %v761 = vrot.slane %v689, 7
        %v762 = vrot.slane %v690, 7
        %v763 = vrot.slane %v691, 7
        %v764 = vrot.slane %v692, 7
        %v765 = vrot.slane %v693, 7
        %v766 = vrot.slane %v694, 7
        %v767 = vrot.slane %v695, 7
        %v768 = vrot.slane %v696, 7
        %v769 = vrot.slane %v697, 7
        %v770 = vrot.slane %v698, 7
        %v771 = vrot.slane %v699, 7
        %v772 = vrot.slane %v700, 7
        %v773 = vrot.slane %v701, 7
        %v774 = vrot.slane %v702, 7
        %v775 = vrot.slane %v703, 7
        %s792 = scalar_lea.vmem [#allocation2], 32
        %793 = vst [vmem:[%s792] sm:$0xfe] %v760
        %794 = vst [vmem:[%s792 + $0x8] sm:$0xfe] %v761
        %795 = vst [vmem:[%s792 + $0x10] sm:$0x1] %v760
        %796 = vst [vmem:[%s792 + $0x18] sm:$0x1] %v761
        %797 = vst [vmem:[%s792 + $0x20] sm:$0xfe] %v762
        %798 = vst [vmem:[%s792 + $0x28] sm:$0xfe] %v763
        %799 = vst [vmem:[%s792 + $0x30] sm:$0x1] %v762
        %800 = vst [vmem:[%s792 + $0x38] sm:$0x1] %v763
        %801 = vst [vmem:[%s792 + $0x40] sm:$0xfe] %v764
        %802 = vst [vmem:[%s792 + $0x48] sm:$0xfe] %v765
        %803 = vst [vmem:[%s792 + $0x50] sm:$0x1] %v764
        %804 = vst [vmem:[%s792 + $0x58] sm:$0x1] %v765
        %805 = vst [vmem:[%s792 + $0x60] sm:$0xfe] %v766
        %806 = vst [vmem:[%s792 + $0x68] sm:$0xfe] %v767
        %807 = vst [vmem:[%s792 + $0x70] sm:$0x1] %v766
        %808 = vst [vmem:[%s792 + $0x78] sm:$0x1] %v767
        %809 = vst [vmem:[%s792 + $0x80] sm:$0xfe] %v768
        %810 = vst [vmem:[%s792 + $0x88] sm:$0xfe] %v769
        %811 = vst [vmem:[%s792 + $0x90] sm:$0x1] %v768
        %812 = vst [vmem:[%s792 + $0x98] sm:$0x1] %v769
        %813 = vst [vmem:[%s792 + $0xa0] sm:$0xfe] %v770
        %814 = vst [vmem:[%s792 + $0xa8] sm:$0xfe] %v771
        %815 = vst [vmem:[%s792 + $0xb0] sm:$0x1] %v770
        %816 = vst [vmem:[%s792 + $0xb8] sm:$0x1] %v771
        %817 = vst [vmem:[%s792 + $0xc0] sm:$0xfe] %v772
        %818 = vst [vmem:[%s792 + $0xc8] sm:$0xfe] %v773
        %819 = vst [vmem:[%s792 + $0xd0] sm:$0x1] %v772
        %820 = vst [vmem:[%s792 + $0xd8] sm:$0x1] %v773
        %821 = vst [vmem:[%s792 + $0xe0] sm:$0xfe] %v774
        %822 = vst [vmem:[%s792 + $0xe8] sm:$0xfe] %v775
        %823 = vst [vmem:[%s792 + $0xf0] sm:$0x1] %v774
        %824 = vst [vmem:[%s792 + $0xf8] sm:$0x1] %v775
        %825 = vst [vmem:[#allocation3] sm:$0xff] 0.0
        %826 = vst [vmem:[#allocation3 + $0x8] sm:$0xff] 0.0
        %827 = vst [vmem:[#allocation3 + $0x10] sm:$0xff] 0.0
        %828 = vst [vmem:[#allocation3 + $0x18] sm:$0xff] 0.0
        %829 = vst [vmem:[#allocation3 + $0x20] sm:$0xff] 0.0
        %830 = vst [vmem:[#allocation3 + $0x28] sm:$0xff] 0.0
        %831 = vst [vmem:[#allocation3 + $0x30] sm:$0xff] 0.0
        %832 = vst [vmem:[#allocation3 + $0x38] sm:$0xff] 0.0
        %833 = vst [vmem:[#allocation3 + $0x40] sm:$0xff] 0.0
        %834 = vst [vmem:[#allocation3 + $0x48] sm:$0xff] 0.0
        %835 = vst [vmem:[#allocation3 + $0x50] sm:$0xff] 0.0
        %836 = vst [vmem:[#allocation3 + $0x58] sm:$0xff] 0.0
        %837 = vst [vmem:[#allocation3 + $0x60] sm:$0xff] 0.0
        %838 = vst [vmem:[#allocation3 + $0x68] sm:$0xff] 0.0
        %839 = vst [vmem:[#allocation3 + $0x70] sm:$0xff] 0.0
        %840 = vst [vmem:[#allocation3 + $0x78] sm:$0xff] 0.0
        %v841 = vld [vmem:[#allocation2] sm:$0xff]
        %v842 = vld [vmem:[#allocation2 + $0x8] sm:$0xff]
        %v843 = vld [vmem:[#allocation2 + $0x20] sm:$0xff]
        %v844 = vld [vmem:[#allocation2 + $0x28] sm:$0xff]
        %v845 = vld [vmem:[#allocation2 + $0x40] sm:$0xff]
        %v846 = vld [vmem:[#allocation2 + $0x48] sm:$0xff]
        %v847 = vld [vmem:[#allocation2 + $0x60] sm:$0xff]
        %v848 = vld [vmem:[#allocation2 + $0x68] sm:$0xff]
        %v849 = vld [vmem:[#allocation2 + $0x80] sm:$0xff]
        %v850 = vld [vmem:[#allocation2 + $0x88] sm:$0xff]
        %v851 = vld [vmem:[#allocation2 + $0xa0] sm:$0xff]
        %v852 = vld [vmem:[#allocation2 + $0xa8] sm:$0xff]
        %v853 = vld [vmem:[#allocation2 + $0xc0] sm:$0xff]
        %v854 = vld [vmem:[#allocation2 + $0xc8] sm:$0xff]
        %v855 = vld [vmem:[#allocation2 + $0xe0] sm:$0xff]
        %v856 = vld [vmem:[#allocation2 + $0xe8] sm:$0xff]
        %v857 = vld [vmem:[#allocation3] sm:$0xff]
        %v858 = vld [vmem:[#allocation3 + $0x8] sm:$0xff]
        %v859 = vld [vmem:[#allocation3 + $0x10] sm:$0xff]
        %v860 = vld [vmem:[#allocation3 + $0x18] sm:$0xff]
        %v861 = vld [vmem:[#allocation3 + $0x20] sm:$0xff]
        %v862 = vld [vmem:[#allocation3 + $0x28] sm:$0xff]
        %v863 = vld [vmem:[#allocation3 + $0x30] sm:$0xff]
        %v864 = vld [vmem:[#allocation3 + $0x38] sm:$0xff]
        %v865 = vld [vmem:[#allocation3 + $0x40] sm:$0xff]
        %v866 = vld [vmem:[#allocation3 + $0x48] sm:$0xff]
        %v867 = vld [vmem:[#allocation3 + $0x50] sm:$0xff]
        %v868 = vld [vmem:[#allocation3 + $0x58] sm:$0xff]
        %v869 = vld [vmem:[#allocation3 + $0x60] sm:$0xff]
        %v870 = vld [vmem:[#allocation3 + $0x68] sm:$0xff]
        %v871 = vld [vmem:[#allocation3 + $0x70] sm:$0xff]
        %v872 = vld [vmem:[#allocation3 + $0x78] sm:$0xff]
        %v873 = vld [vmem:[#allocation9] sm:$0xff]
        %v874 = vld [vmem:[#allocation9 + $0x8] sm:$0xff]
        %v875 = vld [vmem:[#allocation9 + $0x10] sm:$0xff]
        %v876 = vld [vmem:[#allocation9 + $0x18] sm:$0xff]
        %v877 = vld [vmem:[#allocation9 + $0x20] sm:$0xff]
        %v878 = vld [vmem:[#allocation9 + $0x28] sm:$0xff]
        %v879 = vld [vmem:[#allocation9 + $0x30] sm:$0xff]
        %v880 = vld [vmem:[#allocation9 + $0x38] sm:$0xff]
        %v881 = vld [vmem:[#allocation9 + $0x40] sm:$0xff]
        %v882 = vld [vmem:[#allocation9 + $0x48] sm:$0xff]
        %v883 = vld [vmem:[#allocation9 + $0x50] sm:$0xff]
        %v884 = vld [vmem:[#allocation9 + $0x58] sm:$0xff]
        %v885 = vld [vmem:[#allocation9 + $0x60] sm:$0xff]
        %v886 = vld [vmem:[#allocation9 + $0x68] sm:$0xff]
        %v887 = vld [vmem:[#allocation9 + $0x70] sm:$0xff]
        %v888 = vld [vmem:[#allocation9 + $0x78] sm:$0xff]
        %v889 = vld [vmem:[#allocation9 + $0x80] sm:$0xff]
        %v890 = vld [vmem:[#allocation9 + $0x88] sm:$0xff]
        %v891 = vld [vmem:[#allocation9 + $0x90] sm:$0xff]
        %v892 = vld [vmem:[#allocation9 + $0x98] sm:$0xff]
        %v893 = vld [vmem:[#allocation9 + $0xa0] sm:$0xff]
        %v894 = vld [vmem:[#allocation9 + $0xa8] sm:$0xff]
        %v895 = vld [vmem:[#allocation9 + $0xb0] sm:$0xff]
        %v896 = vld [vmem:[#allocation9 + $0xb8] sm:$0xff]
        %v897 = vld [vmem:[#allocation9 + $0xc0] sm:$0xff]
        %v898 = vld [vmem:[#allocation9 + $0xc8] sm:$0xff]
        %v899 = vld [vmem:[#allocation9 + $0xd0] sm:$0xff]
        %v900 = vld [vmem:[#allocation9 + $0xd8] sm:$0xff]
        %v901 = vld [vmem:[#allocation9 + $0xe0] sm:$0xff]
        %v902 = vld [vmem:[#allocation9 + $0xe8] sm:$0xff]
        %v903 = vld [vmem:[#allocation9 + $0xf0] sm:$0xff]
        %v904 = vld [vmem:[#allocation9 + $0xf8] sm:$0xff]
        %v905 = vld [vmem:[#allocation9 + $0x100] sm:$0xff]
        %v906 = vld [vmem:[#allocation9 + $0x108] sm:$0xff]
        %v907 = vld [vmem:[#allocation9 + $0x110] sm:$0xff]
        %v908 = vld [vmem:[#allocation9 + $0x118] sm:$0xff]
        %v909 = vld [vmem:[#allocation9 + $0x120] sm:$0xff]
        %v910 = vld [vmem:[#allocation9 + $0x128] sm:$0xff]
        %v911 = vld [vmem:[#allocation9 + $0x130] sm:$0xff]
        %v912 = vld [vmem:[#allocation9 + $0x138] sm:$0xff]
        %v913 = vld [vmem:[#allocation9 + $0x140] sm:$0xff]
        %v914 = vld [vmem:[#allocation9 + $0x148] sm:$0xff]
        %v915 = vld [vmem:[#allocation9 + $0x150] sm:$0xff]
        %v916 = vld [vmem:[#allocation9 + $0x158] sm:$0xff]
        %v917 = vld [vmem:[#allocation9 + $0x160] sm:$0xff]
        %v918 = vld [vmem:[#allocation9 + $0x168] sm:$0xff]
        %v919 = vld [vmem:[#allocation9 + $0x170] sm:$0xff]
        %v920 = vld [vmem:[#allocation9 + $0x178] sm:$0xff]
        %v921 = vld [vmem:[#allocation9 + $0x180] sm:$0xff]
        %v922 = vld [vmem:[#allocation9 + $0x188] sm:$0xff]
        %v923 = vld [vmem:[#allocation9 + $0x190] sm:$0xff]
        %v924 = vld [vmem:[#allocation9 + $0x198] sm:$0xff]
        %v925 = vld [vmem:[#allocation9 + $0x1a0] sm:$0xff]
        %v926 = vld [vmem:[#allocation9 + $0x1a8] sm:$0xff]
        %v927 = vld [vmem:[#allocation9 + $0x1b0] sm:$0xff]
        %v928 = vld [vmem:[#allocation9 + $0x1b8] sm:$0xff]
        %v929 = vld [vmem:[#allocation9 + $0x1c0] sm:$0xff]
        %v930 = vld [vmem:[#allocation9 + $0x1c8] sm:$0xff]
        %v931 = vld [vmem:[#allocation9 + $0x1d0] sm:$0xff]
        %v932 = vld [vmem:[#allocation9 + $0x1d8] sm:$0xff]
        %v933 = vld [vmem:[#allocation9 + $0x1e0] sm:$0xff]
        %v934 = vld [vmem:[#allocation9 + $0x1e8] sm:$0xff]
        %v935 = vld [vmem:[#allocation9 + $0x1f0] sm:$0xff]
        %v936 = vld [vmem:[#allocation9 + $0x1f8] sm:$0xff]
        %937 = vmatpush.msra.mxu0 %v903
        %938 = vmatpush.msra.mxu0 %v901
        %939 = vmatpush.msra.mxu0 %v899
        %940 = vmatpush.msra.mxu0 %v897
        %941 = vmatpush.msra.mxu0 %v895
        %942 = vmatpush.msra.mxu0 %v893
        %943 = vmatpush.msra.mxu0 %v891
        %944 = vmatpush.msra.mxu0 %v889
        %945 = vmatpush.msra.mxu0 %v887
        %946 = vmatpush.msra.mxu0 %v885
        %947 = vmatpush.msra.mxu0 %v883
        %948 = vmatpush.msra.mxu0 %v881
        %949 = vmatpush.msra.mxu0 %v879
        %950 = vmatpush.msra.mxu0 %v877
        %951 = vmatpush.msra.mxu0 %v875
        %952 = vmatpush.msra.mxu0 %v873
        %953 = vmatmul.f32.gmra.mxu0 %v841
        %v954 = vpop.f32.mrf.mxu0
        %v955 = vadd.f32 0.0, %v954
        %956 = vmatmul.f32.gmra.mxu0 %v843
        %v957 = vpop.f32.mrf.mxu0
        %v958 = vadd.f32 0.0, %v957
        %959 = vmatmul.f32.gmra.mxu0 %v845
        %v960 = vpop.f32.mrf.mxu0
        %v961 = vadd.f32 0.0, %v960
        %962 = vmatmul.f32.gmra.mxu0 %v847
        %v963 = vpop.f32.mrf.mxu0
        %v964 = vadd.f32 0.0, %v963
        %965 = vmatmul.f32.gmra.mxu0 %v849
        %v966 = vpop.f32.mrf.mxu0
        %v967 = vadd.f32 0.0, %v966
        %968 = vmatmul.f32.gmra.mxu0 %v851
        %v969 = vpop.f32.mrf.mxu0
        %v970 = vadd.f32 0.0, %v969
        %971 = vmatmul.f32.gmra.mxu0 %v853
        %v972 = vpop.f32.mrf.mxu0
        %v973 = vadd.f32 0.0, %v972
        %974 = vmatmul.f32.gmra.mxu0 %v855
        %v975 = vpop.f32.mrf.mxu0
        %v976 = vadd.f32 0.0, %v975
        %977 = vdwg.mxu0
        %978 = vmatpush.msra.mxu0 %v935
        %979 = vmatpush.msra.mxu0 %v933
        %980 = vmatpush.msra.mxu0 %v931
        %981 = vmatpush.msra.mxu0 %v929
        %982 = vmatpush.msra.mxu0 %v927
        %983 = vmatpush.msra.mxu0 %v925
        %984 = vmatpush.msra.mxu0 %v923
        %985 = vmatpush.msra.mxu0 %v921
        %986 = vmatpush.msra.mxu0 %v919
        %987 = vmatpush.msra.mxu0 %v917
        %988 = vmatpush.msra.mxu0 %v915
        %989 = vmatpush.msra.mxu0 %v913
        %990 = vmatpush.msra.mxu0 %v911
        %991 = vmatpush.msra.mxu0 %v909
        %992 = vmatpush.msra.mxu0 %v907
        %993 = vmatpush.msra.mxu0 %v905
        %994 = vmatmul.f32.gmra.mxu0 %v842
        %v995 = vpop.f32.mrf.mxu0
        %v996 = vadd.f32 %v955, %v995
        %997 = vmatmul.f32.gmra.mxu0 %v844
        %v998 = vpop.f32.mrf.mxu0
        %v999 = vadd.f32 %v958, %v998
        %1000 = vmatmul.f32.gmra.mxu0 %v846
        %v1001 = vpop.f32.mrf.mxu0
        %v1002 = vadd.f32 %v961, %v1001
        %1003 = vmatmul.f32.gmra.mxu0 %v848
        %v1004 = vpop.f32.mrf.mxu0
        %v1005 = vadd.f32 %v964, %v1004
        %1006 = vmatmul.f32.gmra.mxu0 %v850
        %v1007 = vpop.f32.mrf.mxu0
        %v1008 = vadd.f32 %v967, %v1007
        %1009 = vmatmul.f32.gmra.mxu0 %v852
        %v1010 = vpop.f32.mrf.mxu0
        %v1011 = vadd.f32 %v970, %v1010
        %1012 = vmatmul.f32.gmra.mxu0 %v854
        %v1013 = vpop.f32.mrf.mxu0
        %v1014 = vadd.f32 %v973, %v1013
        %1015 = vmatmul.f32.gmra.mxu0 %v856
        %v1016 = vpop.f32.mrf.mxu0
        %v1017 = vadd.f32 %v976, %v1016
        %1018 = vdwg.mxu0
        %1019 = vmatpush.msra.mxu0 %v904
        %1020 = vmatpush.msra.mxu0 %v902
        %1021 = vmatpush.msra.mxu0 %v900
        %1022 = vmatpush.msra.mxu0 %v898
        %1023 = vmatpush.msra.mxu0 %v896
        %1024 = vmatpush.msra.mxu0 %v894
        %1025 = vmatpush.msra.mxu0 %v892
        %1026 = vmatpush.msra.mxu0 %v890
        %1027 = vmatpush.msra.mxu0 %v888
        %1028 = vmatpush.msra.mxu0 %v886
        %1029 = vmatpush.msra.mxu0 %v884
        %1030 = vmatpush.msra.mxu0 %v882
        %1031 = vmatpush.msra.mxu0 %v880
        %1032 = vmatpush.msra.mxu0 %v878
        %1033 = vmatpush.msra.mxu0 %v876
        %1034 = vmatpush.msra.mxu0 %v874
        %1035 = vmatmul.f32.gmra.mxu0 %v841
        %v1036 = vpop.f32.mrf.mxu0
        %v1037 = vadd.f32 0.0, %v1036
        %1038 = vmatmul.f32.gmra.mxu0 %v843
        %v1039 = vpop.f32.mrf.mxu0
        %v1040 = vadd.f32 0.0, %v1039
        %1041 = vmatmul.f32.gmra.mxu0 %v845
        %v1042 = vpop.f32.mrf.mxu0
        %v1043 = vadd.f32 0.0, %v1042
        %1044 = vmatmul.f32.gmra.mxu0 %v847
        %v1045 = vpop.f32.mrf.mxu0
        %v1046 = vadd.f32 0.0, %v1045
        %1047 = vmatmul.f32.gmra.mxu0 %v849
        %v1048 = vpop.f32.mrf.mxu0
        %v1049 = vadd.f32 0.0, %v1048
        %1050 = vmatmul.f32.gmra.mxu0 %v851
        %v1051 = vpop.f32.mrf.mxu0
        %v1052 = vadd.f32 0.0, %v1051
        %1053 = vmatmul.f32.gmra.mxu0 %v853
        %v1054 = vpop.f32.mrf.mxu0
        %v1055 = vadd.f32 0.0, %v1054
        %1056 = vmatmul.f32.gmra.mxu0 %v855
        %v1057 = vpop.f32.mrf.mxu0
        %v1058 = vadd.f32 0.0, %v1057
        %1059 = vdwg.mxu0
        %1060 = vmatpush.msra.mxu0 %v936
        %1061 = vmatpush.msra.mxu0 %v934
        %1062 = vmatpush.msra.mxu0 %v932
        %1063 = vmatpush.msra.mxu0 %v930
        %1064 = vmatpush.msra.mxu0 %v928
        %1065 = vmatpush.msra.mxu0 %v926
        %1066 = vmatpush.msra.mxu0 %v924
        %1067 = vmatpush.msra.mxu0 %v922
        %1068 = vmatpush.msra.mxu0 %v920
        %1069 = vmatpush.msra.mxu0 %v918
        %1070 = vmatpush.msra.mxu0 %v916
        %1071 = vmatpush.msra.mxu0 %v914
        %1072 = vmatpush.msra.mxu0 %v912
        %1073 = vmatpush.msra.mxu0 %v910
        %1074 = vmatpush.msra.mxu0 %v908
        %1075 = vmatpush.msra.mxu0 %v906
        %1076 = vmatmul.f32.gmra.mxu0 %v842
        %v1077 = vpop.f32.mrf.mxu0
        %v1078 = vadd.f32 %v1037, %v1077
        %1079 = vmatmul.f32.gmra.mxu0 %v844
        %v1080 = vpop.f32.mrf.mxu0
        %v1081 = vadd.f32 %v1040, %v1080
        %1082 = vmatmul.f32.gmra.mxu0 %v846
        %v1083 = vpop.f32.mrf.mxu0
        %v1084 = vadd.f32 %v1043, %v1083
        %1085 = vmatmul.f32.gmra.mxu0 %v848
        %v1086 = vpop.f32.mrf.mxu0
        %v1087 = vadd.f32 %v1046, %v1086
        %1088 = vmatmul.f32.gmra.mxu0 %v850
        %v1089 = vpop.f32.mrf.mxu0
        %v1090 = vadd.f32 %v1049, %v1089
        %1091 = vmatmul.f32.gmra.mxu0 %v852
        %v1092 = vpop.f32.mrf.mxu0
        %v1093 = vadd.f32 %v1052, %v1092
        %1094 = vmatmul.f32.gmra.mxu0 %v854
        %v1095 = vpop.f32.mrf.mxu0
        %v1096 = vadd.f32 %v1055, %v1095
        %1097 = vmatmul.f32.gmra.mxu0 %v856
        %v1098 = vpop.f32.mrf.mxu0
        %v1099 = vadd.f32 %v1058, %v1098
        %1100 = vdwg.mxu0
        %v1101 = vadd.f32 %v857, %v996
        %v1102 = vadd.f32 %v858, %v1078
        %v1103 = vadd.f32 %v859, %v999
        %v1104 = vadd.f32 %v860, %v1081
        %v1105 = vadd.f32 %v861, %v1002
        %v1106 = vadd.f32 %v862, %v1084
        %v1107 = vadd.f32 %v863, %v1005
        %v1108 = vadd.f32 %v864, %v1087
        %v1109 = vadd.f32 %v865, %v1008
        %v1110 = vadd.f32 %v866, %v1090
        %v1111 = vadd.f32 %v867, %v1011
        %v1112 = vadd.f32 %v868, %v1093
        %v1113 = vadd.f32 %v869, %v1014
        %v1114 = vadd.f32 %v870, %v1096
        %v1115 = vadd.f32 %v871, %v1017
        %v1116 = vadd.f32 %v872, %v1099
        %1117 = vst [vmem:[#allocation3] sm:$0xff] %v1101
        %1118 = vst [vmem:[#allocation3 + $0x8] sm:$0xff] %v1102
        %1119 = vst [vmem:[#allocation3 + $0x10] sm:$0xff] %v1103
        %1120 = vst [vmem:[#allocation3 + $0x18] sm:$0xff] %v1104
        %1121 = vst [vmem:[#allocation3 + $0x20] sm:$0xff] %v1105
        %1122 = vst [vmem:[#allocation3 + $0x28] sm:$0xff] %v1106
        %1123 = vst [vmem:[#allocation3 + $0x30] sm:$0xff] %v1107
        %1124 = vst [vmem:[#allocation3 + $0x38] sm:$0xff] %v1108
        %1125 = vst [vmem:[#allocation3 + $0x40] sm:$0xff] %v1109
        %1126 = vst [vmem:[#allocation3 + $0x48] sm:$0xff] %v1110
        %1127 = vst [vmem:[#allocation3 + $0x50] sm:$0xff] %v1111
        %1128 = vst [vmem:[#allocation3 + $0x58] sm:$0xff] %v1112
        %1129 = vst [vmem:[#allocation3 + $0x60] sm:$0xff] %v1113
        %1130 = vst [vmem:[#allocation3 + $0x68] sm:$0xff] %v1114
        %1131 = vst [vmem:[#allocation3 + $0x70] sm:$0xff] %v1115
        %1132 = vst [vmem:[#allocation3 + $0x78] sm:$0xff] %v1116
        %v1133 = vld [vmem:[#allocation2] sm:$0xfe]
        %v1134 = vld [vmem:[#allocation2 + $0x8] sm:$0xfe]
        %v1135 = vld [vmem:[#allocation2 + $0x10] sm:$0x1]
        %v1136 = vld [vmem:[#allocation2 + $0x18] sm:$0x1]
        %v1137 = vld [vmem:[#allocation2 + $0x20] sm:$0xfe]
        %v1138 = vld [vmem:[#allocation2 + $0x28] sm:$0xfe]
        %v1139 = vld [vmem:[#allocation2 + $0x30] sm:$0x1]
        %v1140 = vld [vmem:[#allocation2 + $0x38] sm:$0x1]
        %v1141 = vld [vmem:[#allocation2 + $0x40] sm:$0xfe]
        %v1142 = vld [vmem:[#allocation2 + $0x48] sm:$0xfe]
        %v1143 = vld [vmem:[#allocation2 + $0x50] sm:$0x1]
        %v1144 = vld [vmem:[#allocation2 + $0x58] sm:$0x1]
        %v1145 = vld [vmem:[#allocation2 + $0x60] sm:$0xfe]
        %v1146 = vld [vmem:[#allocation2 + $0x68] sm:$0xfe]
        %v1147 = vld [vmem:[#allocation2 + $0x70] sm:$0x1]
        %v1148 = vld [vmem:[#allocation2 + $0x78] sm:$0x1]
        %v1149 = vld [vmem:[#allocation2 + $0x80] sm:$0xfe]
        %v1150 = vld [vmem:[#allocation2 + $0x88] sm:$0xfe]
        %v1151 = vld [vmem:[#allocation2 + $0x90] sm:$0x1]
        %v1152 = vld [vmem:[#allocation2 + $0x98] sm:$0x1]
        %v1153 = vld [vmem:[#allocation2 + $0xa0] sm:$0xfe]
        %v1154 = vld [vmem:[#allocation2 + $0xa8] sm:$0xfe]
        %v1155 = vld [vmem:[#allocation2 + $0xb0] sm:$0x1]
        %v1156 = vld [vmem:[#allocation2 + $0xb8] sm:$0x1]
        %v1157 = vld [vmem:[#allocation2 + $0xc0] sm:$0xfe]
        %v1158 = vld [vmem:[#allocation2 + $0xc8] sm:$0xfe]
        %v1159 = vld [vmem:[#allocation2 + $0xd0] sm:$0x1]
        %v1160 = vld [vmem:[#allocation2 + $0xd8] sm:$0x1]
        %v1161 = vld [vmem:[#allocation2 + $0xe0] sm:$0xfe]
        %v1162 = vld [vmem:[#allocation2 + $0xe8] sm:$0xfe]
        %v1163 = vld [vmem:[#allocation2 + $0xf0] sm:$0x1]
        %v1164 = vld [vmem:[#allocation2 + $0xf8] sm:$0x1]
        %vm1197 = vcmask 1046528
        %v1198 = vrot.slane %v1133, 1
        %v1199 = vrot.slane %v1135, 1
        %v1200 = vsel %vm1197, %v1198, %v1199
        %v1201 = vrot.slane %v1134, 1
        %v1202 = vrot.slane %v1136, 1
        %v1203 = vsel %vm1197, %v1201, %v1202
        %v1204 = vrot.slane %v1137, 1
        %v1205 = vrot.slane %v1139, 1
        %v1206 = vsel %vm1197, %v1204, %v1205
        %v1207 = vrot.slane %v1138, 1
        %v1208 = vrot.slane %v1140, 1
        %v1209 = vsel %vm1197, %v1207, %v1208
        %v1210 = vrot.slane %v1141, 1
        %v1211 = vrot.slane %v1143, 1
        %v1212 = vsel %vm1197, %v1210, %v1211
        %v1213 = vrot.slane %v1142, 1
        %v1214 = vrot.slane %v1144, 1
        %v1215 = vsel %vm1197, %v1213, %v1214
        %v1216 = vrot.slane %v1145, 1
        %v1217 = vrot.slane %v1147, 1
        %v1218 = vsel %vm1197, %v1216, %v1217
        %v1219 = vrot.slane %v1146, 1
        %v1220 = vrot.slane %v1148, 1
        %v1221 = vsel %vm1197, %v1219, %v1220
        %v1222 = vrot.slane %v1149, 1
        %v1223 = vrot.slane %v1151, 1
        %v1224 = vsel %vm1197, %v1222, %v1223
        %v1225 = vrot.slane %v1150, 1
        %v1226 = vrot.slane %v1152, 1
        %v1227 = vsel %vm1197, %v1225, %v1226
        %v1228 = vrot.slane %v1153, 1
        %v1229 = vrot.slane %v1155, 1
        %v1230 = vsel %vm1197, %v1228, %v1229
        %v1231 = vrot.slane %v1154, 1
        %v1232 = vrot.slane %v1156, 1
        %v1233 = vsel %vm1197, %v1231, %v1232
        %v1234 = vrot.slane %v1157, 1
        %v1235 = vrot.slane %v1159, 1
        %v1236 = vsel %vm1197, %v1234, %v1235
        %v1237 = vrot.slane %v1158, 1
        %v1238 = vrot.slane %v1160, 1
        %v1239 = vsel %vm1197, %v1237, %v1238
        %v1240 = vrot.slane %v1161, 1
        %v1241 = vrot.slane %v1163, 1
        %v1242 = vsel %vm1197, %v1240, %v1241
        %v1243 = vrot.slane %v1162, 1
        %v1244 = vrot.slane %v1164, 1
        %v1245 = vsel %vm1197, %v1243, %v1244
        %v1262 = vld [vmem:[#allocation3] sm:$0xff]
        %v1263 = vld [vmem:[#allocation3 + $0x8] sm:$0xff]
        %v1264 = vld [vmem:[#allocation3 + $0x10] sm:$0xff]
        %v1265 = vld [vmem:[#allocation3 + $0x18] sm:$0xff]
        %v1266 = vld [vmem:[#allocation3 + $0x20] sm:$0xff]
        %v1267 = vld [vmem:[#allocation3 + $0x28] sm:$0xff]
        %v1268 = vld [vmem:[#allocation3 + $0x30] sm:$0xff]
        %v1269 = vld [vmem:[#allocation3 + $0x38] sm:$0xff]
        %v1270 = vld [vmem:[#allocation3 + $0x40] sm:$0xff]
        %v1271 = vld [vmem:[#allocation3 + $0x48] sm:$0xff]
        %v1272 = vld [vmem:[#allocation3 + $0x50] sm:$0xff]
        %v1273 = vld [vmem:[#allocation3 + $0x58] sm:$0xff]
        %v1274 = vld [vmem:[#allocation3 + $0x60] sm:$0xff]
        %v1275 = vld [vmem:[#allocation3 + $0x68] sm:$0xff]
        %v1276 = vld [vmem:[#allocation3 + $0x70] sm:$0xff]
        %v1277 = vld [vmem:[#allocation3 + $0x78] sm:$0xff]
        %s1278 = scalar_lea.vmem [#allocation9], 512
        %v1279 = vld [vmem:[%s1278] sm:$0xff]
        %v1280 = vld [vmem:[%s1278 + $0x8] sm:$0xff]
        %v1281 = vld [vmem:[%s1278 + $0x10] sm:$0xff]
        %v1282 = vld [vmem:[%s1278 + $0x18] sm:$0xff]
        %v1283 = vld [vmem:[%s1278 + $0x20] sm:$0xff]
        %v1284 = vld [vmem:[%s1278 + $0x28] sm:$0xff]
        %v1285 = vld [vmem:[%s1278 + $0x30] sm:$0xff]
        %v1286 = vld [vmem:[%s1278 + $0x38] sm:$0xff]
        %v1287 = vld [vmem:[%s1278 + $0x40] sm:$0xff]
        %v1288 = vld [vmem:[%s1278 + $0x48] sm:$0xff]
        %v1289 = vld [vmem:[%s1278 + $0x50] sm:$0xff]
        %v1290 = vld [vmem:[%s1278 + $0x58] sm:$0xff]
        %v1291 = vld [vmem:[%s1278 + $0x60] sm:$0xff]
        %v1292 = vld [vmem:[%s1278 + $0x68] sm:$0xff]
        %v1293 = vld [vmem:[%s1278 + $0x70] sm:$0xff]
        %v1294 = vld [vmem:[%s1278 + $0x78] sm:$0xff]
        %v1295 = vld [vmem:[%s1278 + $0x80] sm:$0xff]
        %v1296 = vld [vmem:[%s1278 + $0x88] sm:$0xff]
        %v1297 = vld [vmem:[%s1278 + $0x90] sm:$0xff]
        %v1298 = vld [vmem:[%s1278 + $0x98] sm:$0xff]
        %v1299 = vld [vmem:[%s1278 + $0xa0] sm:$0xff]
        %v1300 = vld [vmem:[%s1278 + $0xa8] sm:$0xff]
        %v1301 = vld [vmem:[%s1278 + $0xb0] sm:$0xff]
        %v1302 = vld [vmem:[%s1278 + $0xb8] sm:$0xff]
        %v1303 = vld [vmem:[%s1278 + $0xc0] sm:$0xff]
        %v1304 = vld [vmem:[%s1278 + $0xc8] sm:$0xff]
        %v1305 = vld [vmem:[%s1278 + $0xd0] sm:$0xff]
        %v1306 = vld [vmem:[%s1278 + $0xd8] sm:$0xff]
        %v1307 = vld [vmem:[%s1278 + $0xe0] sm:$0xff]
        %v1308 = vld [vmem:[%s1278 + $0xe8] sm:$0xff]
        %v1309 = vld [vmem:[%s1278 + $0xf0] sm:$0xff]
        %v1310 = vld [vmem:[%s1278 + $0xf8] sm:$0xff]
        %v1311 = vld [vmem:[%s1278 + $0x100] sm:$0xff]
        %v1312 = vld [vmem:[%s1278 + $0x108] sm:$0xff]
        %v1313 = vld [vmem:[%s1278 + $0x110] sm:$0xff]
        %v1314 = vld [vmem:[%s1278 + $0x118] sm:$0xff]
        %v1315 = vld [vmem:[%s1278 + $0x120] sm:$0xff]
        %v1316 = vld [vmem:[%s1278 + $0x128] sm:$0xff]
        %v1317 = vld [vmem:[%s1278 + $0x130] sm:$0xff]
        %v1318 = vld [vmem:[%s1278 + $0x138] sm:$0xff]
        %v1319 = vld [vmem:[%s1278 + $0x140] sm:$0xff]
        %v1320 = vld [vmem:[%s1278 + $0x148] sm:$0xff]
        %v1321 = vld [vmem:[%s1278 + $0x150] sm:$0xff]
        %v1322 = vld [vmem:[%s1278 + $0x158] sm:$0xff]
        %v1323 = vld [vmem:[%s1278 + $0x160] sm:$0xff]
        %v1324 = vld [vmem:[%s1278 + $0x168] sm:$0xff]
        %v1325 = vld [vmem:[%s1278 + $0x170] sm:$0xff]
        %v1326 = vld [vmem:[%s1278 + $0x178] sm:$0xff]
        %v1327 = vld [vmem:[%s1278 + $0x180] sm:$0xff]
        %v1328 = vld [vmem:[%s1278 + $0x188] sm:$0xff]
        %v1329 = vld [vmem:[%s1278 + $0x190] sm:$0xff]
        %v1330 = vld [vmem:[%s1278 + $0x198] sm:$0xff]
        %v1331 = vld [vmem:[%s1278 + $0x1a0] sm:$0xff]
        %v1332 = vld [vmem:[%s1278 + $0x1a8] sm:$0xff]
        %v1333 = vld [vmem:[%s1278 + $0x1b0] sm:$0xff]
        %v1334 = vld [vmem:[%s1278 + $0x1b8] sm:$0xff]
        %v1335 = vld [vmem:[%s1278 + $0x1c0] sm:$0xff]
        %v1336 = vld [vmem:[%s1278 + $0x1c8] sm:$0xff]
        %v1337 = vld [vmem:[%s1278 + $0x1d0] sm:$0xff]
        %v1338 = vld [vmem:[%s1278 + $0x1d8] sm:$0xff]
        %v1339 = vld [vmem:[%s1278 + $0x1e0] sm:$0xff]
        %v1340 = vld [vmem:[%s1278 + $0x1e8] sm:$0xff]
        %v1341 = vld [vmem:[%s1278 + $0x1f0] sm:$0xff]
        %v1342 = vld [vmem:[%s1278 + $0x1f8] sm:$0xff]
        %1343 = vmatpush.msra.mxu0 %v1309
        %1344 = vmatpush.msra.mxu0 %v1307
        %1345 = vmatpush.msra.mxu0 %v1305
        %1346 = vmatpush.msra.mxu0 %v1303
        %1347 = vmatpush.msra.mxu0 %v1301
        %1348 = vmatpush.msra.mxu0 %v1299
        %1349 = vmatpush.msra.mxu0 %v1297
        %1350 = vmatpush.msra.mxu0 %v1295
        %1351 = vmatpush.msra.mxu0 %v1293
        %1352 = vmatpush.msra.mxu0 %v1291
        %1353 = vmatpush.msra.mxu0 %v1289
        %1354 = vmatpush.msra.mxu0 %v1287
        %1355 = vmatpush.msra.mxu0 %v1285
        %1356 = vmatpush.msra.mxu0 %v1283
        %1357 = vmatpush.msra.mxu0 %v1281
        %1358 = vmatpush.msra.mxu0 %v1279
        %1359 = vmatmul.f32.gmra.mxu0 %v1200
        %v1360 = vpop.f32.mrf.mxu0
        %v1361 = vadd.f32 0.0, %v1360
        %1362 = vmatmul.f32.gmra.mxu0 %v1206
        %v1363 = vpop.f32.mrf.mxu0
        %v1364 = vadd.f32 0.0, %v1363
        %1365 = vmatmul.f32.gmra.mxu0 %v1212
        %v1366 = vpop.f32.mrf.mxu0
        %v1367 = vadd.f32 0.0, %v1366
        %1368 = vmatmul.f32.gmra.mxu0 %v1218
        %v1369 = vpop.f32.mrf.mxu0
        %v1370 = vadd.f32 0.0, %v1369
        %1371 = vmatmul.f32.gmra.mxu0 %v1224
        %v1372 = vpop.f32.mrf.mxu0
        %v1373 = vadd.f32 0.0, %v1372
        %1374 = vmatmul.f32.gmra.mxu0 %v1230
        %v1375 = vpop.f32.mrf.mxu0
        %v1376 = vadd.f32 0.0, %v1375
        %1377 = vmatmul.f32.gmra.mxu0 %v1236
        %v1378 = vpop.f32.mrf.mxu0
        %v1379 = vadd.f32 0.0, %v1378
        %1380 = vmatmul.f32.gmra.mxu0 %v1242
        %v1381 = vpop.f32.mrf.mxu0
        %v1382 = vadd.f32 0.0, %v1381
        %1383 = vdwg.mxu0
        %1384 = vmatpush.msra.mxu0 %v1341
        %1385 = vmatpush.msra.mxu0 %v1339
        %1386 = vmatpush.msra.mxu0 %v1337
        %1387 = vmatpush.msra.mxu0 %v1335
        %1388 = vmatpush.msra.mxu0 %v1333
        %1389 = vmatpush.msra.mxu0 %v1331
        %1390 = vmatpush.msra.mxu0 %v1329
        %1391 = vmatpush.msra.mxu0 %v1327
        %1392 = vmatpush.msra.mxu0 %v1325
        %1393 = vmatpush.msra.mxu0 %v1323
        %1394 = vmatpush.msra.mxu0 %v1321
        %1395 = vmatpush.msra.mxu0 %v1319
        %1396 = vmatpush.msra.mxu0 %v1317
        %1397 = vmatpush.msra.mxu0 %v1315
        %1398 = vmatpush.msra.mxu0 %v1313
        %1399 = vmatpush.msra.mxu0 %v1311
        %1400 = vmatmul.f32.gmra.mxu0 %v1203
        %v1401 = vpop.f32.mrf.mxu0
        %v1402 = vadd.f32 %v1361, %v1401
        %1403 = vmatmul.f32.gmra.mxu0 %v1209
        %v1404 = vpop.f32.mrf.mxu0
        %v1405 = vadd.f32 %v1364, %v1404
        %1406 = vmatmul.f32.gmra.mxu0 %v1215
        %v1407 = vpop.f32.mrf.mxu0
        %v1408 = vadd.f32 %v1367, %v1407
        %1409 = vmatmul.f32.gmra.mxu0 %v1221
        %v1410 = vpop.f32.mrf.mxu0
        %v1411 = vadd.f32 %v1370, %v1410
        %1412 = vmatmul.f32.gmra.mxu0 %v1227
        %v1413 = vpop.f32.mrf.mxu0
        %v1414 = vadd.f32 %v1373, %v1413
        %1415 = vmatmul.f32.gmra.mxu0 %v1233
        %v1416 = vpop.f32.mrf.mxu0
        %v1417 = vadd.f32 %v1376, %v1416
        %1418 = vmatmul.f32.gmra.mxu0 %v1239
        %v1419 = vpop.f32.mrf.mxu0
        %v1420 = vadd.f32 %v1379, %v1419
        %1421 = vmatmul.f32.gmra.mxu0 %v1245
        %v1422 = vpop.f32.mrf.mxu0
        %v1423 = vadd.f32 %v1382, %v1422
        %1424 = vdwg.mxu0
        %1425 = vmatpush.msra.mxu0 %v1310
        %1426 = vmatpush.msra.mxu0 %v1308
        %1427 = vmatpush.msra.mxu0 %v1306
        %1428 = vmatpush.msra.mxu0 %v1304
        %1429 = vmatpush.msra.mxu0 %v1302
        %1430 = vmatpush.msra.mxu0 %v1300
        %1431 = vmatpush.msra.mxu0 %v1298
        %1432 = vmatpush.msra.mxu0 %v1296
        %1433 = vmatpush.msra.mxu0 %v1294
        %1434 = vmatpush.msra.mxu0 %v1292
        %1435 = vmatpush.msra.mxu0 %v1290
        %1436 = vmatpush.msra.mxu0 %v1288
        %1437 = vmatpush.msra.mxu0 %v1286
        %1438 = vmatpush.msra.mxu0 %v1284
        %1439 = vmatpush.msra.mxu0 %v1282
        %1440 = vmatpush.msra.mxu0 %v1280
        %1441 = vmatmul.f32.gmra.mxu0 %v1200
        %v1442 = vpop.f32.mrf.mxu0
        %v1443 = vadd.f32 0.0, %v1442
        %1444 = vmatmul.f32.gmra.mxu0 %v1206
        %v1445 = vpop.f32.mrf.mxu0
        %v1446 = vadd.f32 0.0, %v1445
        %1447 = vmatmul.f32.gmra.mxu0 %v1212
        %v1448 = vpop.f32.mrf.mxu0
        %v1449 = vadd.f32 0.0, %v1448
        %1450 = vmatmul.f32.gmra.mxu0 %v1218
        %v1451 = vpop.f32.mrf.mxu0
        %v1452 = vadd.f32 0.0, %v1451
        %1453 = vmatmul.f32.gmra.mxu0 %v1224
        %v1454 = vpop.f32.mrf.mxu0
        %v1455 = vadd.f32 0.0, %v1454
        %1456 = vmatmul.f32.gmra.mxu0 %v1230
        %v1457 = vpop.f32.mrf.mxu0
        %v1458 = vadd.f32 0.0, %v1457
        %1459 = vmatmul.f32.gmra.mxu0 %v1236
        %v1460 = vpop.f32.mrf.mxu0
        %v1461 = vadd.f32 0.0, %v1460
        %1462 = vmatmul.f32.gmra.mxu0 %v1242
        %v1463 = vpop.f32.mrf.mxu0
        %v1464 = vadd.f32 0.0, %v1463
        %1465 = vdwg.mxu0
        %1466 = vmatpush.msra.mxu0 %v1342
        %1467 = vmatpush.msra.mxu0 %v1340
        %1468 = vmatpush.msra.mxu0 %v1338
        %1469 = vmatpush.msra.mxu0 %v1336
        %1470 = vmatpush.msra.mxu0 %v1334
        %1471 = vmatpush.msra.mxu0 %v1332
        %1472 = vmatpush.msra.mxu0 %v1330
        %1473 = vmatpush.msra.mxu0 %v1328
        %1474 = vmatpush.msra.mxu0 %v1326
        %1475 = vmatpush.msra.mxu0 %v1324
        %1476 = vmatpush.msra.mxu0 %v1322
        %1477 = vmatpush.msra.mxu0 %v1320
        %1478 = vmatpush.msra.mxu0 %v1318
        %1479 = vmatpush.msra.mxu0 %v1316
        %1480 = vmatpush.msra.mxu0 %v1314
        %1481 = vmatpush.msra.mxu0 %v1312
        %1482 = vmatmul.f32.gmra.mxu0 %v1203
        %v1483 = vpop.f32.mrf.mxu0
        %v1484 = vadd.f32 %v1443, %v1483
        %1485 = vmatmul.f32.gmra.mxu0 %v1209
        %v1486 = vpop.f32.mrf.mxu0
        %v1487 = vadd.f32 %v1446, %v1486
        %1488 = vmatmul.f32.gmra.mxu0 %v1215
        %v1489 = vpop.f32.mrf.mxu0
        %v1490 = vadd.f32 %v1449, %v1489
        %1491 = vmatmul.f32.gmra.mxu0 %v1221
        %v1492 = vpop.f32.mrf.mxu0
        %v1493 = vadd.f32 %v1452, %v1492
        %1494 = vmatmul.f32.gmra.mxu0 %v1227
        %v1495 = vpop.f32.mrf.mxu0
        %v1496 = vadd.f32 %v1455, %v1495
        %1497 = vmatmul.f32.gmra.mxu0 %v1233
        %v1498 = vpop.f32.mrf.mxu0
        %v1499 = vadd.f32 %v1458, %v1498
        %1500 = vmatmul.f32.gmra.mxu0 %v1239
        %v1501 = vpop.f32.mrf.mxu0
        %v1502 = vadd.f32 %v1461, %v1501
        %1503 = vmatmul.f32.gmra.mxu0 %v1245
        %v1504 = vpop.f32.mrf.mxu0
        %v1505 = vadd.f32 %v1464, %v1504
        %1506 = vdwg.mxu0
        %v1507 = vadd.f32 %v1262, %v1402
        %v1508 = vadd.f32 %v1263, %v1484
        %v1509 = vadd.f32 %v1264, %v1405
        %v1510 = vadd.f32 %v1265, %v1487
        %v1511 = vadd.f32 %v1266, %v1408
        %v1512 = vadd.f32 %v1267, %v1490
        %v1513 = vadd.f32 %v1268, %v1411
        %v1514 = vadd.f32 %v1269, %v1493
        %v1515 = vadd.f32 %v1270, %v1414
        %v1516 = vadd.f32 %v1271, %v1496
        %v1517 = vadd.f32 %v1272, %v1417
        %v1518 = vadd.f32 %v1273, %v1499
        %v1519 = vadd.f32 %v1274, %v1420
        %v1520 = vadd.f32 %v1275, %v1502
        %v1521 = vadd.f32 %v1276, %v1423
        %v1522 = vadd.f32 %v1277, %v1505
        %1523 = vst [vmem:[#allocation3] sm:$0xff] %v1507
        %1524 = vst [vmem:[#allocation3 + $0x8] sm:$0xff] %v1508
        %1525 = vst [vmem:[#allocation3 + $0x10] sm:$0xff] %v1509
        %1526 = vst [vmem:[#allocation3 + $0x18] sm:$0xff] %v1510
        %1527 = vst [vmem:[#allocation3 + $0x20] sm:$0xff] %v1511
        %1528 = vst [vmem:[#allocation3 + $0x28] sm:$0xff] %v1512
        %1529 = vst [vmem:[#allocation3 + $0x30] sm:$0xff] %v1513
        %1530 = vst [vmem:[#allocation3 + $0x38] sm:$0xff] %v1514
        %1531 = vst [vmem:[#allocation3 + $0x40] sm:$0xff] %v1515
        %1532 = vst [vmem:[#allocation3 + $0x48] sm:$0xff] %v1516
        %1533 = vst [vmem:[#allocation3 + $0x50] sm:$0xff] %v1517
        %1534 = vst [vmem:[#allocation3 + $0x58] sm:$0xff] %v1518
        %1535 = vst [vmem:[#allocation3 + $0x60] sm:$0xff] %v1519
        %1536 = vst [vmem:[#allocation3 + $0x68] sm:$0xff] %v1520
        %1537 = vst [vmem:[#allocation3 + $0x70] sm:$0xff] %v1521
        %1538 = vst [vmem:[#allocation3 + $0x78] sm:$0xff] %v1522
        %v1539 = vld [vmem:[#allocation2] sm:$0xfc]
        %v1540 = vld [vmem:[#allocation2 + $0x8] sm:$0xfc]
        %v1541 = vld [vmem:[#allocation2 + $0x10] sm:$0x3]
        %v1542 = vld [vmem:[#allocation2 + $0x18] sm:$0x3]
        %v1543 = vld [vmem:[#allocation2 + $0x20] sm:$0xfc]
        %v1544 = vld [vmem:[#allocation2 + $0x28] sm:$0xfc]
        %v1545 = vld [vmem:[#allocation2 + $0x30] sm:$0x3]
        %v1546 = vld [vmem:[#allocation2 + $0x38] sm:$0x3]
        %v1547 = vld [vmem:[#allocation2 + $0x40] sm:$0xfc]
        %v1548 = vld [vmem:[#allocation2 + $0x48] sm:$0xfc]
        %v1549 = vld [vmem:[#allocation2 + $0x50] sm:$0x3]
        %v1550 = vld [vmem:[#allocation2 + $0x58] sm:$0x3]
        %v1551 = vld [vmem:[#allocation2 + $0x60] sm:$0xfc]
        %v1552 = vld [vmem:[#allocation2 + $0x68] sm:$0xfc]
        %v1553 = vld [vmem:[#allocation2 + $0x70] sm:$0x3]
        %v1554 = vld [vmem:[#allocation2 + $0x78] sm:$0x3]
        %v1555 = vld [vmem:[#allocation2 + $0x80] sm:$0xfc]
        %v1556 = vld [vmem:[#allocation2 + $0x88] sm:$0xfc]
        %v1557 = vld [vmem:[#allocation2 + $0x90] sm:$0x3]
        %v1558 = vld [vmem:[#allocation2 + $0x98] sm:$0x3]
        %v1559 = vld [vmem:[#allocation2 + $0xa0] sm:$0xfc]
        %v1560 = vld [vmem:[#allocation2 + $0xa8] sm:$0xfc]
        %v1561 = vld [vmem:[#allocation2 + $0xb0] sm:$0x3]
        %v1562 = vld [vmem:[#allocation2 + $0xb8] sm:$0x3]
        %v1563 = vld [vmem:[#allocation2 + $0xc0] sm:$0xfc]
        %v1564 = vld [vmem:[#allocation2 + $0xc8] sm:$0xfc]
        %v1565 = vld [vmem:[#allocation2 + $0xd0] sm:$0x3]
        %v1566 = vld [vmem:[#allocation2 + $0xd8] sm:$0x3]
        %v1567 = vld [vmem:[#allocation2 + $0xe0] sm:$0xfc]
        %v1568 = vld [vmem:[#allocation2 + $0xe8] sm:$0xfc]
        %v1569 = vld [vmem:[#allocation2 + $0xf0] sm:$0x3]
        %v1570 = vld [vmem:[#allocation2 + $0xf8] sm:$0x3]
        %vm1603 = vcmask 1045504
        %v1604 = vrot.slane %v1539, 2
        %v1605 = vrot.slane %v1541, 2
        %v1606 = vsel %vm1603, %v1604, %v1605
        %v1607 = vrot.slane %v1540, 2
        %v1608 = vrot.slane %v1542, 2
        %v1609 = vsel %vm1603, %v1607, %v1608
        %v1610 = vrot.slane %v1543, 2
        %v1611 = vrot.slane %v1545, 2
        %v1612 = vsel %vm1603, %v1610, %v1611
        %v1613 = vrot.slane %v1544, 2
        %v1614 = vrot.slane %v1546, 2
        %v1615 = vsel %vm1603, %v1613, %v1614
        %v1616 = vrot.slane %v1547, 2
        %v1617 = vrot.slane %v1549, 2
        %v1618 = vsel %vm1603, %v1616, %v1617
        %v1619 = vrot.slane %v1548, 2
        %v1620 = vrot.slane %v1550, 2
        %v1621 = vsel %vm1603, %v1619, %v1620
        %v1622 = vrot.slane %v1551, 2
        %v1623 = vrot.slane %v1553, 2
        %v1624 = vsel %vm1603, %v1622, %v1623
        %v1625 = vrot.slane %v1552, 2
        %v1626 = vrot.slane %v1554, 2
        %v1627 = vsel %vm1603, %v1625, %v1626
        %v1628 = vrot.slane %v1555, 2
        %v1629 = vrot.slane %v1557, 2
        %v1630 = vsel %vm1603, %v1628, %v1629
        %v1631 = vrot.slane %v1556, 2
        %v1632 = vrot.slane %v1558, 2
        %v1633 = vsel %vm1603, %v1631, %v1632
        %v1634 = vrot.slane %v1559, 2
        %v1635 = vrot.slane %v1561, 2
        %v1636 = vsel %vm1603, %v1634, %v1635
        %v1637 = vrot.slane %v1560, 2
        %v1638 = vrot.slane %v1562, 2
        %v1639 = vsel %vm1603, %v1637, %v1638
        %v1640 = vrot.slane %v1563, 2
        %v1641 = vrot.slane %v1565, 2
        %v1642 = vsel %vm1603, %v1640, %v1641
        %v1643 = vrot.slane %v1564, 2
        %v1644 = vrot.slane %v1566, 2
        %v1645 = vsel %vm1603, %v1643, %v1644
        %v1646 = vrot.slane %v1567, 2
        %v1647 = vrot.slane %v1569, 2
        %v1648 = vsel %vm1603, %v1646, %v1647
        %v1649 = vrot.slane %v1568, 2
        %v1650 = vrot.slane %v1570, 2
        %v1651 = vsel %vm1603, %v1649, %v1650
        %v1668 = vld [vmem:[#allocation3] sm:$0xff]
        %v1669 = vld [vmem:[#allocation3 + $0x8] sm:$0xff]
        %v1670 = vld [vmem:[#allocation3 + $0x10] sm:$0xff]
        %v1671 = vld [vmem:[#allocation3 + $0x18] sm:$0xff]
        %v1672 = vld [vmem:[#allocation3 + $0x20] sm:$0xff]
        %v1673 = vld [vmem:[#allocation3 + $0x28] sm:$0xff]
        %v1674 = vld [vmem:[#allocation3 + $0x30] sm:$0xff]
        %v1675 = vld [vmem:[#allocation3 + $0x38] sm:$0xff]
        %v1676 = vld [vmem:[#allocation3 + $0x40] sm:$0xff]
        %v1677 = vld [vmem:[#allocation3 + $0x48] sm:$0xff]
        %v1678 = vld [vmem:[#allocation3 + $0x50] sm:$0xff]
        %v1679 = vld [vmem:[#allocation3 + $0x58] sm:$0xff]
        %v1680 = vld [vmem:[#allocation3 + $0x60] sm:$0xff]
        %v1681 = vld [vmem:[#allocation3 + $0x68] sm:$0xff]
        %v1682 = vld [vmem:[#allocation3 + $0x70] sm:$0xff]
        %v1683 = vld [vmem:[#allocation3 + $0x78] sm:$0xff]
        %s1684 = scalar_lea.vmem [#allocation9], 1024
        %v1685 = vld [vmem:[%s1684] sm:$0xff]
        %v1686 = vld [vmem:[%s1684 + $0x8] sm:$0xff]
        %v1687 = vld [vmem:[%s1684 + $0x10] sm:$0xff]
        %v1688 = vld [vmem:[%s1684 + $0x18] sm:$0xff]
        %v1689 = vld [vmem:[%s1684 + $0x20] sm:$0xff]
        %v1690 = vld [vmem:[%s1684 + $0x28] sm:$0xff]
        %v1691 = vld [vmem:[%s1684 + $0x30] sm:$0xff]
        %v1692 = vld [vmem:[%s1684 + $0x38] sm:$0xff]
        %v1693 = vld [vmem:[%s1684 + $0x40] sm:$0xff]
        %v1694 = vld [vmem:[%s1684 + $0x48] sm:$0xff]
        %v1695 = vld [vmem:[%s1684 + $0x50] sm:$0xff]
        %v1696 = vld [vmem:[%s1684 + $0x58] sm:$0xff]
        %v1697 = vld [vmem:[%s1684 + $0x60] sm:$0xff]
        %v1698 = vld [vmem:[%s1684 + $0x68] sm:$0xff]
        %v1699 = vld [vmem:[%s1684 + $0x70] sm:$0xff]
        %v1700 = vld [vmem:[%s1684 + $0x78] sm:$0xff]
        %v1701 = vld [vmem:[%s1684 + $0x80] sm:$0xff]
        %v1702 = vld [vmem:[%s1684 + $0x88] sm:$0xff]
        %v1703 = vld [vmem:[%s1684 + $0x90] sm:$0xff]
        %v1704 = vld [vmem:[%s1684 + $0x98] sm:$0xff]
        %v1705 = vld [vmem:[%s1684 + $0xa0] sm:$0xff]
        %v1706 = vld [vmem:[%s1684 + $0xa8] sm:$0xff]
        %v1707 = vld [vmem:[%s1684 + $0xb0] sm:$0xff]
        %v1708 = vld [vmem:[%s1684 + $0xb8] sm:$0xff]
        %v1709 = vld [vmem:[%s1684 + $0xc0] sm:$0xff]
        %v1710 = vld [vmem:[%s1684 + $0xc8] sm:$0xff]
        %v1711 = vld [vmem:[%s1684 + $0xd0] sm:$0xff]
        %v1712 = vld [vmem:[%s1684 + $0xd8] sm:$0xff]
        %v1713 = vld [vmem:[%s1684 + $0xe0] sm:$0xff]
        %v1714 = vld [vmem:[%s1684 + $0xe8] sm:$0xff]
        %v1715 = vld [vmem:[%s1684 + $0xf0] sm:$0xff]
        %v1716 = vld [vmem:[%s1684 + $0xf8] sm:$0xff]
        %v1717 = vld [vmem:[%s1684 + $0x100] sm:$0xff]
        %v1718 = vld [vmem:[%s1684 + $0x108] sm:$0xff]
        %v1719 = vld [vmem:[%s1684 + $0x110] sm:$0xff]
        %v1720 = vld [vmem:[%s1684 + $0x118] sm:$0xff]
        %v1721 = vld [vmem:[%s1684 + $0x120] sm:$0xff]
        %v1722 = vld [vmem:[%s1684 + $0x128] sm:$0xff]
        %v1723 = vld [vmem:[%s1684 + $0x130] sm:$0xff]
        %v1724 = vld [vmem:[%s1684 + $0x138] sm:$0xff]
        %v1725 = vld [vmem:[%s1684 + $0x140] sm:$0xff]
        %v1726 = vld [vmem:[%s1684 + $0x148] sm:$0xff]
        %v1727 = vld [vmem:[%s1684 + $0x150] sm:$0xff]
        %v1728 = vld [vmem:[%s1684 + $0x158] sm:$0xff]
        %v1729 = vld [vmem:[%s1684 + $0x160] sm:$0xff]
        %v1730 = vld [vmem:[%s1684 + $0x168] sm:$0xff]
        %v1731 = vld [vmem:[%s1684 + $0x170] sm:$0xff]
        %v1732 = vld [vmem:[%s1684 + $0x178] sm:$0xff]
        %v1733 = vld [vmem:[%s1684 + $0x180] sm:$0xff]
        %v1734 = vld [vmem:[%s1684 + $0x188] sm:$0xff]
        %v1735 = vld [vmem:[%s1684 + $0x190] sm:$0xff]
        %v1736 = vld [vmem:[%s1684 + $0x198] sm:$0xff]
        %v1737 = vld [vmem:[%s1684 + $0x1a0] sm:$0xff]
        %v1738 = vld [vmem:[%s1684 + $0x1a8] sm:$0xff]
        %v1739 = vld [vmem:[%s1684 + $0x1b0] sm:$0xff]
        %v1740 = vld [vmem:[%s1684 + $0x1b8] sm:$0xff]
        %v1741 = vld [vmem:[%s1684 + $0x1c0] sm:$0xff]
        %v1742 = vld [vmem:[%s1684 + $0x1c8] sm:$0xff]
        %v1743 = vld [vmem:[%s1684 + $0x1d0] sm:$0xff]
        %v1744 = vld [vmem:[%s1684 + $0x1d8] sm:$0xff]
        %v1745 = vld [vmem:[%s1684 + $0x1e0] sm:$0xff]
        %v1746 = vld [vmem:[%s1684 + $0x1e8] sm:$0xff]
        %v1747 = vld [vmem:[%s1684 + $0x1f0] sm:$0xff]
        %v1748 = vld [vmem:[%s1684 + $0x1f8] sm:$0xff]
        %1749 = vmatpush.msra.mxu0 %v1715
        %1750 = vmatpush.msra.mxu0 %v1713
        %1751 = vmatpush.msra.mxu0 %v1711
        %1752 = vmatpush.msra.mxu0 %v1709
        %1753 = vmatpush.msra.mxu0 %v1707
        %1754 = vmatpush.msra.mxu0 %v1705
        %1755 = vmatpush.msra.mxu0 %v1703
        %1756 = vmatpush.msra.mxu0 %v1701
        %1757 = vmatpush.msra.mxu0 %v1699
        %1758 = vmatpush.msra.mxu0 %v1697
        %1759 = vmatpush.msra.mxu0 %v1695
        %1760 = vmatpush.msra.mxu0 %v1693
        %1761 = vmatpush.msra.mxu0 %v1691
        %1762 = vmatpush.msra.mxu0 %v1689
        %1763 = vmatpush.msra.mxu0 %v1687
        %1764 = vmatpush.msra.mxu0 %v1685
        %1765 = vmatmul.f32.gmra.mxu0 %v1606
        %v1766 = vpop.f32.mrf.mxu0
        %v1767 = vadd.f32 0.0, %v1766
        %1768 = vmatmul.f32.gmra.mxu0 %v1612
        %v1769 = vpop.f32.mrf.mxu0
        %v1770 = vadd.f32 0.0, %v1769
        %1771 = vmatmul.f32.gmra.mxu0 %v1618
        %v1772 = vpop.f32.mrf.mxu0
        %v1773 = vadd.f32 0.0, %v1772
        %1774 = vmatmul.f32.gmra.mxu0 %v1624
        %v1775 = vpop.f32.mrf.mxu0
        %v1776 = vadd.f32 0.0, %v1775
        %1777 = vmatmul.f32.gmra.mxu0 %v1630
        %v1778 = vpop.f32.mrf.mxu0
        %v1779 = vadd.f32 0.0, %v1778
        %1780 = vmatmul.f32.gmra.mxu0 %v1636
        %v1781 = vpop.f32.mrf.mxu0
        %v1782 = vadd.f32 0.0, %v1781
        %1783 = vmatmul.f32.gmra.mxu0 %v1642
        %v1784 = vpop.f32.mrf.mxu0
        %v1785 = vadd.f32 0.0, %v1784
        %1786 = vmatmul.f32.gmra.mxu0 %v1648
        %v1787 = vpop.f32.mrf.mxu0
        %v1788 = vadd.f32 0.0, %v1787
        %1789 = vdwg.mxu0
        %1790 = vmatpush.msra.mxu0 %v1747
        %1791 = vmatpush.msra.mxu0 %v1745
        %1792 = vmatpush.msra.mxu0 %v1743
        %1793 = vmatpush.msra.mxu0 %v1741
        %1794 = vmatpush.msra.mxu0 %v1739
        %1795 = vmatpush.msra.mxu0 %v1737
        %1796 = vmatpush.msra.mxu0 %v1735
        %1797 = vmatpush.msra.mxu0 %v1733
        %1798 = vmatpush.msra.mxu0 %v1731
        %1799 = vmatpush.msra.mxu0 %v1729
        %1800 = vmatpush.msra.mxu0 %v1727
        %1801 = vmatpush.msra.mxu0 %v1725
        %1802 = vmatpush.msra.mxu0 %v1723
        %1803 = vmatpush.msra.mxu0 %v1721
        %1804 = vmatpush.msra.mxu0 %v1719
        %1805 = vmatpush.msra.mxu0 %v1717
        %1806 = vmatmul.f32.gmra.mxu0 %v1609
        %v1807 = vpop.f32.mrf.mxu0
        %v1808 = vadd.f32 %v1767, %v1807
        %1809 = vmatmul.f32.gmra.mxu0 %v1615
        %v1810 = vpop.f32.mrf.mxu0
        %v1811 = vadd.f32 %v1770, %v1810
        %1812 = vmatmul.f32.gmra.mxu0 %v1621
        %v1813 = vpop.f32.mrf.mxu0
        %v1814 = vadd.f32 %v1773, %v1813
        %1815 = vmatmul.f32.gmra.mxu0 %v1627
        %v1816 = vpop.f32.mrf.mxu0
        %v1817 = vadd.f32 %v1776, %v1816
        %1818 = vmatmul.f32.gmra.mxu0 %v1633
        %v1819 = vpop.f32.mrf.mxu0
        %v1820 = vadd.f32 %v1779, %v1819
        %1821 = vmatmul.f32.gmra.mxu0 %v1639
        %v1822 = vpop.f32.mrf.mxu0
        %v1823 = vadd.f32 %v1782, %v1822
        %1824 = vmatmul.f32.gmra.mxu0 %v1645
        %v1825 = vpop.f32.mrf.mxu0
        %v1826 = vadd.f32 %v1785, %v1825
        %1827 = vmatmul.f32.gmra.mxu0 %v1651
        %v1828 = vpop.f32.mrf.mxu0
        %v1829 = vadd.f32 %v1788, %v1828
        %1830 = vdwg.mxu0
        %1831 = vmatpush.msra.mxu0 %v1716
        %1832 = vmatpush.msra.mxu0 %v1714
        %1833 = vmatpush.msra.mxu0 %v1712
        %1834 = vmatpush.msra.mxu0 %v1710
        %1835 = vmatpush.msra.mxu0 %v1708
        %1836 = vmatpush.msra.mxu0 %v1706
        %1837 = vmatpush.msra.mxu0 %v1704
        %1838 = vmatpush.msra.mxu0 %v1702
        %1839 = vmatpush.msra.mxu0 %v1700
        %1840 = vmatpush.msra.mxu0 %v1698
        %1841 = vmatpush.msra.mxu0 %v1696
        %1842 = vmatpush.msra.mxu0 %v1694
        %1843 = vmatpush.msra.mxu0 %v1692
        %1844 = vmatpush.msra.mxu0 %v1690
        %1845 = vmatpush.msra.mxu0 %v1688
        %1846 = vmatpush.msra.mxu0 %v1686
        %1847 = vmatmul.f32.gmra.mxu0 %v1606
        %v1848 = vpop.f32.mrf.mxu0
        %v1849 = vadd.f32 0.0, %v1848
        %1850 = vmatmul.f32.gmra.mxu0 %v1612
        %v1851 = vpop.f32.mrf.mxu0
        %v1852 = vadd.f32 0.0, %v1851
        %1853 = vmatmul.f32.gmra.mxu0 %v1618
        %v1854 = vpop.f32.mrf.mxu0
        %v1855 = vadd.f32 0.0, %v1854
        %1856 = vmatmul.f32.gmra.mxu0 %v1624
        %v1857 = vpop.f32.mrf.mxu0
        %v1858 = vadd.f32 0.0, %v1857
        %1859 = vmatmul.f32.gmra.mxu0 %v1630
        %v1860 = vpop.f32.mrf.mxu0
        %v1861 = vadd.f32 0.0, %v1860
        %1862 = vmatmul.f32.gmra.mxu0 %v1636
        %v1863 = vpop.f32.mrf.mxu0
        %v1864 = vadd.f32 0.0, %v1863
        %1865 = vmatmul.f32.gmra.mxu0 %v1642
        %v1866 = vpop.f32.mrf.mxu0
        %v1867 = vadd.f32 0.0, %v1866
        %1868 = vmatmul.f32.gmra.mxu0 %v1648
        %v1869 = vpop.f32.mrf.mxu0
        %v1870 = vadd.f32 0.0, %v1869
        %1871 = vdwg.mxu0
        %1872 = vmatpush.msra.mxu0 %v1748
        %1873 = vmatpush.msra.mxu0 %v1746
        %1874 = vmatpush.msra.mxu0 %v1744
        %1875 = vmatpush.msra.mxu0 %v1742
        %1876 = vmatpush.msra.mxu0 %v1740
        %1877 = vmatpush.msra.mxu0 %v1738
        %1878 = vmatpush.msra.mxu0 %v1736
        %1879 = vmatpush.msra.mxu0 %v1734
        %1880 = vmatpush.msra.mxu0 %v1732
        %1881 = vmatpush.msra.mxu0 %v1730
        %1882 = vmatpush.msra.mxu0 %v1728
        %1883 = vmatpush.msra.mxu0 %v1726
        %1884 = vmatpush.msra.mxu0 %v1724
        %1885 = vmatpush.msra.mxu0 %v1722
        %1886 = vmatpush.msra.mxu0 %v1720
        %1887 = vmatpush.msra.mxu0 %v1718
        %1888 = vmatmul.f32.gmra.mxu0 %v1609
        %v1889 = vpop.f32.mrf.mxu0
        %v1890 = vadd.f32 %v1849, %v1889
        %1891 = vmatmul.f32.gmra.mxu0 %v1615
        %v1892 = vpop.f32.mrf.mxu0
        %v1893 = vadd.f32 %v1852, %v1892
        %1894 = vmatmul.f32.gmra.mxu0 %v1621
        %v1895 = vpop.f32.mrf.mxu0
        %v1896 = vadd.f32 %v1855, %v1895
        %1897 = vmatmul.f32.gmra.mxu0 %v1627
        %v1898 = vpop.f32.mrf.mxu0
        %v1899 = vadd.f32 %v1858, %v1898
        %1900 = vmatmul.f32.gmra.mxu0 %v1633
        %v1901 = vpop.f32.mrf.mxu0
        %v1902 = vadd.f32 %v1861, %v1901
        %1903 = vmatmul.f32.gmra.mxu0 %v1639
        %v1904 = vpop.f32.mrf.mxu0
        %v1905 = vadd.f32 %v1864, %v1904
        %1906 = vmatmul.f32.gmra.mxu0 %v1645
        %v1907 = vpop.f32.mrf.mxu0
        %v1908 = vadd.f32 %v1867, %v1907
        %1909 = vmatmul.f32.gmra.mxu0 %v1651
        %v1910 = vpop.f32.mrf.mxu0
        %v1911 = vadd.f32 %v1870, %v1910
        %1912 = vdwg.mxu0
        %v1913 = vadd.f32 %v1668, %v1808
        %v1914 = vadd.f32 %v1669, %v1890
        %v1915 = vadd.f32 %v1670, %v1811
        %v1916 = vadd.f32 %v1671, %v1893
        %v1917 = vadd.f32 %v1672, %v1814
        %v1918 = vadd.f32 %v1673, %v1896
        %v1919 = vadd.f32 %v1674, %v1817
        %v1920 = vadd.f32 %v1675, %v1899
        %v1921 = vadd.f32 %v1676, %v1820
        %v1922 = vadd.f32 %v1677, %v1902
        %v1923 = vadd.f32 %v1678, %v1823
        %v1924 = vadd.f32 %v1679, %v1905
        %v1925 = vadd.f32 %v1680, %v1826
        %v1926 = vadd.f32 %v1681, %v1908
        %v1927 = vadd.f32 %v1682, %v1829
        %v1928 = vadd.f32 %v1683, %v1911
        %1929 = vst [vmem:[#allocation3] sm:$0xff] %v1913
        %1930 = vst [vmem:[#allocation3 + $0x8] sm:$0xff] %v1914
        %1931 = vst [vmem:[#allocation3 + $0x10] sm:$0xff] %v1915
        %1932 = vst [vmem:[#allocation3 + $0x18] sm:$0xff] %v1916
        %1933 = vst [vmem:[#allocation3 + $0x20] sm:$0xff] %v1917
        %1934 = vst [vmem:[#allocation3 + $0x28] sm:$0xff] %v1918
        %1935 = vst [vmem:[#allocation3 + $0x30] sm:$0xff] %v1919
        %1936 = vst [vmem:[#allocation3 + $0x38] sm:$0xff] %v1920
        %1937 = vst [vmem:[#allocation3 + $0x40] sm:$0xff] %v1921
        %1938 = vst [vmem:[#allocation3 + $0x48] sm:$0xff] %v1922
        %1939 = vst [vmem:[#allocation3 + $0x50] sm:$0xff] %v1923
        %1940 = vst [vmem:[#allocation3 + $0x58] sm:$0xff] %v1924
        %1941 = vst [vmem:[#allocation3 + $0x60] sm:$0xff] %v1925
        %1942 = vst [vmem:[#allocation3 + $0x68] sm:$0xff] %v1926
        %1943 = vst [vmem:[#allocation3 + $0x70] sm:$0xff] %v1927
        %1944 = vst [vmem:[#allocation3 + $0x78] sm:$0xff] %v1928
        %v1945 = vld [vmem:[%s792] sm:$0xff]
        %v1946 = vld [vmem:[%s792 + $0x8] sm:$0xff]
        %v1947 = vld [vmem:[%s792 + $0x20] sm:$0xff]
        %v1948 = vld [vmem:[%s792 + $0x28] sm:$0xff]
        %v1949 = vld [vmem:[%s792 + $0x40] sm:$0xff]
        %v1950 = vld [vmem:[%s792 + $0x48] sm:$0xff]
        %v1951 = vld [vmem:[%s792 + $0x60] sm:$0xff]
        %v1952 = vld [vmem:[%s792 + $0x68] sm:$0xff]
        %v1953 = vld [vmem:[%s792 + $0x80] sm:$0xff]
        %v1954 = vld [vmem:[%s792 + $0x88] sm:$0xff]
        %v1955 = vld [vmem:[%s792 + $0xa0] sm:$0xff]
        %v1956 = vld [vmem:[%s792 + $0xa8] sm:$0xff]
        %v1957 = vld [vmem:[%s792 + $0xc0] sm:$0xff]
        %v1958 = vld [vmem:[%s792 + $0xc8] sm:$0xff]
        %v1959 = vld [vmem:[%s792 + $0xe0] sm:$0xff]
        %v1960 = vld [vmem:[%s792 + $0xe8] sm:$0xff]
        %v1961 = vld [vmem:[#allocation3] sm:$0xff]
        %v1962 = vld [vmem:[#allocation3 + $0x8] sm:$0xff]
        %v1963 = vld [vmem:[#allocation3 + $0x10] sm:$0xff]
        %v1964 = vld [vmem:[#allocation3 + $0x18] sm:$0xff]
        %v1965 = vld [vmem:[#allocation3 + $0x20] sm:$0xff]
        %v1966 = vld [vmem:[#allocation3 + $0x28] sm:$0xff]
        %v1967 = vld [vmem:[#allocation3 + $0x30] sm:$0xff]
        %v1968 = vld [vmem:[#allocation3 + $0x38] sm:$0xff]
        %v1969 = vld [vmem:[#allocation3 + $0x40] sm:$0xff]
        %v1970 = vld [vmem:[#allocation3 + $0x48] sm:$0xff]
        %v1971 = vld [vmem:[#allocation3 + $0x50] sm:$0xff]
        %v1972 = vld [vmem:[#allocation3 + $0x58] sm:$0xff]
        %v1973 = vld [vmem:[#allocation3 + $0x60] sm:$0xff]
        %v1974 = vld [vmem:[#allocation3 + $0x68] sm:$0xff]
        %v1975 = vld [vmem:[#allocation3 + $0x70] sm:$0xff]
        %v1976 = vld [vmem:[#allocation3 + $0x78] sm:$0xff]
        %s1977 = scalar_lea.vmem [#allocation9], 1536
        %v1978 = vld [vmem:[%s1977] sm:$0xff]
        %v1979 = vld [vmem:[%s1977 + $0x8] sm:$0xff]
        %v1980 = vld [vmem:[%s1977 + $0x10] sm:$0xff]
        %v1981 = vld [vmem:[%s1977 + $0x18] sm:$0xff]
        %v1982 = vld [vmem:[%s1977 + $0x20] sm:$0xff]
        %v1983 = vld [vmem:[%s1977 + $0x28] sm:$0xff]
        %v1984 = vld [vmem:[%s1977 + $0x30] sm:$0xff]
        %v1985 = vld [vmem:[%s1977 + $0x38] sm:$0xff]
        %v1986 = vld [vmem:[%s1977 + $0x40] sm:$0xff]
        %v1987 = vld [vmem:[%s1977 + $0x48] sm:$0xff]
        %v1988 = vld [vmem:[%s1977 + $0x50] sm:$0xff]
        %v1989 = vld [vmem:[%s1977 + $0x58] sm:$0xff]
        %v1990 = vld [vmem:[%s1977 + $0x60] sm:$0xff]
        %v1991 = vld [vmem:[%s1977 + $0x68] sm:$0xff]
        %v1992 = vld [vmem:[%s1977 + $0x70] sm:$0xff]
        %v1993 = vld [vmem:[%s1977 + $0x78] sm:$0xff]
        %v1994 = vld [vmem:[%s1977 + $0x80] sm:$0xff]
        %v1995 = vld [vmem:[%s1977 + $0x88] sm:$0xff]
        %v1996 = vld [vmem:[%s1977 + $0x90] sm:$0xff]
        %v1997 = vld [vmem:[%s1977 + $0x98] sm:$0xff]
        %v1998 = vld [vmem:[%s1977 + $0xa0] sm:$0xff]
        %v1999 = vld [vmem:[%s1977 + $0xa8] sm:$0xff]
        %v2000 = vld [vmem:[%s1977 + $0xb0] sm:$0xff]
        %v2001 = vld [vmem:[%s1977 + $0xb8] sm:$0xff]
        %v2002 = vld [vmem:[%s1977 + $0xc0] sm:$0xff]
        %v2003 = vld [vmem:[%s1977 + $0xc8] sm:$0xff]
        %v2004 = vld [vmem:[%s1977 + $0xd0] sm:$0xff]
        %v2005 = vld [vmem:[%s1977 + $0xd8] sm:$0xff]
        %v2006 = vld [vmem:[%s1977 + $0xe0] sm:$0xff]
        %v2007 = vld [vmem:[%s1977 + $0xe8] sm:$0xff]
        %v2008 = vld [vmem:[%s1977 + $0xf0] sm:$0xff]
        %v2009 = vld [vmem:[%s1977 + $0xf8] sm:$0xff]
        %v2010 = vld [vmem:[%s1977 + $0x100] sm:$0xff]
        %v2011 = vld [vmem:[%s1977 + $0x108] sm:$0xff]
        %v2012 = vld [vmem:[%s1977 + $0x110] sm:$0xff]
        %v2013 = vld [vmem:[%s1977 + $0x118] sm:$0xff]
        %v2014 = vld [vmem:[%s1977 + $0x120] sm:$0xff]
        %v2015 = vld [vmem:[%s1977 + $0x128] sm:$0xff]
        %v2016 = vld [vmem:[%s1977 + $0x130] sm:$0xff]
        %v2017 = vld [vmem:[%s1977 + $0x138] sm:$0xff]
        %v2018 = vld [vmem:[%s1977 + $0x140] sm:$0xff]
        %v2019 = vld [vmem:[%s1977 + $0x148] sm:$0xff]
        %v2020 = vld [vmem:[%s1977 + $0x150] sm:$0xff]
        %v2021 = vld [vmem:[%s1977 + $0x158] sm:$0xff]
        %v2022 = vld [vmem:[%s1977 + $0x160] sm:$0xff]
        %v2023 = vld [vmem:[%s1977 + $0x168] sm:$0xff]
        %v2024 = vld [vmem:[%s1977 + $0x170] sm:$0xff]
        %v2025 = vld [vmem:[%s1977 + $0x178] sm:$0xff]
        %v2026 = vld [vmem:[%s1977 + $0x180] sm:$0xff]
        %v2027 = vld [vmem:[%s1977 + $0x188] sm:$0xff]
        %v2028 = vld [vmem:[%s1977 + $0x190] sm:$0xff]
        %v2029 = vld [vmem:[%s1977 + $0x198] sm:$0xff]
        %v2030 = vld [vmem:[%s1977 + $0x1a0] sm:$0xff]
        %v2031 = vld [vmem:[%s1977 + $0x1a8] sm:$0xff]
        %v2032 = vld [vmem:[%s1977 + $0x1b0] sm:$0xff]
        %v2033 = vld [vmem:[%s1977 + $0x1b8] sm:$0xff]
        %v2034 = vld [vmem:[%s1977 + $0x1c0] sm:$0xff]
        %v2035 = vld [vmem:[%s1977 + $0x1c8] sm:$0xff]
        %v2036 = vld [vmem:[%s1977 + $0x1d0] sm:$0xff]
        %v2037 = vld [vmem:[%s1977 + $0x1d8] sm:$0xff]
        %v2038 = vld [vmem:[%s1977 + $0x1e0] sm:$0xff]
        %v2039 = vld [vmem:[%s1977 + $0x1e8] sm:$0xff]
        %v2040 = vld [vmem:[%s1977 + $0x1f0] sm:$0xff]
        %v2041 = vld [vmem:[%s1977 + $0x1f8] sm:$0xff]
        %2042 = vmatpush.msra.mxu0 %v2008
        %2043 = vmatpush.msra.mxu0 %v2006
        %2044 = vmatpush.msra.mxu0 %v2004
        %2045 = vmatpush.msra.mxu0 %v2002
        %2046 = vmatpush.msra.mxu0 %v2000
        %2047 = vmatpush.msra.mxu0 %v1998
        %2048 = vmatpush.msra.mxu0 %v1996
        %2049 = vmatpush.msra.mxu0 %v1994
        %2050 = vmatpush.msra.mxu0 %v1992
        %2051 = vmatpush.msra.mxu0 %v1990
        %2052 = vmatpush.msra.mxu0 %v1988
        %2053 = vmatpush.msra.mxu0 %v1986
        %2054 = vmatpush.msra.mxu0 %v1984
        %2055 = vmatpush.msra.mxu0 %v1982
        %2056 = vmatpush.msra.mxu0 %v1980
        %2057 = vmatpush.msra.mxu0 %v1978
        %2058 = vmatmul.f32.gmra.mxu0 %v1945
        %v2059 = vpop.f32.mrf.mxu0
        %v2060 = vadd.f32 0.0, %v2059
        %2061 = vmatmul.f32.gmra.mxu0 %v1947
        %v2062 = vpop.f32.mrf.mxu0
        %v2063 = vadd.f32 0.0, %v2062
        %2064 = vmatmul.f32.gmra.mxu0 %v1949
        %v2065 = vpop.f32.mrf.mxu0
        %v2066 = vadd.f32 0.0, %v2065
        %2067 = vmatmul.f32.gmra.mxu0 %v1951
        %v2068 = vpop.f32.mrf.mxu0
        %v2069 = vadd.f32 0.0, %v2068
        %2070 = vmatmul.f32.gmra.mxu0 %v1953
        %v2071 = vpop.f32.mrf.mxu0
        %v2072 = vadd.f32 0.0, %v2071
        %2073 = vmatmul.f32.gmra.mxu0 %v1955
        %v2074 = vpop.f32.mrf.mxu0
        %v2075 = vadd.f32 0.0, %v2074
        %2076 = vmatmul.f32.gmra.mxu0 %v1957
        %v2077 = vpop.f32.mrf.mxu0
        %v2078 = vadd.f32 0.0, %v2077
        %2079 = vmatmul.f32.gmra.mxu0 %v1959
        %v2080 = vpop.f32.mrf.mxu0
        %v2081 = vadd.f32 0.0, %v2080
        %2082 = vdwg.mxu0
        %2083 = vmatpush.msra.mxu0 %v2040
        %2084 = vmatpush.msra.mxu0 %v2038
        %2085 = vmatpush.msra.mxu0 %v2036
        %2086 = vmatpush.msra.mxu0 %v2034
        %2087 = vmatpush.msra.mxu0 %v2032
        %2088 = vmatpush.msra.mxu0 %v2030
        %2089 = vmatpush.msra.mxu0 %v2028
        %2090 = vmatpush.msra.mxu0 %v2026
        %2091 = vmatpush.msra.mxu0 %v2024
        %2092 = vmatpush.msra.mxu0 %v2022
        %2093 = vmatpush.msra.mxu0 %v2020
        %2094 = vmatpush.msra.mxu0 %v2018
        %2095 = vmatpush.msra.mxu0 %v2016
        %2096 = vmatpush.msra.mxu0 %v2014
        %2097 = vmatpush.msra.mxu0 %v2012
        %2098 = vmatpush.msra.mxu0 %v2010
        %2099 = vmatmul.f32.gmra.mxu0 %v1946
        %v2100 = vpop.f32.mrf.mxu0
        %v2101 = vadd.f32 %v2060, %v2100
        %2102 = vmatmul.f32.gmra.mxu0 %v1948
        %v2103 = vpop.f32.mrf.mxu0
        %v2104 = vadd.f32 %v2063, %v2103
        %2105 = vmatmul.f32.gmra.mxu0 %v1950
        %v2106 = vpop.f32.mrf.mxu0
        %v2107 = vadd.f32 %v2066, %v2106
        %2108 = vmatmul.f32.gmra.mxu0 %v1952
        %v2109 = vpop.f32.mrf.mxu0
        %v2110 = vadd.f32 %v2069, %v2109
        %2111 = vmatmul.f32.gmra.mxu0 %v1954
        %v2112 = vpop.f32.mrf.mxu0
        %v2113 = vadd.f32 %v2072, %v2112
        %2114 = vmatmul.f32.gmra.mxu0 %v1956
        %v2115 = vpop.f32.mrf.mxu0
        %v2116 = vadd.f32 %v2075, %v2115
        %2117 = vmatmul.f32.gmra.mxu0 %v1958
        %v2118 = vpop.f32.mrf.mxu0
        %v2119 = vadd.f32 %v2078, %v2118
        %2120 = vmatmul.f32.gmra.mxu0 %v1960
        %v2121 = vpop.f32.mrf.mxu0
        %v2122 = vadd.f32 %v2081, %v2121
        %2123 = vdwg.mxu0
        %2124 = vmatpush.msra.mxu0 %v2009
        %2125 = vmatpush.msra.mxu0 %v2007
        %2126 = vmatpush.msra.mxu0 %v2005
        %2127 = vmatpush.msra.mxu0 %v2003
        %2128 = vmatpush.msra.mxu0 %v2001
        %2129 = vmatpush.msra.mxu0 %v1999
        %2130 = vmatpush.msra.mxu0 %v1997
        %2131 = vmatpush.msra.mxu0 %v1995
        %2132 = vmatpush.msra.mxu0 %v1993
        %2133 = vmatpush.msra.mxu0 %v1991
        %2134 = vmatpush.msra.mxu0 %v1989
        %2135 = vmatpush.msra.mxu0 %v1987
        %2136 = vmatpush.msra.mxu0 %v1985
        %2137 = vmatpush.msra.mxu0 %v1983
        %2138 = vmatpush.msra.mxu0 %v1981
        %2139 = vmatpush.msra.mxu0 %v1979
        %2140 = vmatmul.f32.gmra.mxu0 %v1945
        %v2141 = vpop.f32.mrf.mxu0
        %v2142 = vadd.f32 0.0, %v2141
        %2143 = vmatmul.f32.gmra.mxu0 %v1947
        %v2144 = vpop.f32.mrf.mxu0
        %v2145 = vadd.f32 0.0, %v2144
        %2146 = vmatmul.f32.gmra.mxu0 %v1949
        %v2147 = vpop.f32.mrf.mxu0
        %v2148 = vadd.f32 0.0, %v2147
        %2149 = vmatmul.f32.gmra.mxu0 %v1951
        %v2150 = vpop.f32.mrf.mxu0
        %v2151 = vadd.f32 0.0, %v2150
        %2152 = vmatmul.f32.gmra.mxu0 %v1953
        %v2153 = vpop.f32.mrf.mxu0
        %v2154 = vadd.f32 0.0, %v2153
        %2155 = vmatmul.f32.gmra.mxu0 %v1955
        %v2156 = vpop.f32.mrf.mxu0
        %v2157 = vadd.f32 0.0, %v2156
        %2158 = vmatmul.f32.gmra.mxu0 %v1957
        %v2159 = vpop.f32.mrf.mxu0
        %v2160 = vadd.f32 0.0, %v2159
        %2161 = vmatmul.f32.gmra.mxu0 %v1959
        %v2162 = vpop.f32.mrf.mxu0
        %v2163 = vadd.f32 0.0, %v2162
        %2164 = vdwg.mxu0
        %2165 = vmatpush.msra.mxu0 %v2041
        %2166 = vmatpush.msra.mxu0 %v2039
        %2167 = vmatpush.msra.mxu0 %v2037
        %2168 = vmatpush.msra.mxu0 %v2035
        %2169 = vmatpush.msra.mxu0 %v2033
        %2170 = vmatpush.msra.mxu0 %v2031
        %2171 = vmatpush.msra.mxu0 %v2029
        %2172 = vmatpush.msra.mxu0 %v2027
        %2173 = vmatpush.msra.mxu0 %v2025
        %2174 = vmatpush.msra.mxu0 %v2023
        %2175 = vmatpush.msra.mxu0 %v2021
        %2176 = vmatpush.msra.mxu0 %v2019
        %2177 = vmatpush.msra.mxu0 %v2017
        %2178 = vmatpush.msra.mxu0 %v2015
        %2179 = vmatpush.msra.mxu0 %v2013
        %2180 = vmatpush.msra.mxu0 %v2011
        %2181 = vmatmul.f32.gmra.mxu0 %v1946
        %v2182 = vpop.f32.mrf.mxu0
        %v2183 = vadd.f32 %v2142, %v2182
        %2184 = vmatmul.f32.gmra.mxu0 %v1948
        %v2185 = vpop.f32.mrf.mxu0
        %v2186 = vadd.f32 %v2145, %v2185
        %2187 = vmatmul.f32.gmra.mxu0 %v1950
        %v2188 = vpop.f32.mrf.mxu0
        %v2189 = vadd.f32 %v2148, %v2188
        %2190 = vmatmul.f32.gmra.mxu0 %v1952
        %v2191 = vpop.f32.mrf.mxu0
        %v2192 = vadd.f32 %v2151, %v2191
        %2193 = vmatmul.f32.gmra.mxu0 %v1954
        %v2194 = vpop.f32.mrf.mxu0
        %v2195 = vadd.f32 %v2154, %v2194
        %2196 = vmatmul.f32.gmra.mxu0 %v1956
        %v2197 = vpop.f32.mrf.mxu0
        %v2198 = vadd.f32 %v2157, %v2197
        %2199 = vmatmul.f32.gmra.mxu0 %v1958
        %v2200 = vpop.f32.mrf.mxu0
        %v2201 = vadd.f32 %v2160, %v2200
        %2202 = vmatmul.f32.gmra.mxu0 %v1960
        %v2203 = vpop.f32.mrf.mxu0
        %v2204 = vadd.f32 %v2163, %v2203
        %2205 = vdwg.mxu0
        %v2206 = vadd.f32 %v1961, %v2101
        %v2207 = vadd.f32 %v1962, %v2183
        %v2208 = vadd.f32 %v1963, %v2104
        %v2209 = vadd.f32 %v1964, %v2186
        %v2210 = vadd.f32 %v1965, %v2107
        %v2211 = vadd.f32 %v1966, %v2189
        %v2212 = vadd.f32 %v1967, %v2110
        %v2213 = vadd.f32 %v1968, %v2192
        %v2214 = vadd.f32 %v1969, %v2113
        %v2215 = vadd.f32 %v1970, %v2195
        %v2216 = vadd.f32 %v1971, %v2116
        %v2217 = vadd.f32 %v1972, %v2198
        %v2218 = vadd.f32 %v1973, %v2119
        %v2219 = vadd.f32 %v1974, %v2201
        %v2220 = vadd.f32 %v1975, %v2122
        %v2221 = vadd.f32 %v1976, %v2204
        %2222 = vst [vmem:[#allocation3] sm:$0xff] %v2206
        %2223 = vst [vmem:[#allocation3 + $0x8] sm:$0xff] %v2207
        %2224 = vst [vmem:[#allocation3 + $0x10] sm:$0xff] %v2208
        %2225 = vst [vmem:[#allocation3 + $0x18] sm:$0xff] %v2209
        %2226 = vst [vmem:[#allocation3 + $0x20] sm:$0xff] %v2210
        %2227 = vst [vmem:[#allocation3 + $0x28] sm:$0xff] %v2211
        %2228 = vst [vmem:[#allocation3 + $0x30] sm:$0xff] %v2212
        %2229 = vst [vmem:[#allocation3 + $0x38] sm:$0xff] %v2213
        %2230 = vst [vmem:[#allocation3 + $0x40] sm:$0xff] %v2214
        %2231 = vst [vmem:[#allocation3 + $0x48] sm:$0xff] %v2215
        %2232 = vst [vmem:[#allocation3 + $0x50] sm:$0xff] %v2216
        %2233 = vst [vmem:[#allocation3 + $0x58] sm:$0xff] %v2217
        %2234 = vst [vmem:[#allocation3 + $0x60] sm:$0xff] %v2218
        %2235 = vst [vmem:[#allocation3 + $0x68] sm:$0xff] %v2219
        %2236 = vst [vmem:[#allocation3 + $0x70] sm:$0xff] %v2220
        %2237 = vst [vmem:[#allocation3 + $0x78] sm:$0xff] %v2221
        %v2238 = vld [vmem:[%s792] sm:$0xfe]
        %v2239 = vld [vmem:[%s792 + $0x8] sm:$0xfe]
        %v2240 = vld [vmem:[%s792 + $0x10] sm:$0x1]
        %v2241 = vld [vmem:[%s792 + $0x18] sm:$0x1]
        %v2242 = vld [vmem:[%s792 + $0x20] sm:$0xfe]
        %v2243 = vld [vmem:[%s792 + $0x28] sm:$0xfe]
        %v2244 = vld [vmem:[%s792 + $0x30] sm:$0x1]
        %v2245 = vld [vmem:[%s792 + $0x38] sm:$0x1]
        %v2246 = vld [vmem:[%s792 + $0x40] sm:$0xfe]
        %v2247 = vld [vmem:[%s792 + $0x48] sm:$0xfe]
        %v2248 = vld [vmem:[%s792 + $0x50] sm:$0x1]
        %v2249 = vld [vmem:[%s792 + $0x58] sm:$0x1]
        %v2250 = vld [vmem:[%s792 + $0x60] sm:$0xfe]
        %v2251 = vld [vmem:[%s792 + $0x68] sm:$0xfe]
        %v2252 = vld [vmem:[%s792 + $0x70] sm:$0x1]
        %v2253 = vld [vmem:[%s792 + $0x78] sm:$0x1]
        %v2254 = vld [vmem:[%s792 + $0x80] sm:$0xfe]
        %v2255 = vld [vmem:[%s792 + $0x88] sm:$0xfe]
        %v2256 = vld [vmem:[%s792 + $0x90] sm:$0x1]
        %v2257 = vld [vmem:[%s792 + $0x98] sm:$0x1]
        %v2258 = vld [vmem:[%s792 + $0xa0] sm:$0xfe]
        %v2259 = vld [vmem:[%s792 + $0xa8] sm:$0xfe]
        %v2260 = vld [vmem:[%s792 + $0xb0] sm:$0x1]
        %v2261 = vld [vmem:[%s792 + $0xb8] sm:$0x1]
        %v2262 = vld [vmem:[%s792 + $0xc0] sm:$0xfe]
        %v2263 = vld [vmem:[%s792 + $0xc8] sm:$0xfe]
        %v2264 = vld [vmem:[%s792 + $0xd0] sm:$0x1]
        %v2265 = vld [vmem:[%s792 + $0xd8] sm:$0x1]
        %v2266 = vld [vmem:[%s792 + $0xe0] sm:$0xfe]
        %v2267 = vld [vmem:[%s792 + $0xe8] sm:$0xfe]
        %v2268 = vld [vmem:[%s792 + $0xf0] sm:$0x1]
        %v2269 = vld [vmem:[%s792 + $0xf8] sm:$0x1]
        %v2302 = vrot.slane %v2238, 1
        %v2303 = vrot.slane %v2240, 1
        %v2304 = vsel %vm1197, %v2302, %v2303
        %v2305 = vrot.slane %v2239, 1
        %v2306 = vrot.slane %v2241, 1
        %v2307 = vsel %vm1197, %v2305, %v2306
        %v2308 = vrot.slane %v2242, 1
        %v2309 = vrot.slane %v2244, 1
        %v2310 = vsel %vm1197, %v2308, %v2309
        %v2311 = vrot.slane %v2243, 1
        %v2312 = vrot.slane %v2245, 1
        %v2313 = vsel %vm1197, %v2311, %v2312
        %v2314 = vrot.slane %v2246, 1
        %v2315 = vrot.slane %v2248, 1
        %v2316 = vsel %vm1197, %v2314, %v2315
        %v2317 = vrot.slane %v2247, 1
        %v2318 = vrot.slane %v2249, 1
        %v2319 = vsel %vm1197, %v2317, %v2318
        %v2320 = vrot.slane %v2250, 1
        %v2321 = vrot.slane %v2252, 1
        %v2322 = vsel %vm1197, %v2320, %v2321
        %v2323 = vrot.slane %v2251, 1
        %v2324 = vrot.slane %v2253, 1
        %v2325 = vsel %vm1197, %v2323, %v2324
        %v2326 = vrot.slane %v2254, 1
        %v2327 = vrot.slane %v2256, 1
        %v2328 = vsel %vm1197, %v2326, %v2327
        %v2329 = vrot.slane %v2255, 1
        %v2330 = vrot.slane %v2257, 1
        %v2331 = vsel %vm1197, %v2329, %v2330
        %v2332 = vrot.slane %v2258, 1
        %v2333 = vrot.slane %v2260, 1
        %v2334 = vsel %vm1197, %v2332, %v2333
        %v2335 = vrot.slane %v2259, 1
        %v2336 = vrot.slane %v2261, 1
        %v2337 = vsel %vm1197, %v2335, %v2336
        %v2338 = vrot.slane %v2262, 1
        %v2339 = vrot.slane %v2264, 1
        %v2340 = vsel %vm1197, %v2338, %v2339
        %v2341 = vrot.slane %v2263, 1
        %v2342 = vrot.slane %v2265, 1
        %v2343 = vsel %vm1197, %v2341, %v2342
        %v2344 = vrot.slane %v2266, 1
        %v2345 = vrot.slane %v2268, 1
        %v2346 = vsel %vm1197, %v2344, %v2345
        %v2347 = vrot.slane %v2267, 1
        %v2348 = vrot.slane %v2269, 1
        %v2349 = vsel %vm1197, %v2347, %v2348
        %v2366 = vld [vmem:[#allocation3] sm:$0xff]
        %v2367 = vld [vmem:[#allocation3 + $0x8] sm:$0xff]
        %v2368 = vld [vmem:[#allocation3 + $0x10] sm:$0xff]
        %v2369 = vld [vmem:[#allocation3 + $0x18] sm:$0xff]
        %v2370 = vld [vmem:[#allocation3 + $0x20] sm:$0xff]
        %v2371 = vld [vmem:[#allocation3 + $0x28] sm:$0xff]
        %v2372 = vld [vmem:[#allocation3 + $0x30] sm:$0xff]
        %v2373 = vld [vmem:[#allocation3 + $0x38] sm:$0xff]
        %v2374 = vld [vmem:[#allocation3 + $0x40] sm:$0xff]
        %v2375 = vld [vmem:[#allocation3 + $0x48] sm:$0xff]
        %v2376 = vld [vmem:[#allocation3 + $0x50] sm:$0xff]
        %v2377 = vld [vmem:[#allocation3 + $0x58] sm:$0xff]
        %v2378 = vld [vmem:[#allocation3 + $0x60] sm:$0xff]
        %v2379 = vld [vmem:[#allocation3 + $0x68] sm:$0xff]
        %v2380 = vld [vmem:[#allocation3 + $0x70] sm:$0xff]
        %v2381 = vld [vmem:[#allocation3 + $0x78] sm:$0xff]
        %s2382 = scalar_lea.vmem [#allocation9], 2048
        %v2383 = vld [vmem:[%s2382] sm:$0xff]
        %v2384 = vld [vmem:[%s2382 + $0x8] sm:$0xff]
        %v2385 = vld [vmem:[%s2382 + $0x10] sm:$0xff]
        %v2386 = vld [vmem:[%s2382 + $0x18] sm:$0xff]
        %v2387 = vld [vmem:[%s2382 + $0x20] sm:$0xff]
        %v2388 = vld [vmem:[%s2382 + $0x28] sm:$0xff]
        %v2389 = vld [vmem:[%s2382 + $0x30] sm:$0xff]
        %v2390 = vld [vmem:[%s2382 + $0x38] sm:$0xff]
        %v2391 = vld [vmem:[%s2382 + $0x40] sm:$0xff]
        %v2392 = vld [vmem:[%s2382 + $0x48] sm:$0xff]
        %v2393 = vld [vmem:[%s2382 + $0x50] sm:$0xff]
        %v2394 = vld [vmem:[%s2382 + $0x58] sm:$0xff]
        %v2395 = vld [vmem:[%s2382 + $0x60] sm:$0xff]
        %v2396 = vld [vmem:[%s2382 + $0x68] sm:$0xff]
        %v2397 = vld [vmem:[%s2382 + $0x70] sm:$0xff]
        %v2398 = vld [vmem:[%s2382 + $0x78] sm:$0xff]
        %v2399 = vld [vmem:[%s2382 + $0x80] sm:$0xff]
        %v2400 = vld [vmem:[%s2382 + $0x88] sm:$0xff]
        %v2401 = vld [vmem:[%s2382 + $0x90] sm:$0xff]
        %v2402 = vld [vmem:[%s2382 + $0x98] sm:$0xff]
        %v2403 = vld [vmem:[%s2382 + $0xa0] sm:$0xff]
        %v2404 = vld [vmem:[%s2382 + $0xa8] sm:$0xff]
        %v2405 = vld [vmem:[%s2382 + $0xb0] sm:$0xff]
        %v2406 = vld [vmem:[%s2382 + $0xb8] sm:$0xff]
        %v2407 = vld [vmem:[%s2382 + $0xc0] sm:$0xff]
        %v2408 = vld [vmem:[%s2382 + $0xc8] sm:$0xff]
        %v2409 = vld [vmem:[%s2382 + $0xd0] sm:$0xff]
        %v2410 = vld [vmem:[%s2382 + $0xd8] sm:$0xff]
        %v2411 = vld [vmem:[%s2382 + $0xe0] sm:$0xff]
        %v2412 = vld [vmem:[%s2382 + $0xe8] sm:$0xff]
        %v2413 = vld [vmem:[%s2382 + $0xf0] sm:$0xff]
        %v2414 = vld [vmem:[%s2382 + $0xf8] sm:$0xff]
        %v2415 = vld [vmem:[%s2382 + $0x100] sm:$0xff]
        %v2416 = vld [vmem:[%s2382 + $0x108] sm:$0xff]
        %v2417 = vld [vmem:[%s2382 + $0x110] sm:$0xff]
        %v2418 = vld [vmem:[%s2382 + $0x118] sm:$0xff]
        %v2419 = vld [vmem:[%s2382 + $0x120] sm:$0xff]
        %v2420 = vld [vmem:[%s2382 + $0x128] sm:$0xff]
        %v2421 = vld [vmem:[%s2382 + $0x130] sm:$0xff]
        %v2422 = vld [vmem:[%s2382 + $0x138] sm:$0xff]
        %v2423 = vld [vmem:[%s2382 + $0x140] sm:$0xff]
        %v2424 = vld [vmem:[%s2382 + $0x148] sm:$0xff]
        %v2425 = vld [vmem:[%s2382 + $0x150] sm:$0xff]
        %v2426 = vld [vmem:[%s2382 + $0x158] sm:$0xff]
        %v2427 = vld [vmem:[%s2382 + $0x160] sm:$0xff]
        %v2428 = vld [vmem:[%s2382 + $0x168] sm:$0xff]
        %v2429 = vld [vmem:[%s2382 + $0x170] sm:$0xff]
        %v2430 = vld [vmem:[%s2382 + $0x178] sm:$0xff]
        %v2431 = vld [vmem:[%s2382 + $0x180] sm:$0xff]
        %v2432 = vld [vmem:[%s2382 + $0x188] sm:$0xff]
        %v2433 = vld [vmem:[%s2382 + $0x190] sm:$0xff]
        %v2434 = vld [vmem:[%s2382 + $0x198] sm:$0xff]
        %v2435 = vld [vmem:[%s2382 + $0x1a0] sm:$0xff]
        %v2436 = vld [vmem:[%s2382 + $0x1a8] sm:$0xff]
        %v2437 = vld [vmem:[%s2382 + $0x1b0] sm:$0xff]
        %v2438 = vld [vmem:[%s2382 + $0x1b8] sm:$0xff]
        %v2439 = vld [vmem:[%s2382 + $0x1c0] sm:$0xff]
        %v2440 = vld [vmem:[%s2382 + $0x1c8] sm:$0xff]
        %v2441 = vld [vmem:[%s2382 + $0x1d0] sm:$0xff]
        %v2442 = vld [vmem:[%s2382 + $0x1d8] sm:$0xff]
        %v2443 = vld [vmem:[%s2382 + $0x1e0] sm:$0xff]
        %v2444 = vld [vmem:[%s2382 + $0x1e8] sm:$0xff]
        %v2445 = vld [vmem:[%s2382 + $0x1f0] sm:$0xff]
        %v2446 = vld [vmem:[%s2382 + $0x1f8] sm:$0xff]
        %2447 = vmatpush.msra.mxu0 %v2413
        %2448 = vmatpush.msra.mxu0 %v2411
        %2449 = vmatpush.msra.mxu0 %v2409
        %2450 = vmatpush.msra.mxu0 %v2407
        %2451 = vmatpush.msra.mxu0 %v2405
        %2452 = vmatpush.msra.mxu0 %v2403
        %2453 = vmatpush.msra.mxu0 %v2401
        %2454 = vmatpush.msra.mxu0 %v2399
        %2455 = vmatpush.msra.mxu0 %v2397
        %2456 = vmatpush.msra.mxu0 %v2395
        %2457 = vmatpush.msra.mxu0 %v2393
        %2458 = vmatpush.msra.mxu0 %v2391
        %2459 = vmatpush.msra.mxu0 %v2389
        %2460 = vmatpush.msra.mxu0 %v2387
        %2461 = vmatpush.msra.mxu0 %v2385
        %2462 = vmatpush.msra.mxu0 %v2383
        %2463 = vmatmul.f32.gmra.mxu0 %v2304
        %v2464 = vpop.f32.mrf.mxu0
        %v2465 = vadd.f32 0.0, %v2464
        %2466 = vmatmul.f32.gmra.mxu0 %v2310
        %v2467 = vpop.f32.mrf.mxu0
        %v2468 = vadd.f32 0.0, %v2467
        %2469 = vmatmul.f32.gmra.mxu0 %v2316
        %v2470 = vpop.f32.mrf.mxu0
        %v2471 = vadd.f32 0.0, %v2470
        %2472 = vmatmul.f32.gmra.mxu0 %v2322
        %v2473 = vpop.f32.mrf.mxu0
        %v2474 = vadd.f32 0.0, %v2473
        %2475 = vmatmul.f32.gmra.mxu0 %v2328
        %v2476 = vpop.f32.mrf.mxu0
        %v2477 = vadd.f32 0.0, %v2476
        %2478 = vmatmul.f32.gmra.mxu0 %v2334
        %v2479 = vpop.f32.mrf.mxu0
        %v2480 = vadd.f32 0.0, %v2479
        %2481 = vmatmul.f32.gmra.mxu0 %v2340
        %v2482 = vpop.f32.mrf.mxu0
        %v2483 = vadd.f32 0.0, %v2482
        %2484 = vmatmul.f32.gmra.mxu0 %v2346
        %v2485 = vpop.f32.mrf.mxu0
        %v2486 = vadd.f32 0.0, %v2485
        %2487 = vdwg.mxu0
        %2488 = vmatpush.msra.mxu0 %v2445
        %2489 = vmatpush.msra.mxu0 %v2443
        %2490 = vmatpush.msra.mxu0 %v2441
        %2491 = vmatpush.msra.mxu0 %v2439
        %2492 = vmatpush.msra.mxu0 %v2437
        %2493 = vmatpush.msra.mxu0 %v2435
        %2494 = vmatpush.msra.mxu0 %v2433
        %2495 = vmatpush.msra.mxu0 %v2431
        %2496 = vmatpush.msra.mxu0 %v2429
        %2497 = vmatpush.msra.mxu0 %v2427
        %2498 = vmatpush.msra.mxu0 %v2425
        %2499 = vmatpush.msra.mxu0 %v2423
        %2500 = vmatpush.msra.mxu0 %v2421
        %2501 = vmatpush.msra.mxu0 %v2419
        %2502 = vmatpush.msra.mxu0 %v2417
        %2503 = vmatpush.msra.mxu0 %v2415
        %2504 = vmatmul.f32.gmra.mxu0 %v2307
        %v2505 = vpop.f32.mrf.mxu0
        %v2506 = vadd.f32 %v2465, %v2505
        %2507 = vmatmul.f32.gmra.mxu0 %v2313
        %v2508 = vpop.f32.mrf.mxu0
        %v2509 = vadd.f32 %v2468, %v2508
        %2510 = vmatmul.f32.gmra.mxu0 %v2319
        %v2511 = vpop.f32.mrf.mxu0
        %v2512 = vadd.f32 %v2471, %v2511
        %2513 = vmatmul.f32.gmra.mxu0 %v2325
        %v2514 = vpop.f32.mrf.mxu0
        %v2515 = vadd.f32 %v2474, %v2514
        %2516 = vmatmul.f32.gmra.mxu0 %v2331
        %v2517 = vpop.f32.mrf.mxu0
        %v2518 = vadd.f32 %v2477, %v2517
        %2519 = vmatmul.f32.gmra.mxu0 %v2337
        %v2520 = vpop.f32.mrf.mxu0
        %v2521 = vadd.f32 %v2480, %v2520
        %2522 = vmatmul.f32.gmra.mxu0 %v2343
        %v2523 = vpop.f32.mrf.mxu0
        %v2524 = vadd.f32 %v2483, %v2523
        %2525 = vmatmul.f32.gmra.mxu0 %v2349
        %v2526 = vpop.f32.mrf.mxu0
        %v2527 = vadd.f32 %v2486, %v2526
        %2528 = vdwg.mxu0
        %2529 = vmatpush.msra.mxu0 %v2414
        %2530 = vmatpush.msra.mxu0 %v2412
        %2531 = vmatpush.msra.mxu0 %v2410
        %2532 = vmatpush.msra.mxu0 %v2408
        %2533 = vmatpush.msra.mxu0 %v2406
        %2534 = vmatpush.msra.mxu0 %v2404
        %2535 = vmatpush.msra.mxu0 %v2402
        %2536 = vmatpush.msra.mxu0 %v2400
        %2537 = vmatpush.msra.mxu0 %v2398
        %2538 = vmatpush.msra.mxu0 %v2396
        %2539 = vmatpush.msra.mxu0 %v2394
        %2540 = vmatpush.msra.mxu0 %v2392
        %2541 = vmatpush.msra.mxu0 %v2390
        %2542 = vmatpush.msra.mxu0 %v2388
        %2543 = vmatpush.msra.mxu0 %v2386
        %2544 = vmatpush.msra.mxu0 %v2384
        %2545 = vmatmul.f32.gmra.mxu0 %v2304
        %v2546 = vpop.f32.mrf.mxu0
        %v2547 = vadd.f32 0.0, %v2546
        %2548 = vmatmul.f32.gmra.mxu0 %v2310
        %v2549 = vpop.f32.mrf.mxu0
        %v2550 = vadd.f32 0.0, %v2549
        %2551 = vmatmul.f32.gmra.mxu0 %v2316
        %v2552 = vpop.f32.mrf.mxu0
        %v2553 = vadd.f32 0.0, %v2552
        %2554 = vmatmul.f32.gmra.mxu0 %v2322
        %v2555 = vpop.f32.mrf.mxu0
        %v2556 = vadd.f32 0.0, %v2555
        %2557 = vmatmul.f32.gmra.mxu0 %v2328
        %v2558 = vpop.f32.mrf.mxu0
        %v2559 = vadd.f32 0.0, %v2558
        %2560 = vmatmul.f32.gmra.mxu0 %v2334
        %v2561 = vpop.f32.mrf.mxu0
        %v2562 = vadd.f32 0.0, %v2561
        %2563 = vmatmul.f32.gmra.mxu0 %v2340
        %v2564 = vpop.f32.mrf.mxu0
        %v2565 = vadd.f32 0.0, %v2564
        %2566 = vmatmul.f32.gmra.mxu0 %v2346
        %v2567 = vpop.f32.mrf.mxu0
        %v2568 = vadd.f32 0.0, %v2567
        %2569 = vdwg.mxu0
        %2570 = vmatpush.msra.mxu0 %v2446
        %2571 = vmatpush.msra.mxu0 %v2444
        %2572 = vmatpush.msra.mxu0 %v2442
        %2573 = vmatpush.msra.mxu0 %v2440
        %2574 = vmatpush.msra.mxu0 %v2438
        %2575 = vmatpush.msra.mxu0 %v2436
        %2576 = vmatpush.msra.mxu0 %v2434
        %2577 = vmatpush.msra.mxu0 %v2432
        %2578 = vmatpush.msra.mxu0 %v2430
        %2579 = vmatpush.msra.mxu0 %v2428
        %2580 = vmatpush.msra.mxu0 %v2426
        %2581 = vmatpush.msra.mxu0 %v2424
        %2582 = vmatpush.msra.mxu0 %v2422
        %2583 = vmatpush.msra.mxu0 %v2420
        %2584 = vmatpush.msra.mxu0 %v2418
        %2585 = vmatpush.msra.mxu0 %v2416
        %2586 = vmatmul.f32.gmra.mxu0 %v2307
        %v2587 = vpop.f32.mrf.mxu0
        %v2588 = vadd.f32 %v2547, %v2587
        %2589 = vmatmul.f32.gmra.mxu0 %v2313
        %v2590 = vpop.f32.mrf.mxu0
        %v2591 = vadd.f32 %v2550, %v2590
        %2592 = vmatmul.f32.gmra.mxu0 %v2319
        %v2593 = vpop.f32.mrf.mxu0
        %v2594 = vadd.f32 %v2553, %v2593
        %2595 = vmatmul.f32.gmra.mxu0 %v2325
        %v2596 = vpop.f32.mrf.mxu0
        %v2597 = vadd.f32 %v2556, %v2596
        %2598 = vmatmul.f32.gmra.mxu0 %v2331
        %v2599 = vpop.f32.mrf.mxu0
        %v2600 = vadd.f32 %v2559, %v2599
        %2601 = vmatmul.f32.gmra.mxu0 %v2337
        %v2602 = vpop.f32.mrf.mxu0
        %v2603 = vadd.f32 %v2562, %v2602
        %2604 = vmatmul.f32.gmra.mxu0 %v2343
        %v2605 = vpop.f32.mrf.mxu0
        %v2606 = vadd.f32 %v2565, %v2605
        %2607 = vmatmul.f32.gmra.mxu0 %v2349
        %v2608 = vpop.f32.mrf.mxu0
        %v2609 = vadd.f32 %v2568, %v2608
        %2610 = vdwg.mxu0
        %v2611 = vadd.f32 %v2366, %v2506
        %v2612 = vadd.f32 %v2367, %v2588
        %v2613 = vadd.f32 %v2368, %v2509
        %v2614 = vadd.f32 %v2369, %v2591
        %v2615 = vadd.f32 %v2370, %v2512
        %v2616 = vadd.f32 %v2371, %v2594
        %v2617 = vadd.f32 %v2372, %v2515
        %v2618 = vadd.f32 %v2373, %v2597
        %v2619 = vadd.f32 %v2374, %v2518
        %v2620 = vadd.f32 %v2375, %v2600
        %v2621 = vadd.f32 %v2376, %v2521
        %v2622 = vadd.f32 %v2377, %v2603
        %v2623 = vadd.f32 %v2378, %v2524
        %v2624 = vadd.f32 %v2379, %v2606
        %v2625 = vadd.f32 %v2380, %v2527
        %v2626 = vadd.f32 %v2381, %v2609
        %2627 = vst [vmem:[#allocation3] sm:$0xff] %v2611
        %2628 = vst [vmem:[#allocation3 + $0x8] sm:$0xff] %v2612
        %2629 = vst [vmem:[#allocation3 + $0x10] sm:$0xff] %v2613
        %2630 = vst [vmem:[#allocation3 + $0x18] sm:$0xff] %v2614
        %2631 = vst [vmem:[#allocation3 + $0x20] sm:$0xff] %v2615
        %2632 = vst [vmem:[#allocation3 + $0x28] sm:$0xff] %v2616
        %2633 = vst [vmem:[#allocation3 + $0x30] sm:$0xff] %v2617
        %2634 = vst [vmem:[#allocation3 + $0x38] sm:$0xff] %v2618
        %2635 = vst [vmem:[#allocation3 + $0x40] sm:$0xff] %v2619
        %2636 = vst [vmem:[#allocation3 + $0x48] sm:$0xff] %v2620
        %2637 = vst [vmem:[#allocation3 + $0x50] sm:$0xff] %v2621
        %2638 = vst [vmem:[#allocation3 + $0x58] sm:$0xff] %v2622
        %2639 = vst [vmem:[#allocation3 + $0x60] sm:$0xff] %v2623
        %2640 = vst [vmem:[#allocation3 + $0x68] sm:$0xff] %v2624
        %2641 = vst [vmem:[#allocation3 + $0x70] sm:$0xff] %v2625
        %2642 = vst [vmem:[#allocation3 + $0x78] sm:$0xff] %v2626
        %v2643 = vld [vmem:[%s792] sm:$0xfc]
        %v2644 = vld [vmem:[%s792 + $0x8] sm:$0xfc]
        %v2645 = vld [vmem:[%s792 + $0x10] sm:$0x3]
        %v2646 = vld [vmem:[%s792 + $0x18] sm:$0x3]
        %v2647 = vld [vmem:[%s792 + $0x20] sm:$0xfc]
        %v2648 = vld [vmem:[%s792 + $0x28] sm:$0xfc]
        %v2649 = vld [vmem:[%s792 + $0x30] sm:$0x3]
        %v2650 = vld [vmem:[%s792 + $0x38] sm:$0x3]
        %v2651 = vld [vmem:[%s792 + $0x40] sm:$0xfc]
        %v2652 = vld [vmem:[%s792 + $0x48] sm:$0xfc]
        %v2653 = vld [vmem:[%s792 + $0x50] sm:$0x3]
        %v2654 = vld [vmem:[%s792 + $0x58] sm:$0x3]
        %v2655 = vld [vmem:[%s792 + $0x60] sm:$0xfc]
        %v2656 = vld [vmem:[%s792 + $0x68] sm:$0xfc]
        %v2657 = vld [vmem:[%s792 + $0x70] sm:$0x3]
        %v2658 = vld [vmem:[%s792 + $0x78] sm:$0x3]
        %v2659 = vld [vmem:[%s792 + $0x80] sm:$0xfc]
        %v2660 = vld [vmem:[%s792 + $0x88] sm:$0xfc]
        %v2661 = vld [vmem:[%s792 + $0x90] sm:$0x3]
        %v2662 = vld [vmem:[%s792 + $0x98] sm:$0x3]
        %v2663 = vld [vmem:[%s792 + $0xa0] sm:$0xfc]
        %v2664 = vld [vmem:[%s792 + $0xa8] sm:$0xfc]
        %v2665 = vld [vmem:[%s792 + $0xb0] sm:$0x3]
        %v2666 = vld [vmem:[%s792 + $0xb8] sm:$0x3]
        %v2667 = vld [vmem:[%s792 + $0xc0] sm:$0xfc]
        %v2668 = vld [vmem:[%s792 + $0xc8] sm:$0xfc]
        %v2669 = vld [vmem:[%s792 + $0xd0] sm:$0x3]
        %v2670 = vld [vmem:[%s792 + $0xd8] sm:$0x3]
        %v2671 = vld [vmem:[%s792 + $0xe0] sm:$0xfc]
        %v2672 = vld [vmem:[%s792 + $0xe8] sm:$0xfc]
        %v2673 = vld [vmem:[%s792 + $0xf0] sm:$0x3]
        %v2674 = vld [vmem:[%s792 + $0xf8] sm:$0x3]
        %v2707 = vrot.slane %v2643, 2
        %v2708 = vrot.slane %v2645, 2
        %v2709 = vsel %vm1603, %v2707, %v2708
        %v2710 = vrot.slane %v2644, 2
        %v2711 = vrot.slane %v2646, 2
        %v2712 = vsel %vm1603, %v2710, %v2711
        %v2713 = vrot.slane %v2647, 2
        %v2714 = vrot.slane %v2649, 2
        %v2715 = vsel %vm1603, %v2713, %v2714
        %v2716 = vrot.slane %v2648, 2
        %v2717 = vrot.slane %v2650, 2
        %v2718 = vsel %vm1603, %v2716, %v2717
        %v2719 = vrot.slane %v2651, 2
        %v2720 = vrot.slane %v2653, 2
        %v2721 = vsel %vm1603, %v2719, %v2720
        %v2722 = vrot.slane %v2652, 2
        %v2723 = vrot.slane %v2654, 2
        %v2724 = vsel %vm1603, %v2722, %v2723
        %v2725 = vrot.slane %v2655, 2
        %v2726 = vrot.slane %v2657, 2
        %v2727 = vsel %vm1603, %v2725, %v2726
        %v2728 = vrot.slane %v2656, 2
        %v2729 = vrot.slane %v2658, 2
        %v2730 = vsel %vm1603, %v2728, %v2729
        %v2731 = vrot.slane %v2659, 2
        %v2732 = vrot.slane %v2661, 2
        %v2733 = vsel %vm1603, %v2731, %v2732
        %v2734 = vrot.slane %v2660, 2
        %v2735 = vrot.slane %v2662, 2
        %v2736 = vsel %vm1603, %v2734, %v2735
        %v2737 = vrot.slane %v2663, 2
        %v2738 = vrot.slane %v2665, 2
        %v2739 = vsel %vm1603, %v2737, %v2738
        %v2740 = vrot.slane %v2664, 2
        %v2741 = vrot.slane %v2666, 2
        %v2742 = vsel %vm1603, %v2740, %v2741
        %v2743 = vrot.slane %v2667, 2
        %v2744 = vrot.slane %v2669, 2
        %v2745 = vsel %vm1603, %v2743, %v2744
        %v2746 = vrot.slane %v2668, 2
        %v2747 = vrot.slane %v2670, 2
        %v2748 = vsel %vm1603, %v2746, %v2747
        %v2749 = vrot.slane %v2671, 2
        %v2750 = vrot.slane %v2673, 2
        %v2751 = vsel %vm1603, %v2749, %v2750
        %v2752 = vrot.slane %v2672, 2
        %v2753 = vrot.slane %v2674, 2
        %v2754 = vsel %vm1603, %v2752, %v2753
        %v2771 = vld [vmem:[#allocation3] sm:$0xff]
        %v2772 = vld [vmem:[#allocation3 + $0x8] sm:$0xff]
        %v2773 = vld [vmem:[#allocation3 + $0x10] sm:$0xff]
        %v2774 = vld [vmem:[#allocation3 + $0x18] sm:$0xff]
        %v2775 = vld [vmem:[#allocation3 + $0x20] sm:$0xff]
        %v2776 = vld [vmem:[#allocation3 + $0x28] sm:$0xff]
        %v2777 = vld [vmem:[#allocation3 + $0x30] sm:$0xff]
        %v2778 = vld [vmem:[#allocation3 + $0x38] sm:$0xff]
        %v2779 = vld [vmem:[#allocation3 + $0x40] sm:$0xff]
        %v2780 = vld [vmem:[#allocation3 + $0x48] sm:$0xff]
        %v2781 = vld [vmem:[#allocation3 + $0x50] sm:$0xff]
        %v2782 = vld [vmem:[#allocation3 + $0x58] sm:$0xff]
        %v2783 = vld [vmem:[#allocation3 + $0x60] sm:$0xff]
        %v2784 = vld [vmem:[#allocation3 + $0x68] sm:$0xff]
        %v2785 = vld [vmem:[#allocation3 + $0x70] sm:$0xff]
        %v2786 = vld [vmem:[#allocation3 + $0x78] sm:$0xff]
        %s2787 = scalar_lea.vmem [#allocation9], 2560
        %v2788 = vld [vmem:[%s2787] sm:$0xff]
        %v2789 = vld [vmem:[%s2787 + $0x8] sm:$0xff]
        %v2790 = vld [vmem:[%s2787 + $0x10] sm:$0xff]
        %v2791 = vld [vmem:[%s2787 + $0x18] sm:$0xff]
        %v2792 = vld [vmem:[%s2787 + $0x20] sm:$0xff]
        %v2793 = vld [vmem:[%s2787 + $0x28] sm:$0xff]
        %v2794 = vld [vmem:[%s2787 + $0x30] sm:$0xff]
        %v2795 = vld [vmem:[%s2787 + $0x38] sm:$0xff]
        %v2796 = vld [vmem:[%s2787 + $0x40] sm:$0xff]
        %v2797 = vld [vmem:[%s2787 + $0x48] sm:$0xff]
        %v2798 = vld [vmem:[%s2787 + $0x50] sm:$0xff]
        %v2799 = vld [vmem:[%s2787 + $0x58] sm:$0xff]
        %v2800 = vld [vmem:[%s2787 + $0x60] sm:$0xff]
        %v2801 = vld [vmem:[%s2787 + $0x68] sm:$0xff]
        %v2802 = vld [vmem:[%s2787 + $0x70] sm:$0xff]
        %v2803 = vld [vmem:[%s2787 + $0x78] sm:$0xff]
        %v2804 = vld [vmem:[%s2787 + $0x80] sm:$0xff]
        %v2805 = vld [vmem:[%s2787 + $0x88] sm:$0xff]
        %v2806 = vld [vmem:[%s2787 + $0x90] sm:$0xff]
        %v2807 = vld [vmem:[%s2787 + $0x98] sm:$0xff]
        %v2808 = vld [vmem:[%s2787 + $0xa0] sm:$0xff]
        %v2809 = vld [vmem:[%s2787 + $0xa8] sm:$0xff]
        %v2810 = vld [vmem:[%s2787 + $0xb0] sm:$0xff]
        %v2811 = vld [vmem:[%s2787 + $0xb8] sm:$0xff]
        %v2812 = vld [vmem:[%s2787 + $0xc0] sm:$0xff]
        %v2813 = vld [vmem:[%s2787 + $0xc8] sm:$0xff]
        %v2814 = vld [vmem:[%s2787 + $0xd0] sm:$0xff]
        %v2815 = vld [vmem:[%s2787 + $0xd8] sm:$0xff]
        %v2816 = vld [vmem:[%s2787 + $0xe0] sm:$0xff]
        %v2817 = vld [vmem:[%s2787 + $0xe8] sm:$0xff]
        %v2818 = vld [vmem:[%s2787 + $0xf0] sm:$0xff]
        %v2819 = vld [vmem:[%s2787 + $0xf8] sm:$0xff]
        %v2820 = vld [vmem:[%s2787 + $0x100] sm:$0xff]
        %v2821 = vld [vmem:[%s2787 + $0x108] sm:$0xff]
        %v2822 = vld [vmem:[%s2787 + $0x110] sm:$0xff]
        %v2823 = vld [vmem:[%s2787 + $0x118] sm:$0xff]
        %v2824 = vld [vmem:[%s2787 + $0x120] sm:$0xff]
        %v2825 = vld [vmem:[%s2787 + $0x128] sm:$0xff]
        %v2826 = vld [vmem:[%s2787 + $0x130] sm:$0xff]
        %v2827 = vld [vmem:[%s2787 + $0x138] sm:$0xff]
        %v2828 = vld [vmem:[%s2787 + $0x140] sm:$0xff]
        %v2829 = vld [vmem:[%s2787 + $0x148] sm:$0xff]
        %v2830 = vld [vmem:[%s2787 + $0x150] sm:$0xff]
        %v2831 = vld [vmem:[%s2787 + $0x158] sm:$0xff]
        %v2832 = vld [vmem:[%s2787 + $0x160] sm:$0xff]
        %v2833 = vld [vmem:[%s2787 + $0x168] sm:$0xff]
        %v2834 = vld [vmem:[%s2787 + $0x170] sm:$0xff]
        %v2835 = vld [vmem:[%s2787 + $0x178] sm:$0xff]
        %v2836 = vld [vmem:[%s2787 + $0x180] sm:$0xff]
        %v2837 = vld [vmem:[%s2787 + $0x188] sm:$0xff]
        %v2838 = vld [vmem:[%s2787 + $0x190] sm:$0xff]
        %v2839 = vld [vmem:[%s2787 + $0x198] sm:$0xff]
        %v2840 = vld [vmem:[%s2787 + $0x1a0] sm:$0xff]
        %v2841 = vld [vmem:[%s2787 + $0x1a8] sm:$0xff]
        %v2842 = vld [vmem:[%s2787 + $0x1b0] sm:$0xff]
        %v2843 = vld [vmem:[%s2787 + $0x1b8] sm:$0xff]
        %v2844 = vld [vmem:[%s2787 + $0x1c0] sm:$0xff]
        %v2845 = vld [vmem:[%s2787 + $0x1c8] sm:$0xff]
        %v2846 = vld [vmem:[%s2787 + $0x1d0] sm:$0xff]
        %v2847 = vld [vmem:[%s2787 + $0x1d8] sm:$0xff]
        %v2848 = vld [vmem:[%s2787 + $0x1e0] sm:$0xff]
        %v2849 = vld [vmem:[%s2787 + $0x1e8] sm:$0xff]
        %v2850 = vld [vmem:[%s2787 + $0x1f0] sm:$0xff]
        %v2851 = vld [vmem:[%s2787 + $0x1f8] sm:$0xff]
        %2852 = vmatpush.msra.mxu0 %v2818
        %2853 = vmatpush.msra.mxu0 %v2816
        %2854 = vmatpush.msra.mxu0 %v2814
        %2855 = vmatpush.msra.mxu0 %v2812
        %2856 = vmatpush.msra.mxu0 %v2810
        %2857 = vmatpush.msra.mxu0 %v2808
        %2858 = vmatpush.msra.mxu0 %v2806
        %2859 = vmatpush.msra.mxu0 %v2804
        %2860 = vmatpush.msra.mxu0 %v2802
        %2861 = vmatpush.msra.mxu0 %v2800
        %2862 = vmatpush.msra.mxu0 %v2798
        %2863 = vmatpush.msra.mxu0 %v2796
        %2864 = vmatpush.msra.mxu0 %v2794
        %2865 = vmatpush.msra.mxu0 %v2792
        %2866 = vmatpush.msra.mxu0 %v2790
        %2867 = vmatpush.msra.mxu0 %v2788
        %2868 = vmatmul.f32.gmra.mxu0 %v2709
        %v2869 = vpop.f32.mrf.mxu0
        %v2870 = vadd.f32 0.0, %v2869
        %2871 = vmatmul.f32.gmra.mxu0 %v2715
        %v2872 = vpop.f32.mrf.mxu0
        %v2873 = vadd.f32 0.0, %v2872
        %2874 = vmatmul.f32.gmra.mxu0 %v2721
        %v2875 = vpop.f32.mrf.mxu0
        %v2876 = vadd.f32 0.0, %v2875
        %2877 = vmatmul.f32.gmra.mxu0 %v2727
        %v2878 = vpop.f32.mrf.mxu0
        %v2879 = vadd.f32 0.0, %v2878
        %2880 = vmatmul.f32.gmra.mxu0 %v2733
        %v2881 = vpop.f32.mrf.mxu0
        %v2882 = vadd.f32 0.0, %v2881
        %2883 = vmatmul.f32.gmra.mxu0 %v2739
        %v2884 = vpop.f32.mrf.mxu0
        %v2885 = vadd.f32 0.0, %v2884
        %2886 = vmatmul.f32.gmra.mxu0 %v2745
        %v2887 = vpop.f32.mrf.mxu0
        %v2888 = vadd.f32 0.0, %v2887
        %2889 = vmatmul.f32.gmra.mxu0 %v2751
        %v2890 = vpop.f32.mrf.mxu0
        %v2891 = vadd.f32 0.0, %v2890
        %2892 = vdwg.mxu0
        %2893 = vmatpush.msra.mxu0 %v2850
        %2894 = vmatpush.msra.mxu0 %v2848
        %2895 = vmatpush.msra.mxu0 %v2846
        %2896 = vmatpush.msra.mxu0 %v2844
        %2897 = vmatpush.msra.mxu0 %v2842
        %2898 = vmatpush.msra.mxu0 %v2840
        %2899 = vmatpush.msra.mxu0 %v2838
        %2900 = vmatpush.msra.mxu0 %v2836
        %2901 = vmatpush.msra.mxu0 %v2834
        %2902 = vmatpush.msra.mxu0 %v2832
        %2903 = vmatpush.msra.mxu0 %v2830
        %2904 = vmatpush.msra.mxu0 %v2828
        %2905 = vmatpush.msra.mxu0 %v2826
        %2906 = vmatpush.msra.mxu0 %v2824
        %2907 = vmatpush.msra.mxu0 %v2822
        %2908 = vmatpush.msra.mxu0 %v2820
        %2909 = vmatmul.f32.gmra.mxu0 %v2712
        %v2910 = vpop.f32.mrf.mxu0
        %v2911 = vadd.f32 %v2870, %v2910
        %2912 = vmatmul.f32.gmra.mxu0 %v2718
        %v2913 = vpop.f32.mrf.mxu0
        %v2914 = vadd.f32 %v2873, %v2913
        %2915 = vmatmul.f32.gmra.mxu0 %v2724
        %v2916 = vpop.f32.mrf.mxu0
        %v2917 = vadd.f32 %v2876, %v2916
        %2918 = vmatmul.f32.gmra.mxu0 %v2730
        %v2919 = vpop.f32.mrf.mxu0
        %v2920 = vadd.f32 %v2879, %v2919
        %2921 = vmatmul.f32.gmra.mxu0 %v2736
        %v2922 = vpop.f32.mrf.mxu0
        %v2923 = vadd.f32 %v2882, %v2922
        %2924 = vmatmul.f32.gmra.mxu0 %v2742
        %v2925 = vpop.f32.mrf.mxu0
        %v2926 = vadd.f32 %v2885, %v2925
        %2927 = vmatmul.f32.gmra.mxu0 %v2748
        %v2928 = vpop.f32.mrf.mxu0
        %v2929 = vadd.f32 %v2888, %v2928
        %2930 = vmatmul.f32.gmra.mxu0 %v2754
        %v2931 = vpop.f32.mrf.mxu0
        %v2932 = vadd.f32 %v2891, %v2931
        %2933 = vdwg.mxu0
        %2934 = vmatpush.msra.mxu0 %v2819
        %2935 = vmatpush.msra.mxu0 %v2817
        %2936 = vmatpush.msra.mxu0 %v2815
        %2937 = vmatpush.msra.mxu0 %v2813
        %2938 = vmatpush.msra.mxu0 %v2811
        %2939 = vmatpush.msra.mxu0 %v2809
        %2940 = vmatpush.msra.mxu0 %v2807
        %2941 = vmatpush.msra.mxu0 %v2805
        %2942 = vmatpush.msra.mxu0 %v2803
        %2943 = vmatpush.msra.mxu0 %v2801
        %2944 = vmatpush.msra.mxu0 %v2799
        %2945 = vmatpush.msra.mxu0 %v2797
        %2946 = vmatpush.msra.mxu0 %v2795
        %2947 = vmatpush.msra.mxu0 %v2793
        %2948 = vmatpush.msra.mxu0 %v2791
        %2949 = vmatpush.msra.mxu0 %v2789
        %2950 = vmatmul.f32.gmra.mxu0 %v2709
        %v2951 = vpop.f32.mrf.mxu0
        %v2952 = vadd.f32 0.0, %v2951
        %2953 = vmatmul.f32.gmra.mxu0 %v2715
        %v2954 = vpop.f32.mrf.mxu0
        %v2955 = vadd.f32 0.0, %v2954
        %2956 = vmatmul.f32.gmra.mxu0 %v2721
        %v2957 = vpop.f32.mrf.mxu0
        %v2958 = vadd.f32 0.0, %v2957
        %2959 = vmatmul.f32.gmra.mxu0 %v2727
        %v2960 = vpop.f32.mrf.mxu0
        %v2961 = vadd.f32 0.0, %v2960
        %2962 = vmatmul.f32.gmra.mxu0 %v2733
        %v2963 = vpop.f32.mrf.mxu0
        %v2964 = vadd.f32 0.0, %v2963
        %2965 = vmatmul.f32.gmra.mxu0 %v2739
        %v2966 = vpop.f32.mrf.mxu0
        %v2967 = vadd.f32 0.0, %v2966
        %2968 = vmatmul.f32.gmra.mxu0 %v2745
        %v2969 = vpop.f32.mrf.mxu0
        %v2970 = vadd.f32 0.0, %v2969
        %2971 = vmatmul.f32.gmra.mxu0 %v2751
        %v2972 = vpop.f32.mrf.mxu0
        %v2973 = vadd.f32 0.0, %v2972
        %2974 = vdwg.mxu0
        %2975 = vmatpush.msra.mxu0 %v2851
        %2976 = vmatpush.msra.mxu0 %v2849
        %2977 = vmatpush.msra.mxu0 %v2847
        %2978 = vmatpush.msra.mxu0 %v2845
        %2979 = vmatpush.msra.mxu0 %v2843
        %2980 = vmatpush.msra.mxu0 %v2841
        %2981 = vmatpush.msra.mxu0 %v2839
        %2982 = vmatpush.msra.mxu0 %v2837
        %2983 = vmatpush.msra.mxu0 %v2835
        %2984 = vmatpush.msra.mxu0 %v2833
        %2985 = vmatpush.msra.mxu0 %v2831
        %2986 = vmatpush.msra.mxu0 %v2829
        %2987 = vmatpush.msra.mxu0 %v2827
        %2988 = vmatpush.msra.mxu0 %v2825
        %2989 = vmatpush.msra.mxu0 %v2823
        %2990 = vmatpush.msra.mxu0 %v2821
        %2991 = vmatmul.f32.gmra.mxu0 %v2712
        %v2992 = vpop.f32.mrf.mxu0
        %v2993 = vadd.f32 %v2952, %v2992
        %2994 = vmatmul.f32.gmra.mxu0 %v2718
        %v2995 = vpop.f32.mrf.mxu0
        %v2996 = vadd.f32 %v2955, %v2995
        %2997 = vmatmul.f32.gmra.mxu0 %v2724
        %v2998 = vpop.f32.mrf.mxu0
        %v2999 = vadd.f32 %v2958, %v2998
        %3000 = vmatmul.f32.gmra.mxu0 %v2730
        %v3001 = vpop.f32.mrf.mxu0
        %v3002 = vadd.f32 %v2961, %v3001
        %3003 = vmatmul.f32.gmra.mxu0 %v2736
        %v3004 = vpop.f32.mrf.mxu0
        %v3005 = vadd.f32 %v2964, %v3004
        %3006 = vmatmul.f32.gmra.mxu0 %v2742
        %v3007 = vpop.f32.mrf.mxu0
        %v3008 = vadd.f32 %v2967, %v3007
        %3009 = vmatmul.f32.gmra.mxu0 %v2748
        %v3010 = vpop.f32.mrf.mxu0
        %v3011 = vadd.f32 %v2970, %v3010
        %3012 = vmatmul.f32.gmra.mxu0 %v2754
        %v3013 = vpop.f32.mrf.mxu0
        %v3014 = vadd.f32 %v2973, %v3013
        %3015 = vdwg.mxu0
        %v3016 = vadd.f32 %v2771, %v2911
        %v3017 = vadd.f32 %v2772, %v2993
        %v3018 = vadd.f32 %v2773, %v2914
        %v3019 = vadd.f32 %v2774, %v2996
        %v3020 = vadd.f32 %v2775, %v2917
        %v3021 = vadd.f32 %v2776, %v2999
        %v3022 = vadd.f32 %v2777, %v2920
        %v3023 = vadd.f32 %v2778, %v3002
        %v3024 = vadd.f32 %v2779, %v2923
        %v3025 = vadd.f32 %v2780, %v3005
        %v3026 = vadd.f32 %v2781, %v2926
        %v3027 = vadd.f32 %v2782, %v3008
        %v3028 = vadd.f32 %v2783, %v2929
        %v3029 = vadd.f32 %v2784, %v3011
        %v3030 = vadd.f32 %v2785, %v2932
        %v3031 = vadd.f32 %v2786, %v3014
        %3032 = vst [vmem:[#allocation3] sm:$0xff] %v3016
        %3033 = vst [vmem:[#allocation3 + $0x8] sm:$0xff] %v3017
        %3034 = vst [vmem:[#allocation3 + $0x10] sm:$0xff] %v3018
        %3035 = vst [vmem:[#allocation3 + $0x18] sm:$0xff] %v3019
        %3036 = vst [vmem:[#allocation3 + $0x20] sm:$0xff] %v3020
        %3037 = vst [vmem:[#allocation3 + $0x28] sm:$0xff] %v3021
        %3038 = vst [vmem:[#allocation3 + $0x30] sm:$0xff] %v3022
        %3039 = vst [vmem:[#allocation3 + $0x38] sm:$0xff] %v3023
        %3040 = vst [vmem:[#allocation3 + $0x40] sm:$0xff] %v3024
        %3041 = vst [vmem:[#allocation3 + $0x48] sm:$0xff] %v3025
        %3042 = vst [vmem:[#allocation3 + $0x50] sm:$0xff] %v3026
        %3043 = vst [vmem:[#allocation3 + $0x58] sm:$0xff] %v3027
        %3044 = vst [vmem:[#allocation3 + $0x60] sm:$0xff] %v3028
        %3045 = vst [vmem:[#allocation3 + $0x68] sm:$0xff] %v3029
        %3046 = vst [vmem:[#allocation3 + $0x70] sm:$0xff] %v3030
        %3047 = vst [vmem:[#allocation3 + $0x78] sm:$0xff] %v3031
        %s3048 = scalar_lea.vmem [#allocation2], 64
        %v3049 = vld [vmem:[%s3048] sm:$0xff]
        %v3050 = vld [vmem:[%s3048 + $0x8] sm:$0xff]
        %v3051 = vld [vmem:[%s3048 + $0x20] sm:$0xff]
        %v3052 = vld [vmem:[%s3048 + $0x28] sm:$0xff]
        %v3053 = vld [vmem:[%s3048 + $0x40] sm:$0xff]
        %v3054 = vld [vmem:[%s3048 + $0x48] sm:$0xff]
        %v3055 = vld [vmem:[%s3048 + $0x60] sm:$0xff]
        %v3056 = vld [vmem:[%s3048 + $0x68] sm:$0xff]
        %v3057 = vld [vmem:[%s3048 + $0x80] sm:$0xff]
        %v3058 = vld [vmem:[%s3048 + $0x88] sm:$0xff]
        %v3059 = vld [vmem:[%s3048 + $0xa0] sm:$0xff]
        %v3060 = vld [vmem:[%s3048 + $0xa8] sm:$0xff]
        %v3061 = vld [vmem:[%s3048 + $0xc0] sm:$0xff]
        %v3062 = vld [vmem:[%s3048 + $0xc8] sm:$0xff]
        %v3063 = vld [vmem:[%s3048 + $0xe0] sm:$0xff]
        %v3064 = vld [vmem:[%s3048 + $0xe8] sm:$0xff]
        %v3065 = vld [vmem:[#allocation3] sm:$0xff]
        %v3066 = vld [vmem:[#allocation3 + $0x8] sm:$0xff]
        %v3067 = vld [vmem:[#allocation3 + $0x10] sm:$0xff]
        %v3068 = vld [vmem:[#allocation3 + $0x18] sm:$0xff]
        %v3069 = vld [vmem:[#allocation3 + $0x20] sm:$0xff]
        %v3070 = vld [vmem:[#allocation3 + $0x28] sm:$0xff]
        %v3071 = vld [vmem:[#allocation3 + $0x30] sm:$0xff]
        %v3072 = vld [vmem:[#allocation3 + $0x38] sm:$0xff]
        %v3073 = vld [vmem:[#allocation3 + $0x40] sm:$0xff]
        %v3074 = vld [vmem:[#allocation3 + $0x48] sm:$0xff]
        %v3075 = vld [vmem:[#allocation3 + $0x50] sm:$0xff]
        %v3076 = vld [vmem:[#allocation3 + $0x58] sm:$0xff]
        %v3077 = vld [vmem:[#allocation3 + $0x60] sm:$0xff]
        %v3078 = vld [vmem:[#allocation3 + $0x68] sm:$0xff]
        %v3079 = vld [vmem:[#allocation3 + $0x70] sm:$0xff]
        %v3080 = vld [vmem:[#allocation3 + $0x78] sm:$0xff]
        %s3081 = scalar_lea.vmem [#allocation9], 3072
        %v3082 = vld [vmem:[%s3081] sm:$0xff]
        %v3083 = vld [vmem:[%s3081 + $0x8] sm:$0xff]
        %v3084 = vld [vmem:[%s3081 + $0x10] sm:$0xff]
        %v3085 = vld [vmem:[%s3081 + $0x18] sm:$0xff]
        %v3086 = vld [vmem:[%s3081 + $0x20] sm:$0xff]
        %v3087 = vld [vmem:[%s3081 + $0x28] sm:$0xff]
        %v3088 = vld [vmem:[%s3081 + $0x30] sm:$0xff]
        %v3089 = vld [vmem:[%s3081 + $0x38] sm:$0xff]
        %v3090 = vld [vmem:[%s3081 + $0x40] sm:$0xff]
        %v3091 = vld [vmem:[%s3081 + $0x48] sm:$0xff]
        %v3092 = vld [vmem:[%s3081 + $0x50] sm:$0xff]
        %v3093 = vld [vmem:[%s3081 + $0x58] sm:$0xff]
        %v3094 = vld [vmem:[%s3081 + $0x60] sm:$0xff]
        %v3095 = vld [vmem:[%s3081 + $0x68] sm:$0xff]
        %v3096 = vld [vmem:[%s3081 + $0x70] sm:$0xff]
        %v3097 = vld [vmem:[%s3081 + $0x78] sm:$0xff]
        %v3098 = vld [vmem:[%s3081 + $0x80] sm:$0xff]
        %v3099 = vld [vmem:[%s3081 + $0x88] sm:$0xff]
        %v3100 = vld [vmem:[%s3081 + $0x90] sm:$0xff]
        %v3101 = vld [vmem:[%s3081 + $0x98] sm:$0xff]
        %v3102 = vld [vmem:[%s3081 + $0xa0] sm:$0xff]
        %v3103 = vld [vmem:[%s3081 + $0xa8] sm:$0xff]
        %v3104 = vld [vmem:[%s3081 + $0xb0] sm:$0xff]
        %v3105 = vld [vmem:[%s3081 + $0xb8] sm:$0xff]
        %v3106 = vld [vmem:[%s3081 + $0xc0] sm:$0xff]
        %v3107 = vld [vmem:[%s3081 + $0xc8] sm:$0xff]
        %v3108 = vld [vmem:[%s3081 + $0xd0] sm:$0xff]
        %v3109 = vld [vmem:[%s3081 + $0xd8] sm:$0xff]
        %v3110 = vld [vmem:[%s3081 + $0xe0] sm:$0xff]
        %v3111 = vld [vmem:[%s3081 + $0xe8] sm:$0xff]
        %v3112 = vld [vmem:[%s3081 + $0xf0] sm:$0xff]
        %v3113 = vld [vmem:[%s3081 + $0xf8] sm:$0xff]
        %v3114 = vld [vmem:[%s3081 + $0x100] sm:$0xff]
        %v3115 = vld [vmem:[%s3081 + $0x108] sm:$0xff]
        %v3116 = vld [vmem:[%s3081 + $0x110] sm:$0xff]
        %v3117 = vld [vmem:[%s3081 + $0x118] sm:$0xff]
        %v3118 = vld [vmem:[%s3081 + $0x120] sm:$0xff]
        %v3119 = vld [vmem:[%s3081 + $0x128] sm:$0xff]
        %v3120 = vld [vmem:[%s3081 + $0x130] sm:$0xff]
        %v3121 = vld [vmem:[%s3081 + $0x138] sm:$0xff]
        %v3122 = vld [vmem:[%s3081 + $0x140] sm:$0xff]
        %v3123 = vld [vmem:[%s3081 + $0x148] sm:$0xff]
        %v3124 = vld [vmem:[%s3081 + $0x150] sm:$0xff]
        %v3125 = vld [vmem:[%s3081 + $0x158] sm:$0xff]
        %v3126 = vld [vmem:[%s3081 + $0x160] sm:$0xff]
        %v3127 = vld [vmem:[%s3081 + $0x168] sm:$0xff]
        %v3128 = vld [vmem:[%s3081 + $0x170] sm:$0xff]
        %v3129 = vld [vmem:[%s3081 + $0x178] sm:$0xff]
        %v3130 = vld [vmem:[%s3081 + $0x180] sm:$0xff]
        %v3131 = vld [vmem:[%s3081 + $0x188] sm:$0xff]
        %v3132 = vld [vmem:[%s3081 + $0x190] sm:$0xff]
        %v3133 = vld [vmem:[%s3081 + $0x198] sm:$0xff]
        %v3134 = vld [vmem:[%s3081 + $0x1a0] sm:$0xff]
        %v3135 = vld [vmem:[%s3081 + $0x1a8] sm:$0xff]
        %v3136 = vld [vmem:[%s3081 + $0x1b0] sm:$0xff]
        %v3137 = vld [vmem:[%s3081 + $0x1b8] sm:$0xff]
        %v3138 = vld [vmem:[%s3081 + $0x1c0] sm:$0xff]
        %v3139 = vld [vmem:[%s3081 + $0x1c8] sm:$0xff]
        %v3140 = vld [vmem:[%s3081 + $0x1d0] sm:$0xff]
        %v3141 = vld [vmem:[%s3081 + $0x1d8] sm:$0xff]
        %v3142 = vld [vmem:[%s3081 + $0x1e0] sm:$0xff]
        %v3143 = vld [vmem:[%s3081 + $0x1e8] sm:$0xff]
        %v3144 = vld [vmem:[%s3081 + $0x1f0] sm:$0xff]
        %v3145 = vld [vmem:[%s3081 + $0x1f8] sm:$0xff]
        %3146 = vmatpush.msra.mxu0 %v3112
        %3147 = vmatpush.msra.mxu0 %v3110
        %3148 = vmatpush.msra.mxu0 %v3108
        %3149 = vmatpush.msra.mxu0 %v3106
        %3150 = vmatpush.msra.mxu0 %v3104
        %3151 = vmatpush.msra.mxu0 %v3102
        %3152 = vmatpush.msra.mxu0 %v3100
        %3153 = vmatpush.msra.mxu0 %v3098
        %3154 = vmatpush.msra.mxu0 %v3096
        %3155 = vmatpush.msra.mxu0 %v3094
        %3156 = vmatpush.msra.mxu0 %v3092
        %3157 = vmatpush.msra.mxu0 %v3090
        %3158 = vmatpush.msra.mxu0 %v3088
        %3159 = vmatpush.msra.mxu0 %v3086
        %3160 = vmatpush.msra.mxu0 %v3084
        %3161 = vmatpush.msra.mxu0 %v3082
        %3162 = vmatmul.f32.gmra.mxu0 %v3049
        %v3163 = vpop.f32.mrf.mxu0
        %v3164 = vadd.f32 0.0, %v3163
        %3165 = vmatmul.f32.gmra.mxu0 %v3051
        %v3166 = vpop.f32.mrf.mxu0
        %v3167 = vadd.f32 0.0, %v3166
        %3168 = vmatmul.f32.gmra.mxu0 %v3053
        %v3169 = vpop.f32.mrf.mxu0
        %v3170 = vadd.f32 0.0, %v3169
        %3171 = vmatmul.f32.gmra.mxu0 %v3055
        %v3172 = vpop.f32.mrf.mxu0
        %v3173 = vadd.f32 0.0, %v3172
        %3174 = vmatmul.f32.gmra.mxu0 %v3057
        %v3175 = vpop.f32.mrf.mxu0
        %v3176 = vadd.f32 0.0, %v3175
        %3177 = vmatmul.f32.gmra.mxu0 %v3059
        %v3178 = vpop.f32.mrf.mxu0
        %v3179 = vadd.f32 0.0, %v3178
        %3180 = vmatmul.f32.gmra.mxu0 %v3061
        %v3181 = vpop.f32.mrf.mxu0
        %v3182 = vadd.f32 0.0, %v3181
        %3183 = vmatmul.f32.gmra.mxu0 %v3063
        %v3184 = vpop.f32.mrf.mxu0
        %v3185 = vadd.f32 0.0, %v3184
        %3186 = vdwg.mxu0
        %3187 = vmatpush.msra.mxu0 %v3144
        %3188 = vmatpush.msra.mxu0 %v3142
        %3189 = vmatpush.msra.mxu0 %v3140
        %3190 = vmatpush.msra.mxu0 %v3138
        %3191 = vmatpush.msra.mxu0 %v3136
        %3192 = vmatpush.msra.mxu0 %v3134
        %3193 = vmatpush.msra.mxu0 %v3132
        %3194 = vmatpush.msra.mxu0 %v3130
        %3195 = vmatpush.msra.mxu0 %v3128
        %3196 = vmatpush.msra.mxu0 %v3126
        %3197 = vmatpush.msra.mxu0 %v3124
        %3198 = vmatpush.msra.mxu0 %v3122
        %3199 = vmatpush.msra.mxu0 %v3120
        %3200 = vmatpush.msra.mxu0 %v3118
        %3201 = vmatpush.msra.mxu0 %v3116
        %3202 = vmatpush.msra.mxu0 %v3114
        %3203 = vmatmul.f32.gmra.mxu0 %v3050
        %v3204 = vpop.f32.mrf.mxu0
        %v3205 = vadd.f32 %v3164, %v3204
        %3206 = vmatmul.f32.gmra.mxu0 %v3052
        %v3207 = vpop.f32.mrf.mxu0
        %v3208 = vadd.f32 %v3167, %v3207
        %3209 = vmatmul.f32.gmra.mxu0 %v3054
        %v3210 = vpop.f32.mrf.mxu0
        %v3211 = vadd.f32 %v3170, %v3210
        %3212 = vmatmul.f32.gmra.mxu0 %v3056
        %v3213 = vpop.f32.mrf.mxu0
        %v3214 = vadd.f32 %v3173, %v3213
        %3215 = vmatmul.f32.gmra.mxu0 %v3058
        %v3216 = vpop.f32.mrf.mxu0
        %v3217 = vadd.f32 %v3176, %v3216
        %3218 = vmatmul.f32.gmra.mxu0 %v3060
        %v3219 = vpop.f32.mrf.mxu0
        %v3220 = vadd.f32 %v3179, %v3219
        %3221 = vmatmul.f32.gmra.mxu0 %v3062
        %v3222 = vpop.f32.mrf.mxu0
        %v3223 = vadd.f32 %v3182, %v3222
        %3224 = vmatmul.f32.gmra.mxu0 %v3064
        %v3225 = vpop.f32.mrf.mxu0
        %v3226 = vadd.f32 %v3185, %v3225
        %3227 = vdwg.mxu0
        %3228 = vmatpush.msra.mxu0 %v3113
        %3229 = vmatpush.msra.mxu0 %v3111
        %3230 = vmatpush.msra.mxu0 %v3109
        %3231 = vmatpush.msra.mxu0 %v3107
        %3232 = vmatpush.msra.mxu0 %v3105
        %3233 = vmatpush.msra.mxu0 %v3103
        %3234 = vmatpush.msra.mxu0 %v3101
        %3235 = vmatpush.msra.mxu0 %v3099
        %3236 = vmatpush.msra.mxu0 %v3097
        %3237 = vmatpush.msra.mxu0 %v3095
        %3238 = vmatpush.msra.mxu0 %v3093
        %3239 = vmatpush.msra.mxu0 %v3091
        %3240 = vmatpush.msra.mxu0 %v3089
        %3241 = vmatpush.msra.mxu0 %v3087
        %3242 = vmatpush.msra.mxu0 %v3085
        %3243 = vmatpush.msra.mxu0 %v3083
        %3244 = vmatmul.f32.gmra.mxu0 %v3049
        %v3245 = vpop.f32.mrf.mxu0
        %v3246 = vadd.f32 0.0, %v3245
        %3247 = vmatmul.f32.gmra.mxu0 %v3051
        %v3248 = vpop.f32.mrf.mxu0
        %v3249 = vadd.f32 0.0, %v3248
        %3250 = vmatmul.f32.gmra.mxu0 %v3053
        %v3251 = vpop.f32.mrf.mxu0
        %v3252 = vadd.f32 0.0, %v3251
        %3253 = vmatmul.f32.gmra.mxu0 %v3055
        %v3254 = vpop.f32.mrf.mxu0
        %v3255 = vadd.f32 0.0, %v3254
        %3256 = vmatmul.f32.gmra.mxu0 %v3057
        %v3257 = vpop.f32.mrf.mxu0
        %v3258 = vadd.f32 0.0, %v3257
        %3259 = vmatmul.f32.gmra.mxu0 %v3059
        %v3260 = vpop.f32.mrf.mxu0
        %v3261 = vadd.f32 0.0, %v3260
        %3262 = vmatmul.f32.gmra.mxu0 %v3061
        %v3263 = vpop.f32.mrf.mxu0
        %v3264 = vadd.f32 0.0, %v3263
        %3265 = vmatmul.f32.gmra.mxu0 %v3063
        %v3266 = vpop.f32.mrf.mxu0
        %v3267 = vadd.f32 0.0, %v3266
        %3268 = vdwg.mxu0
        %3269 = vmatpush.msra.mxu0 %v3145
        %3270 = vmatpush.msra.mxu0 %v3143
        %3271 = vmatpush.msra.mxu0 %v3141
        %3272 = vmatpush.msra.mxu0 %v3139
        %3273 = vmatpush.msra.mxu0 %v3137
        %3274 = vmatpush.msra.mxu0 %v3135
        %3275 = vmatpush.msra.mxu0 %v3133
        %3276 = vmatpush.msra.mxu0 %v3131
        %3277 = vmatpush.msra.mxu0 %v3129
        %3278 = vmatpush.msra.mxu0 %v3127
        %3279 = vmatpush.msra.mxu0 %v3125
        %3280 = vmatpush.msra.mxu0 %v3123
        %3281 = vmatpush.msra.mxu0 %v3121
        %3282 = vmatpush.msra.mxu0 %v3119
        %3283 = vmatpush.msra.mxu0 %v3117
        %3284 = vmatpush.msra.mxu0 %v3115
        %3285 = vmatmul.f32.gmra.mxu0 %v3050
        %v3286 = vpop.f32.mrf.mxu0
        %v3287 = vadd.f32 %v3246, %v3286
        %3288 = vmatmul.f32.gmra.mxu0 %v3052
        %v3289 = vpop.f32.mrf.mxu0
        %v3290 = vadd.f32 %v3249, %v3289
        %3291 = vmatmul.f32.gmra.mxu0 %v3054
        %v3292 = vpop.f32.mrf.mxu0
        %v3293 = vadd.f32 %v3252, %v3292
        %3294 = vmatmul.f32.gmra.mxu0 %v3056
        %v3295 = vpop.f32.mrf.mxu0
        %v3296 = vadd.f32 %v3255, %v3295
        %3297 = vmatmul.f32.gmra.mxu0 %v3058
        %v3298 = vpop.f32.mrf.mxu0
        %v3299 = vadd.f32 %v3258, %v3298
        %3300 = vmatmul.f32.gmra.mxu0 %v3060
        %v3301 = vpop.f32.mrf.mxu0
        %v3302 = vadd.f32 %v3261, %v3301
        %3303 = vmatmul.f32.gmra.mxu0 %v3062
        %v3304 = vpop.f32.mrf.mxu0
        %v3305 = vadd.f32 %v3264, %v3304
        %3306 = vmatmul.f32.gmra.mxu0 %v3064
        %v3307 = vpop.f32.mrf.mxu0
        %v3308 = vadd.f32 %v3267, %v3307
        %3309 = vdwg.mxu0
        %v3310 = vadd.f32 %v3065, %v3205
        %v3311 = vadd.f32 %v3066, %v3287
        %v3312 = vadd.f32 %v3067, %v3208
        %v3313 = vadd.f32 %v3068, %v3290
        %v3314 = vadd.f32 %v3069, %v3211
        %v3315 = vadd.f32 %v3070, %v3293
        %v3316 = vadd.f32 %v3071, %v3214
        %v3317 = vadd.f32 %v3072, %v3296
        %v3318 = vadd.f32 %v3073, %v3217
        %v3319 = vadd.f32 %v3074, %v3299
        %v3320 = vadd.f32 %v3075, %v3220
        %v3321 = vadd.f32 %v3076, %v3302
        %v3322 = vadd.f32 %v3077, %v3223
        %v3323 = vadd.f32 %v3078, %v3305
        %v3324 = vadd.f32 %v3079, %v3226
        %v3325 = vadd.f32 %v3080, %v3308
        %3326 = vst [vmem:[#allocation3] sm:$0xff] %v3310
        %3327 = vst [vmem:[#allocation3 + $0x8] sm:$0xff] %v3311
        %3328 = vst [vmem:[#allocation3 + $0x10] sm:$0xff] %v3312
        %3329 = vst [vmem:[#allocation3 + $0x18] sm:$0xff] %v3313
        %3330 = vst [vmem:[#allocation3 + $0x20] sm:$0xff] %v3314
        %3331 = vst [vmem:[#allocation3 + $0x28] sm:$0xff] %v3315
        %3332 = vst [vmem:[#allocation3 + $0x30] sm:$0xff] %v3316
        %3333 = vst [vmem:[#allocation3 + $0x38] sm:$0xff] %v3317
        %3334 = vst [vmem:[#allocation3 + $0x40] sm:$0xff] %v3318
        %3335 = vst [vmem:[#allocation3 + $0x48] sm:$0xff] %v3319
        %3336 = vst [vmem:[#allocation3 + $0x50] sm:$0xff] %v3320
        %3337 = vst [vmem:[#allocation3 + $0x58] sm:$0xff] %v3321
        %3338 = vst [vmem:[#allocation3 + $0x60] sm:$0xff] %v3322
        %3339 = vst [vmem:[#allocation3 + $0x68] sm:$0xff] %v3323
        %3340 = vst [vmem:[#allocation3 + $0x70] sm:$0xff] %v3324
        %3341 = vst [vmem:[#allocation3 + $0x78] sm:$0xff] %v3325
        %v3342 = vld [vmem:[%s3048] sm:$0xfe]
        %v3343 = vld [vmem:[%s3048 + $0x8] sm:$0xfe]
        %v3344 = vld [vmem:[%s3048 + $0x10] sm:$0x1]
        %v3345 = vld [vmem:[%s3048 + $0x18] sm:$0x1]
        %v3346 = vld [vmem:[%s3048 + $0x20] sm:$0xfe]
        %v3347 = vld [vmem:[%s3048 + $0x28] sm:$0xfe]
        %v3348 = vld [vmem:[%s3048 + $0x30] sm:$0x1]
        %v3349 = vld [vmem:[%s3048 + $0x38] sm:$0x1]
        %v3350 = vld [vmem:[%s3048 + $0x40] sm:$0xfe]
        %v3351 = vld [vmem:[%s3048 + $0x48] sm:$0xfe]
        %v3352 = vld [vmem:[%s3048 + $0x50] sm:$0x1]
        %v3353 = vld [vmem:[%s3048 + $0x58] sm:$0x1]
        %v3354 = vld [vmem:[%s3048 + $0x60] sm:$0xfe]
        %v3355 = vld [vmem:[%s3048 + $0x68] sm:$0xfe]
        %v3356 = vld [vmem:[%s3048 + $0x70] sm:$0x1]
        %v3357 = vld [vmem:[%s3048 + $0x78] sm:$0x1]
        %v3358 = vld [vmem:[%s3048 + $0x80] sm:$0xfe]
        %v3359 = vld [vmem:[%s3048 + $0x88] sm:$0xfe]
        %v3360 = vld [vmem:[%s3048 + $0x90] sm:$0x1]
        %v3361 = vld [vmem:[%s3048 + $0x98] sm:$0x1]
        %v3362 = vld [vmem:[%s3048 + $0xa0] sm:$0xfe]
        %v3363 = vld [vmem:[%s3048 + $0xa8] sm:$0xfe]
        %v3364 = vld [vmem:[%s3048 + $0xb0] sm:$0x1]
        %v3365 = vld [vmem:[%s3048 + $0xb8] sm:$0x1]
        %v3366 = vld [vmem:[%s3048 + $0xc0] sm:$0xfe]
        %v3367 = vld [vmem:[%s3048 + $0xc8] sm:$0xfe]
        %v3368 = vld [vmem:[%s3048 + $0xd0] sm:$0x1]
        %v3369 = vld [vmem:[%s3048 + $0xd8] sm:$0x1]
        %v3370 = vld [vmem:[%s3048 + $0xe0] sm:$0xfe]
        %v3371 = vld [vmem:[%s3048 + $0xe8] sm:$0xfe]
        %v3372 = vld [vmem:[%s3048 + $0xf0] sm:$0x1]
        %v3373 = vld [vmem:[%s3048 + $0xf8] sm:$0x1]
        %v3406 = vrot.slane %v3342, 1
        %v3407 = vrot.slane %v3344, 1
        %v3408 = vsel %vm1197, %v3406, %v3407
        %v3409 = vrot.slane %v3343, 1
        %v3410 = vrot.slane %v3345, 1
        %v3411 = vsel %vm1197, %v3409, %v3410
        %v3412 = vrot.slane %v3346, 1
        %v3413 = vrot.slane %v3348, 1
        %v3414 = vsel %vm1197, %v3412, %v3413
        %v3415 = vrot.slane %v3347, 1
        %v3416 = vrot.slane %v3349, 1
        %v3417 = vsel %vm1197, %v3415, %v3416
        %v3418 = vrot.slane %v3350, 1
        %v3419 = vrot.slane %v3352, 1
        %v3420 = vsel %vm1197, %v3418, %v3419
        %v3421 = vrot.slane %v3351, 1
        %v3422 = vrot.slane %v3353, 1
        %v3423 = vsel %vm1197, %v3421, %v3422
        %v3424 = vrot.slane %v3354, 1
        %v3425 = vrot.slane %v3356, 1
        %v3426 = vsel %vm1197, %v3424, %v3425
        %v3427 = vrot.slane %v3355, 1
        %v3428 = vrot.slane %v3357, 1
        %v3429 = vsel %vm1197, %v3427, %v3428
        %v3430 = vrot.slane %v3358, 1
        %v3431 = vrot.slane %v3360, 1
        %v3432 = vsel %vm1197, %v3430, %v3431
        %v3433 = vrot.slane %v3359, 1
        %v3434 = vrot.slane %v3361, 1
        %v3435 = vsel %vm1197, %v3433, %v3434
        %v3436 = vrot.slane %v3362, 1
        %v3437 = vrot.slane %v3364, 1
        %v3438 = vsel %vm1197, %v3436, %v3437
        %v3439 = vrot.slane %v3363, 1
        %v3440 = vrot.slane %v3365, 1
        %v3441 = vsel %vm1197, %v3439, %v3440
        %v3442 = vrot.slane %v3366, 1
        %v3443 = vrot.slane %v3368, 1
        %v3444 = vsel %vm1197, %v3442, %v3443
        %v3445 = vrot.slane %v3367, 1
        %v3446 = vrot.slane %v3369, 1
        %v3447 = vsel %vm1197, %v3445, %v3446
        %v3448 = vrot.slane %v3370, 1
        %v3449 = vrot.slane %v3372, 1
        %v3450 = vsel %vm1197, %v3448, %v3449
        %v3451 = vrot.slane %v3371, 1
        %v3452 = vrot.slane %v3373, 1
        %v3453 = vsel %vm1197, %v3451, %v3452
        %v3470 = vld [vmem:[#allocation3] sm:$0xff]
        %v3471 = vld [vmem:[#allocation3 + $0x8] sm:$0xff]
        %v3472 = vld [vmem:[#allocation3 + $0x10] sm:$0xff]
        %v3473 = vld [vmem:[#allocation3 + $0x18] sm:$0xff]
        %v3474 = vld [vmem:[#allocation3 + $0x20] sm:$0xff]
        %v3475 = vld [vmem:[#allocation3 + $0x28] sm:$0xff]
        %v3476 = vld [vmem:[#allocation3 + $0x30] sm:$0xff]
        %v3477 = vld [vmem:[#allocation3 + $0x38] sm:$0xff]
        %v3478 = vld [vmem:[#allocation3 + $0x40] sm:$0xff]
        %v3479 = vld [vmem:[#allocation3 + $0x48] sm:$0xff]
        %v3480 = vld [vmem:[#allocation3 + $0x50] sm:$0xff]
        %v3481 = vld [vmem:[#allocation3 + $0x58] sm:$0xff]
        %v3482 = vld [vmem:[#allocation3 + $0x60] sm:$0xff]
        %v3483 = vld [vmem:[#allocation3 + $0x68] sm:$0xff]
        %v3484 = vld [vmem:[#allocation3 + $0x70] sm:$0xff]
        %v3485 = vld [vmem:[#allocation3 + $0x78] sm:$0xff]
        %s3486 = scalar_lea.vmem [#allocation9], 3584
        %v3487 = vld [vmem:[%s3486] sm:$0xff]
        %v3488 = vld [vmem:[%s3486 + $0x8] sm:$0xff]
        %v3489 = vld [vmem:[%s3486 + $0x10] sm:$0xff]
        %v3490 = vld [vmem:[%s3486 + $0x18] sm:$0xff]
        %v3491 = vld [vmem:[%s3486 + $0x20] sm:$0xff]
        %v3492 = vld [vmem:[%s3486 + $0x28] sm:$0xff]
        %v3493 = vld [vmem:[%s3486 + $0x30] sm:$0xff]
        %v3494 = vld [vmem:[%s3486 + $0x38] sm:$0xff]
        %v3495 = vld [vmem:[%s3486 + $0x40] sm:$0xff]
        %v3496 = vld [vmem:[%s3486 + $0x48] sm:$0xff]
        %v3497 = vld [vmem:[%s3486 + $0x50] sm:$0xff]
        %v3498 = vld [vmem:[%s3486 + $0x58] sm:$0xff]
        %v3499 = vld [vmem:[%s3486 + $0x60] sm:$0xff]
        %v3500 = vld [vmem:[%s3486 + $0x68] sm:$0xff]
        %v3501 = vld [vmem:[%s3486 + $0x70] sm:$0xff]
        %v3502 = vld [vmem:[%s3486 + $0x78] sm:$0xff]
        %v3503 = vld [vmem:[%s3486 + $0x80] sm:$0xff]
        %v3504 = vld [vmem:[%s3486 + $0x88] sm:$0xff]
        %v3505 = vld [vmem:[%s3486 + $0x90] sm:$0xff]
        %v3506 = vld [vmem:[%s3486 + $0x98] sm:$0xff]
        %v3507 = vld [vmem:[%s3486 + $0xa0] sm:$0xff]
        %v3508 = vld [vmem:[%s3486 + $0xa8] sm:$0xff]
        %v3509 = vld [vmem:[%s3486 + $0xb0] sm:$0xff]
        %v3510 = vld [vmem:[%s3486 + $0xb8] sm:$0xff]
        %v3511 = vld [vmem:[%s3486 + $0xc0] sm:$0xff]
        %v3512 = vld [vmem:[%s3486 + $0xc8] sm:$0xff]
        %v3513 = vld [vmem:[%s3486 + $0xd0] sm:$0xff]
        %v3514 = vld [vmem:[%s3486 + $0xd8] sm:$0xff]
        %v3515 = vld [vmem:[%s3486 + $0xe0] sm:$0xff]
        %v3516 = vld [vmem:[%s3486 + $0xe8] sm:$0xff]
        %v3517 = vld [vmem:[%s3486 + $0xf0] sm:$0xff]
        %v3518 = vld [vmem:[%s3486 + $0xf8] sm:$0xff]
        %v3519 = vld [vmem:[%s3486 + $0x100] sm:$0xff]
        %v3520 = vld [vmem:[%s3486 + $0x108] sm:$0xff]
        %v3521 = vld [vmem:[%s3486 + $0x110] sm:$0xff]
        %v3522 = vld [vmem:[%s3486 + $0x118] sm:$0xff]
        %v3523 = vld [vmem:[%s3486 + $0x120] sm:$0xff]
        %v3524 = vld [vmem:[%s3486 + $0x128] sm:$0xff]
        %v3525 = vld [vmem:[%s3486 + $0x130] sm:$0xff]
        %v3526 = vld [vmem:[%s3486 + $0x138] sm:$0xff]
        %v3527 = vld [vmem:[%s3486 + $0x140] sm:$0xff]
        %v3528 = vld [vmem:[%s3486 + $0x148] sm:$0xff]
        %v3529 = vld [vmem:[%s3486 + $0x150] sm:$0xff]
        %v3530 = vld [vmem:[%s3486 + $0x158] sm:$0xff]
        %v3531 = vld [vmem:[%s3486 + $0x160] sm:$0xff]
        %v3532 = vld [vmem:[%s3486 + $0x168] sm:$0xff]
        %v3533 = vld [vmem:[%s3486 + $0x170] sm:$0xff]
        %v3534 = vld [vmem:[%s3486 + $0x178] sm:$0xff]
        %v3535 = vld [vmem:[%s3486 + $0x180] sm:$0xff]
        %v3536 = vld [vmem:[%s3486 + $0x188] sm:$0xff]
        %v3537 = vld [vmem:[%s3486 + $0x190] sm:$0xff]
        %v3538 = vld [vmem:[%s3486 + $0x198] sm:$0xff]
        %v3539 = vld [vmem:[%s3486 + $0x1a0] sm:$0xff]
        %v3540 = vld [vmem:[%s3486 + $0x1a8] sm:$0xff]
        %v3541 = vld [vmem:[%s3486 + $0x1b0] sm:$0xff]
        %v3542 = vld [vmem:[%s3486 + $0x1b8] sm:$0xff]
        %v3543 = vld [vmem:[%s3486 + $0x1c0] sm:$0xff]
        %v3544 = vld [vmem:[%s3486 + $0x1c8] sm:$0xff]
        %v3545 = vld [vmem:[%s3486 + $0x1d0] sm:$0xff]
        %v3546 = vld [vmem:[%s3486 + $0x1d8] sm:$0xff]
        %v3547 = vld [vmem:[%s3486 + $0x1e0] sm:$0xff]
        %v3548 = vld [vmem:[%s3486 + $0x1e8] sm:$0xff]
        %v3549 = vld [vmem:[%s3486 + $0x1f0] sm:$0xff]
        %v3550 = vld [vmem:[%s3486 + $0x1f8] sm:$0xff]
        %3551 = vmatpush.msra.mxu0 %v3517
        %3552 = vmatpush.msra.mxu0 %v3515
        %3553 = vmatpush.msra.mxu0 %v3513
        %3554 = vmatpush.msra.mxu0 %v3511
        %3555 = vmatpush.msra.mxu0 %v3509
        %3556 = vmatpush.msra.mxu0 %v3507
        %3557 = vmatpush.msra.mxu0 %v3505
        %3558 = vmatpush.msra.mxu0 %v3503
        %3559 = vmatpush.msra.mxu0 %v3501
        %3560 = vmatpush.msra.mxu0 %v3499
        %3561 = vmatpush.msra.mxu0 %v3497
        %3562 = vmatpush.msra.mxu0 %v3495
        %3563 = vmatpush.msra.mxu0 %v3493
        %3564 = vmatpush.msra.mxu0 %v3491
        %3565 = vmatpush.msra.mxu0 %v3489
        %3566 = vmatpush.msra.mxu0 %v3487
        %3567 = vmatmul.f32.gmra.mxu0 %v3408
        %v3568 = vpop.f32.mrf.mxu0
        %v3569 = vadd.f32 0.0, %v3568
        %3570 = vmatmul.f32.gmra.mxu0 %v3414
        %v3571 = vpop.f32.mrf.mxu0
        %v3572 = vadd.f32 0.0, %v3571
        %3573 = vmatmul.f32.gmra.mxu0 %v3420
        %v3574 = vpop.f32.mrf.mxu0
        %v3575 = vadd.f32 0.0, %v3574
        %3576 = vmatmul.f32.gmra.mxu0 %v3426
        %v3577 = vpop.f32.mrf.mxu0
        %v3578 = vadd.f32 0.0, %v3577
        %3579 = vmatmul.f32.gmra.mxu0 %v3432
        %v3580 = vpop.f32.mrf.mxu0
        %v3581 = vadd.f32 0.0, %v3580
        %3582 = vmatmul.f32.gmra.mxu0 %v3438
        %v3583 = vpop.f32.mrf.mxu0
        %v3584 = vadd.f32 0.0, %v3583
        %3585 = vmatmul.f32.gmra.mxu0 %v3444
        %v3586 = vpop.f32.mrf.mxu0
        %v3587 = vadd.f32 0.0, %v3586
        %3588 = vmatmul.f32.gmra.mxu0 %v3450
        %v3589 = vpop.f32.mrf.mxu0
        %v3590 = vadd.f32 0.0, %v3589
        %3591 = vdwg.mxu0
        %3592 = vmatpush.msra.mxu0 %v3549
        %3593 = vmatpush.msra.mxu0 %v3547
        %3594 = vmatpush.msra.mxu0 %v3545
        %3595 = vmatpush.msra.mxu0 %v3543
        %3596 = vmatpush.msra.mxu0 %v3541
        %3597 = vmatpush.msra.mxu0 %v3539
        %3598 = vmatpush.msra.mxu0 %v3537
        %3599 = vmatpush.msra.mxu0 %v3535
        %3600 = vmatpush.msra.mxu0 %v3533
        %3601 = vmatpush.msra.mxu0 %v3531
        %3602 = vmatpush.msra.mxu0 %v3529
        %3603 = vmatpush.msra.mxu0 %v3527
        %3604 = vmatpush.msra.mxu0 %v3525
        %3605 = vmatpush.msra.mxu0 %v3523
        %3606 = vmatpush.msra.mxu0 %v3521
        %3607 = vmatpush.msra.mxu0 %v3519
        %3608 = vmatmul.f32.gmra.mxu0 %v3411
        %v3609 = vpop.f32.mrf.mxu0
        %v3610 = vadd.f32 %v3569, %v3609
        %3611 = vmatmul.f32.gmra.mxu0 %v3417
        %v3612 = vpop.f32.mrf.mxu0
        %v3613 = vadd.f32 %v3572, %v3612
        %3614 = vmatmul.f32.gmra.mxu0 %v3423
        %v3615 = vpop.f32.mrf.mxu0
        %v3616 = vadd.f32 %v3575, %v3615
        %3617 = vmatmul.f32.gmra.mxu0 %v3429
        %v3618 = vpop.f32.mrf.mxu0
        %v3619 = vadd.f32 %v3578, %v3618
        %3620 = vmatmul.f32.gmra.mxu0 %v3435
        %v3621 = vpop.f32.mrf.mxu0
        %v3622 = vadd.f32 %v3581, %v3621
        %3623 = vmatmul.f32.gmra.mxu0 %v3441
        %v3624 = vpop.f32.mrf.mxu0
        %v3625 = vadd.f32 %v3584, %v3624
        %3626 = vmatmul.f32.gmra.mxu0 %v3447
        %v3627 = vpop.f32.mrf.mxu0
        %v3628 = vadd.f32 %v3587, %v3627
        %3629 = vmatmul.f32.gmra.mxu0 %v3453
        %v3630 = vpop.f32.mrf.mxu0
        %v3631 = vadd.f32 %v3590, %v3630
        %3632 = vdwg.mxu0
        %3633 = vmatpush.msra.mxu0 %v3518
        %3634 = vmatpush.msra.mxu0 %v3516
        %3635 = vmatpush.msra.mxu0 %v3514
        %3636 = vmatpush.msra.mxu0 %v3512
        %3637 = vmatpush.msra.mxu0 %v3510
        %3638 = vmatpush.msra.mxu0 %v3508
        %3639 = vmatpush.msra.mxu0 %v3506
        %3640 = vmatpush.msra.mxu0 %v3504
        %3641 = vmatpush.msra.mxu0 %v3502
        %3642 = vmatpush.msra.mxu0 %v3500
        %3643 = vmatpush.msra.mxu0 %v3498
        %3644 = vmatpush.msra.mxu0 %v3496
        %3645 = vmatpush.msra.mxu0 %v3494
        %3646 = vmatpush.msra.mxu0 %v3492
        %3647 = vmatpush.msra.mxu0 %v3490
        %3648 = vmatpush.msra.mxu0 %v3488
        %3649 = vmatmul.f32.gmra.mxu0 %v3408
        %v3650 = vpop.f32.mrf.mxu0
        %v3651 = vadd.f32 0.0, %v3650
        %3652 = vmatmul.f32.gmra.mxu0 %v3414
        %v3653 = vpop.f32.mrf.mxu0
        %v3654 = vadd.f32 0.0, %v3653
        %3655 = vmatmul.f32.gmra.mxu0 %v3420
        %v3656 = vpop.f32.mrf.mxu0
        %v3657 = vadd.f32 0.0, %v3656
        %3658 = vmatmul.f32.gmra.mxu0 %v3426
        %v3659 = vpop.f32.mrf.mxu0
        %v3660 = vadd.f32 0.0, %v3659
        %3661 = vmatmul.f32.gmra.mxu0 %v3432
        %v3662 = vpop.f32.mrf.mxu0
        %v3663 = vadd.f32 0.0, %v3662
        %3664 = vmatmul.f32.gmra.mxu0 %v3438
        %v3665 = vpop.f32.mrf.mxu0
        %v3666 = vadd.f32 0.0, %v3665
        %3667 = vmatmul.f32.gmra.mxu0 %v3444
        %v3668 = vpop.f32.mrf.mxu0
        %v3669 = vadd.f32 0.0, %v3668
        %3670 = vmatmul.f32.gmra.mxu0 %v3450
        %v3671 = vpop.f32.mrf.mxu0
        %v3672 = vadd.f32 0.0, %v3671
        %3673 = vdwg.mxu0
        %3674 = vmatpush.msra.mxu0 %v3550
        %3675 = vmatpush.msra.mxu0 %v3548
        %3676 = vmatpush.msra.mxu0 %v3546
        %3677 = vmatpush.msra.mxu0 %v3544
        %3678 = vmatpush.msra.mxu0 %v3542
        %3679 = vmatpush.msra.mxu0 %v3540
        %3680 = vmatpush.msra.mxu0 %v3538
        %3681 = vmatpush.msra.mxu0 %v3536
        %3682 = vmatpush.msra.mxu0 %v3534
        %3683 = vmatpush.msra.mxu0 %v3532
        %3684 = vmatpush.msra.mxu0 %v3530
        %3685 = vmatpush.msra.mxu0 %v3528
        %3686 = vmatpush.msra.mxu0 %v3526
        %3687 = vmatpush.msra.mxu0 %v3524
        %3688 = vmatpush.msra.mxu0 %v3522
        %3689 = vmatpush.msra.mxu0 %v3520
        %3690 = vmatmul.f32.gmra.mxu0 %v3411
        %v3691 = vpop.f32.mrf.mxu0
        %v3692 = vadd.f32 %v3651, %v3691
        %3693 = vmatmul.f32.gmra.mxu0 %v3417
        %v3694 = vpop.f32.mrf.mxu0
        %v3695 = vadd.f32 %v3654, %v3694
        %3696 = vmatmul.f32.gmra.mxu0 %v3423
        %v3697 = vpop.f32.mrf.mxu0
        %v3698 = vadd.f32 %v3657, %v3697
        %3699 = vmatmul.f32.gmra.mxu0 %v3429
        %v3700 = vpop.f32.mrf.mxu0
        %v3701 = vadd.f32 %v3660, %v3700
        %3702 = vmatmul.f32.gmra.mxu0 %v3435
        %v3703 = vpop.f32.mrf.mxu0
        %v3704 = vadd.f32 %v3663, %v3703
        %3705 = vmatmul.f32.gmra.mxu0 %v3441
        %v3706 = vpop.f32.mrf.mxu0
        %v3707 = vadd.f32 %v3666, %v3706
        %3708 = vmatmul.f32.gmra.mxu0 %v3447
        %v3709 = vpop.f32.mrf.mxu0
        %v3710 = vadd.f32 %v3669, %v3709
        %3711 = vmatmul.f32.gmra.mxu0 %v3453
        %v3712 = vpop.f32.mrf.mxu0
        %v3713 = vadd.f32 %v3672, %v3712
        %3714 = vdwg.mxu0
        %v3715 = vadd.f32 %v3470, %v3610
        %v3716 = vadd.f32 %v3471, %v3692
        %v3717 = vadd.f32 %v3472, %v3613
        %v3718 = vadd.f32 %v3473, %v3695
        %v3719 = vadd.f32 %v3474, %v3616
        %v3720 = vadd.f32 %v3475, %v3698
        %v3721 = vadd.f32 %v3476, %v3619
        %v3722 = vadd.f32 %v3477, %v3701
        %v3723 = vadd.f32 %v3478, %v3622
        %v3724 = vadd.f32 %v3479, %v3704
        %v3725 = vadd.f32 %v3480, %v3625
        %v3726 = vadd.f32 %v3481, %v3707
        %v3727 = vadd.f32 %v3482, %v3628
        %v3728 = vadd.f32 %v3483, %v3710
        %v3729 = vadd.f32 %v3484, %v3631
        %v3730 = vadd.f32 %v3485, %v3713
        %3731 = vst [vmem:[#allocation3] sm:$0xff] %v3715
        %3732 = vst [vmem:[#allocation3 + $0x8] sm:$0xff] %v3716
        %3733 = vst [vmem:[#allocation3 + $0x10] sm:$0xff] %v3717
        %3734 = vst [vmem:[#allocation3 + $0x18] sm:$0xff] %v3718
        %3735 = vst [vmem:[#allocation3 + $0x20] sm:$0xff] %v3719
        %3736 = vst [vmem:[#allocation3 + $0x28] sm:$0xff] %v3720
        %3737 = vst [vmem:[#allocation3 + $0x30] sm:$0xff] %v3721
        %3738 = vst [vmem:[#allocation3 + $0x38] sm:$0xff] %v3722
        %3739 = vst [vmem:[#allocation3 + $0x40] sm:$0xff] %v3723
        %3740 = vst [vmem:[#allocation3 + $0x48] sm:$0xff] %v3724
        %3741 = vst [vmem:[#allocation3 + $0x50] sm:$0xff] %v3725
        %3742 = vst [vmem:[#allocation3 + $0x58] sm:$0xff] %v3726
        %3743 = vst [vmem:[#allocation3 + $0x60] sm:$0xff] %v3727
        %3744 = vst [vmem:[#allocation3 + $0x68] sm:$0xff] %v3728
        %3745 = vst [vmem:[#allocation3 + $0x70] sm:$0xff] %v3729
        %3746 = vst [vmem:[#allocation3 + $0x78] sm:$0xff] %v3730
        %v3747 = vld [vmem:[%s3048] sm:$0xfc]
        %v3748 = vld [vmem:[%s3048 + $0x8] sm:$0xfc]
        %v3749 = vld [vmem:[%s3048 + $0x10] sm:$0x3]
        %v3750 = vld [vmem:[%s3048 + $0x18] sm:$0x3]
        %v3751 = vld [vmem:[%s3048 + $0x20] sm:$0xfc]
        %v3752 = vld [vmem:[%s3048 + $0x28] sm:$0xfc]
        %v3753 = vld [vmem:[%s3048 + $0x30] sm:$0x3]
        %v3754 = vld [vmem:[%s3048 + $0x38] sm:$0x3]
        %v3755 = vld [vmem:[%s3048 + $0x40] sm:$0xfc]
        %v3756 = vld [vmem:[%s3048 + $0x48] sm:$0xfc]
        %v3757 = vld [vmem:[%s3048 + $0x50] sm:$0x3]
        %v3758 = vld [vmem:[%s3048 + $0x58] sm:$0x3]
        %v3759 = vld [vmem:[%s3048 + $0x60] sm:$0xfc]
        %v3760 = vld [vmem:[%s3048 + $0x68] sm:$0xfc]
        %v3761 = vld [vmem:[%s3048 + $0x70] sm:$0x3]
        %v3762 = vld [vmem:[%s3048 + $0x78] sm:$0x3]
        %v3763 = vld [vmem:[%s3048 + $0x80] sm:$0xfc]
        %v3764 = vld [vmem:[%s3048 + $0x88] sm:$0xfc]
        %v3765 = vld [vmem:[%s3048 + $0x90] sm:$0x3]
        %v3766 = vld [vmem:[%s3048 + $0x98] sm:$0x3]
        %v3767 = vld [vmem:[%s3048 + $0xa0] sm:$0xfc]
        %v3768 = vld [vmem:[%s3048 + $0xa8] sm:$0xfc]
        %v3769 = vld [vmem:[%s3048 + $0xb0] sm:$0x3]
        %v3770 = vld [vmem:[%s3048 + $0xb8] sm:$0x3]
        %v3771 = vld [vmem:[%s3048 + $0xc0] sm:$0xfc]
        %v3772 = vld [vmem:[%s3048 + $0xc8] sm:$0xfc]
        %v3773 = vld [vmem:[%s3048 + $0xd0] sm:$0x3]
        %v3774 = vld [vmem:[%s3048 + $0xd8] sm:$0x3]
        %v3775 = vld [vmem:[%s3048 + $0xe0] sm:$0xfc]
        %v3776 = vld [vmem:[%s3048 + $0xe8] sm:$0xfc]
        %v3777 = vld [vmem:[%s3048 + $0xf0] sm:$0x3]
        %v3778 = vld [vmem:[%s3048 + $0xf8] sm:$0x3]
        %v3811 = vrot.slane %v3747, 2
        %v3812 = vrot.slane %v3749, 2
        %v3813 = vsel %vm1603, %v3811, %v3812
        %v3814 = vrot.slane %v3748, 2
        %v3815 = vrot.slane %v3750, 2
        %v3816 = vsel %vm1603, %v3814, %v3815
        %v3817 = vrot.slane %v3751, 2
        %v3818 = vrot.slane %v3753, 2
        %v3819 = vsel %vm1603, %v3817, %v3818
        %v3820 = vrot.slane %v3752, 2
        %v3821 = vrot.slane %v3754, 2
        %v3822 = vsel %vm1603, %v3820, %v3821
        %v3823 = vrot.slane %v3755, 2
        %v3824 = vrot.slane %v3757, 2
        %v3825 = vsel %vm1603, %v3823, %v3824
        %v3826 = vrot.slane %v3756, 2
        %v3827 = vrot.slane %v3758, 2
        %v3828 = vsel %vm1603, %v3826, %v3827
        %v3829 = vrot.slane %v3759, 2
        %v3830 = vrot.slane %v3761, 2
        %v3831 = vsel %vm1603, %v3829, %v3830
        %v3832 = vrot.slane %v3760, 2
        %v3833 = vrot.slane %v3762, 2
        %v3834 = vsel %vm1603, %v3832, %v3833
        %v3835 = vrot.slane %v3763, 2
        %v3836 = vrot.slane %v3765, 2
        %v3837 = vsel %vm1603, %v3835, %v3836
        %v3838 = vrot.slane %v3764, 2
        %v3839 = vrot.slane %v3766, 2
        %v3840 = vsel %vm1603, %v3838, %v3839
        %v3841 = vrot.slane %v3767, 2
        %v3842 = vrot.slane %v3769, 2
        %v3843 = vsel %vm1603, %v3841, %v3842
        %v3844 = vrot.slane %v3768, 2
        %v3845 = vrot.slane %v3770, 2
        %v3846 = vsel %vm1603, %v3844, %v3845
        %v3847 = vrot.slane %v3771, 2
        %v3848 = vrot.slane %v3773, 2
        %v3849 = vsel %vm1603, %v3847, %v3848
        %v3850 = vrot.slane %v3772, 2
        %v3851 = vrot.slane %v3774, 2
        %v3852 = vsel %vm1603, %v3850, %v3851
        %v3853 = vrot.slane %v3775, 2
        %v3854 = vrot.slane %v3777, 2
        %v3855 = vsel %vm1603, %v3853, %v3854
        %v3856 = vrot.slane %v3776, 2
        %v3857 = vrot.slane %v3778, 2
        %v3858 = vsel %vm1603, %v3856, %v3857
        %v3875 = vld [vmem:[#allocation3] sm:$0xff]
        %v3876 = vld [vmem:[#allocation3 + $0x8] sm:$0xff]
        %v3877 = vld [vmem:[#allocation3 + $0x10] sm:$0xff]
        %v3878 = vld [vmem:[#allocation3 + $0x18] sm:$0xff]
        %v3879 = vld [vmem:[#allocation3 + $0x20] sm:$0xff]
        %v3880 = vld [vmem:[#allocation3 + $0x28] sm:$0xff]
        %v3881 = vld [vmem:[#allocation3 + $0x30] sm:$0xff]
        %v3882 = vld [vmem:[#allocation3 + $0x38] sm:$0xff]
        %v3883 = vld [vmem:[#allocation3 + $0x40] sm:$0xff]
        %v3884 = vld [vmem:[#allocation3 + $0x48] sm:$0xff]
        %v3885 = vld [vmem:[#allocation3 + $0x50] sm:$0xff]
        %v3886 = vld [vmem:[#allocation3 + $0x58] sm:$0xff]
        %v3887 = vld [vmem:[#allocation3 + $0x60] sm:$0xff]
        %v3888 = vld [vmem:[#allocation3 + $0x68] sm:$0xff]
        %v3889 = vld [vmem:[#allocation3 + $0x70] sm:$0xff]
        %v3890 = vld [vmem:[#allocation3 + $0x78] sm:$0xff]
        %s3891 = scalar_lea.vmem [#allocation9], 4096
        %v3892 = vld [vmem:[%s3891] sm:$0xff]
        %v3893 = vld [vmem:[%s3891 + $0x8] sm:$0xff]
        %v3894 = vld [vmem:[%s3891 + $0x10] sm:$0xff]
        %v3895 = vld [vmem:[%s3891 + $0x18] sm:$0xff]
        %v3896 = vld [vmem:[%s3891 + $0x20] sm:$0xff]
        %v3897 = vld [vmem:[%s3891 + $0x28] sm:$0xff]
        %v3898 = vld [vmem:[%s3891 + $0x30] sm:$0xff]
        %v3899 = vld [vmem:[%s3891 + $0x38] sm:$0xff]
        %v3900 = vld [vmem:[%s3891 + $0x40] sm:$0xff]
        %v3901 = vld [vmem:[%s3891 + $0x48] sm:$0xff]
        %v3902 = vld [vmem:[%s3891 + $0x50] sm:$0xff]
        %v3903 = vld [vmem:[%s3891 + $0x58] sm:$0xff]
        %v3904 = vld [vmem:[%s3891 + $0x60] sm:$0xff]
        %v3905 = vld [vmem:[%s3891 + $0x68] sm:$0xff]
        %v3906 = vld [vmem:[%s3891 + $0x70] sm:$0xff]
        %v3907 = vld [vmem:[%s3891 + $0x78] sm:$0xff]
        %v3908 = vld [vmem:[%s3891 + $0x80] sm:$0xff]
        %v3909 = vld [vmem:[%s3891 + $0x88] sm:$0xff]
        %v3910 = vld [vmem:[%s3891 + $0x90] sm:$0xff]
        %v3911 = vld [vmem:[%s3891 + $0x98] sm:$0xff]
        %v3912 = vld [vmem:[%s3891 + $0xa0] sm:$0xff]
        %v3913 = vld [vmem:[%s3891 + $0xa8] sm:$0xff]
        %v3914 = vld [vmem:[%s3891 + $0xb0] sm:$0xff]
        %v3915 = vld [vmem:[%s3891 + $0xb8] sm:$0xff]
        %v3916 = vld [vmem:[%s3891 + $0xc0] sm:$0xff]
        %v3917 = vld [vmem:[%s3891 + $0xc8] sm:$0xff]
        %v3918 = vld [vmem:[%s3891 + $0xd0] sm:$0xff]
        %v3919 = vld [vmem:[%s3891 + $0xd8] sm:$0xff]
        %v3920 = vld [vmem:[%s3891 + $0xe0] sm:$0xff]
        %v3921 = vld [vmem:[%s3891 + $0xe8] sm:$0xff]
        %v3922 = vld [vmem:[%s3891 + $0xf0] sm:$0xff]
        %v3923 = vld [vmem:[%s3891 + $0xf8] sm:$0xff]
        %v3924 = vld [vmem:[%s3891 + $0x100] sm:$0xff]
        %v3925 = vld [vmem:[%s3891 + $0x108] sm:$0xff]
        %v3926 = vld [vmem:[%s3891 + $0x110] sm:$0xff]
        %v3927 = vld [vmem:[%s3891 + $0x118] sm:$0xff]
        %v3928 = vld [vmem:[%s3891 + $0x120] sm:$0xff]
        %v3929 = vld [vmem:[%s3891 + $0x128] sm:$0xff]
        %v3930 = vld [vmem:[%s3891 + $0x130] sm:$0xff]
        %v3931 = vld [vmem:[%s3891 + $0x138] sm:$0xff]
        %v3932 = vld [vmem:[%s3891 + $0x140] sm:$0xff]
        %v3933 = vld [vmem:[%s3891 + $0x148] sm:$0xff]
        %v3934 = vld [vmem:[%s3891 + $0x150] sm:$0xff]
        %v3935 = vld [vmem:[%s3891 + $0x158] sm:$0xff]
        %v3936 = vld [vmem:[%s3891 + $0x160] sm:$0xff]
        %v3937 = vld [vmem:[%s3891 + $0x168] sm:$0xff]
        %v3938 = vld [vmem:[%s3891 + $0x170] sm:$0xff]
        %v3939 = vld [vmem:[%s3891 + $0x178] sm:$0xff]
        %v3940 = vld [vmem:[%s3891 + $0x180] sm:$0xff]
        %v3941 = vld [vmem:[%s3891 + $0x188] sm:$0xff]
        %v3942 = vld [vmem:[%s3891 + $0x190] sm:$0xff]
        %v3943 = vld [vmem:[%s3891 + $0x198] sm:$0xff]
        %v3944 = vld [vmem:[%s3891 + $0x1a0] sm:$0xff]
        %v3945 = vld [vmem:[%s3891 + $0x1a8] sm:$0xff]
        %v3946 = vld [vmem:[%s3891 + $0x1b0] sm:$0xff]
        %v3947 = vld [vmem:[%s3891 + $0x1b8] sm:$0xff]
        %v3948 = vld [vmem:[%s3891 + $0x1c0] sm:$0xff]
        %v3949 = vld [vmem:[%s3891 + $0x1c8] sm:$0xff]
        %v3950 = vld [vmem:[%s3891 + $0x1d0] sm:$0xff]
        %v3951 = vld [vmem:[%s3891 + $0x1d8] sm:$0xff]
        %v3952 = vld [vmem:[%s3891 + $0x1e0] sm:$0xff]
        %v3953 = vld [vmem:[%s3891 + $0x1e8] sm:$0xff]
        %v3954 = vld [vmem:[%s3891 + $0x1f0] sm:$0xff]
        %v3955 = vld [vmem:[%s3891 + $0x1f8] sm:$0xff]
        %3956 = vmatpush.msra.mxu0 %v3922
        %3957 = vmatpush.msra.mxu0 %v3920
        %3958 = vmatpush.msra.mxu0 %v3918
        %3959 = vmatpush.msra.mxu0 %v3916
        %3960 = vmatpush.msra.mxu0 %v3914
        %3961 = vmatpush.msra.mxu0 %v3912
        %3962 = vmatpush.msra.mxu0 %v3910
        %3963 = vmatpush.msra.mxu0 %v3908
        %3964 = vmatpush.msra.mxu0 %v3906
        %3965 = vmatpush.msra.mxu0 %v3904
        %3966 = vmatpush.msra.mxu0 %v3902
        %3967 = vmatpush.msra.mxu0 %v3900
        %3968 = vmatpush.msra.mxu0 %v3898
        %3969 = vmatpush.msra.mxu0 %v3896
        %3970 = vmatpush.msra.mxu0 %v3894
        %3971 = vmatpush.msra.mxu0 %v3892
        %3972 = vmatmul.f32.gmra.mxu0 %v3813
        %v3973 = vpop.f32.mrf.mxu0
        %v3974 = vadd.f32 0.0, %v3973
        %3975 = vmatmul.f32.gmra.mxu0 %v3819
        %v3976 = vpop.f32.mrf.mxu0
        %v3977 = vadd.f32 0.0, %v3976
        %3978 = vmatmul.f32.gmra.mxu0 %v3825
        %v3979 = vpop.f32.mrf.mxu0
        %v3980 = vadd.f32 0.0, %v3979
        %3981 = vmatmul.f32.gmra.mxu0 %v3831
        %v3982 = vpop.f32.mrf.mxu0
        %v3983 = vadd.f32 0.0, %v3982
        %3984 = vmatmul.f32.gmra.mxu0 %v3837
        %v3985 = vpop.f32.mrf.mxu0
        %v3986 = vadd.f32 0.0, %v3985
        %3987 = vmatmul.f32.gmra.mxu0 %v3843
        %v3988 = vpop.f32.mrf.mxu0
        %v3989 = vadd.f32 0.0, %v3988
        %3990 = vmatmul.f32.gmra.mxu0 %v3849
        %v3991 = vpop.f32.mrf.mxu0
        %v3992 = vadd.f32 0.0, %v3991
        %3993 = vmatmul.f32.gmra.mxu0 %v3855
        %v3994 = vpop.f32.mrf.mxu0
        %v3995 = vadd.f32 0.0, %v3994
        %3996 = vdwg.mxu0
        %3997 = vmatpush.msra.mxu0 %v3954
        %3998 = vmatpush.msra.mxu0 %v3952
        %3999 = vmatpush.msra.mxu0 %v3950
        %4000 = vmatpush.msra.mxu0 %v3948
        %4001 = vmatpush.msra.mxu0 %v3946
        %4002 = vmatpush.msra.mxu0 %v3944
        %4003 = vmatpush.msra.mxu0 %v3942
        %4004 = vmatpush.msra.mxu0 %v3940
        %4005 = vmatpush.msra.mxu0 %v3938
        %4006 = vmatpush.msra.mxu0 %v3936
        %4007 = vmatpush.msra.mxu0 %v3934
        %4008 = vmatpush.msra.mxu0 %v3932
        %4009 = vmatpush.msra.mxu0 %v3930
        %4010 = vmatpush.msra.mxu0 %v3928
        %4011 = vmatpush.msra.mxu0 %v3926
        %4012 = vmatpush.msra.mxu0 %v3924
        %4013 = vmatmul.f32.gmra.mxu0 %v3816
        %v4014 = vpop.f32.mrf.mxu0
        %v4015 = vadd.f32 %v3974, %v4014
        %4016 = vmatmul.f32.gmra.mxu0 %v3822
        %v4017 = vpop.f32.mrf.mxu0
        %v4018 = vadd.f32 %v3977, %v4017
        %4019 = vmatmul.f32.gmra.mxu0 %v3828
        %v4020 = vpop.f32.mrf.mxu0
        %v4021 = vadd.f32 %v3980, %v4020
        %4022 = vmatmul.f32.gmra.mxu0 %v3834
        %v4023 = vpop.f32.mrf.mxu0
        %v4024 = vadd.f32 %v3983, %v4023
        %4025 = vmatmul.f32.gmra.mxu0 %v3840
        %v4026 = vpop.f32.mrf.mxu0
        %v4027 = vadd.f32 %v3986, %v4026
        %4028 = vmatmul.f32.gmra.mxu0 %v3846
        %v4029 = vpop.f32.mrf.mxu0
        %v4030 = vadd.f32 %v3989, %v4029
        %4031 = vmatmul.f32.gmra.mxu0 %v3852
        %v4032 = vpop.f32.mrf.mxu0
        %v4033 = vadd.f32 %v3992, %v4032
        %4034 = vmatmul.f32.gmra.mxu0 %v3858
        %v4035 = vpop.f32.mrf.mxu0
        %v4036 = vadd.f32 %v3995, %v4035
        %4037 = vdwg.mxu0
        %4038 = vmatpush.msra.mxu0 %v3923
        %4039 = vmatpush.msra.mxu0 %v3921
        %4040 = vmatpush.msra.mxu0 %v3919
        %4041 = vmatpush.msra.mxu0 %v3917
        %4042 = vmatpush.msra.mxu0 %v3915
        %4043 = vmatpush.msra.mxu0 %v3913
        %4044 = vmatpush.msra.mxu0 %v3911
        %4045 = vmatpush.msra.mxu0 %v3909
        %4046 = vmatpush.msra.mxu0 %v3907
        %4047 = vmatpush.msra.mxu0 %v3905
        %4048 = vmatpush.msra.mxu0 %v3903
        %4049 = vmatpush.msra.mxu0 %v3901
        %4050 = vmatpush.msra.mxu0 %v3899
        %4051 = vmatpush.msra.mxu0 %v3897
        %4052 = vmatpush.msra.mxu0 %v3895
        %4053 = vmatpush.msra.mxu0 %v3893
        %4054 = vmatmul.f32.gmra.mxu0 %v3813
        %v4055 = vpop.f32.mrf.mxu0
        %v4056 = vadd.f32 0.0, %v4055
        %4057 = vmatmul.f32.gmra.mxu0 %v3819
        %v4058 = vpop.f32.mrf.mxu0
        %v4059 = vadd.f32 0.0, %v4058
        %4060 = vmatmul.f32.gmra.mxu0 %v3825
        %v4061 = vpop.f32.mrf.mxu0
        %v4062 = vadd.f32 0.0, %v4061
        %4063 = vmatmul.f32.gmra.mxu0 %v3831
        %v4064 = vpop.f32.mrf.mxu0
        %v4065 = vadd.f32 0.0, %v4064
        %4066 = vmatmul.f32.gmra.mxu0 %v3837
        %v4067 = vpop.f32.mrf.mxu0
        %v4068 = vadd.f32 0.0, %v4067
        %4069 = vmatmul.f32.gmra.mxu0 %v3843
        %v4070 = vpop.f32.mrf.mxu0
        %v4071 = vadd.f32 0.0, %v4070
        %4072 = vmatmul.f32.gmra.mxu0 %v3849
        %v4073 = vpop.f32.mrf.mxu0
        %v4074 = vadd.f32 0.0, %v4073
        %4075 = vmatmul.f32.gmra.mxu0 %v3855
        %v4076 = vpop.f32.mrf.mxu0
        %v4077 = vadd.f32 0.0, %v4076
        %4078 = vdwg.mxu0
        %4079 = vmatpush.msra.mxu0 %v3955
        %4080 = vmatpush.msra.mxu0 %v3953
        %4081 = vmatpush.msra.mxu0 %v3951
        %4082 = vmatpush.msra.mxu0 %v3949
        %4083 = vmatpush.msra.mxu0 %v3947
        %4084 = vmatpush.msra.mxu0 %v3945
        %4085 = vmatpush.msra.mxu0 %v3943
        %4086 = vmatpush.msra.mxu0 %v3941
        %4087 = vmatpush.msra.mxu0 %v3939
        %4088 = vmatpush.msra.mxu0 %v3937
        %4089 = vmatpush.msra.mxu0 %v3935
        %4090 = vmatpush.msra.mxu0 %v3933
        %4091 = vmatpush.msra.mxu0 %v3931
        %4092 = vmatpush.msra.mxu0 %v3929
        %4093 = vmatpush.msra.mxu0 %v3927
        %4094 = vmatpush.msra.mxu0 %v3925
        %4095 = vmatmul.f32.gmra.mxu0 %v3816
        %v4096 = vpop.f32.mrf.mxu0
        %v4097 = vadd.f32 %v4056, %v4096
        %4098 = vmatmul.f32.gmra.mxu0 %v3822
        %v4099 = vpop.f32.mrf.mxu0
        %v4100 = vadd.f32 %v4059, %v4099
        %4101 = vmatmul.f32.gmra.mxu0 %v3828
        %v4102 = vpop.f32.mrf.mxu0
        %v4103 = vadd.f32 %v4062, %v4102
        %4104 = vmatmul.f32.gmra.mxu0 %v3834
        %v4105 = vpop.f32.mrf.mxu0
        %v4106 = vadd.f32 %v4065, %v4105
        %4107 = vmatmul.f32.gmra.mxu0 %v3840
        %v4108 = vpop.f32.mrf.mxu0
        %v4109 = vadd.f32 %v4068, %v4108
        %4110 = vmatmul.f32.gmra.mxu0 %v3846
        %v4111 = vpop.f32.mrf.mxu0
        %v4112 = vadd.f32 %v4071, %v4111
        %4113 = vmatmul.f32.gmra.mxu0 %v3852
        %v4114 = vpop.f32.mrf.mxu0
        %v4115 = vadd.f32 %v4074, %v4114
        %4116 = vmatmul.f32.gmra.mxu0 %v3858
        %v4117 = vpop.f32.mrf.mxu0
        %v4118 = vadd.f32 %v4077, %v4117
        %4119 = vdwg.mxu0
        %v4120 = vadd.f32 %v3875, %v4015
        %v4121 = vadd.f32 %v3876, %v4097
        %v4122 = vadd.f32 %v3877, %v4018
        %v4123 = vadd.f32 %v3878, %v4100
        %v4124 = vadd.f32 %v3879, %v4021
        %v4125 = vadd.f32 %v3880, %v4103
        %v4126 = vadd.f32 %v3881, %v4024
        %v4127 = vadd.f32 %v3882, %v4106
        %v4128 = vadd.f32 %v3883, %v4027
        %v4129 = vadd.f32 %v3884, %v4109
        %v4130 = vadd.f32 %v3885, %v4030
        %v4131 = vadd.f32 %v3886, %v4112
        %v4132 = vadd.f32 %v3887, %v4033
        %v4133 = vadd.f32 %v3888, %v4115
        %v4134 = vadd.f32 %v3889, %v4036
        %v4135 = vadd.f32 %v3890, %v4118
        %4136 = vst [vmem:[#allocation3] sm:$0xff] %v4120
        %4137 = vst [vmem:[#allocation3 + $0x8] sm:$0xff] %v4121
        %4138 = vst [vmem:[#allocation3 + $0x10] sm:$0xff] %v4122
        %4139 = vst [vmem:[#allocation3 + $0x18] sm:$0xff] %v4123
        %4140 = vst [vmem:[#allocation3 + $0x20] sm:$0xff] %v4124
        %4141 = vst [vmem:[#allocation3 + $0x28] sm:$0xff] %v4125
        %4142 = vst [vmem:[#allocation3 + $0x30] sm:$0xff] %v4126
        %4143 = vst [vmem:[#allocation3 + $0x38] sm:$0xff] %v4127
        %4144 = vst [vmem:[#allocation3 + $0x40] sm:$0xff] %v4128
        %4145 = vst [vmem:[#allocation3 + $0x48] sm:$0xff] %v4129
        %4146 = vst [vmem:[#allocation3 + $0x50] sm:$0xff] %v4130
        %4147 = vst [vmem:[#allocation3 + $0x58] sm:$0xff] %v4131
        %4148 = vst [vmem:[#allocation3 + $0x60] sm:$0xff] %v4132
        %4149 = vst [vmem:[#allocation3 + $0x68] sm:$0xff] %v4133
        %4150 = vst [vmem:[#allocation3 + $0x70] sm:$0xff] %v4134
        %4151 = vst [vmem:[#allocation3 + $0x78] sm:$0xff] %v4135
        %v4152 = vld [vmem:[#allocation3] sm:$0xff]
        %v4153 = vld [vmem:[#allocation3 + $0x8] sm:$0xff]
        %v4154 = vld [vmem:[#allocation3 + $0x10] sm:$0xff]
        %v4155 = vld [vmem:[#allocation3 + $0x18] sm:$0xff]
        %v4156 = vld [vmem:[#allocation3 + $0x20] sm:$0xff]
        %v4157 = vld [vmem:[#allocation3 + $0x28] sm:$0xff]
        %v4158 = vld [vmem:[#allocation3 + $0x30] sm:$0xff]
        %v4159 = vld [vmem:[#allocation3 + $0x38] sm:$0xff]
        %v4160 = vld [vmem:[#allocation3 + $0x40] sm:$0xff]
        %v4161 = vld [vmem:[#allocation3 + $0x48] sm:$0xff]
        %v4162 = vld [vmem:[#allocation3 + $0x50] sm:$0xff]
        %v4163 = vld [vmem:[#allocation3 + $0x58] sm:$0xff]
        %v4164 = vld [vmem:[#allocation3 + $0x60] sm:$0xff]
        %v4165 = vld [vmem:[#allocation3 + $0x68] sm:$0xff]
        %v4166 = vld [vmem:[#allocation3 + $0x70] sm:$0xff]
        %v4167 = vld [vmem:[#allocation3 + $0x78] sm:$0xff]
        %4168 = vst [vmem:[%s314] sm:$0xff] %v4152
        %4169 = vst [vmem:[%s314 + $0x8] sm:$0xff] %v4153
        %4170 = vst [vmem:[%s314 + $0x10] sm:$0xff] %v4154
        %4171 = vst [vmem:[%s314 + $0x18] sm:$0xff] %v4155
        %4172 = vst [vmem:[%s314 + $0x20] sm:$0xff] %v4156
        %4173 = vst [vmem:[%s314 + $0x28] sm:$0xff] %v4157
        %4174 = vst [vmem:[%s314 + $0x30] sm:$0xff] %v4158
        %4175 = vst [vmem:[%s314 + $0x38] sm:$0xff] %v4159
        %4176 = vst [vmem:[%s314 + $0x40] sm:$0xff] %v4160
        %4177 = vst [vmem:[%s314 + $0x48] sm:$0xff] %v4161
        %4178 = vst [vmem:[%s314 + $0x50] sm:$0xff] %v4162
        %4179 = vst [vmem:[%s314 + $0x58] sm:$0xff] %v4163
        %4180 = vst [vmem:[%s314 + $0x60] sm:$0xff] %v4164
        %4181 = vst [vmem:[%s314 + $0x68] sm:$0xff] %v4165
        %4182 = vst [vmem:[%s314 + $0x70] sm:$0xff] %v4166
        %4183 = vst [vmem:[%s314 + $0x78] sm:$0xff] %v4167
        %p4184 = scmp.lt.s32.totalorder %s20, 1
        %s4185 = scalar_select %p4184, %s20, 1
        %s4186 = smul.addr %s4185, 16
        %s4187 = smul.addr %s4186, 8
        %s4188 = scalar_lea.vmem %s6, %s4187
        // Predicated region
        $region61: #{dyn_no_bottleneck_forward.2} parent=43 // pred_check
          %p4189 = pneg %p169
        $region62: #{dyn_no_bottleneck_forward.2} parent=43 // pred_check_branch
          %4191 = sbr.rel (%p4189) target = $region64
        $region63: #{dyn_no_bottleneck_forward.2} parent=43 // pred_region
          _
        $region64: #{dyn_no_bottleneck_forward.2} parent=43 // pred_fallthru
          _
      $region44: #{dyn_no_bottleneck_forward.2} parent=5 // pred_fallthru
        _
      %p4192 = scmp.le.s32.totalorder 2, %s15
      // Predicated region
      $region65: #{dyn_no_bottleneck_forward.2} parent=5 // pred_check
        %p4193 = pneg %p4192
      $region66: #{dyn_no_bottleneck_forward.2} parent=5 // pred_check_branch
        %4195 = sbr.rel (%p4193) target = $region68
      $region67: #{dyn_no_bottleneck_forward.2} parent=5 // pred_region
        %s4196 = ssub.s32 %s15, 2
        // Predicated region
        $region69: #{dyn_no_bottleneck_forward.2} parent=67 // pred_check
          %p4197 = pneg %p175
        $region70: #{dyn_no_bottleneck_forward.2} parent=67 // pred_check_branch
          %4199 = sbr.rel (%p4197) target = $region72
        $region71: #{dyn_no_bottleneck_forward.2} parent=67 // pred_region
          %p4200 = scmp.lt.s32.totalorder %s21, 1
          %s4201 = scalar_select %p4200, %s21, 1
          %s4202 = smul.addr %s4201, 16
          %s4203 = smul.addr %s4202, 8
          %s4204 = scalar_lea.vmem %s6, %s4203
        $region72: #{dyn_no_bottleneck_forward.2} parent=67 // pred_fallthru
          _
      $region68: #{dyn_no_bottleneck_forward.2} parent=5 // pred_fallthru
        _
    $region6: #{dyn_no_bottleneck_forward.2} parent=1 // loop_footer
      %s19 = sadd.s32 1, %s15
    $region7: #{dyn_no_bottleneck_forward.2} parent=1 // loop_footer_branch
      %14 = sbr.rel target = $region3
    $region8: #{dyn_no_bottleneck_forward.2} parent=1 // loop_exit
      _
    %4205 = vsyncpa [#allocation5], 1
    %s4206 = scalar_lea.sflag [#allocation5], 1
    %4207 = vsyncpa %s4206, 1
    %4208 = vsyncpa [#allocation7], 1
    %4209 = vsyncpa [#allocation10], 1

</llo_original>
